<compile_context>
chip_gen: v7x
topology: tpu7x:2x2x1
jax: 0.10.0
libtpu: 0.0.40
codegen_flags: <defaults>
</compile_context>

<pallas_src>
import jax
import jax.numpy as jnp
from jax import lax
from jax.experimental import pallas as pl
from jax.experimental.pallas import tpu as pltpu

COMPUTE_DTYPE = jnp.bfloat16   # matmul-operand dtype; accumulation/epilogue in f32


def _round_up(x, m):
    return (x + m - 1) // m * m


def _make_bottleneck_kernel(rels, c_mid, p_lanes, margin):
    """Fused 1x1x1 -> 3x3x3 -> 1x1x1 Bottleneck (BN folded, identity residual)."""

    def kernel(xf_ref, mask_ref, w1_ref, w2_ref, w3_ref,
               b1_ref, b2_ref, b3_ref, o_ref, h1x_ref):
        x = xf_ref[0]                # (Cin, Pl) bf16: channels on sublanes, space on lanes
        mask = mask_ref[...]         # (1, Pl) f32: 1.0 on interior voxels, 0.0 on pad ring/tail

        # conv1 (1x1x1, BN scale pre-folded into w1) + bias + ReLU; the mask
        # re-zeros the padding ring so conv2's zero-padding semantics hold
        # without an HBM round trip.
        h1 = jnp.dot(w1_ref[...], x, preferred_element_type=jnp.float32)
        h1 = jnp.maximum(h1 + b1_ref[...], 0.0) * mask

        # Stage into a lane-extended scratch so every 3x3x3 tap is a plain
        # static lane-window read.  The interior is fully overwritten every
        # step; only the two margin strips need (cheap) re-zeroing.
        h1x_ref[:, :margin] = jnp.zeros((c_mid, margin), h1x_ref.dtype)
        h1x_ref[:, margin + p_lanes:margin + p_lanes + margin] = jnp.zeros(
            (c_mid, margin), h1x_ref.dtype)
        h1x_ref[:, margin:margin + p_lanes] = h1.astype(h1x_ref.dtype)

        # conv2 (3x3x3, BN folded): 27 accumulating per-tap matmuls directly
        # on lane windows -- no materialized im2col stack, and the cross-lane
        # window shifts interleave with the MXU work.
        acc = jnp.zeros((c_mid, p_lanes), jnp.float32)
        for t, rel in enumerate(rels):
            lo = margin + rel
            win = h1x_ref[:, lo:lo + p_lanes]
            acc = acc + jnp.dot(w2_ref[t], win, preferred_element_type=jnp.float32)
        h2 = jnp.maximum(acc + b2_ref[...], 0.0).astype(x.dtype)

        # conv3 (1x1x1, BN folded) + bias + identity residual + ReLU (f32 epilogue).
        h3 = jnp.dot(w3_ref[...], h2, preferred_element_type=jnp.float32)
        h3 = h3 + b3_ref[...] + x.astype(jnp.float32)
        o_ref[0] = jnp.maximum(h3, 0.0).astype(o_ref.dtype)

    return kernel


def bottleneck_forward(x, params):
    """x: (N, Cin, D, H, W) NCDHW.  stride=1, identity shortcut only."""
    N, Cin, D, H, W = x.shape
    Cmid = params["w1"].shape[0]
    Cout = params["w3"].shape[0]
    if Cout != Cin:
        # TODO(synk): downsample (1x1x1 conv + BN) shortcut / stride != 1 not implemented.
        raise NotImplementedError("identity residual requires inplanes == planes * expansion")

    Dp, Hp, Wp = D + 2, H + 2, W + 2
    P = Dp * Hp * Wp
    Pl = _round_up(P, 128)                        # lane-dense flattened spatial axis
    margin = _round_up(Hp * Wp + Wp + 1, 128)     # >= largest |3x3x3 tap offset|

    # Channels-on-sublanes, padded-flattened-space-on-lanes layout, bf16 operands.
    xp = jnp.pad(x, ((0, 0), (0, 0), (1, 1), (1, 1), (1, 1)))
    xf = jnp.pad(xp.reshape(N, Cin, P), ((0, 0), (0, 0), (0, Pl - P))).astype(COMPUTE_DTYPE)
    # TODO(synk): when chaining Bottleneck blocks, keep this padded (N, C, Pl)
    # bf16 layout resident across blocks (the in-kernel mask-before-conv2 keeps
    # the halo semantics correct) and un-pad only once at the very end.

    mask3 = jnp.zeros((Dp, Hp, Wp), jnp.float32).at[1:1 + D, 1:1 + H, 1:1 + W].set(1.0)
    mask = jnp.pad(mask3.reshape(1, P), ((0, 0), (0, Pl - P)))

    # Flattened offset of each 3x3x3 tap in padded space (row-major D, H, W),
    # matching the (27, Cout, Cin) per-tap weight layout.
    rels = tuple((kd - 1) * Hp * Wp + (kh - 1) * Wp + (kw - 1)
                 for kd in range(3) for kh in range(3) for kw in range(3))

    kernel = _make_bottleneck_kernel(rels, Cmid, Pl, margin)

    vox = D * H * W
    flops = 2 * N * vox * (Cin * Cmid + 27 * Cmid * Cmid + Cmid * Cout)
    w_bytes = 2 * int(params["w1"].size + params["w2"].size + params["w3"].size)
    bytes_accessed = int(2 * N * Cin * Pl + 4 * N * Cout * Pl + 4 * Pl
                         + w_bytes + 4 * (2 * Cmid + Cout))

    inv = dict(pipeline_mode=pl.Buffered(1))      # single-buffer grid-invariant operands

    out = pl.pallas_call(
        kernel,
        out_shape=jax.ShapeDtypeStruct((N, Cout, Pl), jnp.float32),
        grid=(N,),
        in_specs=[
            pl.BlockSpec((1, Cin, Pl), lambda n: (n, 0, 0)),            # x (flat, padded, bf16)
            pl.BlockSpec((1, Pl), lambda n: (0, 0), **inv),             # interior mask (f32)
            pl.BlockSpec((Cmid, Cin), lambda n: (0, 0), **inv),         # w1 (BN-folded, bf16)
            pl.BlockSpec((27, Cmid, Cmid), lambda n: (0, 0, 0), **inv),  # w2 per-tap (bf16)
            pl.BlockSpec((Cout, Cmid), lambda n: (0, 0), **inv),        # w3 (BN-folded, bf16)
            pl.BlockSpec((Cmid, 1), lambda n: (0, 0), **inv),           # bn1 shift
            pl.BlockSpec((Cmid, 1), lambda n: (0, 0), **inv),           # bn2 shift
            pl.BlockSpec((Cout, 1), lambda n: (0, 0), **inv),           # bn3 shift
        ],
        out_specs=pl.BlockSpec((1, Cout, Pl), lambda n: (n, 0, 0)),
        scratch_shapes=[
            pltpu.VMEM((Cmid, Pl + 2 * margin), COMPUTE_DTYPE),         # lane-extended conv1 output
        ],
        compiler_params=pltpu.CompilerParams(dimension_semantics=("parallel",)),
        cost_estimate=pl.CostEstimate(flops=flops, transcendentals=0,
                                      bytes_accessed=bytes_accessed),
    )(xf, mask, params["w1"], params["w2"], params["w3"],
      params["b1"], params["b2"], params["b3"])

    out = out[:, :, :P].reshape(N, Cout, Dp, Hp, Wp)
    return out[:, :, 1:1 + D, 1:1 + H, 1:1 + W]


def init_params(key, inplanes, planes, eps=1e-5, expansion=4):
    cout = planes * expansion
    ks = jax.random.split(key, 6)
    # PyTorch-layout (O, I, kd, kh, kw) conv weights, kaiming-ish scale.
    w1 = jax.random.normal(ks[0], (planes, inplanes, 1, 1, 1), jnp.float32) * (2.0 / inplanes) ** 0.5
    w2 = jax.random.normal(ks[1], (planes, planes, 3, 3, 3), jnp.float32) * (2.0 / (planes * 27)) ** 0.5
    w3 = jax.random.normal(ks[2], (cout, planes, 1, 1, 1), jnp.float32) * (2.0 / planes) ** 0.5

    def bn(k, c):
        kg, kb, km, kv = jax.random.split(k, 4)
        gamma = 1.0 + 0.1 * jax.random.normal(kg, (c,), jnp.float32)
        beta = 0.1 * jax.random.normal(kb, (c,), jnp.float32)
        mean = 0.1 * jax.random.normal(km, (c,), jnp.float32)
        var = 1.0 + 0.1 * jnp.abs(jax.random.normal(kv, (c,), jnp.float32))
        scale = gamma / jnp.sqrt(var + eps)
        shift = beta - mean * scale
        return scale, shift

    s1, b1 = bn(ks[3], planes)
    s2, b2 = bn(ks[4], planes)
    s3, b3 = bn(ks[5], cout)

    # Inference BN folding: conv -> BN  ==  conv(w * scale) + shift.  Fold in
    # f32 on the host, then cast the matmul operands to bf16; the bias-add /
    # ReLU epilogues stay f32 inside the kernel.
    w1f = (w1.reshape(planes, inplanes) * s1[:, None]).astype(COMPUTE_DTYPE)
    # conv2 in per-tap layout (27, Cout, Cin); tap order is (kd, kh, kw)
    # row-major, matching `rels` in the wrapper.
    w2f = (jnp.transpose(w2, (2, 3, 4, 0, 1)).reshape(27, planes, planes)
           * s2[None, :, None]).astype(COMPUTE_DTYPE)
    w3f = (w3.reshape(cout, planes) * s3[:, None]).astype(COMPUTE_DTYPE)

    return {
        # Kernel-layout folded bf16 weights + f32 column-vector shifts.
        "w1": w1f, "w2": w2f, "w3": w3f,
        "b1": b1.reshape(planes, 1), "b2": b2.reshape(planes, 1), "b3": b3.reshape(cout, 1),
        # Reference-layout (OIDHW) views of the SAME folded bf16 weights plus
        # flat shift vectors, so the reference mirrors the kernel's precision.
        "w1_oidhw": w1f.reshape(planes, inplanes, 1, 1, 1),
        "w2_oidhw": jnp.transpose(w2f.reshape(3, 3, 3, planes, planes), (3, 4, 0, 1, 2)),
        "w3_oidhw": w3f.reshape(cout, planes, 1, 1, 1),
        "shift1": b1, "shift2": b2, "shift3": b3,
    }


def bottleneck_reference(x, params):
    """Pure-JAX reference (lax conv, NCDHW) mirroring the kernel's precision:
    BN scales folded into bf16 weights, bf16 matmul operands, f32 accumulation."""
    dn = ("NCDHW", "OIDHW", "NCDHW")

    def conv(t, w, pad):
        return lax.conv_general_dilated(t.astype(COMPUTE_DTYPE), w, (1, 1, 1),
                                        [(pad, pad)] * 3, dimension_numbers=dn,
                                        preferred_element_type=jnp.float32)

    def shift(t, b):
        return t + b[None, :, None, None, None]

    out = jnp.maximum(shift(conv(x, params["w1_oidhw"], 0), params["shift1"]), 0.0)
    out = jnp.maximum(shift(conv(out, params["w2_oidhw"], 1), params["shift2"]), 0.0)
    out = shift(conv(out, params["w3_oidhw"], 0), params["shift3"])
    out = out + x.astype(COMPUTE_DTYPE).astype(jnp.float32)
    return jnp.maximum(out, 0.0)


if __name__ == "__main__":
    key = jax.random.PRNGKey(0)
    kx, kp = jax.random.split(key)

    # Small Bottleneck consistent with the module: planes=8, expansion=4,
    # identity shortcut (inplanes == planes*4), stride=1.
    N, planes, D, H, W = 2, 8, 8, 8, 8
    inplanes = planes * 4
    x = jax.random.normal(kx, (N, inplanes, D, H, W), jnp.float32)
    params = init_params(kp, inplanes=inplanes, planes=planes)

    out = jax.block_until_ready(jax.jit(bottleneck_forward)(x, params))
    ref = jax.block_until_ready(bottleneck_reference(x, params))

    assert out.shape == (N, inplanes, D, H, W)
    err = float(jnp.max(jnp.abs(out - ref)))
    # Kernel and reference use bit-identical bf16 operands; the tolerance only
    # covers f32-accumulation-order differences and borderline bf16 rounding
    # of the inter-conv activations.
    assert jnp.allclose(out, ref, atol=1e-2, rtol=1e-2), (
        f"mismatch vs reference (max abs err {err})")
    print("KERNEL_OK")
</pallas_src>

<mosaic_0001>
module attributes {stable_mosaic.version = 11 : i64} {
  func.func @kernel(%arg0: i32, %arg1: memref<1x32x1024xbf16, #tpu.memory_space<vmem>>, %arg2: memref<1x1024xf32, #tpu.memory_space<vmem>>, %arg3: memref<8x32xbf16, #tpu.memory_space<vmem>>, %arg4: memref<27x8x8xbf16, #tpu.memory_space<vmem>>, %arg5: memref<32x8xbf16, #tpu.memory_space<vmem>>, %arg6: memref<8x1xf32, #tpu.memory_space<vmem>>, %arg7: memref<8x1xf32, #tpu.memory_space<vmem>>, %arg8: memref<32x1xf32, #tpu.memory_space<vmem>>, %arg9: memref<1x32x1024xf32, #tpu.memory_space<vmem>>, %arg10: memref<8x1280xbf16, #tpu.memory_space<vmem>>) attributes {dimension_semantics = [#tpu.dimension_semantics<parallel>], iteration_bounds = array<i64: 2>, scalar_prefetch = 0 : i64, scratch_operands = 1 : i64, tpu.core_type = #tpu.core_type<tc>, window_params = [{transform_indices = @transform_0, window_bounds = array<i64: 1, 32, 1024>}, {pipeline_mode = #tpu.pipeline_mode<synchronous>, transform_indices = @transform_1, window_bounds = array<i64: 1, 1024>}, {pipeline_mode = #tpu.pipeline_mode<synchronous>, transform_indices = @transform_2, window_bounds = array<i64: 8, 32>}, {pipeline_mode = #tpu.pipeline_mode<synchronous>, transform_indices = @transform_3, window_bounds = array<i64: 27, 8, 8>}, {pipeline_mode = #tpu.pipeline_mode<synchronous>, transform_indices = @transform_4, window_bounds = array<i64: 32, 8>}, {pipeline_mode = #tpu.pipeline_mode<synchronous>, transform_indices = @transform_5, window_bounds = array<i64: 8, 1>}, {pipeline_mode = #tpu.pipeline_mode<synchronous>, transform_indices = @transform_6, window_bounds = array<i64: 8, 1>}, {pipeline_mode = #tpu.pipeline_mode<synchronous>, transform_indices = @transform_7, window_bounds = array<i64: 32, 1>}, {transform_indices = @transform_8, window_bounds = array<i64: 1, 32, 1024>}]} {
    %c0 = arith.constant 0 : index
    %c0_0 = arith.constant 0 : index
    %c0_1 = arith.constant 0 : index
    %0 = vector.load %arg1[%c0, %c0_0, %c0_1] : memref<1x32x1024xbf16, #tpu.memory_space<vmem>>, vector<1x32x1024xbf16>
    %1 = vector.shape_cast %0 : vector<1x32x1024xbf16> to vector<32x1024xbf16>
    %c0_2 = arith.constant 0 : index
    %c0_3 = arith.constant 0 : index
    %2 = vector.load %arg2[%c0_2, %c0_3] : memref<1x1024xf32, #tpu.memory_space<vmem>>, vector<1x1024xf32>
    %c0_4 = arith.constant 0 : index
    %c0_5 = arith.constant 0 : index
    %3 = vector.load %arg3[%c0_4, %c0_5] : memref<8x32xbf16, #tpu.memory_space<vmem>>, vector<8x32xbf16>
    %cst = arith.constant dense<0.000000e+00> : vector<8x1024xf32>
    %4 = tpu.matmul %3, %1, %cst {dimension_numbers = #tpu.dot_dimension_numbers<[1], [0], [0], [1], [0, 0, 1, 1], [], []>} : vector<8x32xbf16>, vector<32x1024xbf16>, vector<8x1024xf32> -> vector<8x1024xf32>
    %c0_6 = arith.constant 0 : index
    %c0_7 = arith.constant 0 : index
    %5 = vector.load %arg6[%c0_6, %c0_7] : memref<8x1xf32, #tpu.memory_space<vmem>>, vector<8x1xf32>
    %6 = vector.broadcast %5 : vector<8x1xf32> to vector<8x1024xf32>
    %7 = arith.addf %4, %6 : vector<8x1024xf32>
    %cst_8 = arith.constant 0.000000e+00 : f32
    %8 = vector.broadcast %cst_8 : f32 to vector<8x1024xf32>
    %9 = arith.maximumf %7, %8 : vector<8x1024xf32>
    %10 = vector.broadcast %2 : vector<1x1024xf32> to vector<8x1024xf32>
    %11 = arith.mulf %9, %10 : vector<8x1024xf32>
    %cst_9 = arith.constant 0.000000e+00 : bf16
    %12 = vector.broadcast %cst_9 : bf16 to vector<8x128xbf16>
    %c0_10 = arith.constant 0 : index
    %c0_11 = arith.constant 0 : index
    %13 = vector.load %arg10[%c0_10, %c0_11] : memref<8x1280xbf16, #tpu.memory_space<vmem>>, vector<8x128xbf16>
    tpu.vector_store %arg10[%c0_10, %c0_11], %12 {strides = array<i32>} : memref<8x1280xbf16, #tpu.memory_space<vmem>>, vector<8x128xbf16>,
    %cst_12 = arith.constant 0.000000e+00 : bf16
    %14 = vector.broadcast %cst_12 : bf16 to vector<8x128xbf16>
    %c0_13 = arith.constant 0 : index
    %c1152 = arith.constant 1152 : index
    %15 = vector.load %arg10[%c0_13, %c1152] : memref<8x1280xbf16, #tpu.memory_space<vmem>>, vector<8x128xbf16>
    tpu.vector_store %arg10[%c0_13, %c1152], %14 {strides = array<i32>} : memref<8x1280xbf16, #tpu.memory_space<vmem>>, vector<8x128xbf16>,
    %16 = arith.truncf %11 : vector<8x1024xf32> to vector<8x1024xbf16>
    %c0_14 = arith.constant 0 : index
    %c128 = arith.constant 128 : index
    %17 = vector.load %arg10[%c0_14, %c128] : memref<8x1280xbf16, #tpu.memory_space<vmem>>, vector<8x1024xbf16>
    tpu.vector_store %arg10[%c0_14, %c128], %16 {strides = array<i32>} : memref<8x1280xbf16, #tpu.memory_space<vmem>>, vector<8x1024xbf16>,
    %cst_15 = arith.constant 0.000000e+00 : f32
    %18 = vector.broadcast %cst_15 : f32 to vector<8x1024xf32>
    %c0_16 = arith.constant 0 : index
    %c17 = arith.constant 17 : index
    %19 = vector.load %arg10[%c0_16, %c17] : memref<8x1280xbf16, #tpu.memory_space<vmem>>, vector<8x1024xbf16>
    %c0_17 = arith.constant 0 : index
    %c0_18 = arith.constant 0 : index
    %c0_19 = arith.constant 0 : index
    %20 = vector.load %arg4[%c0_17, %c0_18, %c0_19] : memref<27x8x8xbf16, #tpu.memory_space<vmem>>, vector<1x8x8xbf16>
    %21 = vector.shape_cast %20 : vector<1x8x8xbf16> to vector<8x8xbf16>
    %cst_20 = arith.constant dense<0.000000e+00> : vector<8x1024xf32>
    %22 = tpu.matmul %21, %19, %cst_20 {dimension_numbers = #tpu.dot_dimension_numbers<[1], [0], [0], [1], [0, 0, 1, 1], [], []>} : vector<8x8xbf16>, vector<8x1024xbf16>, vector<8x1024xf32> -> vector<8x1024xf32>
    %23 = arith.addf %18, %22 : vector<8x1024xf32>
    %c0_21 = arith.constant 0 : index
    %c18 = arith.constant 18 : index
    %24 = vector.load %arg10[%c0_21, %c18] : memref<8x1280xbf16, #tpu.memory_space<vmem>>, vector<8x1024xbf16>
    %c1 = arith.constant 1 : index
    %c0_22 = arith.constant 0 : index
    %c0_23 = arith.constant 0 : index
    %25 = vector.load %arg4[%c1, %c0_22, %c0_23] : memref<27x8x8xbf16, #tpu.memory_space<vmem>>, vector<1x8x8xbf16>
    %26 = vector.shape_cast %25 : vector<1x8x8xbf16> to vector<8x8xbf16>
    %cst_24 = arith.constant dense<0.000000e+00> : vector<8x1024xf32>
    %27 = tpu.matmul %26, %24, %cst_24 {dimension_numbers = #tpu.dot_dimension_numbers<[1], [0], [0], [1], [0, 0, 1, 1], [], []>} : vector<8x8xbf16>, vector<8x1024xbf16>, vector<8x1024xf32> -> vector<8x1024xf32>
    %28 = arith.addf %23, %27 : vector<8x1024xf32>
    %c0_25 = arith.constant 0 : index
    %c19 = arith.constant 19 : index
    %29 = vector.load %arg10[%c0_25, %c19] : memref<8x1280xbf16, #tpu.memory_space<vmem>>, vector<8x1024xbf16>
    %c2 = arith.constant 2 : index
    %c0_26 = arith.constant 0 : index
    %c0_27 = arith.constant 0 : index
    %30 = vector.load %arg4[%c2, %c0_26, %c0_27] : memref<27x8x8xbf16, #tpu.memory_space<vmem>>, vector<1x8x8xbf16>
    %31 = vector.shape_cast %30 : vector<1x8x8xbf16> to vector<8x8xbf16>
    %cst_28 = arith.constant dense<0.000000e+00> : vector<8x1024xf32>
    %32 = tpu.matmul %31, %29, %cst_28 {dimension_numbers = #tpu.dot_dimension_numbers<[1], [0], [0], [1], [0, 0, 1, 1], [], []>} : vector<8x8xbf16>, vector<8x1024xbf16>, vector<8x1024xf32> -> vector<8x1024xf32>
    %33 = arith.addf %28, %32 : vector<8x1024xf32>
    %c0_29 = arith.constant 0 : index
    %c27 = arith.constant 27 : index
    %34 = vector.load %arg10[%c0_29, %c27] : memref<8x1280xbf16, #tpu.memory_space<vmem>>, vector<8x1024xbf16>
    %c3 = arith.constant 3 : index
    %c0_30 = arith.constant 0 : index
    %c0_31 = arith.constant 0 : index
    %35 = vector.load %arg4[%c3, %c0_30, %c0_31] : memref<27x8x8xbf16, #tpu.memory_space<vmem>>, vector<1x8x8xbf16>
    %36 = vector.shape_cast %35 : vector<1x8x8xbf16> to vector<8x8xbf16>
    %cst_32 = arith.constant dense<0.000000e+00> : vector<8x1024xf32>
    %37 = tpu.matmul %36, %34, %cst_32 {dimension_numbers = #tpu.dot_dimension_numbers<[1], [0], [0], [1], [0, 0, 1, 1], [], []>} : vector<8x8xbf16>, vector<8x1024xbf16>, vector<8x1024xf32> -> vector<8x1024xf32>
    %38 = arith.addf %33, %37 : vector<8x1024xf32>
    %c0_33 = arith.constant 0 : index
    %c28 = arith.constant 28 : index
    %39 = vector.load %arg10[%c0_33, %c28] : memref<8x1280xbf16, #tpu.memory_space<vmem>>, vector<8x1024xbf16>
    %c4 = arith.constant 4 : index
    %c0_34 = arith.constant 0 : index
    %c0_35 = arith.constant 0 : index
    %40 = vector.load %arg4[%c4, %c0_34, %c0_35] : memref<27x8x8xbf16, #tpu.memory_space<vmem>>, vector<1x8x8xbf16>
    %41 = vector.shape_cast %40 : vector<1x8x8xbf16> to vector<8x8xbf16>
    %cst_36 = arith.constant dense<0.000000e+00> : vector<8x1024xf32>
    %42 = tpu.matmul %41, %39, %cst_36 {dimension_numbers = #tpu.dot_dimension_numbers<[1], [0], [0], [1], [0, 0, 1, 1], [], []>} : vector<8x8xbf16>, vector<8x1024xbf16>, vector<8x1024xf32> -> vector<8x1024xf32>
    %43 = arith.addf %38, %42 : vector<8x1024xf32>
    %c0_37 = arith.constant 0 : index
    %c29 = arith.constant 29 : index
    %44 = vector.load %arg10[%c0_37, %c29] : memref<8x1280xbf16, #tpu.memory_space<vmem>>, vector<8x1024xbf16>
    %c5 = arith.constant 5 : index
    %c0_38 = arith.constant 0 : index
    %c0_39 = arith.constant 0 : index
    %45 = vector.load %arg4[%c5, %c0_38, %c0_39] : memref<27x8x8xbf16, #tpu.memory_space<vmem>>, vector<1x8x8xbf16>
    %46 = vector.shape_cast %45 : vector<1x8x8xbf16> to vector<8x8xbf16>
    %cst_40 = arith.constant dense<0.000000e+00> : vector<8x1024xf32>
    %47 = tpu.matmul %46, %44, %cst_40 {dimension_numbers = #tpu.dot_dimension_numbers<[1], [0], [0], [1], [0, 0, 1, 1], [], []>} : vector<8x8xbf16>, vector<8x1024xbf16>, vector<8x1024xf32> -> vector<8x1024xf32>
    %48 = arith.addf %43, %47 : vector<8x1024xf32>
    %c0_41 = arith.constant 0 : index
    %c37 = arith.constant 37 : index
    %49 = vector.load %arg10[%c0_41, %c37] : memref<8x1280xbf16, #tpu.memory_space<vmem>>, vector<8x1024xbf16>
    %c6 = arith.constant 6 : index
    %c0_42 = arith.constant 0 : index
    %c0_43 = arith.constant 0 : index
    %50 = vector.load %arg4[%c6, %c0_42, %c0_43] : memref<27x8x8xbf16, #tpu.memory_space<vmem>>, vector<1x8x8xbf16>
    %51 = vector.shape_cast %50 : vector<1x8x8xbf16> to vector<8x8xbf16>
    %cst_44 = arith.constant dense<0.000000e+00> : vector<8x1024xf32>
    %52 = tpu.matmul %51, %49, %cst_44 {dimension_numbers = #tpu.dot_dimension_numbers<[1], [0], [0], [1], [0, 0, 1, 1], [], []>} : vector<8x8xbf16>, vector<8x1024xbf16>, vector<8x1024xf32> -> vector<8x1024xf32>
    %53 = arith.addf %48, %52 : vector<8x1024xf32>
    %c0_45 = arith.constant 0 : index
    %c38 = arith.constant 38 : index
    %54 = vector.load %arg10[%c0_45, %c38] : memref<8x1280xbf16, #tpu.memory_space<vmem>>, vector<8x1024xbf16>
    %c7 = arith.constant 7 : index
    %c0_46 = arith.constant 0 : index
    %c0_47 = arith.constant 0 : index
    %55 = vector.load %arg4[%c7, %c0_46, %c0_47] : memref<27x8x8xbf16, #tpu.memory_space<vmem>>, vector<1x8x8xbf16>
    %56 = vector.shape_cast %55 : vector<1x8x8xbf16> to vector<8x8xbf16>
    %cst_48 = arith.constant dense<0.000000e+00> : vector<8x1024xf32>
    %57 = tpu.matmul %56, %54, %cst_48 {dimension_numbers = #tpu.dot_dimension_numbers<[1], [0], [0], [1], [0, 0, 1, 1], [], []>} : vector<8x8xbf16>, vector<8x1024xbf16>, vector<8x1024xf32> -> vector<8x1024xf32>
    %58 = arith.addf %53, %57 : vector<8x1024xf32>
    %c0_49 = arith.constant 0 : index
    %c39 = arith.constant 39 : index
    %59 = vector.load %arg10[%c0_49, %c39] : memref<8x1280xbf16, #tpu.memory_space<vmem>>, vector<8x1024xbf16>
    %c8 = arith.constant 8 : index
    %c0_50 = arith.constant 0 : index
    %c0_51 = arith.constant 0 : index
    %60 = vector.load %arg4[%c8, %c0_50, %c0_51] : memref<27x8x8xbf16, #tpu.memory_space<vmem>>, vector<1x8x8xbf16>
    %61 = vector.shape_cast %60 : vector<1x8x8xbf16> to vector<8x8xbf16>
    %cst_52 = arith.constant dense<0.000000e+00> : vector<8x1024xf32>
    %62 = tpu.matmul %61, %59, %cst_52 {dimension_numbers = #tpu.dot_dimension_numbers<[1], [0], [0], [1], [0, 0, 1, 1], [], []>} : vector<8x8xbf16>, vector<8x1024xbf16>, vector<8x1024xf32> -> vector<8x1024xf32>
    %63 = arith.addf %58, %62 : vector<8x1024xf32>
    %c0_53 = arith.constant 0 : index
    %c117 = arith.constant 117 : index
    %64 = vector.load %arg10[%c0_53, %c117] : memref<8x1280xbf16, #tpu.memory_space<vmem>>, vector<8x1024xbf16>
    %c9 = arith.constant 9 : index
    %c0_54 = arith.constant 0 : index
    %c0_55 = arith.constant 0 : index
    %65 = vector.load %arg4[%c9, %c0_54, %c0_55] : memref<27x8x8xbf16, #tpu.memory_space<vmem>>, vector<1x8x8xbf16>
    %66 = vector.shape_cast %65 : vector<1x8x8xbf16> to vector<8x8xbf16>
    %cst_56 = arith.constant dense<0.000000e+00> : vector<8x1024xf32>
    %67 = tpu.matmul %66, %64, %cst_56 {dimension_numbers = #tpu.dot_dimension_numbers<[1], [0], [0], [1], [0, 0, 1, 1], [], []>} : vector<8x8xbf16>, vector<8x1024xbf16>, vector<8x1024xf32> -> vector<8x1024xf32>
    %68 = arith.addf %63, %67 : vector<8x1024xf32>
    %c0_57 = arith.constant 0 : index
    %c118 = arith.constant 118 : index
    %69 = vector.load %arg10[%c0_57, %c118] : memref<8x1280xbf16, #tpu.memory_space<vmem>>, vector<8x1024xbf16>
    %c10 = arith.constant 10 : index
    %c0_58 = arith.constant 0 : index
    %c0_59 = arith.constant 0 : index
    %70 = vector.load %arg4[%c10, %c0_58, %c0_59] : memref<27x8x8xbf16, #tpu.memory_space<vmem>>, vector<1x8x8xbf16>
    %71 = vector.shape_cast %70 : vector<1x8x8xbf16> to vector<8x8xbf16>
    %cst_60 = arith.constant dense<0.000000e+00> : vector<8x1024xf32>
    %72 = tpu.matmul %71, %69, %cst_60 {dimension_numbers = #tpu.dot_dimension_numbers<[1], [0], [0], [1], [0, 0, 1, 1], [], []>} : vector<8x8xbf16>, vector<8x1024xbf16>, vector<8x1024xf32> -> vector<8x1024xf32>
    %73 = arith.addf %68, %72 : vector<8x1024xf32>
    %c0_61 = arith.constant 0 : index
    %c119 = arith.constant 119 : index
    %74 = vector.load %arg10[%c0_61, %c119] : memref<8x1280xbf16, #tpu.memory_space<vmem>>, vector<8x1024xbf16>
    %c11 = arith.constant 11 : index
    %c0_62 = arith.constant 0 : index
    %c0_63 = arith.constant 0 : index
    %75 = vector.load %arg4[%c11, %c0_62, %c0_63] : memref<27x8x8xbf16, #tpu.memory_space<vmem>>, vector<1x8x8xbf16>
    %76 = vector.shape_cast %75 : vector<1x8x8xbf16> to vector<8x8xbf16>
    %cst_64 = arith.constant dense<0.000000e+00> : vector<8x1024xf32>
    %77 = tpu.matmul %76, %74, %cst_64 {dimension_numbers = #tpu.dot_dimension_numbers<[1], [0], [0], [1], [0, 0, 1, 1], [], []>} : vector<8x8xbf16>, vector<8x1024xbf16>, vector<8x1024xf32> -> vector<8x1024xf32>
    %78 = arith.addf %73, %77 : vector<8x1024xf32>
    %c0_65 = arith.constant 0 : index
    %c127 = arith.constant 127 : index
    %79 = vector.load %arg10[%c0_65, %c127] : memref<8x1280xbf16, #tpu.memory_space<vmem>>, vector<8x1024xbf16>
    %c12 = arith.constant 12 : index
    %c0_66 = arith.constant 0 : index
    %c0_67 = arith.constant 0 : index
    %80 = vector.load %arg4[%c12, %c0_66, %c0_67] : memref<27x8x8xbf16, #tpu.memory_space<vmem>>, vector<1x8x8xbf16>
    %81 = vector.shape_cast %80 : vector<1x8x8xbf16> to vector<8x8xbf16>
    %cst_68 = arith.constant dense<0.000000e+00> : vector<8x1024xf32>
    %82 = tpu.matmul %81, %79, %cst_68 {dimension_numbers = #tpu.dot_dimension_numbers<[1], [0], [0], [1], [0, 0, 1, 1], [], []>} : vector<8x8xbf16>, vector<8x1024xbf16>, vector<8x1024xf32> -> vector<8x1024xf32>
    %83 = arith.addf %78, %82 : vector<8x1024xf32>
    %c0_69 = arith.constant 0 : index
    %c128_70 = arith.constant 128 : index
    %84 = vector.load %arg10[%c0_69, %c128_70] : memref<8x1280xbf16, #tpu.memory_space<vmem>>, vector<8x1024xbf16>
    %c13 = arith.constant 13 : index
    %c0_71 = arith.constant 0 : index
    %c0_72 = arith.constant 0 : index
    %85 = vector.load %arg4[%c13, %c0_71, %c0_72] : memref<27x8x8xbf16, #tpu.memory_space<vmem>>, vector<1x8x8xbf16>
    %86 = vector.shape_cast %85 : vector<1x8x8xbf16> to vector<8x8xbf16>
    %cst_73 = arith.constant dense<0.000000e+00> : vector<8x1024xf32>
    %87 = tpu.matmul %86, %84, %cst_73 {dimension_numbers = #tpu.dot_dimension_numbers<[1], [0], [0], [1], [0, 0, 1, 1], [], []>} : vector<8x8xbf16>, vector<8x1024xbf16>, vector<8x1024xf32> -> vector<8x1024xf32>
    %88 = arith.addf %83, %87 : vector<8x1024xf32>
    %c0_74 = arith.constant 0 : index
    %c129 = arith.constant 129 : index
    %89 = vector.load %arg10[%c0_74, %c129] : memref<8x1280xbf16, #tpu.memory_space<vmem>>, vector<8x1024xbf16>
    %c14 = arith.constant 14 : index
    %c0_75 = arith.constant 0 : index
    %c0_76 = arith.constant 0 : index
    %90 = vector.load %arg4[%c14, %c0_75, %c0_76] : memref<27x8x8xbf16, #tpu.memory_space<vmem>>, vector<1x8x8xbf16>
    %91 = vector.shape_cast %90 : vector<1x8x8xbf16> to vector<8x8xbf16>
    %cst_77 = arith.constant dense<0.000000e+00> : vector<8x1024xf32>
    %92 = tpu.matmul %91, %89, %cst_77 {dimension_numbers = #tpu.dot_dimension_numbers<[1], [0], [0], [1], [0, 0, 1, 1], [], []>} : vector<8x8xbf16>, vector<8x1024xbf16>, vector<8x1024xf32> -> vector<8x1024xf32>
    %93 = arith.addf %88, %92 : vector<8x1024xf32>
    %c0_78 = arith.constant 0 : index
    %c137 = arith.constant 137 : index
    %94 = vector.load %arg10[%c0_78, %c137] : memref<8x1280xbf16, #tpu.memory_space<vmem>>, vector<8x1024xbf16>
    %c15 = arith.constant 15 : index
    %c0_79 = arith.constant 0 : index
    %c0_80 = arith.constant 0 : index
    %95 = vector.load %arg4[%c15, %c0_79, %c0_80] : memref<27x8x8xbf16, #tpu.memory_space<vmem>>, vector<1x8x8xbf16>
    %96 = vector.shape_cast %95 : vector<1x8x8xbf16> to vector<8x8xbf16>
    %cst_81 = arith.constant dense<0.000000e+00> : vector<8x1024xf32>
    %97 = tpu.matmul %96, %94, %cst_81 {dimension_numbers = #tpu.dot_dimension_numbers<[1], [0], [0], [1], [0, 0, 1, 1], [], []>} : vector<8x8xbf16>, vector<8x1024xbf16>, vector<8x1024xf32> -> vector<8x1024xf32>
    %98 = arith.addf %93, %97 : vector<8x1024xf32>
    %c0_82 = arith.constant 0 : index
    %c138 = arith.constant 138 : index
    %99 = vector.load %arg10[%c0_82, %c138] : memref<8x1280xbf16, #tpu.memory_space<vmem>>, vector<8x1024xbf16>
    %c16 = arith.constant 16 : index
    %c0_83 = arith.constant 0 : index
    %c0_84 = arith.constant 0 : index
    %100 = vector.load %arg4[%c16, %c0_83, %c0_84] : memref<27x8x8xbf16, #tpu.memory_space<vmem>>, vector<1x8x8xbf16>
    %101 = vector.shape_cast %100 : vector<1x8x8xbf16> to vector<8x8xbf16>
    %cst_85 = arith.constant dense<0.000000e+00> : vector<8x1024xf32>
    %102 = tpu.matmul %101, %99, %cst_85 {dimension_numbers = #tpu.dot_dimension_numbers<[1], [0], [0], [1], [0, 0, 1, 1], [], []>} : vector<8x8xbf16>, vector<8x1024xbf16>, vector<8x1024xf32> -> vector<8x1024xf32>
    %103 = arith.addf %98, %102 : vector<8x1024xf32>
    %c0_86 = arith.constant 0 : index
    %c139 = arith.constant 139 : index
    %104 = vector.load %arg10[%c0_86, %c139] : memref<8x1280xbf16, #tpu.memory_space<vmem>>, vector<8x1024xbf16>
    %c17_87 = arith.constant 17 : index
    %c0_88 = arith.constant 0 : index
    %c0_89 = arith.constant 0 : index
    %105 = vector.load %arg4[%c17_87, %c0_88, %c0_89] : memref<27x8x8xbf16, #tpu.memory_space<vmem>>, vector<1x8x8xbf16>
    %106 = vector.shape_cast %105 : vector<1x8x8xbf16> to vector<8x8xbf16>
    %cst_90 = arith.constant dense<0.000000e+00> : vector<8x1024xf32>
    %107 = tpu.matmul %106, %104, %cst_90 {dimension_numbers = #tpu.dot_dimension_numbers<[1], [0], [0], [1], [0, 0, 1, 1], [], []>} : vector<8x8xbf16>, vector<8x1024xbf16>, vector<8x1024xf32> -> vector<8x1024xf32>
    %108 = arith.addf %103, %107 : vector<8x1024xf32>
    %c0_91 = arith.constant 0 : index
    %c217 = arith.constant 217 : index
    %109 = vector.load %arg10[%c0_91, %c217] : memref<8x1280xbf16, #tpu.memory_space<vmem>>, vector<8x1024xbf16>
    %c18_92 = arith.constant 18 : index
    %c0_93 = arith.constant 0 : index
    %c0_94 = arith.constant 0 : index
    %110 = vector.load %arg4[%c18_92, %c0_93, %c0_94] : memref<27x8x8xbf16, #tpu.memory_space<vmem>>, vector<1x8x8xbf16>
    %111 = vector.shape_cast %110 : vector<1x8x8xbf16> to vector<8x8xbf16>
    %cst_95 = arith.constant dense<0.000000e+00> : vector<8x1024xf32>
    %112 = tpu.matmul %111, %109, %cst_95 {dimension_numbers = #tpu.dot_dimension_numbers<[1], [0], [0], [1], [0, 0, 1, 1], [], []>} : vector<8x8xbf16>, vector<8x1024xbf16>, vector<8x1024xf32> -> vector<8x1024xf32>
    %113 = arith.addf %108, %112 : vector<8x1024xf32>
    %c0_96 = arith.constant 0 : index
    %c218 = arith.constant 218 : index
    %114 = vector.load %arg10[%c0_96, %c218] : memref<8x1280xbf16, #tpu.memory_space<vmem>>, vector<8x1024xbf16>
    %c19_97 = arith.constant 19 : index
    %c0_98 = arith.constant 0 : index
    %c0_99 = arith.constant 0 : index
    %115 = vector.load %arg4[%c19_97, %c0_98, %c0_99] : memref<27x8x8xbf16, #tpu.memory_space<vmem>>, vector<1x8x8xbf16>
    %116 = vector.shape_cast %115 : vector<1x8x8xbf16> to vector<8x8xbf16>
    %cst_100 = arith.constant dense<0.000000e+00> : vector<8x1024xf32>
    %117 = tpu.matmul %116, %114, %cst_100 {dimension_numbers = #tpu.dot_dimension_numbers<[1], [0], [0], [1], [0, 0, 1, 1], [], []>} : vector<8x8xbf16>, vector<8x1024xbf16>, vector<8x1024xf32> -> vector<8x1024xf32>
    %118 = arith.addf %113, %117 : vector<8x1024xf32>
    %c0_101 = arith.constant 0 : index
    %c219 = arith.constant 219 : index
    %119 = vector.load %arg10[%c0_101, %c219] : memref<8x1280xbf16, #tpu.memory_space<vmem>>, vector<8x1024xbf16>
    %c20 = arith.constant 20 : index
    %c0_102 = arith.constant 0 : index
    %c0_103 = arith.constant 0 : index
    %120 = vector.load %arg4[%c20, %c0_102, %c0_103] : memref<27x8x8xbf16, #tpu.memory_space<vmem>>, vector<1x8x8xbf16>
    %121 = vector.shape_cast %120 : vector<1x8x8xbf16> to vector<8x8xbf16>
    %cst_104 = arith.constant dense<0.000000e+00> : vector<8x1024xf32>
    %122 = tpu.matmul %121, %119, %cst_104 {dimension_numbers = #tpu.dot_dimension_numbers<[1], [0], [0], [1], [0, 0, 1, 1], [], []>} : vector<8x8xbf16>, vector<8x1024xbf16>, vector<8x1024xf32> -> vector<8x1024xf32>
    %123 = arith.addf %118, %122 : vector<8x1024xf32>
    %c0_105 = arith.constant 0 : index
    %c227 = arith.constant 227 : index
    %124 = vector.load %arg10[%c0_105, %c227] : memref<8x1280xbf16, #tpu.memory_space<vmem>>, vector<8x1024xbf16>
    %c21 = arith.constant 21 : index
    %c0_106 = arith.constant 0 : index
    %c0_107 = arith.constant 0 : index
    %125 = vector.load %arg4[%c21, %c0_106, %c0_107] : memref<27x8x8xbf16, #tpu.memory_space<vmem>>, vector<1x8x8xbf16>
    %126 = vector.shape_cast %125 : vector<1x8x8xbf16> to vector<8x8xbf16>
    %cst_108 = arith.constant dense<0.000000e+00> : vector<8x1024xf32>
    %127 = tpu.matmul %126, %124, %cst_108 {dimension_numbers = #tpu.dot_dimension_numbers<[1], [0], [0], [1], [0, 0, 1, 1], [], []>} : vector<8x8xbf16>, vector<8x1024xbf16>, vector<8x1024xf32> -> vector<8x1024xf32>
    %128 = arith.addf %123, %127 : vector<8x1024xf32>
    %c0_109 = arith.constant 0 : index
    %c228 = arith.constant 228 : index
    %129 = vector.load %arg10[%c0_109, %c228] : memref<8x1280xbf16, #tpu.memory_space<vmem>>, vector<8x1024xbf16>
    %c22 = arith.constant 22 : index
    %c0_110 = arith.constant 0 : index
    %c0_111 = arith.constant 0 : index
    %130 = vector.load %arg4[%c22, %c0_110, %c0_111] : memref<27x8x8xbf16, #tpu.memory_space<vmem>>, vector<1x8x8xbf16>
    %131 = vector.shape_cast %130 : vector<1x8x8xbf16> to vector<8x8xbf16>
    %cst_112 = arith.constant dense<0.000000e+00> : vector<8x1024xf32>
    %132 = tpu.matmul %131, %129, %cst_112 {dimension_numbers = #tpu.dot_dimension_numbers<[1], [0], [0], [1], [0, 0, 1, 1], [], []>} : vector<8x8xbf16>, vector<8x1024xbf16>, vector<8x1024xf32> -> vector<8x1024xf32>
    %133 = arith.addf %128, %132 : vector<8x1024xf32>
    %c0_113 = arith.constant 0 : index
    %c229 = arith.constant 229 : index
    %134 = vector.load %arg10[%c0_113, %c229] : memref<8x1280xbf16, #tpu.memory_space<vmem>>, vector<8x1024xbf16>
    %c23 = arith.constant 23 : index
    %c0_114 = arith.constant 0 : index
    %c0_115 = arith.constant 0 : index
    %135 = vector.load %arg4[%c23, %c0_114, %c0_115] : memref<27x8x8xbf16, #tpu.memory_space<vmem>>, vector<1x8x8xbf16>
    %136 = vector.shape_cast %135 : vector<1x8x8xbf16> to vector<8x8xbf16>
    %cst_116 = arith.constant dense<0.000000e+00> : vector<8x1024xf32>
    %137 = tpu.matmul %136, %134, %cst_116 {dimension_numbers = #tpu.dot_dimension_numbers<[1], [0], [0], [1], [0, 0, 1, 1], [], []>} : vector<8x8xbf16>, vector<8x1024xbf16>, vector<8x1024xf32> -> vector<8x1024xf32>
    %138 = arith.addf %133, %137 : vector<8x1024xf32>
    %c0_117 = arith.constant 0 : index
    %c237 = arith.constant 237 : index
    %139 = vector.load %arg10[%c0_117, %c237] : memref<8x1280xbf16, #tpu.memory_space<vmem>>, vector<8x1024xbf16>
    %c24 = arith.constant 24 : index
    %c0_118 = arith.constant 0 : index
    %c0_119 = arith.constant 0 : index
    %140 = vector.load %arg4[%c24, %c0_118, %c0_119] : memref<27x8x8xbf16, #tpu.memory_space<vmem>>, vector<1x8x8xbf16>
    %141 = vector.shape_cast %140 : vector<1x8x8xbf16> to vector<8x8xbf16>
    %cst_120 = arith.constant dense<0.000000e+00> : vector<8x1024xf32>
    %142 = tpu.matmul %141, %139, %cst_120 {dimension_numbers = #tpu.dot_dimension_numbers<[1], [0], [0], [1], [0, 0, 1, 1], [], []>} : vector<8x8xbf16>, vector<8x1024xbf16>, vector<8x1024xf32> -> vector<8x1024xf32>
    %143 = arith.addf %138, %142 : vector<8x1024xf32>
    %c0_121 = arith.constant 0 : index
    %c238 = arith.constant 238 : index
    %144 = vector.load %arg10[%c0_121, %c238] : memref<8x1280xbf16, #tpu.memory_space<vmem>>, vector<8x1024xbf16>
    %c25 = arith.constant 25 : index
    %c0_122 = arith.constant 0 : index
    %c0_123 = arith.constant 0 : index
    %145 = vector.load %arg4[%c25, %c0_122, %c0_123] : memref<27x8x8xbf16, #tpu.memory_space<vmem>>, vector<1x8x8xbf16>
    %146 = vector.shape_cast %145 : vector<1x8x8xbf16> to vector<8x8xbf16>
    %cst_124 = arith.constant dense<0.000000e+00> : vector<8x1024xf32>
    %147 = tpu.matmul %146, %144, %cst_124 {dimension_numbers = #tpu.dot_dimension_numbers<[1], [0], [0], [1], [0, 0, 1, 1], [], []>} : vector<8x8xbf16>, vector<8x1024xbf16>, vector<8x1024xf32> -> vector<8x1024xf32>
    %148 = arith.addf %143, %147 : vector<8x1024xf32>
    %c0_125 = arith.constant 0 : index
    %c239 = arith.constant 239 : index
    %149 = vector.load %arg10[%c0_125, %c239] : memref<8x1280xbf16, #tpu.memory_space<vmem>>, vector<8x1024xbf16>
    %c26 = arith.constant 26 : index
    %c0_126 = arith.constant 0 : index
    %c0_127 = arith.constant 0 : index
    %150 = vector.load %arg4[%c26, %c0_126, %c0_127] : memref<27x8x8xbf16, #tpu.memory_space<vmem>>, vector<1x8x8xbf16>
    %151 = vector.shape_cast %150 : vector<1x8x8xbf16> to vector<8x8xbf16>
    %cst_128 = arith.constant dense<0.000000e+00> : vector<8x1024xf32>
    %152 = tpu.matmul %151, %149, %cst_128 {dimension_numbers = #tpu.dot_dimension_numbers<[1], [0], [0], [1], [0, 0, 1, 1], [], []>} : vector<8x8xbf16>, vector<8x1024xbf16>, vector<8x1024xf32> -> vector<8x1024xf32>
    %153 = arith.addf %148, %152 : vector<8x1024xf32>
    %c0_129 = arith.constant 0 : index
    %c0_130 = arith.constant 0 : index
    %154 = vector.load %arg7[%c0_129, %c0_130] : memref<8x1xf32, #tpu.memory_space<vmem>>, vector<8x1xf32>
    %155 = vector.broadcast %154 : vector<8x1xf32> to vector<8x1024xf32>
    %156 = arith.addf %153, %155 : vector<8x1024xf32>
    %cst_131 = arith.constant 0.000000e+00 : f32
    %157 = vector.broadcast %cst_131 : f32 to vector<8x1024xf32>
    %158 = arith.maximumf %156, %157 : vector<8x1024xf32>
    %159 = arith.truncf %158 : vector<8x1024xf32> to vector<8x1024xbf16>
    %c0_132 = arith.constant 0 : index
    %c0_133 = arith.constant 0 : index
    %160 = vector.load %arg5[%c0_132, %c0_133] : memref<32x8xbf16, #tpu.memory_space<vmem>>, vector<32x8xbf16>
    %cst_134 = arith.constant dense<0.000000e+00> : vector<32x1024xf32>
    %161 = tpu.matmul %160, %159, %cst_134 {dimension_numbers = #tpu.dot_dimension_numbers<[1], [0], [0], [1], [0, 0, 1, 1], [], []>} : vector<32x8xbf16>, vector<8x1024xbf16>, vector<32x1024xf32> -> vector<32x1024xf32>
    %c0_135 = arith.constant 0 : index
    %c0_136 = arith.constant 0 : index
    %162 = vector.load %arg8[%c0_135, %c0_136] : memref<32x1xf32, #tpu.memory_space<vmem>>, vector<32x1xf32>
    %163 = vector.broadcast %162 : vector<32x1xf32> to vector<32x1024xf32>
    %164 = arith.addf %161, %163 : vector<32x1024xf32>
    %165 = arith.extf %1 : vector<32x1024xbf16> to vector<32x1024xf32>
    %166 = arith.addf %164, %165 : vector<32x1024xf32>
    %cst_137 = arith.constant 0.000000e+00 : f32
    %167 = vector.broadcast %cst_137 : f32 to vector<32x1024xf32>
    %168 = arith.maximumf %166, %167 : vector<32x1024xf32>
    %c0_138 = arith.constant 0 : index
    %c0_139 = arith.constant 0 : index
    %c0_140 = arith.constant 0 : index
    %169 = vector.load %arg9[%c0_138, %c0_139, %c0_140] : memref<1x32x1024xf32, #tpu.memory_space<vmem>>, vector<1x32x1024xf32>
    %170 = vector.shape_cast %169 : vector<1x32x1024xf32> to vector<32x1024xf32>
    %171 = vector.shape_cast %168 : vector<32x1024xf32> to vector<1x32x1024xf32>
    tpu.vector_store %arg9[%c0_138, %c0_139, %c0_140], %171 {strides = array<i32>} : memref<1x32x1024xf32, #tpu.memory_space<vmem>>, vector<1x32x1024xf32>,
    return
  }
  func.func @transform_0(%arg0: i32) -> (i32, i32, i32) {
    %c0_i32 = arith.constant 0 : i32
    %c0_i32_0 = arith.constant 0 : i32
    %c0_i32_1 = arith.constant 0 : i32
    return %arg0, %c0_i32, %c0_i32_0 : i32, i32, i32
  }
  func.func @transform_1(%arg0: i32) -> (i32, i32) {
    %c0_i32 = arith.constant 0 : i32
    %c0_i32_0 = arith.constant 0 : i32
    %c0_i32_1 = arith.constant 0 : i32
    return %c0_i32, %c0_i32_0 : i32, i32
  }
  func.func @transform_2(%arg0: i32) -> (i32, i32) {
    %c0_i32 = arith.constant 0 : i32
    %c0_i32_0 = arith.constant 0 : i32
    %c0_i32_1 = arith.constant 0 : i32
    return %c0_i32, %c0_i32_0 : i32, i32
  }
  func.func @transform_3(%arg0: i32) -> (i32, i32, i32) {
    %c0_i32 = arith.constant 0 : i32
    %c0_i32_0 = arith.constant 0 : i32
    %c0_i32_1 = arith.constant 0 : i32
    %c0_i32_2 = arith.constant 0 : i32
    return %c0_i32, %c0_i32_0, %c0_i32_1 : i32, i32, i32
  }
  func.func @transform_4(%arg0: i32) -> (i32, i32) {
    %c0_i32 = arith.constant 0 : i32
    %c0_i32_0 = arith.constant 0 : i32
    %c0_i32_1 = arith.constant 0 : i32
    return %c0_i32, %c0_i32_0 : i32, i32
  }
  func.func @transform_5(%arg0: i32) -> (i32, i32) {
    %c0_i32 = arith.constant 0 : i32
    %c0_i32_0 = arith.constant 0 : i32
    %c0_i32_1 = arith.constant 0 : i32
    return %c0_i32, %c0_i32_0 : i32, i32
  }
  func.func @transform_6(%arg0: i32) -> (i32, i32) {
    %c0_i32 = arith.constant 0 : i32
    %c0_i32_0 = arith.constant 0 : i32
    %c0_i32_1 = arith.constant 0 : i32
    return %c0_i32, %c0_i32_0 : i32, i32
  }
  func.func @transform_7(%arg0: i32) -> (i32, i32) {
    %c0_i32 = arith.constant 0 : i32
    %c0_i32_0 = arith.constant 0 : i32
    %c0_i32_1 = arith.constant 0 : i32
    return %c0_i32, %c0_i32_0 : i32, i32
  }
  func.func @transform_8(%arg0: i32) -> (i32, i32, i32) {
    %c0_i32 = arith.constant 0 : i32
    %c0_i32_0 = arith.constant 0 : i32
    %c0_i32_1 = arith.constant 0 : i32
    return %arg0, %c0_i32, %c0_i32_0 : i32, i32, i32
  }
}

</mosaic_0001>

<llo_original>
// kernel: bottleneck_forward.1
$region0: #{bottleneck_forward.1}
  #allocation0 [shape = 'u32[]', space=smem, size = 0x4, offset = 0x4, fixed_abs, tag = 'smem constant byte address 0x4 - core index']
  #allocation1 [shape = 'u32[144,128]{1,0:T(1,128)}', space=vmem, size = 0x12000, scoped, tag = 'internal scratch']
  #allocation2 [shape = 'bf16[8,1280]{1,0:T(8,128)(2,1)}', space=vmem, size = 0x5000, scoped, tag = 'scratch operand']
  %s0 = inlined_call_operand.vmem [shape: bf16[2,32,1024], index: 0, kind: input, shape index: {}]
  %s1 = inlined_call_operand.vmem [shape: f32[1,1024], index: 1, kind: input, shape index: {}]
  %s2 = inlined_call_operand.vmem [shape: bf16[8,32], index: 2, kind: input, shape index: {}]
  %s3 = inlined_call_operand.vmem [shape: bf16[27,8,8], index: 3, kind: input, shape index: {}]
  %s4 = inlined_call_operand.vmem [shape: bf16[32,8], index: 4, kind: input, shape index: {}]
  %s5 = inlined_call_operand.vmem [shape: f32[8,1], index: 5, kind: input, shape index: {}]
  %s6 = inlined_call_operand.vmem [shape: f32[8,1], index: 6, kind: input, shape index: {}]
  %s7 = inlined_call_operand.vmem [shape: f32[32,1], index: 7, kind: input, shape index: {}]
  %s8 = inlined_call_operand.vmem [shape: f32[2,32,1024], index: 8, kind: output, shape index: {}]
  %s9 = sld [smem:[#allocation0]]
  $region65: #{bottleneck_forward.1} parent=0
    _
  %s11 = ssub.s32 1, %s9
  %s12 = scalar_select 0, %s11, %s9
  loop: start=0, step=1, limit=4
  $region2: #{bottleneck_forward.1} parent=0 // loop_pre_header
    _
  $region3: #{bottleneck_forward.1} parent=0 // loop_header
    %s14 = sphi 0, %s18
    %p15 = scmp.ge.s32.totalorder %s14, 4
    %s24 = sphi 0, %s26
    %s27 = sphi 0, %s24
    %s28 = sphi 0, %s27
    %s44 = sphi 0, %s28
    %s48 = sphi 0, %s48
    %s50 = sphi 0, %s48
    %s51 = sphi 0, %s50
    %s65 = sphi 0, %s51
    %s69 = sphi 0, %s69
    %s71 = sphi 0, %s69
    %s72 = sphi 0, %s71
    %s86 = sphi 0, %s72
    %s90 = sphi 0, %s90
    %s92 = sphi 0, %s90
    %s93 = sphi 0, %s92
    %s107 = sphi 0, %s93
    %s111 = sphi 0, %s111
    %s113 = sphi 0, %s111
    %s114 = sphi 0, %s113
    %s128 = sphi 0, %s114
    %s132 = sphi 0, %s132
    %s134 = sphi 0, %s132
    %s135 = sphi 0, %s134
    %s149 = sphi 0, %s135
    %s153 = sphi 0, %s153
    %s155 = sphi 0, %s153
    %s156 = sphi 0, %s155
    %s170 = sphi 0, %s156
    %s174 = sphi 0, %s174
    %s176 = sphi 0, %s174
    %s177 = sphi 0, %s176
    %s191 = sphi 0, %s177
    %s197 = sphi 0, %s199
    %s200 = sphi 0, %s197
    %s201 = sphi 0, %s200
    %s217 = sphi 0, %s201
  $region4: #{bottleneck_forward.1} parent=0 // loop_header_branch
    %17 = sbr.rel (%p15) target = $region8
  $region5: #{bottleneck_forward.1} parent=0 // loop_body
    %s19 = ssub.s32 %s14, 1
    %s20 = ssub.s32 %s14, 2
    %s21 = sadd.s32 %s14, 1
    %s22 = ssub.s32 %s14, %s21
    %p23 = scmp.eq.s32.totalorder %s22, 0
    %s25 = sadd.s32 %s24, 1
    %s26 = scalar_select %p23, %s24, %s25
    %p29 = pneg %p23
    %p30 = scmp.eq.s32.totalorder %s14, 1
    %p31 = por %p29, %p30
    %p32 = scmp.ne.s32.totalorder %s24, %s27
    %p33 = scmp.eq.s32.totalorder %s14, 0
    %p34 = por %p32, %p33
    %p35 = scmp.ne.s32.totalorder %s24, %s27
    %p36 = scmp.eq.s32.totalorder %s19, 1
    %p37 = por %p35, %p36
    %p38 = scmp.ne.s32.totalorder %s27, %s28
    %p39 = scmp.eq.s32.totalorder %s19, 0
    %p40 = por %p38, %p39
    %p41 = scmp.ne.s32.totalorder %s27, %s28
    %p42 = scmp.eq.s32.totalorder %s20, 1
    %p43 = por %p41, %p42
    %p45 = scmp.ne.s32.totalorder %s28, %s44
    %p46 = scmp.eq.s32.totalorder %s20, 0
    %p47 = por %p45, %p46
    %s49 = sadd.s32 %s48, 1
    %p52 = scmp.eq.s32.totalorder %s14, 1
    %p53 = scmp.ne.s32.totalorder %s48, %s50
    %p54 = scmp.eq.s32.totalorder %s14, 0
    %p55 = por %p53, %p54
    %p56 = scmp.ne.s32.totalorder %s48, %s50
    %p57 = scmp.eq.s32.totalorder %s19, 1
    %p58 = por %p56, %p57
    %p59 = scmp.ne.s32.totalorder %s50, %s51
    %p60 = scmp.eq.s32.totalorder %s19, 0
    %p61 = por %p59, %p60
    %p62 = scmp.ne.s32.totalorder %s50, %s51
    %p63 = scmp.eq.s32.totalorder %s20, 1
    %p64 = por %p62, %p63
    %p66 = scmp.ne.s32.totalorder %s51, %s65
    %p67 = scmp.eq.s32.totalorder %s20, 0
    %p68 = por %p66, %p67
    %s70 = sadd.s32 %s69, 1
    %p73 = scmp.eq.s32.totalorder %s14, 1
    %p74 = scmp.ne.s32.totalorder %s69, %s71
    %p75 = scmp.eq.s32.totalorder %s14, 0
    %p76 = por %p74, %p75
    %p77 = scmp.ne.s32.totalorder %s69, %s71
    %p78 = scmp.eq.s32.totalorder %s19, 1
    %p79 = por %p77, %p78
    %p80 = scmp.ne.s32.totalorder %s71, %s72
    %p81 = scmp.eq.s32.totalorder %s19, 0
    %p82 = por %p80, %p81
    %p83 = scmp.ne.s32.totalorder %s71, %s72
    %p84 = scmp.eq.s32.totalorder %s20, 1
    %p85 = por %p83, %p84
    %p87 = scmp.ne.s32.totalorder %s72, %s86
    %p88 = scmp.eq.s32.totalorder %s20, 0
    %p89 = por %p87, %p88
    %s91 = sadd.s32 %s90, 1
    %p94 = scmp.eq.s32.totalorder %s14, 1
    %p95 = scmp.ne.s32.totalorder %s90, %s92
    %p96 = scmp.eq.s32.totalorder %s14, 0
    %p97 = por %p95, %p96
    %p98 = scmp.ne.s32.totalorder %s90, %s92
    %p99 = scmp.eq.s32.totalorder %s19, 1
    %p100 = por %p98, %p99
    %p101 = scmp.ne.s32.totalorder %s92, %s93
    %p102 = scmp.eq.s32.totalorder %s19, 0
    %p103 = por %p101, %p102
    %p104 = scmp.ne.s32.totalorder %s92, %s93
    %p105 = scmp.eq.s32.totalorder %s20, 1
    %p106 = por %p104, %p105
    %p108 = scmp.ne.s32.totalorder %s93, %s107
    %p109 = scmp.eq.s32.totalorder %s20, 0
    %p110 = por %p108, %p109
    %s112 = sadd.s32 %s111, 1
    %p115 = scmp.eq.s32.totalorder %s14, 1
    %p116 = scmp.ne.s32.totalorder %s111, %s113
    %p117 = scmp.eq.s32.totalorder %s14, 0
    %p118 = por %p116, %p117
    %p119 = scmp.ne.s32.totalorder %s111, %s113
    %p120 = scmp.eq.s32.totalorder %s19, 1
    %p121 = por %p119, %p120
    %p122 = scmp.ne.s32.totalorder %s113, %s114
    %p123 = scmp.eq.s32.totalorder %s19, 0
    %p124 = por %p122, %p123
    %p125 = scmp.ne.s32.totalorder %s113, %s114
    %p126 = scmp.eq.s32.totalorder %s20, 1
    %p127 = por %p125, %p126
    %p129 = scmp.ne.s32.totalorder %s114, %s128
    %p130 = scmp.eq.s32.totalorder %s20, 0
    %p131 = por %p129, %p130
    %s133 = sadd.s32 %s132, 1
    %p136 = scmp.eq.s32.totalorder %s14, 1
    %p137 = scmp.ne.s32.totalorder %s132, %s134
    %p138 = scmp.eq.s32.totalorder %s14, 0
    %p139 = por %p137, %p138
    %p140 = scmp.ne.s32.totalorder %s132, %s134
    %p141 = scmp.eq.s32.totalorder %s19, 1
    %p142 = por %p140, %p141
    %p143 = scmp.ne.s32.totalorder %s134, %s135
    %p144 = scmp.eq.s32.totalorder %s19, 0
    %p145 = por %p143, %p144
    %p146 = scmp.ne.s32.totalorder %s134, %s135
    %p147 = scmp.eq.s32.totalorder %s20, 1
    %p148 = por %p146, %p147
    %p150 = scmp.ne.s32.totalorder %s135, %s149
    %p151 = scmp.eq.s32.totalorder %s20, 0
    %p152 = por %p150, %p151
    %s154 = sadd.s32 %s153, 1
    %p157 = scmp.eq.s32.totalorder %s14, 1
    %p158 = scmp.ne.s32.totalorder %s153, %s155
    %p159 = scmp.eq.s32.totalorder %s14, 0
    %p160 = por %p158, %p159
    %p161 = scmp.ne.s32.totalorder %s153, %s155
    %p162 = scmp.eq.s32.totalorder %s19, 1
    %p163 = por %p161, %p162
    %p164 = scmp.ne.s32.totalorder %s155, %s156
    %p165 = scmp.eq.s32.totalorder %s19, 0
    %p166 = por %p164, %p165
    %p167 = scmp.ne.s32.totalorder %s155, %s156
    %p168 = scmp.eq.s32.totalorder %s20, 1
    %p169 = por %p167, %p168
    %p171 = scmp.ne.s32.totalorder %s156, %s170
    %p172 = scmp.eq.s32.totalorder %s20, 0
    %p173 = por %p171, %p172
    %s175 = sadd.s32 %s174, 1
    %p178 = scmp.eq.s32.totalorder %s14, 1
    %p179 = scmp.ne.s32.totalorder %s174, %s176
    %p180 = scmp.eq.s32.totalorder %s14, 0
    %p181 = por %p179, %p180
    %p182 = scmp.ne.s32.totalorder %s174, %s176
    %p183 = scmp.eq.s32.totalorder %s19, 1
    %p184 = por %p182, %p183
    %p185 = scmp.ne.s32.totalorder %s176, %s177
    %p186 = scmp.eq.s32.totalorder %s19, 0
    %p187 = por %p185, %p186
    %p188 = scmp.ne.s32.totalorder %s176, %s177
    %p189 = scmp.eq.s32.totalorder %s20, 1
    %p190 = por %p188, %p189
    %p192 = scmp.ne.s32.totalorder %s177, %s191
    %p193 = scmp.eq.s32.totalorder %s20, 0
    %p194 = por %p192, %p193
    %s195 = ssub.s32 %s14, %s21
    %p196 = scmp.eq.s32.totalorder %s195, 0
    %s198 = sadd.s32 %s197, 1
    %s199 = scalar_select %p196, %s197, %s198
    %p202 = pneg %p196
    %p203 = scmp.eq.s32.totalorder %s14, 1
    %p204 = por %p202, %p203
    %p205 = scmp.ne.s32.totalorder %s197, %s200
    %p206 = scmp.eq.s32.totalorder %s14, 0
    %p207 = por %p205, %p206
    %p208 = scmp.ne.s32.totalorder %s197, %s200
    %p209 = scmp.eq.s32.totalorder %s19, 1
    %p210 = por %p208, %p209
    %p211 = scmp.ne.s32.totalorder %s200, %s201
    %p212 = scmp.eq.s32.totalorder %s19, 0
    %p213 = por %p211, %p212
    %p214 = scmp.ne.s32.totalorder %s200, %s201
    %p215 = scmp.eq.s32.totalorder %s20, 1
    %p216 = por %p214, %p215
    %p218 = scmp.ne.s32.totalorder %s201, %s217
    %p219 = scmp.eq.s32.totalorder %s20, 0
    %p220 = por %p218, %p219
    %p221 = scmp.le.s32.totalorder 1, %s14
    %p222 = scmp.lt.s32.totalorder %s14, 3
    %p223 = pnand %p221, %p222
    %p224 = pneg %p223
    // Predicated region
    $region9: #{bottleneck_forward.1} parent=5 // pred_check
      _
    $region10: #{bottleneck_forward.1} parent=5 // pred_check_branch
      %226 = sbr.rel (%p223) target = $region12
    $region11: #{bottleneck_forward.1} parent=5 // pred_region
      %s227 = ssub.s32 %s14, 1
      // Predicated region
      $region13: #{bottleneck_forward.1} parent=11 // pred_check
        %p228 = pneg %p61
      $region14: #{bottleneck_forward.1} parent=11 // pred_check_branch
        %230 = sbr.rel (%p228) target = $region16
      $region15: #{bottleneck_forward.1} parent=11 // pred_region
        _
      $region16: #{bottleneck_forward.1} parent=11 // pred_fallthru
        _
      // Predicated region
      $region17: #{bottleneck_forward.1} parent=11 // pred_check
        %p231 = pneg %p82
      $region18: #{bottleneck_forward.1} parent=11 // pred_check_branch
        %233 = sbr.rel (%p231) target = $region20
      $region19: #{bottleneck_forward.1} parent=11 // pred_region
        _
      $region20: #{bottleneck_forward.1} parent=11 // pred_fallthru
        _
      // Predicated region
      $region21: #{bottleneck_forward.1} parent=11 // pred_check
        %p234 = pneg %p103
      $region22: #{bottleneck_forward.1} parent=11 // pred_check_branch
        %236 = sbr.rel (%p234) target = $region24
      $region23: #{bottleneck_forward.1} parent=11 // pred_region
        _
      $region24: #{bottleneck_forward.1} parent=11 // pred_fallthru
        _
      // Predicated region
      $region25: #{bottleneck_forward.1} parent=11 // pred_check
        %p237 = pneg %p124
      $region26: #{bottleneck_forward.1} parent=11 // pred_check_branch
        %239 = sbr.rel (%p237) target = $region28
      $region27: #{bottleneck_forward.1} parent=11 // pred_region
        _
      $region28: #{bottleneck_forward.1} parent=11 // pred_fallthru
        _
      // Predicated region
      $region29: #{bottleneck_forward.1} parent=11 // pred_check
        %p240 = pneg %p145
      $region30: #{bottleneck_forward.1} parent=11 // pred_check_branch
        %242 = sbr.rel (%p240) target = $region32
      $region31: #{bottleneck_forward.1} parent=11 // pred_region
        _
      $region32: #{bottleneck_forward.1} parent=11 // pred_fallthru
        _
      // Predicated region
      $region33: #{bottleneck_forward.1} parent=11 // pred_check
        %p243 = pneg %p166
      $region34: #{bottleneck_forward.1} parent=11 // pred_check_branch
        %245 = sbr.rel (%p243) target = $region36
      $region35: #{bottleneck_forward.1} parent=11 // pred_region
        _
      $region36: #{bottleneck_forward.1} parent=11 // pred_fallthru
        _
      // Predicated region
      $region37: #{bottleneck_forward.1} parent=11 // pred_check
        %p246 = pneg %p187
      $region38: #{bottleneck_forward.1} parent=11 // pred_check_branch
        %248 = sbr.rel (%p246) target = $region40
      $region39: #{bottleneck_forward.1} parent=11 // pred_region
        _
      $region40: #{bottleneck_forward.1} parent=11 // pred_fallthru
        _
    $region12: #{bottleneck_forward.1} parent=5 // pred_fallthru
      _
    %p249 = scmp.lt.s32.totalorder %s14, 2
    // Predicated region
    $region41: #{bottleneck_forward.1} parent=5 // pred_check
      %p250 = pneg %p249
    $region42: #{bottleneck_forward.1} parent=5 // pred_check_branch
      %252 = sbr.rel (%p250) target = $region44
    $region43: #{bottleneck_forward.1} parent=5 // pred_region
      // Predicated region
      $region45: #{bottleneck_forward.1} parent=43 // pred_check
        %p253 = pneg %p34
      $region46: #{bottleneck_forward.1} parent=43 // pred_check_branch
        %255 = sbr.rel (%p253) target = $region48
      $region47: #{bottleneck_forward.1} parent=43 // pred_region
        %p256 = scmp.lt.s32.totalorder %s14, 1
        %s257 = scalar_select %p256, %s14, 1
        %s258 = smul.addr %s257, 32
        %s259 = smul.addr %s258, 4
        %s260 = scalar_lea.vmem %s0, %s259
      $region48: #{bottleneck_forward.1} parent=43 // pred_fallthru
        _
    $region44: #{bottleneck_forward.1} parent=5 // pred_fallthru
      _
    %p261 = scmp.le.s32.totalorder 1, %s14
    %p262 = scmp.lt.s32.totalorder %s14, 3
    %p263 = pnand %p261, %p262
    %p264 = pneg %p263
    // Predicated region
    $region49: #{bottleneck_forward.1} parent=5 // pred_check
      _
    $region50: #{bottleneck_forward.1} parent=5 // pred_check_branch
      %266 = sbr.rel (%p263) target = $region52
    $region51: #{bottleneck_forward.1} parent=5 // pred_region
      %s267 = ssub.s32 %s14, 1
      %p268 = scmp.lt.s32.totalorder %s19, 1
      %s269 = scalar_select %p268, %s19, 1
      %s270 = smul.addr %s269, 32
      %s271 = smul.addr %s270, 4
      %s272 = scalar_lea.vmem %s0, %s271
      %p273 = pneg %p40
      %p274 = pneg %p37
      %p275 = pneg %p61
      %p276 = pneg %p58
      %p277 = pneg %p82
      %p278 = pneg %p79
      %p279 = pneg %p103
      %p280 = pneg %p100
      %p281 = pneg %p124
      %p282 = pneg %p121
      %p283 = pneg %p145
      %p284 = pneg %p142
      %p285 = pneg %p166
      %p286 = pneg %p163
      %p287 = pneg %p187
      %p288 = pneg %p184
      %p289 = pneg %p213
      %p290 = pneg %p210
      %p291 = scmp.lt.s32.totalorder %s19, 1
      %s292 = scalar_select %p291, %s19, 1
      %s293 = smul.addr %s292, 32
      %s294 = smul.addr %s293, 8
      %s295 = scalar_lea.vmem %s8, %s294
      %p296 = scmp.lt.s32.totalorder %s19, 1
      %s297 = scalar_select %p296, %s19, 1
      %s298 = smul.addr %s297, 32
      %s299 = smul.addr %s298, 4
      %s300 = scalar_lea.vmem %s0, %s299
      %p301 = scmp.lt.s32.totalorder %s19, 1
      %s302 = scalar_select %p301, %s19, 1
      %s303 = smul.addr %s302, 32
      %s304 = smul.addr %s303, 8
      %s305 = scalar_lea.vmem %s8, %s304
      %v307 = vld [vmem:[%s300] sm:$0xff]
      %v308 = vld [vmem:[%s300 + $0x8] sm:$0xff]
      %v309 = vld [vmem:[%s300 + $0x10] sm:$0xff]
      %v310 = vld [vmem:[%s300 + $0x18] sm:$0xff]
      %v311 = vld [vmem:[%s300 + $0x20] sm:$0xff]
      %v312 = vld [vmem:[%s300 + $0x28] sm:$0xff]
      %v313 = vld [vmem:[%s300 + $0x30] sm:$0xff]
      %v314 = vld [vmem:[%s300 + $0x38] sm:$0xff]
      %v315 = vld [vmem:[%s300 + $0x40] sm:$0xff]
      %v316 = vld [vmem:[%s300 + $0x48] sm:$0xff]
      %v317 = vld [vmem:[%s300 + $0x50] sm:$0xff]
      %v318 = vld [vmem:[%s300 + $0x58] sm:$0xff]
      %v319 = vld [vmem:[%s300 + $0x60] sm:$0xff]
      %v320 = vld [vmem:[%s300 + $0x68] sm:$0xff]
      %v321 = vld [vmem:[%s300 + $0x70] sm:$0xff]
      %v322 = vld [vmem:[%s300 + $0x78] sm:$0xff]
      %v323 = vld [vmem:[%s1] sm:$0xff]
      %v324 = vld [vmem:[%s2] sm:$0xf]
      %v325 = vld [vmem:[%s5] sm:$0xff]
      %327 = vset.pattern.permute.xlu0 0
      %328 = vperm.xlu0 %327, %v325
      %v329 = vpop.permute.xlu0 %328
      %v347 = vunpack.c.l.b16 %v307
      %v348 = vunpack.c.h.b16 %v307
      %v349 = vunpack.c.l.b16 %v308
      %v350 = vunpack.c.h.b16 %v308
      %v351 = vunpack.c.l.b16 %v309
      %v352 = vunpack.c.h.b16 %v309
      %v353 = vunpack.c.l.b16 %v310
      %v354 = vunpack.c.h.b16 %v310
      %v355 = vunpack.c.l.b16 %v311
      %v356 = vunpack.c.h.b16 %v311
      %v357 = vunpack.c.l.b16 %v312
      %v358 = vunpack.c.h.b16 %v312
      %v359 = vunpack.c.l.b16 %v313
      %v360 = vunpack.c.h.b16 %v313
      %v361 = vunpack.c.l.b16 %v314
      %v362 = vunpack.c.h.b16 %v314
      %v363 = vunpack.c.l.b16 %v315
      %v364 = vunpack.c.h.b16 %v315
      %v365 = vunpack.c.l.b16 %v316
      %v366 = vunpack.c.h.b16 %v316
      %v367 = vunpack.c.l.b16 %v317
      %v368 = vunpack.c.h.b16 %v317
      %v369 = vunpack.c.l.b16 %v318
      %v370 = vunpack.c.h.b16 %v318
      %v371 = vunpack.c.l.b16 %v319
      %v372 = vunpack.c.h.b16 %v319
      %v373 = vunpack.c.l.b16 %v320
      %v374 = vunpack.c.h.b16 %v320
      %v375 = vunpack.c.l.b16 %v321
      %v376 = vunpack.c.h.b16 %v321
      %v377 = vunpack.c.l.b16 %v322
      %v378 = vunpack.c.h.b16 %v322
      %v379 = vpack.c.b16 %v355, %v347
      %v380 = vpack.c.b16 %v356, %v348
      %v381 = vpack.c.b16 %v357, %v349
      %v382 = vpack.c.b16 %v358, %v350
      %v383 = vpack.c.b16 %v359, %v351
      %v384 = vpack.c.b16 %v360, %v352
      %v385 = vpack.c.b16 %v361, %v353
      %v386 = vpack.c.b16 %v362, %v354
      %v387 = vpack.c.b16 %v371, %v363
      %v388 = vpack.c.b16 %v372, %v364
      %v389 = vpack.c.b16 %v373, %v365
      %v390 = vpack.c.b16 %v374, %v366
      %v391 = vpack.c.b16 %v375, %v367
      %v392 = vpack.c.b16 %v376, %v368
      %v393 = vpack.c.b16 %v377, %v369
      %v394 = vpack.c.b16 %v378, %v370
      %vm411 = vcmask 261120
      %v413 = vsel %vm411, %v324, 0
      %415 = vmatprep.subr.bf16.mxu0 %v380
      %416 = vmatpush1.bf16.msra.mxu0 %v379
      %417 = vmatprep.subr.bf16.mxu0 %v388
      %418 = vmatpush1.bf16.msra.mxu0 %v387
      %419 = vmatprep.subr.bf16.mxu0 0
      %420 = vmatpush1.bf16.msra.mxu0 0
      %421 = vmatprep.subr.bf16.mxu0 0
      %422 = vmatpush1.bf16.msra.mxu0 0
      %423 = vmatprep.subr.bf16.mxu0 0
      %424 = vmatpush1.bf16.msra.mxu0 0
      %425 = vmatprep.subr.bf16.mxu0 0
      %426 = vmatpush1.bf16.msra.mxu0 0
      %427 = vmatprep.subr.bf16.mxu0 0
      %428 = vmatpush1.bf16.msra.mxu0 0
      %429 = vmatprep.subr.bf16.mxu0 0
      %430 = vmatpush1.bf16.msra.mxu0 0
      %431 = vmatprep.subr.bf16.mxu0 0
      %432 = vmatpush1.bf16.msra.mxu0 0
      %433 = vmatprep.subr.bf16.mxu0 0
      %434 = vmatpush1.bf16.msra.mxu0 0
      %435 = vmatprep.subr.bf16.mxu0 0
      %436 = vmatpush1.bf16.msra.mxu0 0
      %437 = vmatprep.subr.bf16.mxu0 0
      %438 = vmatpush1.bf16.msra.mxu0 0
      %439 = vmatprep.subr.bf16.mxu0 0
      %440 = vmatpush1.bf16.msra.mxu0 0
      %441 = vmatprep.subr.bf16.mxu0 0
      %442 = vmatpush1.bf16.msra.mxu0 0
      %443 = vmatprep.subr.bf16.mxu0 0
      %444 = vmatpush1.bf16.msra.mxu0 0
      %445 = vmatprep.subr.bf16.mxu0 0
      %446 = vmatpush1.bf16.msra.mxu0 0
      %447 = vmatprep.mubr.bf16.mxu0 0
      %448 = vmatmul.mubr.bf16.gmra.mrb[0].mxu0 %v413
      %v449 = vpop.f32.mrb[0].mxu0
      %v450 = vadd.f32 %v329, %v449
      %v451 = vpop.f32.mrb[0].mxu0
      %v452 = vadd.f32 %v329, %v451
      %v453 = vpop.f32.mrb[0].mxu0
      %v454 = vpop.f32.mrb[0].mxu0
      %455 = vdwg.mxu0
      %456 = vmatprep.subr.bf16.mxu0 %v382
      %457 = vmatpush1.bf16.msra.mxu0 %v381
      %458 = vmatprep.subr.bf16.mxu0 %v390
      %459 = vmatpush1.bf16.msra.mxu0 %v389
      %460 = vmatprep.subr.bf16.mxu0 0
      %461 = vmatpush1.bf16.msra.mxu0 0
      %462 = vmatprep.subr.bf16.mxu0 0
      %463 = vmatpush1.bf16.msra.mxu0 0
      %464 = vmatprep.subr.bf16.mxu0 0
      %465 = vmatpush1.bf16.msra.mxu0 0
      %466 = vmatprep.subr.bf16.mxu0 0
      %467 = vmatpush1.bf16.msra.mxu0 0
      %468 = vmatprep.subr.bf16.mxu0 0
      %469 = vmatpush1.bf16.msra.mxu0 0
      %470 = vmatprep.subr.bf16.mxu0 0
      %471 = vmatpush1.bf16.msra.mxu0 0
      %472 = vmatprep.subr.bf16.mxu0 0
      %473 = vmatpush1.bf16.msra.mxu0 0
      %474 = vmatprep.subr.bf16.mxu0 0
      %475 = vmatpush1.bf16.msra.mxu0 0
      %476 = vmatprep.subr.bf16.mxu0 0
      %477 = vmatpush1.bf16.msra.mxu0 0
      %478 = vmatprep.subr.bf16.mxu0 0
      %479 = vmatpush1.bf16.msra.mxu0 0
      %480 = vmatprep.subr.bf16.mxu0 0
      %481 = vmatpush1.bf16.msra.mxu0 0
      %482 = vmatprep.subr.bf16.mxu0 0
      %483 = vmatpush1.bf16.msra.mxu0 0
      %484 = vmatprep.subr.bf16.mxu0 0
      %485 = vmatpush1.bf16.msra.mxu0 0
      %486 = vmatprep.subr.bf16.mxu0 0
      %487 = vmatpush1.bf16.msra.mxu0 0
      %488 = vmatprep.mubr.bf16.mxu0 0
      %489 = vmatmul.mubr.bf16.gmra.mrb[0].mxu0 %v413
      %v490 = vpop.f32.mrb[0].mxu0
      %v491 = vadd.f32 %v329, %v490
      %v492 = vpop.f32.mrb[0].mxu0
      %v493 = vadd.f32 %v329, %v492
      %v494 = vpop.f32.mrb[0].mxu0
      %v495 = vpop.f32.mrb[0].mxu0
      %496 = vdwg.mxu0
      %497 = vmatprep.subr.bf16.mxu0 %v384
      %498 = vmatpush1.bf16.msra.mxu0 %v383
      %499 = vmatprep.subr.bf16.mxu0 %v392
      %500 = vmatpush1.bf16.msra.mxu0 %v391
      %501 = vmatprep.subr.bf16.mxu0 0
      %502 = vmatpush1.bf16.msra.mxu0 0
      %503 = vmatprep.subr.bf16.mxu0 0
      %504 = vmatpush1.bf16.msra.mxu0 0
      %505 = vmatprep.subr.bf16.mxu0 0
      %506 = vmatpush1.bf16.msra.mxu0 0
      %507 = vmatprep.subr.bf16.mxu0 0
      %508 = vmatpush1.bf16.msra.mxu0 0
      %509 = vmatprep.subr.bf16.mxu0 0
      %510 = vmatpush1.bf16.msra.mxu0 0
      %511 = vmatprep.subr.bf16.mxu0 0
      %512 = vmatpush1.bf16.msra.mxu0 0
      %513 = vmatprep.subr.bf16.mxu0 0
      %514 = vmatpush1.bf16.msra.mxu0 0
      %515 = vmatprep.subr.bf16.mxu0 0
      %516 = vmatpush1.bf16.msra.mxu0 0
      %517 = vmatprep.subr.bf16.mxu0 0
      %518 = vmatpush1.bf16.msra.mxu0 0
      %519 = vmatprep.subr.bf16.mxu0 0
      %520 = vmatpush1.bf16.msra.mxu0 0
      %521 = vmatprep.subr.bf16.mxu0 0
      %522 = vmatpush1.bf16.msra.mxu0 0
      %523 = vmatprep.subr.bf16.mxu0 0
      %524 = vmatpush1.bf16.msra.mxu0 0
      %525 = vmatprep.subr.bf16.mxu0 0
      %526 = vmatpush1.bf16.msra.mxu0 0
      %527 = vmatprep.subr.bf16.mxu0 0
      %528 = vmatpush1.bf16.msra.mxu0 0
      %529 = vmatprep.mubr.bf16.mxu0 0
      %530 = vmatmul.mubr.bf16.gmra.mrb[0].mxu0 %v413
      %v531 = vpop.f32.mrb[0].mxu0
      %v532 = vadd.f32 %v329, %v531
      %v533 = vpop.f32.mrb[0].mxu0
      %v534 = vadd.f32 %v329, %v533
      %v535 = vpop.f32.mrb[0].mxu0
      %v536 = vpop.f32.mrb[0].mxu0
      %537 = vdwg.mxu0
      %538 = vmatprep.subr.bf16.mxu0 %v386
      %539 = vmatpush1.bf16.msra.mxu0 %v385
      %540 = vmatprep.subr.bf16.mxu0 %v394
      %541 = vmatpush1.bf16.msra.mxu0 %v393
      %542 = vmatprep.subr.bf16.mxu0 0
      %543 = vmatpush1.bf16.msra.mxu0 0
      %544 = vmatprep.subr.bf16.mxu0 0
      %545 = vmatpush1.bf16.msra.mxu0 0
      %546 = vmatprep.subr.bf16.mxu0 0
      %547 = vmatpush1.bf16.msra.mxu0 0
      %548 = vmatprep.subr.bf16.mxu0 0
      %549 = vmatpush1.bf16.msra.mxu0 0
      %550 = vmatprep.subr.bf16.mxu0 0
      %551 = vmatpush1.bf16.msra.mxu0 0
      %552 = vmatprep.subr.bf16.mxu0 0
      %553 = vmatpush1.bf16.msra.mxu0 0
      %554 = vmatprep.subr.bf16.mxu0 0
      %555 = vmatpush1.bf16.msra.mxu0 0
      %556 = vmatprep.subr.bf16.mxu0 0
      %557 = vmatpush1.bf16.msra.mxu0 0
      %558 = vmatprep.subr.bf16.mxu0 0
      %559 = vmatpush1.bf16.msra.mxu0 0
      %560 = vmatprep.subr.bf16.mxu0 0
      %561 = vmatpush1.bf16.msra.mxu0 0
      %562 = vmatprep.subr.bf16.mxu0 0
      %563 = vmatpush1.bf16.msra.mxu0 0
      %564 = vmatprep.subr.bf16.mxu0 0
      %565 = vmatpush1.bf16.msra.mxu0 0
      %566 = vmatprep.subr.bf16.mxu0 0
      %567 = vmatpush1.bf16.msra.mxu0 0
      %568 = vmatprep.subr.bf16.mxu0 0
      %569 = vmatpush1.bf16.msra.mxu0 0
      %570 = vmatprep.mubr.bf16.mxu0 0
      %571 = vmatmul.mubr.bf16.gmra.mrb[0].mxu0 %v413
      %v572 = vpop.f32.mrb[0].mxu0
      %v573 = vadd.f32 %v329, %v572
      %v574 = vpop.f32.mrb[0].mxu0
      %v575 = vadd.f32 %v329, %v574
      %v576 = vpop.f32.mrb[0].mxu0
      %v577 = vpop.f32.mrb[0].mxu0
      %578 = vdwg.mxu0
      %v579 = vmax.f32 %v450, 0.0
      %v580 = vmax.f32 %v452, 0.0
      %v581 = vmax.f32 %v491, 0.0
      %v582 = vmax.f32 %v493, 0.0
      %v583 = vmax.f32 %v532, 0.0
      %v584 = vmax.f32 %v534, 0.0
      %v585 = vmax.f32 %v573, 0.0
      %v586 = vmax.f32 %v575, 0.0
      %v588 = vlaneseq
      %v589 = vshrl.u32 %v588, 7
      %v590 = vsub.s32 0, %v589
      %v591 = vrot.slane %v323, %v590
      %v592 = vlaneseq
      %v593 = vshrl.u32 %v592, 7
      %v594 = vsub.s32 1, %v593
      %v595 = vrot.slane %v323, %v594
      %v596 = vlaneseq
      %v597 = vshrl.u32 %v596, 7
      %v598 = vsub.s32 2, %v597
      %v599 = vrot.slane %v323, %v598
      %v600 = vlaneseq
      %v601 = vshrl.u32 %v600, 7
      %v602 = vsub.s32 3, %v601
      %v603 = vrot.slane %v323, %v602
      %v604 = vlaneseq
      %v605 = vshrl.u32 %v604, 7
      %v606 = vsub.s32 4, %v605
      %v607 = vrot.slane %v323, %v606
      %v608 = vlaneseq
      %v609 = vshrl.u32 %v608, 7
      %v610 = vsub.s32 5, %v609
      %v611 = vrot.slane %v323, %v610
      %v612 = vlaneseq
      %v613 = vshrl.u32 %v612, 7
      %v614 = vsub.s32 6, %v613
      %v615 = vrot.slane %v323, %v614
      %v616 = vlaneseq
      %v617 = vshrl.u32 %v616, 7
      %v618 = vsub.s32 7, %v617
      %v619 = vrot.slane %v323, %v618
      %v628 = vmul.f32 %v579, %v591
      %v629 = vmul.f32 %v580, %v595
      %v630 = vmul.f32 %v581, %v599
      %v631 = vmul.f32 %v582, %v603
      %v632 = vmul.f32 %v583, %v607
      %v633 = vmul.f32 %v584, %v611
      %v634 = vmul.f32 %v585, %v615
      %v635 = vmul.f32 %v586, %v619
      %636 = vst [vmem:[#allocation2] sm:$0xf] 0
      %637 = vst [vmem:[#allocation2 + $0x24] sm:$0xf] 0
      %v638 = vpack.c.bf16 %v628, %v628
      %v639 = vpack.c.bf16 %v629, %v629
      %v640 = vpack.c.bf16 %v630, %v630
      %v641 = vpack.c.bf16 %v631, %v631
      %v642 = vpack.c.bf16 %v632, %v632
      %v643 = vpack.c.bf16 %v633, %v633
      %v644 = vpack.c.bf16 %v634, %v634
      %v645 = vpack.c.bf16 %v635, %v635
      %v654 = vunpack.c.l.b16 %v638
      %v655 = vunpack.c.l.b16 %v639
      %v656 = vunpack.c.l.b16 %v640
      %v657 = vunpack.c.l.b16 %v641
      %v658 = vunpack.c.l.b16 %v642
      %v659 = vunpack.c.l.b16 %v643
      %v660 = vunpack.c.l.b16 %v644
      %v661 = vunpack.c.l.b16 %v645
      %v662 = vpack.c.b16 %v655, %v654
      %v663 = vpack.c.b16 %v657, %v656
      %v664 = vpack.c.b16 %v659, %v658
      %v665 = vpack.c.b16 %v661, %v660
      %670 = vst [vmem:[#allocation2 + $0x4] sm:$0xff] %v662
      %671 = vst [vmem:[#allocation2 + $0xc] sm:$0xff] %v663
      %672 = vst [vmem:[#allocation2 + $0x14] sm:$0xff] %v664
      %673 = vst [vmem:[#allocation2 + $0x1c] sm:$0xff] %v665
      %v674 = vld [vmem:[#allocation2] sm:$0xff]
      %v675 = vld [vmem:[#allocation2 + $0x8] sm:$0xff]
      %v676 = vld [vmem:[#allocation2 + $0x10] sm:$0xff]
      %v677 = vld [vmem:[#allocation2 + $0x18] sm:$0xff]
      %v678 = vld [vmem:[#allocation2 + $0x20] sm:$0xf]
      %v679 = vld [vmem:[%s3] sm:$0xf]
      %s680 = scalar_lea.vmem %s3, 4
      %v681 = vld [vmem:[%s680] sm:$0xf]
      %v687 = vunpack.c.l.b16 %v674
      %v688 = vunpack.c.h.b16 %v674
      %v689 = vunpack.c.l.b16 %v675
      %v690 = vunpack.c.h.b16 %v675
      %v691 = vunpack.c.l.b16 %v676
      %v692 = vunpack.c.h.b16 %v676
      %v693 = vunpack.c.l.b16 %v677
      %v694 = vunpack.c.h.b16 %v677
      %v695 = vunpack.c.l.b16 %v678
      %v696 = vpack.c.b16 %v687, %v687
      %v697 = vpack.c.b16 %v688, %v688
      %v698 = vpack.c.b16 %v689, %v689
      %v699 = vpack.c.b16 %v690, %v690
      %v700 = vpack.c.b16 %v691, %v691
      %v701 = vpack.c.b16 %v692, %v692
      %v702 = vpack.c.b16 %v693, %v693
      %v703 = vpack.c.b16 %v694, %v694
      %v704 = vpack.c.b16 %v695, %v695
      %705 = vrot.lane.b32.xlu0 %v696, 110
      %v706 = vpop.permute.xlu0 %705
      %707 = vrot.lane.b32.xlu0 %v697, 110
      %v708 = vpop.permute.xlu0 %707
      %709 = vrot.lane.b32.xlu0 %v698, 110
      %v710 = vpop.permute.xlu0 %709
      %711 = vrot.lane.b32.xlu0 %v699, 110
      %v712 = vpop.permute.xlu0 %711
      %713 = vrot.lane.b32.xlu0 %v700, 110
      %v714 = vpop.permute.xlu0 %713
      %715 = vrot.lane.b32.xlu0 %v701, 110
      %v716 = vpop.permute.xlu0 %715
      %717 = vrot.lane.b32.xlu0 %v702, 110
      %v718 = vpop.permute.xlu0 %717
      %719 = vrot.lane.b32.xlu0 %v703, 110
      %v720 = vpop.permute.xlu0 %719
      %721 = vrot.lane.b32.xlu0 %v704, 110
      %v722 = vpop.permute.xlu0 %721
      %vm723 = vcmask 900096
      %v724 = vsel %vm723, %v706, %v708
      %v725 = vsel %vm723, %v708, %v710
      %v726 = vsel %vm723, %v710, %v712
      %v727 = vsel %vm723, %v712, %v714
      %v728 = vsel %vm723, %v714, %v716
      %v729 = vsel %vm723, %v716, %v718
      %v730 = vsel %vm723, %v718, %v720
      %v731 = vsel %vm723, %v720, %v722
      %vm732 = vcmask 64512
      %v734 = vsel %vm732, %v681, 0
      %vm736 = vcmask 1043456
      %v738 = vsel %vm736, %v724, 0
      %v741 = vsel %vm736, %v725, 0
      %v744 = vsel %vm736, %v726, 0
      %v747 = vsel %vm736, %v727, 0
      %v750 = vsel %vm736, %v728, 0
      %v753 = vsel %vm736, %v729, 0
      %v756 = vsel %vm736, %v730, 0
      %v759 = vsel %vm736, %v731, 0
      %761 = vmatprep.subr.bf16.mxu0 %v741
      %762 = vmatpush1.bf16.msra.mxu0 %v738
      %763 = vmatprep.subr.bf16.mxu0 0
      %764 = vmatpush1.bf16.msra.mxu0 0
      %765 = vmatprep.subr.bf16.mxu0 0
      %766 = vmatpush1.bf16.msra.mxu0 0
      %767 = vmatprep.subr.bf16.mxu0 0
      %768 = vmatpush1.bf16.msra.mxu0 0
      %769 = vmatprep.subr.bf16.mxu0 0
      %770 = vmatpush1.bf16.msra.mxu0 0
      %771 = vmatprep.subr.bf16.mxu0 0
      %772 = vmatpush1.bf16.msra.mxu0 0
      %773 = vmatprep.subr.bf16.mxu0 0
      %774 = vmatpush1.bf16.msra.mxu0 0
      %775 = vmatprep.subr.bf16.mxu0 0
      %776 = vmatpush1.bf16.msra.mxu0 0
      %777 = vmatprep.subr.bf16.mxu0 0
      %778 = vmatpush1.bf16.msra.mxu0 0
      %779 = vmatprep.subr.bf16.mxu0 0
      %780 = vmatpush1.bf16.msra.mxu0 0
      %781 = vmatprep.subr.bf16.mxu0 0
      %782 = vmatpush1.bf16.msra.mxu0 0
      %783 = vmatprep.subr.bf16.mxu0 0
      %784 = vmatpush1.bf16.msra.mxu0 0
      %785 = vmatprep.subr.bf16.mxu0 0
      %786 = vmatpush1.bf16.msra.mxu0 0
      %787 = vmatprep.subr.bf16.mxu0 0
      %788 = vmatpush1.bf16.msra.mxu0 0
      %789 = vmatprep.subr.bf16.mxu0 0
      %790 = vmatpush1.bf16.msra.mxu0 0
      %791 = vmatprep.subr.bf16.mxu0 0
      %792 = vmatpush1.bf16.msra.mxu0 0
      %793 = vmatprep.mubr.bf16.mxu0 0
      %794 = vmatmul.mubr.bf16.gmra.mrb[0].mxu0 %v734
      %v795 = vpop.f32.mrb[0].mxu0
      %v796 = vadd.f32 0.0, %v795
      %v797 = vpop.f32.mrb[0].mxu0
      %v798 = vadd.f32 0.0, %v797
      %v799 = vpop.f32.mrb[0].mxu0
      %v800 = vpop.f32.mrb[0].mxu0
      %801 = vdwg.mxu0
      %802 = vmatprep.subr.bf16.mxu0 %v747
      %803 = vmatpush1.bf16.msra.mxu0 %v744
      %804 = vmatprep.subr.bf16.mxu0 0
      %805 = vmatpush1.bf16.msra.mxu0 0
      %806 = vmatprep.subr.bf16.mxu0 0
      %807 = vmatpush1.bf16.msra.mxu0 0
      %808 = vmatprep.subr.bf16.mxu0 0
      %809 = vmatpush1.bf16.msra.mxu0 0
      %810 = vmatprep.subr.bf16.mxu0 0
      %811 = vmatpush1.bf16.msra.mxu0 0
      %812 = vmatprep.subr.bf16.mxu0 0
      %813 = vmatpush1.bf16.msra.mxu0 0
      %814 = vmatprep.subr.bf16.mxu0 0
      %815 = vmatpush1.bf16.msra.mxu0 0
      %816 = vmatprep.subr.bf16.mxu0 0
      %817 = vmatpush1.bf16.msra.mxu0 0
      %818 = vmatprep.subr.bf16.mxu0 0
      %819 = vmatpush1.bf16.msra.mxu0 0
      %820 = vmatprep.subr.bf16.mxu0 0
      %821 = vmatpush1.bf16.msra.mxu0 0
      %822 = vmatprep.subr.bf16.mxu0 0
      %823 = vmatpush1.bf16.msra.mxu0 0
      %824 = vmatprep.subr.bf16.mxu0 0
      %825 = vmatpush1.bf16.msra.mxu0 0
      %826 = vmatprep.subr.bf16.mxu0 0
      %827 = vmatpush1.bf16.msra.mxu0 0
      %828 = vmatprep.subr.bf16.mxu0 0
      %829 = vmatpush1.bf16.msra.mxu0 0
      %830 = vmatprep.subr.bf16.mxu0 0
      %831 = vmatpush1.bf16.msra.mxu0 0
      %832 = vmatprep.subr.bf16.mxu0 0
      %833 = vmatpush1.bf16.msra.mxu0 0
      %834 = vmatprep.mubr.bf16.mxu0 0
      %835 = vmatmul.mubr.bf16.gmra.mrb[0].mxu0 %v734
      %v836 = vpop.f32.mrb[0].mxu0
      %v837 = vadd.f32 0.0, %v836
      %v838 = vpop.f32.mrb[0].mxu0
      %v839 = vadd.f32 0.0, %v838
      %v840 = vpop.f32.mrb[0].mxu0
      %v841 = vpop.f32.mrb[0].mxu0
      %842 = vdwg.mxu0
      %843 = vmatprep.subr.bf16.mxu0 %v753
      %844 = vmatpush1.bf16.msra.mxu0 %v750
      %845 = vmatprep.subr.bf16.mxu0 0
      %846 = vmatpush1.bf16.msra.mxu0 0
      %847 = vmatprep.subr.bf16.mxu0 0
      %848 = vmatpush1.bf16.msra.mxu0 0
      %849 = vmatprep.subr.bf16.mxu0 0
      %850 = vmatpush1.bf16.msra.mxu0 0
      %851 = vmatprep.subr.bf16.mxu0 0
      %852 = vmatpush1.bf16.msra.mxu0 0
      %853 = vmatprep.subr.bf16.mxu0 0
      %854 = vmatpush1.bf16.msra.mxu0 0
      %855 = vmatprep.subr.bf16.mxu0 0
      %856 = vmatpush1.bf16.msra.mxu0 0
      %857 = vmatprep.subr.bf16.mxu0 0
      %858 = vmatpush1.bf16.msra.mxu0 0
      %859 = vmatprep.subr.bf16.mxu0 0
      %860 = vmatpush1.bf16.msra.mxu0 0
      %861 = vmatprep.subr.bf16.mxu0 0
      %862 = vmatpush1.bf16.msra.mxu0 0
      %863 = vmatprep.subr.bf16.mxu0 0
      %864 = vmatpush1.bf16.msra.mxu0 0
      %865 = vmatprep.subr.bf16.mxu0 0
      %866 = vmatpush1.bf16.msra.mxu0 0
      %867 = vmatprep.subr.bf16.mxu0 0
      %868 = vmatpush1.bf16.msra.mxu0 0
      %869 = vmatprep.subr.bf16.mxu0 0
      %870 = vmatpush1.bf16.msra.mxu0 0
      %871 = vmatprep.subr.bf16.mxu0 0
      %872 = vmatpush1.bf16.msra.mxu0 0
      %873 = vmatprep.subr.bf16.mxu0 0
      %874 = vmatpush1.bf16.msra.mxu0 0
      %875 = vmatprep.mubr.bf16.mxu0 0
      %876 = vmatmul.mubr.bf16.gmra.mrb[0].mxu0 %v734
      %v877 = vpop.f32.mrb[0].mxu0
      %v878 = vadd.f32 0.0, %v877
      %v879 = vpop.f32.mrb[0].mxu0
      %v880 = vadd.f32 0.0, %v879
      %v881 = vpop.f32.mrb[0].mxu0
      %v882 = vpop.f32.mrb[0].mxu0
      %883 = vdwg.mxu0
      %884 = vmatprep.subr.bf16.mxu0 %v759
      %885 = vmatpush1.bf16.msra.mxu0 %v756
      %886 = vmatprep.subr.bf16.mxu0 0
      %887 = vmatpush1.bf16.msra.mxu0 0
      %888 = vmatprep.subr.bf16.mxu0 0
      %889 = vmatpush1.bf16.msra.mxu0 0
      %890 = vmatprep.subr.bf16.mxu0 0
      %891 = vmatpush1.bf16.msra.mxu0 0
      %892 = vmatprep.subr.bf16.mxu0 0
      %893 = vmatpush1.bf16.msra.mxu0 0
      %894 = vmatprep.subr.bf16.mxu0 0
      %895 = vmatpush1.bf16.msra.mxu0 0
      %896 = vmatprep.subr.bf16.mxu0 0
      %897 = vmatpush1.bf16.msra.mxu0 0
      %898 = vmatprep.subr.bf16.mxu0 0
      %899 = vmatpush1.bf16.msra.mxu0 0
      %900 = vmatprep.subr.bf16.mxu0 0
      %901 = vmatpush1.bf16.msra.mxu0 0
      %902 = vmatprep.subr.bf16.mxu0 0
      %903 = vmatpush1.bf16.msra.mxu0 0
      %904 = vmatprep.subr.bf16.mxu0 0
      %905 = vmatpush1.bf16.msra.mxu0 0
      %906 = vmatprep.subr.bf16.mxu0 0
      %907 = vmatpush1.bf16.msra.mxu0 0
      %908 = vmatprep.subr.bf16.mxu0 0
      %909 = vmatpush1.bf16.msra.mxu0 0
      %910 = vmatprep.subr.bf16.mxu0 0
      %911 = vmatpush1.bf16.msra.mxu0 0
      %912 = vmatprep.subr.bf16.mxu0 0
      %913 = vmatpush1.bf16.msra.mxu0 0
      %914 = vmatprep.subr.bf16.mxu0 0
      %915 = vmatpush1.bf16.msra.mxu0 0
      %916 = vmatprep.mubr.bf16.mxu0 0
      %917 = vmatmul.mubr.bf16.gmra.mrb[0].mxu0 %v734
      %v918 = vpop.f32.mrb[0].mxu0
      %v919 = vadd.f32 0.0, %v918
      %v920 = vpop.f32.mrb[0].mxu0
      %v921 = vadd.f32 0.0, %v920
      %v922 = vpop.f32.mrb[0].mxu0
      %v923 = vpop.f32.mrb[0].mxu0
      %924 = vdwg.mxu0
      %925 = vrot.lane.b32.xlu0 %v696, 111
      %v926 = vpop.permute.xlu0 %925
      %927 = vrot.lane.b32.xlu0 %v697, 111
      %v928 = vpop.permute.xlu0 %927
      %929 = vrot.lane.b32.xlu0 %v698, 111
      %v930 = vpop.permute.xlu0 %929
      %931 = vrot.lane.b32.xlu0 %v699, 111
      %v932 = vpop.permute.xlu0 %931
      %933 = vrot.lane.b32.xlu0 %v700, 111
      %v934 = vpop.permute.xlu0 %933
      %935 = vrot.lane.b32.xlu0 %v701, 111
      %v936 = vpop.permute.xlu0 %935
      %937 = vrot.lane.b32.xlu0 %v702, 111
      %v938 = vpop.permute.xlu0 %937
      %939 = vrot.lane.b32.xlu0 %v703, 111
      %v940 = vpop.permute.xlu0 %939
      %941 = vrot.lane.b32.xlu0 %v704, 111
      %v942 = vpop.permute.xlu0 %941
      %vm943 = vcmask 908288
      %v944 = vsel %vm943, %v926, %v928
      %v945 = vsel %vm943, %v928, %v930
      %v946 = vsel %vm943, %v930, %v932
      %v947 = vsel %vm943, %v932, %v934
      %v948 = vsel %vm943, %v934, %v936
      %v949 = vsel %vm943, %v936, %v938
      %v950 = vsel %vm943, %v938, %v940
      %v951 = vsel %vm943, %v940, %v942
      %v953 = vsel %vm732, %v679, 0
      %v956 = vsel %vm736, %v944, 0
      %v959 = vsel %vm736, %v945, 0
      %v962 = vsel %vm736, %v946, 0
      %v965 = vsel %vm736, %v947, 0
      %v968 = vsel %vm736, %v948, 0
      %v971 = vsel %vm736, %v949, 0
      %v974 = vsel %vm736, %v950, 0
      %v977 = vsel %vm736, %v951, 0
      %979 = vmatprep.subr.bf16.mxu0 %v959
      %980 = vmatpush1.bf16.msra.mxu0 %v956
      %981 = vmatprep.subr.bf16.mxu0 0
      %982 = vmatpush1.bf16.msra.mxu0 0
      %983 = vmatprep.subr.bf16.mxu0 0
      %984 = vmatpush1.bf16.msra.mxu0 0
      %985 = vmatprep.subr.bf16.mxu0 0
      %986 = vmatpush1.bf16.msra.mxu0 0
      %987 = vmatprep.subr.bf16.mxu0 0
      %988 = vmatpush1.bf16.msra.mxu0 0
      %989 = vmatprep.subr.bf16.mxu0 0
      %990 = vmatpush1.bf16.msra.mxu0 0
      %991 = vmatprep.subr.bf16.mxu0 0
      %992 = vmatpush1.bf16.msra.mxu0 0
      %993 = vmatprep.subr.bf16.mxu0 0
      %994 = vmatpush1.bf16.msra.mxu0 0
      %995 = vmatprep.subr.bf16.mxu0 0
      %996 = vmatpush1.bf16.msra.mxu0 0
      %997 = vmatprep.subr.bf16.mxu0 0
      %998 = vmatpush1.bf16.msra.mxu0 0
      %999 = vmatprep.subr.bf16.mxu0 0
      %1000 = vmatpush1.bf16.msra.mxu0 0
      %1001 = vmatprep.subr.bf16.mxu0 0
      %1002 = vmatpush1.bf16.msra.mxu0 0
      %1003 = vmatprep.subr.bf16.mxu0 0
      %1004 = vmatpush1.bf16.msra.mxu0 0
      %1005 = vmatprep.subr.bf16.mxu0 0
      %1006 = vmatpush1.bf16.msra.mxu0 0
      %1007 = vmatprep.subr.bf16.mxu0 0
      %1008 = vmatpush1.bf16.msra.mxu0 0
      %1009 = vmatprep.subr.bf16.mxu0 0
      %1010 = vmatpush1.bf16.msra.mxu0 0
      %1011 = vmatprep.mubr.bf16.mxu0 0
      %1012 = vmatmul.mubr.bf16.gmra.mrb[0].mxu0 %v953
      %v1013 = vpop.f32.mrb[0].mxu0
      %v1014 = vadd.f32 %v796, %v1013
      %v1015 = vpop.f32.mrb[0].mxu0
      %v1016 = vadd.f32 %v798, %v1015
      %v1017 = vpop.f32.mrb[0].mxu0
      %v1018 = vpop.f32.mrb[0].mxu0
      %1019 = vdwg.mxu0
      %1020 = vmatprep.subr.bf16.mxu0 %v965
      %1021 = vmatpush1.bf16.msra.mxu0 %v962
      %1022 = vmatprep.subr.bf16.mxu0 0
      %1023 = vmatpush1.bf16.msra.mxu0 0
      %1024 = vmatprep.subr.bf16.mxu0 0
      %1025 = vmatpush1.bf16.msra.mxu0 0
      %1026 = vmatprep.subr.bf16.mxu0 0
      %1027 = vmatpush1.bf16.msra.mxu0 0
      %1028 = vmatprep.subr.bf16.mxu0 0
      %1029 = vmatpush1.bf16.msra.mxu0 0
      %1030 = vmatprep.subr.bf16.mxu0 0
      %1031 = vmatpush1.bf16.msra.mxu0 0
      %1032 = vmatprep.subr.bf16.mxu0 0
      %1033 = vmatpush1.bf16.msra.mxu0 0
      %1034 = vmatprep.subr.bf16.mxu0 0
      %1035 = vmatpush1.bf16.msra.mxu0 0
      %1036 = vmatprep.subr.bf16.mxu0 0
      %1037 = vmatpush1.bf16.msra.mxu0 0
      %1038 = vmatprep.subr.bf16.mxu0 0
      %1039 = vmatpush1.bf16.msra.mxu0 0
      %1040 = vmatprep.subr.bf16.mxu0 0
      %1041 = vmatpush1.bf16.msra.mxu0 0
      %1042 = vmatprep.subr.bf16.mxu0 0
      %1043 = vmatpush1.bf16.msra.mxu0 0
      %1044 = vmatprep.subr.bf16.mxu0 0
      %1045 = vmatpush1.bf16.msra.mxu0 0
      %1046 = vmatprep.subr.bf16.mxu0 0
      %1047 = vmatpush1.bf16.msra.mxu0 0
      %1048 = vmatprep.subr.bf16.mxu0 0
      %1049 = vmatpush1.bf16.msra.mxu0 0
      %1050 = vmatprep.subr.bf16.mxu0 0
      %1051 = vmatpush1.bf16.msra.mxu0 0
      %1052 = vmatprep.mubr.bf16.mxu0 0
      %1053 = vmatmul.mubr.bf16.gmra.mrb[0].mxu0 %v953
      %v1054 = vpop.f32.mrb[0].mxu0
      %v1055 = vadd.f32 %v837, %v1054
      %v1056 = vpop.f32.mrb[0].mxu0
      %v1057 = vadd.f32 %v839, %v1056
      %v1058 = vpop.f32.mrb[0].mxu0
      %v1059 = vpop.f32.mrb[0].mxu0
      %1060 = vdwg.mxu0
      %1061 = vmatprep.subr.bf16.mxu0 %v971
      %1062 = vmatpush1.bf16.msra.mxu0 %v968
      %1063 = vmatprep.subr.bf16.mxu0 0
      %1064 = vmatpush1.bf16.msra.mxu0 0
      %1065 = vmatprep.subr.bf16.mxu0 0
      %1066 = vmatpush1.bf16.msra.mxu0 0
      %1067 = vmatprep.subr.bf16.mxu0 0
      %1068 = vmatpush1.bf16.msra.mxu0 0
      %1069 = vmatprep.subr.bf16.mxu0 0
      %1070 = vmatpush1.bf16.msra.mxu0 0
      %1071 = vmatprep.subr.bf16.mxu0 0
      %1072 = vmatpush1.bf16.msra.mxu0 0
      %1073 = vmatprep.subr.bf16.mxu0 0
      %1074 = vmatpush1.bf16.msra.mxu0 0
      %1075 = vmatprep.subr.bf16.mxu0 0
      %1076 = vmatpush1.bf16.msra.mxu0 0
      %1077 = vmatprep.subr.bf16.mxu0 0
      %1078 = vmatpush1.bf16.msra.mxu0 0
      %1079 = vmatprep.subr.bf16.mxu0 0
      %1080 = vmatpush1.bf16.msra.mxu0 0
      %1081 = vmatprep.subr.bf16.mxu0 0
      %1082 = vmatpush1.bf16.msra.mxu0 0
      %1083 = vmatprep.subr.bf16.mxu0 0
      %1084 = vmatpush1.bf16.msra.mxu0 0
      %1085 = vmatprep.subr.bf16.mxu0 0
      %1086 = vmatpush1.bf16.msra.mxu0 0
      %1087 = vmatprep.subr.bf16.mxu0 0
      %1088 = vmatpush1.bf16.msra.mxu0 0
      %1089 = vmatprep.subr.bf16.mxu0 0
      %1090 = vmatpush1.bf16.msra.mxu0 0
      %1091 = vmatprep.subr.bf16.mxu0 0
      %1092 = vmatpush1.bf16.msra.mxu0 0
      %1093 = vmatprep.mubr.bf16.mxu0 0
      %1094 = vmatmul.mubr.bf16.gmra.mrb[0].mxu0 %v953
      %v1095 = vpop.f32.mrb[0].mxu0
      %v1096 = vadd.f32 %v878, %v1095
      %v1097 = vpop.f32.mrb[0].mxu0
      %v1098 = vadd.f32 %v880, %v1097
      %v1099 = vpop.f32.mrb[0].mxu0
      %v1100 = vpop.f32.mrb[0].mxu0
      %1101 = vdwg.mxu0
      %1102 = vmatprep.subr.bf16.mxu0 %v977
      %1103 = vmatpush1.bf16.msra.mxu0 %v974
      %1104 = vmatprep.subr.bf16.mxu0 0
      %1105 = vmatpush1.bf16.msra.mxu0 0
      %1106 = vmatprep.subr.bf16.mxu0 0
      %1107 = vmatpush1.bf16.msra.mxu0 0
      %1108 = vmatprep.subr.bf16.mxu0 0
      %1109 = vmatpush1.bf16.msra.mxu0 0
      %1110 = vmatprep.subr.bf16.mxu0 0
      %1111 = vmatpush1.bf16.msra.mxu0 0
      %1112 = vmatprep.subr.bf16.mxu0 0
      %1113 = vmatpush1.bf16.msra.mxu0 0
      %1114 = vmatprep.subr.bf16.mxu0 0
      %1115 = vmatpush1.bf16.msra.mxu0 0
      %1116 = vmatprep.subr.bf16.mxu0 0
      %1117 = vmatpush1.bf16.msra.mxu0 0
      %1118 = vmatprep.subr.bf16.mxu0 0
      %1119 = vmatpush1.bf16.msra.mxu0 0
      %1120 = vmatprep.subr.bf16.mxu0 0
      %1121 = vmatpush1.bf16.msra.mxu0 0
      %1122 = vmatprep.subr.bf16.mxu0 0
      %1123 = vmatpush1.bf16.msra.mxu0 0
      %1124 = vmatprep.subr.bf16.mxu0 0
      %1125 = vmatpush1.bf16.msra.mxu0 0
      %1126 = vmatprep.subr.bf16.mxu0 0
      %1127 = vmatpush1.bf16.msra.mxu0 0
      %1128 = vmatprep.subr.bf16.mxu0 0
      %1129 = vmatpush1.bf16.msra.mxu0 0
      %1130 = vmatprep.subr.bf16.mxu0 0
      %1131 = vmatpush1.bf16.msra.mxu0 0
      %1132 = vmatprep.subr.bf16.mxu0 0
      %1133 = vmatpush1.bf16.msra.mxu0 0
      %1134 = vmatprep.mubr.bf16.mxu0 0
      %1135 = vmatmul.mubr.bf16.gmra.mrb[0].mxu0 %v953
      %v1136 = vpop.f32.mrb[0].mxu0
      %v1137 = vadd.f32 %v919, %v1136
      %v1138 = vpop.f32.mrb[0].mxu0
      %v1139 = vadd.f32 %v921, %v1138
      %v1140 = vpop.f32.mrb[0].mxu0
      %v1141 = vpop.f32.mrb[0].mxu0
      %1142 = vdwg.mxu0
      %s1143 = scalar_lea.vmem %s3, 8
      %v1144 = vld [vmem:[%s1143] sm:$0xf]
      %1145 = vrot.lane.b32.xlu0 %v696, 109
      %v1146 = vpop.permute.xlu0 %1145
      %1147 = vrot.lane.b32.xlu0 %v697, 109
      %v1148 = vpop.permute.xlu0 %1147
      %1149 = vrot.lane.b32.xlu0 %v698, 109
      %v1150 = vpop.permute.xlu0 %1149
      %1151 = vrot.lane.b32.xlu0 %v699, 109
      %v1152 = vpop.permute.xlu0 %1151
      %1153 = vrot.lane.b32.xlu0 %v700, 109
      %v1154 = vpop.permute.xlu0 %1153
      %1155 = vrot.lane.b32.xlu0 %v701, 109
      %v1156 = vpop.permute.xlu0 %1155
      %1157 = vrot.lane.b32.xlu0 %v702, 109
      %v1158 = vpop.permute.xlu0 %1157
      %1159 = vrot.lane.b32.xlu0 %v703, 109
      %v1160 = vpop.permute.xlu0 %1159
      %1161 = vrot.lane.b32.xlu0 %v704, 109
      %v1162 = vpop.permute.xlu0 %1161
      %vm1163 = vcmask 891904
      %v1164 = vsel %vm1163, %v1146, %v1148
      %v1165 = vsel %vm1163, %v1148, %v1150
      %v1166 = vsel %vm1163, %v1150, %v1152
      %v1167 = vsel %vm1163, %v1152, %v1154
      %v1168 = vsel %vm1163, %v1154, %v1156
      %v1169 = vsel %vm1163, %v1156, %v1158
      %v1170 = vsel %vm1163, %v1158, %v1160
      %v1171 = vsel %vm1163, %v1160, %v1162
      %v1173 = vsel %vm732, %v1144, 0
      %v1176 = vsel %vm736, %v1164, 0
      %v1179 = vsel %vm736, %v1165, 0
      %v1182 = vsel %vm736, %v1166, 0
      %v1185 = vsel %vm736, %v1167, 0
      %v1188 = vsel %vm736, %v1168, 0
      %v1191 = vsel %vm736, %v1169, 0
      %v1194 = vsel %vm736, %v1170, 0
      %v1197 = vsel %vm736, %v1171, 0
      %1199 = vmatprep.subr.bf16.mxu0 %v1179
      %1200 = vmatpush1.bf16.msra.mxu0 %v1176
      %1201 = vmatprep.subr.bf16.mxu0 0
      %1202 = vmatpush1.bf16.msra.mxu0 0
      %1203 = vmatprep.subr.bf16.mxu0 0
      %1204 = vmatpush1.bf16.msra.mxu0 0
      %1205 = vmatprep.subr.bf16.mxu0 0
      %1206 = vmatpush1.bf16.msra.mxu0 0
      %1207 = vmatprep.subr.bf16.mxu0 0
      %1208 = vmatpush1.bf16.msra.mxu0 0
      %1209 = vmatprep.subr.bf16.mxu0 0
      %1210 = vmatpush1.bf16.msra.mxu0 0
      %1211 = vmatprep.subr.bf16.mxu0 0
      %1212 = vmatpush1.bf16.msra.mxu0 0
      %1213 = vmatprep.subr.bf16.mxu0 0
      %1214 = vmatpush1.bf16.msra.mxu0 0
      %1215 = vmatprep.subr.bf16.mxu0 0
      %1216 = vmatpush1.bf16.msra.mxu0 0
      %1217 = vmatprep.subr.bf16.mxu0 0
      %1218 = vmatpush1.bf16.msra.mxu0 0
      %1219 = vmatprep.subr.bf16.mxu0 0
      %1220 = vmatpush1.bf16.msra.mxu0 0
      %1221 = vmatprep.subr.bf16.mxu0 0
      %1222 = vmatpush1.bf16.msra.mxu0 0
      %1223 = vmatprep.subr.bf16.mxu0 0
      %1224 = vmatpush1.bf16.msra.mxu0 0
      %1225 = vmatprep.subr.bf16.mxu0 0
      %1226 = vmatpush1.bf16.msra.mxu0 0
      %1227 = vmatprep.subr.bf16.mxu0 0
      %1228 = vmatpush1.bf16.msra.mxu0 0
      %1229 = vmatprep.subr.bf16.mxu0 0
      %1230 = vmatpush1.bf16.msra.mxu0 0
      %1231 = vmatprep.mubr.bf16.mxu0 0
      %1232 = vmatmul.mubr.bf16.gmra.mrb[0].mxu0 %v1173
      %v1233 = vpop.f32.mrb[0].mxu0
      %v1234 = vadd.f32 0.0, %v1233
      %v1235 = vpop.f32.mrb[0].mxu0
      %v1236 = vadd.f32 0.0, %v1235
      %v1237 = vpop.f32.mrb[0].mxu0
      %v1238 = vpop.f32.mrb[0].mxu0
      %1239 = vdwg.mxu0
      %1240 = vmatprep.subr.bf16.mxu0 %v1185
      %1241 = vmatpush1.bf16.msra.mxu0 %v1182
      %1242 = vmatprep.subr.bf16.mxu0 0
      %1243 = vmatpush1.bf16.msra.mxu0 0
      %1244 = vmatprep.subr.bf16.mxu0 0
      %1245 = vmatpush1.bf16.msra.mxu0 0
      %1246 = vmatprep.subr.bf16.mxu0 0
      %1247 = vmatpush1.bf16.msra.mxu0 0
      %1248 = vmatprep.subr.bf16.mxu0 0
      %1249 = vmatpush1.bf16.msra.mxu0 0
      %1250 = vmatprep.subr.bf16.mxu0 0
      %1251 = vmatpush1.bf16.msra.mxu0 0
      %1252 = vmatprep.subr.bf16.mxu0 0
      %1253 = vmatpush1.bf16.msra.mxu0 0
      %1254 = vmatprep.subr.bf16.mxu0 0
      %1255 = vmatpush1.bf16.msra.mxu0 0
      %1256 = vmatprep.subr.bf16.mxu0 0
      %1257 = vmatpush1.bf16.msra.mxu0 0
      %1258 = vmatprep.subr.bf16.mxu0 0
      %1259 = vmatpush1.bf16.msra.mxu0 0
      %1260 = vmatprep.subr.bf16.mxu0 0
      %1261 = vmatpush1.bf16.msra.mxu0 0
      %1262 = vmatprep.subr.bf16.mxu0 0
      %1263 = vmatpush1.bf16.msra.mxu0 0
      %1264 = vmatprep.subr.bf16.mxu0 0
      %1265 = vmatpush1.bf16.msra.mxu0 0
      %1266 = vmatprep.subr.bf16.mxu0 0
      %1267 = vmatpush1.bf16.msra.mxu0 0
      %1268 = vmatprep.subr.bf16.mxu0 0
      %1269 = vmatpush1.bf16.msra.mxu0 0
      %1270 = vmatprep.subr.bf16.mxu0 0
      %1271 = vmatpush1.bf16.msra.mxu0 0
      %1272 = vmatprep.mubr.bf16.mxu0 0
      %1273 = vmatmul.mubr.bf16.gmra.mrb[0].mxu0 %v1173
      %v1274 = vpop.f32.mrb[0].mxu0
      %v1275 = vadd.f32 0.0, %v1274
      %v1276 = vpop.f32.mrb[0].mxu0
      %v1277 = vadd.f32 0.0, %v1276
      %v1278 = vpop.f32.mrb[0].mxu0
      %v1279 = vpop.f32.mrb[0].mxu0
      %1280 = vdwg.mxu0
      %1281 = vmatprep.subr.bf16.mxu0 %v1191
      %1282 = vmatpush1.bf16.msra.mxu0 %v1188
      %1283 = vmatprep.subr.bf16.mxu0 0
      %1284 = vmatpush1.bf16.msra.mxu0 0
      %1285 = vmatprep.subr.bf16.mxu0 0
      %1286 = vmatpush1.bf16.msra.mxu0 0
      %1287 = vmatprep.subr.bf16.mxu0 0
      %1288 = vmatpush1.bf16.msra.mxu0 0
      %1289 = vmatprep.subr.bf16.mxu0 0
      %1290 = vmatpush1.bf16.msra.mxu0 0
      %1291 = vmatprep.subr.bf16.mxu0 0
      %1292 = vmatpush1.bf16.msra.mxu0 0
      %1293 = vmatprep.subr.bf16.mxu0 0
      %1294 = vmatpush1.bf16.msra.mxu0 0
      %1295 = vmatprep.subr.bf16.mxu0 0
      %1296 = vmatpush1.bf16.msra.mxu0 0
      %1297 = vmatprep.subr.bf16.mxu0 0
      %1298 = vmatpush1.bf16.msra.mxu0 0
      %1299 = vmatprep.subr.bf16.mxu0 0
      %1300 = vmatpush1.bf16.msra.mxu0 0
      %1301 = vmatprep.subr.bf16.mxu0 0
      %1302 = vmatpush1.bf16.msra.mxu0 0
      %1303 = vmatprep.subr.bf16.mxu0 0
      %1304 = vmatpush1.bf16.msra.mxu0 0
      %1305 = vmatprep.subr.bf16.mxu0 0
      %1306 = vmatpush1.bf16.msra.mxu0 0
      %1307 = vmatprep.subr.bf16.mxu0 0
      %1308 = vmatpush1.bf16.msra.mxu0 0
      %1309 = vmatprep.subr.bf16.mxu0 0
      %1310 = vmatpush1.bf16.msra.mxu0 0
      %1311 = vmatprep.subr.bf16.mxu0 0
      %1312 = vmatpush1.bf16.msra.mxu0 0
      %1313 = vmatprep.mubr.bf16.mxu0 0
      %1314 = vmatmul.mubr.bf16.gmra.mrb[0].mxu0 %v1173
      %v1315 = vpop.f32.mrb[0].mxu0
      %v1316 = vadd.f32 0.0, %v1315
      %v1317 = vpop.f32.mrb[0].mxu0
      %v1318 = vadd.f32 0.0, %v1317
      %v1319 = vpop.f32.mrb[0].mxu0
      %v1320 = vpop.f32.mrb[0].mxu0
      %1321 = vdwg.mxu0
      %1322 = vmatprep.subr.bf16.mxu0 %v1197
      %1323 = vmatpush1.bf16.msra.mxu0 %v1194
      %1324 = vmatprep.subr.bf16.mxu0 0
      %1325 = vmatpush1.bf16.msra.mxu0 0
      %1326 = vmatprep.subr.bf16.mxu0 0
      %1327 = vmatpush1.bf16.msra.mxu0 0
      %1328 = vmatprep.subr.bf16.mxu0 0
      %1329 = vmatpush1.bf16.msra.mxu0 0
      %1330 = vmatprep.subr.bf16.mxu0 0
      %1331 = vmatpush1.bf16.msra.mxu0 0
      %1332 = vmatprep.subr.bf16.mxu0 0
      %1333 = vmatpush1.bf16.msra.mxu0 0
      %1334 = vmatprep.subr.bf16.mxu0 0
      %1335 = vmatpush1.bf16.msra.mxu0 0
      %1336 = vmatprep.subr.bf16.mxu0 0
      %1337 = vmatpush1.bf16.msra.mxu0 0
      %1338 = vmatprep.subr.bf16.mxu0 0
      %1339 = vmatpush1.bf16.msra.mxu0 0
      %1340 = vmatprep.subr.bf16.mxu0 0
      %1341 = vmatpush1.bf16.msra.mxu0 0
      %1342 = vmatprep.subr.bf16.mxu0 0
      %1343 = vmatpush1.bf16.msra.mxu0 0
      %1344 = vmatprep.subr.bf16.mxu0 0
      %1345 = vmatpush1.bf16.msra.mxu0 0
      %1346 = vmatprep.subr.bf16.mxu0 0
      %1347 = vmatpush1.bf16.msra.mxu0 0
      %1348 = vmatprep.subr.bf16.mxu0 0
      %1349 = vmatpush1.bf16.msra.mxu0 0
      %1350 = vmatprep.subr.bf16.mxu0 0
      %1351 = vmatpush1.bf16.msra.mxu0 0
      %1352 = vmatprep.subr.bf16.mxu0 0
      %1353 = vmatpush1.bf16.msra.mxu0 0
      %1354 = vmatprep.mubr.bf16.mxu0 0
      %1355 = vmatmul.mubr.bf16.gmra.mrb[0].mxu0 %v1173
      %v1356 = vpop.f32.mrb[0].mxu0
      %v1357 = vadd.f32 0.0, %v1356
      %v1358 = vpop.f32.mrb[0].mxu0
      %v1359 = vadd.f32 0.0, %v1358
      %v1360 = vpop.f32.mrb[0].mxu0
      %v1361 = vpop.f32.mrb[0].mxu0
      %1362 = vdwg.mxu0
      %v1363 = vadd.f32 %v1014, %v1234
      %v1364 = vadd.f32 %v1016, %v1236
      %v1365 = vadd.f32 %v1055, %v1275
      %v1366 = vadd.f32 %v1057, %v1277
      %v1367 = vadd.f32 %v1096, %v1316
      %v1368 = vadd.f32 %v1098, %v1318
      %v1369 = vadd.f32 %v1137, %v1357
      %v1370 = vadd.f32 %v1139, %v1359
      %s1371 = scalar_lea.vmem %s3, 12
      %v1372 = vld [vmem:[%s1371] sm:$0xf]
      %1373 = vrot.lane.b32.xlu0 %v696, 101
      %v1374 = vpop.permute.xlu0 %1373
      %1375 = vrot.lane.b32.xlu0 %v697, 101
      %v1376 = vpop.permute.xlu0 %1375
      %1377 = vrot.lane.b32.xlu0 %v698, 101
      %v1378 = vpop.permute.xlu0 %1377
      %1379 = vrot.lane.b32.xlu0 %v699, 101
      %v1380 = vpop.permute.xlu0 %1379
      %1381 = vrot.lane.b32.xlu0 %v700, 101
      %v1382 = vpop.permute.xlu0 %1381
      %1383 = vrot.lane.b32.xlu0 %v701, 101
      %v1384 = vpop.permute.xlu0 %1383
      %1385 = vrot.lane.b32.xlu0 %v702, 101
      %v1386 = vpop.permute.xlu0 %1385
      %1387 = vrot.lane.b32.xlu0 %v703, 101
      %v1388 = vpop.permute.xlu0 %1387
      %1389 = vrot.lane.b32.xlu0 %v704, 101
      %v1390 = vpop.permute.xlu0 %1389
      %vm1391 = vcmask 826368
      %v1392 = vsel %vm1391, %v1374, %v1376
      %v1393 = vsel %vm1391, %v1376, %v1378
      %v1394 = vsel %vm1391, %v1378, %v1380
      %v1395 = vsel %vm1391, %v1380, %v1382
      %v1396 = vsel %vm1391, %v1382, %v1384
      %v1397 = vsel %vm1391, %v1384, %v1386
      %v1398 = vsel %vm1391, %v1386, %v1388
      %v1399 = vsel %vm1391, %v1388, %v1390
      %v1401 = vsel %vm732, %v1372, 0
      %v1404 = vsel %vm736, %v1392, 0
      %v1407 = vsel %vm736, %v1393, 0
      %v1410 = vsel %vm736, %v1394, 0
      %v1413 = vsel %vm736, %v1395, 0
      %v1416 = vsel %vm736, %v1396, 0
      %v1419 = vsel %vm736, %v1397, 0
      %v1422 = vsel %vm736, %v1398, 0
      %v1425 = vsel %vm736, %v1399, 0
      %1427 = vmatprep.subr.bf16.mxu0 %v1407
      %1428 = vmatpush1.bf16.msra.mxu0 %v1404
      %1429 = vmatprep.subr.bf16.mxu0 0
      %1430 = vmatpush1.bf16.msra.mxu0 0
      %1431 = vmatprep.subr.bf16.mxu0 0
      %1432 = vmatpush1.bf16.msra.mxu0 0
      %1433 = vmatprep.subr.bf16.mxu0 0
      %1434 = vmatpush1.bf16.msra.mxu0 0
      %1435 = vmatprep.subr.bf16.mxu0 0
      %1436 = vmatpush1.bf16.msra.mxu0 0
      %1437 = vmatprep.subr.bf16.mxu0 0
      %1438 = vmatpush1.bf16.msra.mxu0 0
      %1439 = vmatprep.subr.bf16.mxu0 0
      %1440 = vmatpush1.bf16.msra.mxu0 0
      %1441 = vmatprep.subr.bf16.mxu0 0
      %1442 = vmatpush1.bf16.msra.mxu0 0
      %1443 = vmatprep.subr.bf16.mxu0 0
      %1444 = vmatpush1.bf16.msra.mxu0 0
      %1445 = vmatprep.subr.bf16.mxu0 0
      %1446 = vmatpush1.bf16.msra.mxu0 0
      %1447 = vmatprep.subr.bf16.mxu0 0
      %1448 = vmatpush1.bf16.msra.mxu0 0
      %1449 = vmatprep.subr.bf16.mxu0 0
      %1450 = vmatpush1.bf16.msra.mxu0 0
      %1451 = vmatprep.subr.bf16.mxu0 0
      %1452 = vmatpush1.bf16.msra.mxu0 0
      %1453 = vmatprep.subr.bf16.mxu0 0
      %1454 = vmatpush1.bf16.msra.mxu0 0
      %1455 = vmatprep.subr.bf16.mxu0 0
      %1456 = vmatpush1.bf16.msra.mxu0 0
      %1457 = vmatprep.subr.bf16.mxu0 0
      %1458 = vmatpush1.bf16.msra.mxu0 0
      %1459 = vmatprep.mubr.bf16.mxu0 0
      %1460 = vmatmul.mubr.bf16.gmra.mrb[0].mxu0 %v1401
      %v1461 = vpop.f32.mrb[0].mxu0
      %v1462 = vadd.f32 0.0, %v1461
      %v1463 = vpop.f32.mrb[0].mxu0
      %v1464 = vadd.f32 0.0, %v1463
      %v1465 = vpop.f32.mrb[0].mxu0
      %v1466 = vpop.f32.mrb[0].mxu0
      %1467 = vdwg.mxu0
      %1468 = vmatprep.subr.bf16.mxu0 %v1413
      %1469 = vmatpush1.bf16.msra.mxu0 %v1410
      %1470 = vmatprep.subr.bf16.mxu0 0
      %1471 = vmatpush1.bf16.msra.mxu0 0
      %1472 = vmatprep.subr.bf16.mxu0 0
      %1473 = vmatpush1.bf16.msra.mxu0 0
      %1474 = vmatprep.subr.bf16.mxu0 0
      %1475 = vmatpush1.bf16.msra.mxu0 0
      %1476 = vmatprep.subr.bf16.mxu0 0
      %1477 = vmatpush1.bf16.msra.mxu0 0
      %1478 = vmatprep.subr.bf16.mxu0 0
      %1479 = vmatpush1.bf16.msra.mxu0 0
      %1480 = vmatprep.subr.bf16.mxu0 0
      %1481 = vmatpush1.bf16.msra.mxu0 0
      %1482 = vmatprep.subr.bf16.mxu0 0
      %1483 = vmatpush1.bf16.msra.mxu0 0
      %1484 = vmatprep.subr.bf16.mxu0 0
      %1485 = vmatpush1.bf16.msra.mxu0 0
      %1486 = vmatprep.subr.bf16.mxu0 0
      %1487 = vmatpush1.bf16.msra.mxu0 0
      %1488 = vmatprep.subr.bf16.mxu0 0
      %1489 = vmatpush1.bf16.msra.mxu0 0
      %1490 = vmatprep.subr.bf16.mxu0 0
      %1491 = vmatpush1.bf16.msra.mxu0 0
      %1492 = vmatprep.subr.bf16.mxu0 0
      %1493 = vmatpush1.bf16.msra.mxu0 0
      %1494 = vmatprep.subr.bf16.mxu0 0
      %1495 = vmatpush1.bf16.msra.mxu0 0
      %1496 = vmatprep.subr.bf16.mxu0 0
      %1497 = vmatpush1.bf16.msra.mxu0 0
      %1498 = vmatprep.subr.bf16.mxu0 0
      %1499 = vmatpush1.bf16.msra.mxu0 0
      %1500 = vmatprep.mubr.bf16.mxu0 0
      %1501 = vmatmul.mubr.bf16.gmra.mrb[0].mxu0 %v1401
      %v1502 = vpop.f32.mrb[0].mxu0
      %v1503 = vadd.f32 0.0, %v1502
      %v1504 = vpop.f32.mrb[0].mxu0
      %v1505 = vadd.f32 0.0, %v1504
      %v1506 = vpop.f32.mrb[0].mxu0
      %v1507 = vpop.f32.mrb[0].mxu0
      %1508 = vdwg.mxu0
      %1509 = vmatprep.subr.bf16.mxu0 %v1419
      %1510 = vmatpush1.bf16.msra.mxu0 %v1416
      %1511 = vmatprep.subr.bf16.mxu0 0
      %1512 = vmatpush1.bf16.msra.mxu0 0
      %1513 = vmatprep.subr.bf16.mxu0 0
      %1514 = vmatpush1.bf16.msra.mxu0 0
      %1515 = vmatprep.subr.bf16.mxu0 0
      %1516 = vmatpush1.bf16.msra.mxu0 0
      %1517 = vmatprep.subr.bf16.mxu0 0
      %1518 = vmatpush1.bf16.msra.mxu0 0
      %1519 = vmatprep.subr.bf16.mxu0 0
      %1520 = vmatpush1.bf16.msra.mxu0 0
      %1521 = vmatprep.subr.bf16.mxu0 0
      %1522 = vmatpush1.bf16.msra.mxu0 0
      %1523 = vmatprep.subr.bf16.mxu0 0
      %1524 = vmatpush1.bf16.msra.mxu0 0
      %1525 = vmatprep.subr.bf16.mxu0 0
      %1526 = vmatpush1.bf16.msra.mxu0 0
      %1527 = vmatprep.subr.bf16.mxu0 0
      %1528 = vmatpush1.bf16.msra.mxu0 0
      %1529 = vmatprep.subr.bf16.mxu0 0
      %1530 = vmatpush1.bf16.msra.mxu0 0
      %1531 = vmatprep.subr.bf16.mxu0 0
      %1532 = vmatpush1.bf16.msra.mxu0 0
      %1533 = vmatprep.subr.bf16.mxu0 0
      %1534 = vmatpush1.bf16.msra.mxu0 0
      %1535 = vmatprep.subr.bf16.mxu0 0
      %1536 = vmatpush1.bf16.msra.mxu0 0
      %1537 = vmatprep.subr.bf16.mxu0 0
      %1538 = vmatpush1.bf16.msra.mxu0 0
      %1539 = vmatprep.subr.bf16.mxu0 0
      %1540 = vmatpush1.bf16.msra.mxu0 0
      %1541 = vmatprep.mubr.bf16.mxu0 0
      %1542 = vmatmul.mubr.bf16.gmra.mrb[0].mxu0 %v1401
      %v1543 = vpop.f32.mrb[0].mxu0
      %v1544 = vadd.f32 0.0, %v1543
      %v1545 = vpop.f32.mrb[0].mxu0
      %v1546 = vadd.f32 0.0, %v1545
      %v1547 = vpop.f32.mrb[0].mxu0
      %v1548 = vpop.f32.mrb[0].mxu0
      %1549 = vdwg.mxu0
      %1550 = vmatprep.subr.bf16.mxu0 %v1425
      %1551 = vmatpush1.bf16.msra.mxu0 %v1422
      %1552 = vmatprep.subr.bf16.mxu0 0
      %1553 = vmatpush1.bf16.msra.mxu0 0
      %1554 = vmatprep.subr.bf16.mxu0 0
      %1555 = vmatpush1.bf16.msra.mxu0 0
      %1556 = vmatprep.subr.bf16.mxu0 0
      %1557 = vmatpush1.bf16.msra.mxu0 0
      %1558 = vmatprep.subr.bf16.mxu0 0
      %1559 = vmatpush1.bf16.msra.mxu0 0
      %1560 = vmatprep.subr.bf16.mxu0 0
      %1561 = vmatpush1.bf16.msra.mxu0 0
      %1562 = vmatprep.subr.bf16.mxu0 0
      %1563 = vmatpush1.bf16.msra.mxu0 0
      %1564 = vmatprep.subr.bf16.mxu0 0
      %1565 = vmatpush1.bf16.msra.mxu0 0
      %1566 = vmatprep.subr.bf16.mxu0 0
      %1567 = vmatpush1.bf16.msra.mxu0 0
      %1568 = vmatprep.subr.bf16.mxu0 0
      %1569 = vmatpush1.bf16.msra.mxu0 0
      %1570 = vmatprep.subr.bf16.mxu0 0
      %1571 = vmatpush1.bf16.msra.mxu0 0
      %1572 = vmatprep.subr.bf16.mxu0 0
      %1573 = vmatpush1.bf16.msra.mxu0 0
      %1574 = vmatprep.subr.bf16.mxu0 0
      %1575 = vmatpush1.bf16.msra.mxu0 0
      %1576 = vmatprep.subr.bf16.mxu0 0
      %1577 = vmatpush1.bf16.msra.mxu0 0
      %1578 = vmatprep.subr.bf16.mxu0 0
      %1579 = vmatpush1.bf16.msra.mxu0 0
      %1580 = vmatprep.subr.bf16.mxu0 0
      %1581 = vmatpush1.bf16.msra.mxu0 0
      %1582 = vmatprep.mubr.bf16.mxu0 0
      %1583 = vmatmul.mubr.bf16.gmra.mrb[0].mxu0 %v1401
      %v1584 = vpop.f32.mrb[0].mxu0
      %v1585 = vadd.f32 0.0, %v1584
      %v1586 = vpop.f32.mrb[0].mxu0
      %v1587 = vadd.f32 0.0, %v1586
      %v1588 = vpop.f32.mrb[0].mxu0
      %v1589 = vpop.f32.mrb[0].mxu0
      %1590 = vdwg.mxu0
      %v1591 = vadd.f32 %v1363, %v1462
      %v1592 = vadd.f32 %v1364, %v1464
      %v1593 = vadd.f32 %v1365, %v1503
      %v1594 = vadd.f32 %v1366, %v1505
      %v1595 = vadd.f32 %v1367, %v1544
      %v1596 = vadd.f32 %v1368, %v1546
      %v1597 = vadd.f32 %v1369, %v1585
      %v1598 = vadd.f32 %v1370, %v1587
      %s1599 = scalar_lea.vmem %s3, 16
      %v1600 = vld [vmem:[%s1599] sm:$0xf]
      %1601 = vrot.lane.b32.xlu0 %v696, 100
      %v1602 = vpop.permute.xlu0 %1601
      %1603 = vrot.lane.b32.xlu0 %v697, 100
      %v1604 = vpop.permute.xlu0 %1603
      %1605 = vrot.lane.b32.xlu0 %v698, 100
      %v1606 = vpop.permute.xlu0 %1605
      %1607 = vrot.lane.b32.xlu0 %v699, 100
      %v1608 = vpop.permute.xlu0 %1607
      %1609 = vrot.lane.b32.xlu0 %v700, 100
      %v1610 = vpop.permute.xlu0 %1609
      %1611 = vrot.lane.b32.xlu0 %v701, 100
      %v1612 = vpop.permute.xlu0 %1611
      %1613 = vrot.lane.b32.xlu0 %v702, 100
      %v1614 = vpop.permute.xlu0 %1613
      %1615 = vrot.lane.b32.xlu0 %v703, 100
      %v1616 = vpop.permute.xlu0 %1615
      %1617 = vrot.lane.b32.xlu0 %v704, 100
      %v1618 = vpop.permute.xlu0 %1617
      %vm1619 = vcmask 818176
      %v1620 = vsel %vm1619, %v1602, %v1604
      %v1621 = vsel %vm1619, %v1604, %v1606
      %v1622 = vsel %vm1619, %v1606, %v1608
      %v1623 = vsel %vm1619, %v1608, %v1610
      %v1624 = vsel %vm1619, %v1610, %v1612
      %v1625 = vsel %vm1619, %v1612, %v1614
      %v1626 = vsel %vm1619, %v1614, %v1616
      %v1627 = vsel %vm1619, %v1616, %v1618
      %v1629 = vsel %vm732, %v1600, 0
      %v1632 = vsel %vm736, %v1620, 0
      %v1635 = vsel %vm736, %v1621, 0
      %v1638 = vsel %vm736, %v1622, 0
      %v1641 = vsel %vm736, %v1623, 0
      %v1644 = vsel %vm736, %v1624, 0
      %v1647 = vsel %vm736, %v1625, 0
      %v1650 = vsel %vm736, %v1626, 0
      %v1653 = vsel %vm736, %v1627, 0
      %1655 = vmatprep.subr.bf16.mxu0 %v1635
      %1656 = vmatpush1.bf16.msra.mxu0 %v1632
      %1657 = vmatprep.subr.bf16.mxu0 0
      %1658 = vmatpush1.bf16.msra.mxu0 0
      %1659 = vmatprep.subr.bf16.mxu0 0
      %1660 = vmatpush1.bf16.msra.mxu0 0
      %1661 = vmatprep.subr.bf16.mxu0 0
      %1662 = vmatpush1.bf16.msra.mxu0 0
      %1663 = vmatprep.subr.bf16.mxu0 0
      %1664 = vmatpush1.bf16.msra.mxu0 0
      %1665 = vmatprep.subr.bf16.mxu0 0
      %1666 = vmatpush1.bf16.msra.mxu0 0
      %1667 = vmatprep.subr.bf16.mxu0 0
      %1668 = vmatpush1.bf16.msra.mxu0 0
      %1669 = vmatprep.subr.bf16.mxu0 0
      %1670 = vmatpush1.bf16.msra.mxu0 0
      %1671 = vmatprep.subr.bf16.mxu0 0
      %1672 = vmatpush1.bf16.msra.mxu0 0
      %1673 = vmatprep.subr.bf16.mxu0 0
      %1674 = vmatpush1.bf16.msra.mxu0 0
      %1675 = vmatprep.subr.bf16.mxu0 0
      %1676 = vmatpush1.bf16.msra.mxu0 0
      %1677 = vmatprep.subr.bf16.mxu0 0
      %1678 = vmatpush1.bf16.msra.mxu0 0
      %1679 = vmatprep.subr.bf16.mxu0 0
      %1680 = vmatpush1.bf16.msra.mxu0 0
      %1681 = vmatprep.subr.bf16.mxu0 0
      %1682 = vmatpush1.bf16.msra.mxu0 0
      %1683 = vmatprep.subr.bf16.mxu0 0
      %1684 = vmatpush1.bf16.msra.mxu0 0
      %1685 = vmatprep.subr.bf16.mxu0 0
      %1686 = vmatpush1.bf16.msra.mxu0 0
      %1687 = vmatprep.mubr.bf16.mxu0 0
      %1688 = vmatmul.mubr.bf16.gmra.mrb[0].mxu0 %v1629
      %v1689 = vpop.f32.mrb[0].mxu0
      %v1690 = vadd.f32 0.0, %v1689
      %v1691 = vpop.f32.mrb[0].mxu0
      %v1692 = vadd.f32 0.0, %v1691
      %v1693 = vpop.f32.mrb[0].mxu0
      %v1694 = vpop.f32.mrb[0].mxu0
      %1695 = vdwg.mxu0
      %1696 = vmatprep.subr.bf16.mxu0 %v1641
      %1697 = vmatpush1.bf16.msra.mxu0 %v1638
      %1698 = vmatprep.subr.bf16.mxu0 0
      %1699 = vmatpush1.bf16.msra.mxu0 0
      %1700 = vmatprep.subr.bf16.mxu0 0
      %1701 = vmatpush1.bf16.msra.mxu0 0
      %1702 = vmatprep.subr.bf16.mxu0 0
      %1703 = vmatpush1.bf16.msra.mxu0 0
      %1704 = vmatprep.subr.bf16.mxu0 0
      %1705 = vmatpush1.bf16.msra.mxu0 0
      %1706 = vmatprep.subr.bf16.mxu0 0
      %1707 = vmatpush1.bf16.msra.mxu0 0
      %1708 = vmatprep.subr.bf16.mxu0 0
      %1709 = vmatpush1.bf16.msra.mxu0 0
      %1710 = vmatprep.subr.bf16.mxu0 0
      %1711 = vmatpush1.bf16.msra.mxu0 0
      %1712 = vmatprep.subr.bf16.mxu0 0
      %1713 = vmatpush1.bf16.msra.mxu0 0
      %1714 = vmatprep.subr.bf16.mxu0 0
      %1715 = vmatpush1.bf16.msra.mxu0 0
      %1716 = vmatprep.subr.bf16.mxu0 0
      %1717 = vmatpush1.bf16.msra.mxu0 0
      %1718 = vmatprep.subr.bf16.mxu0 0
      %1719 = vmatpush1.bf16.msra.mxu0 0
      %1720 = vmatprep.subr.bf16.mxu0 0
      %1721 = vmatpush1.bf16.msra.mxu0 0
      %1722 = vmatprep.subr.bf16.mxu0 0
      %1723 = vmatpush1.bf16.msra.mxu0 0
      %1724 = vmatprep.subr.bf16.mxu0 0
      %1725 = vmatpush1.bf16.msra.mxu0 0
      %1726 = vmatprep.subr.bf16.mxu0 0
      %1727 = vmatpush1.bf16.msra.mxu0 0
      %1728 = vmatprep.mubr.bf16.mxu0 0
      %1729 = vmatmul.mubr.bf16.gmra.mrb[0].mxu0 %v1629
      %v1730 = vpop.f32.mrb[0].mxu0
      %v1731 = vadd.f32 0.0, %v1730
      %v1732 = vpop.f32.mrb[0].mxu0
      %v1733 = vadd.f32 0.0, %v1732
      %v1734 = vpop.f32.mrb[0].mxu0
      %v1735 = vpop.f32.mrb[0].mxu0
      %1736 = vdwg.mxu0
      %1737 = vmatprep.subr.bf16.mxu0 %v1647
      %1738 = vmatpush1.bf16.msra.mxu0 %v1644
      %1739 = vmatprep.subr.bf16.mxu0 0
      %1740 = vmatpush1.bf16.msra.mxu0 0
      %1741 = vmatprep.subr.bf16.mxu0 0
      %1742 = vmatpush1.bf16.msra.mxu0 0
      %1743 = vmatprep.subr.bf16.mxu0 0
      %1744 = vmatpush1.bf16.msra.mxu0 0
      %1745 = vmatprep.subr.bf16.mxu0 0
      %1746 = vmatpush1.bf16.msra.mxu0 0
      %1747 = vmatprep.subr.bf16.mxu0 0
      %1748 = vmatpush1.bf16.msra.mxu0 0
      %1749 = vmatprep.subr.bf16.mxu0 0
      %1750 = vmatpush1.bf16.msra.mxu0 0
      %1751 = vmatprep.subr.bf16.mxu0 0
      %1752 = vmatpush1.bf16.msra.mxu0 0
      %1753 = vmatprep.subr.bf16.mxu0 0
      %1754 = vmatpush1.bf16.msra.mxu0 0
      %1755 = vmatprep.subr.bf16.mxu0 0
      %1756 = vmatpush1.bf16.msra.mxu0 0
      %1757 = vmatprep.subr.bf16.mxu0 0
      %1758 = vmatpush1.bf16.msra.mxu0 0
      %1759 = vmatprep.subr.bf16.mxu0 0
      %1760 = vmatpush1.bf16.msra.mxu0 0
      %1761 = vmatprep.subr.bf16.mxu0 0
      %1762 = vmatpush1.bf16.msra.mxu0 0
      %1763 = vmatprep.subr.bf16.mxu0 0
      %1764 = vmatpush1.bf16.msra.mxu0 0
      %1765 = vmatprep.subr.bf16.mxu0 0
      %1766 = vmatpush1.bf16.msra.mxu0 0
      %1767 = vmatprep.subr.bf16.mxu0 0
      %1768 = vmatpush1.bf16.msra.mxu0 0
      %1769 = vmatprep.mubr.bf16.mxu0 0
      %1770 = vmatmul.mubr.bf16.gmra.mrb[0].mxu0 %v1629
      %v1771 = vpop.f32.mrb[0].mxu0
      %v1772 = vadd.f32 0.0, %v1771
      %v1773 = vpop.f32.mrb[0].mxu0
      %v1774 = vadd.f32 0.0, %v1773
      %v1775 = vpop.f32.mrb[0].mxu0
      %v1776 = vpop.f32.mrb[0].mxu0
      %1777 = vdwg.mxu0
      %1778 = vmatprep.subr.bf16.mxu0 %v1653
      %1779 = vmatpush1.bf16.msra.mxu0 %v1650
      %1780 = vmatprep.subr.bf16.mxu0 0
      %1781 = vmatpush1.bf16.msra.mxu0 0
      %1782 = vmatprep.subr.bf16.mxu0 0
      %1783 = vmatpush1.bf16.msra.mxu0 0
      %1784 = vmatprep.subr.bf16.mxu0 0
      %1785 = vmatpush1.bf16.msra.mxu0 0
      %1786 = vmatprep.subr.bf16.mxu0 0
      %1787 = vmatpush1.bf16.msra.mxu0 0
      %1788 = vmatprep.subr.bf16.mxu0 0
      %1789 = vmatpush1.bf16.msra.mxu0 0
      %1790 = vmatprep.subr.bf16.mxu0 0
      %1791 = vmatpush1.bf16.msra.mxu0 0
      %1792 = vmatprep.subr.bf16.mxu0 0
      %1793 = vmatpush1.bf16.msra.mxu0 0
      %1794 = vmatprep.subr.bf16.mxu0 0
      %1795 = vmatpush1.bf16.msra.mxu0 0
      %1796 = vmatprep.subr.bf16.mxu0 0
      %1797 = vmatpush1.bf16.msra.mxu0 0
      %1798 = vmatprep.subr.bf16.mxu0 0
      %1799 = vmatpush1.bf16.msra.mxu0 0
      %1800 = vmatprep.subr.bf16.mxu0 0
      %1801 = vmatpush1.bf16.msra.mxu0 0
      %1802 = vmatprep.subr.bf16.mxu0 0
      %1803 = vmatpush1.bf16.msra.mxu0 0
      %1804 = vmatprep.subr.bf16.mxu0 0
      %1805 = vmatpush1.bf16.msra.mxu0 0
      %1806 = vmatprep.subr.bf16.mxu0 0
      %1807 = vmatpush1.bf16.msra.mxu0 0
      %1808 = vmatprep.subr.bf16.mxu0 0
      %1809 = vmatpush1.bf16.msra.mxu0 0
      %1810 = vmatprep.mubr.bf16.mxu0 0
      %1811 = vmatmul.mubr.bf16.gmra.mrb[0].mxu0 %v1629
      %v1812 = vpop.f32.mrb[0].mxu0
      %v1813 = vadd.f32 0.0, %v1812
      %v1814 = vpop.f32.mrb[0].mxu0
      %v1815 = vadd.f32 0.0, %v1814
      %v1816 = vpop.f32.mrb[0].mxu0
      %v1817 = vpop.f32.mrb[0].mxu0
      %1818 = vdwg.mxu0
      %v1819 = vadd.f32 %v1591, %v1690
      %v1820 = vadd.f32 %v1592, %v1692
      %v1821 = vadd.f32 %v1593, %v1731
      %v1822 = vadd.f32 %v1594, %v1733
      %v1823 = vadd.f32 %v1595, %v1772
      %v1824 = vadd.f32 %v1596, %v1774
      %v1825 = vadd.f32 %v1597, %v1813
      %v1826 = vadd.f32 %v1598, %v1815
      %s1827 = scalar_lea.vmem %s3, 20
      %v1828 = vld [vmem:[%s1827] sm:$0xf]
      %1829 = vrot.lane.b32.xlu0 %v696, 99
      %v1830 = vpop.permute.xlu0 %1829
      %1831 = vrot.lane.b32.xlu0 %v697, 99
      %v1832 = vpop.permute.xlu0 %1831
      %1833 = vrot.lane.b32.xlu0 %v698, 99
      %v1834 = vpop.permute.xlu0 %1833
      %1835 = vrot.lane.b32.xlu0 %v699, 99
      %v1836 = vpop.permute.xlu0 %1835
      %1837 = vrot.lane.b32.xlu0 %v700, 99
      %v1838 = vpop.permute.xlu0 %1837
      %1839 = vrot.lane.b32.xlu0 %v701, 99
      %v1840 = vpop.permute.xlu0 %1839
      %1841 = vrot.lane.b32.xlu0 %v702, 99
      %v1842 = vpop.permute.xlu0 %1841
      %1843 = vrot.lane.b32.xlu0 %v703, 99
      %v1844 = vpop.permute.xlu0 %1843
      %1845 = vrot.lane.b32.xlu0 %v704, 99
      %v1846 = vpop.permute.xlu0 %1845
      %vm1847 = vcmask 809984
      %v1848 = vsel %vm1847, %v1830, %v1832
      %v1849 = vsel %vm1847, %v1832, %v1834
      %v1850 = vsel %vm1847, %v1834, %v1836
      %v1851 = vsel %vm1847, %v1836, %v1838
      %v1852 = vsel %vm1847, %v1838, %v1840
      %v1853 = vsel %vm1847, %v1840, %v1842
      %v1854 = vsel %vm1847, %v1842, %v1844
      %v1855 = vsel %vm1847, %v1844, %v1846
      %v1857 = vsel %vm732, %v1828, 0
      %v1860 = vsel %vm736, %v1848, 0
      %v1863 = vsel %vm736, %v1849, 0
      %v1866 = vsel %vm736, %v1850, 0
      %v1869 = vsel %vm736, %v1851, 0
      %v1872 = vsel %vm736, %v1852, 0
      %v1875 = vsel %vm736, %v1853, 0
      %v1878 = vsel %vm736, %v1854, 0
      %v1881 = vsel %vm736, %v1855, 0
      %1883 = vmatprep.subr.bf16.mxu0 %v1863
      %1884 = vmatpush1.bf16.msra.mxu0 %v1860
      %1885 = vmatprep.subr.bf16.mxu0 0
      %1886 = vmatpush1.bf16.msra.mxu0 0
      %1887 = vmatprep.subr.bf16.mxu0 0
      %1888 = vmatpush1.bf16.msra.mxu0 0
      %1889 = vmatprep.subr.bf16.mxu0 0
      %1890 = vmatpush1.bf16.msra.mxu0 0
      %1891 = vmatprep.subr.bf16.mxu0 0
      %1892 = vmatpush1.bf16.msra.mxu0 0
      %1893 = vmatprep.subr.bf16.mxu0 0
      %1894 = vmatpush1.bf16.msra.mxu0 0
      %1895 = vmatprep.subr.bf16.mxu0 0
      %1896 = vmatpush1.bf16.msra.mxu0 0
      %1897 = vmatprep.subr.bf16.mxu0 0
      %1898 = vmatpush1.bf16.msra.mxu0 0
      %1899 = vmatprep.subr.bf16.mxu0 0
      %1900 = vmatpush1.bf16.msra.mxu0 0
      %1901 = vmatprep.subr.bf16.mxu0 0
      %1902 = vmatpush1.bf16.msra.mxu0 0
      %1903 = vmatprep.subr.bf16.mxu0 0
      %1904 = vmatpush1.bf16.msra.mxu0 0
      %1905 = vmatprep.subr.bf16.mxu0 0
      %1906 = vmatpush1.bf16.msra.mxu0 0
      %1907 = vmatprep.subr.bf16.mxu0 0
      %1908 = vmatpush1.bf16.msra.mxu0 0
      %1909 = vmatprep.subr.bf16.mxu0 0
      %1910 = vmatpush1.bf16.msra.mxu0 0
      %1911 = vmatprep.subr.bf16.mxu0 0
      %1912 = vmatpush1.bf16.msra.mxu0 0
      %1913 = vmatprep.subr.bf16.mxu0 0
      %1914 = vmatpush1.bf16.msra.mxu0 0
      %1915 = vmatprep.mubr.bf16.mxu0 0
      %1916 = vmatmul.mubr.bf16.gmra.mrb[0].mxu0 %v1857
      %v1917 = vpop.f32.mrb[0].mxu0
      %v1918 = vadd.f32 0.0, %v1917
      %v1919 = vpop.f32.mrb[0].mxu0
      %v1920 = vadd.f32 0.0, %v1919
      %v1921 = vpop.f32.mrb[0].mxu0
      %v1922 = vpop.f32.mrb[0].mxu0
      %1923 = vdwg.mxu0
      %1924 = vmatprep.subr.bf16.mxu0 %v1869
      %1925 = vmatpush1.bf16.msra.mxu0 %v1866
      %1926 = vmatprep.subr.bf16.mxu0 0
      %1927 = vmatpush1.bf16.msra.mxu0 0
      %1928 = vmatprep.subr.bf16.mxu0 0
      %1929 = vmatpush1.bf16.msra.mxu0 0
      %1930 = vmatprep.subr.bf16.mxu0 0
      %1931 = vmatpush1.bf16.msra.mxu0 0
      %1932 = vmatprep.subr.bf16.mxu0 0
      %1933 = vmatpush1.bf16.msra.mxu0 0
      %1934 = vmatprep.subr.bf16.mxu0 0
      %1935 = vmatpush1.bf16.msra.mxu0 0
      %1936 = vmatprep.subr.bf16.mxu0 0
      %1937 = vmatpush1.bf16.msra.mxu0 0
      %1938 = vmatprep.subr.bf16.mxu0 0
      %1939 = vmatpush1.bf16.msra.mxu0 0
      %1940 = vmatprep.subr.bf16.mxu0 0
      %1941 = vmatpush1.bf16.msra.mxu0 0
      %1942 = vmatprep.subr.bf16.mxu0 0
      %1943 = vmatpush1.bf16.msra.mxu0 0
      %1944 = vmatprep.subr.bf16.mxu0 0
      %1945 = vmatpush1.bf16.msra.mxu0 0
      %1946 = vmatprep.subr.bf16.mxu0 0
      %1947 = vmatpush1.bf16.msra.mxu0 0
      %1948 = vmatprep.subr.bf16.mxu0 0
      %1949 = vmatpush1.bf16.msra.mxu0 0
      %1950 = vmatprep.subr.bf16.mxu0 0
      %1951 = vmatpush1.bf16.msra.mxu0 0
      %1952 = vmatprep.subr.bf16.mxu0 0
      %1953 = vmatpush1.bf16.msra.mxu0 0
      %1954 = vmatprep.subr.bf16.mxu0 0
      %1955 = vmatpush1.bf16.msra.mxu0 0
      %1956 = vmatprep.mubr.bf16.mxu0 0
      %1957 = vmatmul.mubr.bf16.gmra.mrb[0].mxu0 %v1857
      %v1958 = vpop.f32.mrb[0].mxu0
      %v1959 = vadd.f32 0.0, %v1958
      %v1960 = vpop.f32.mrb[0].mxu0
      %v1961 = vadd.f32 0.0, %v1960
      %v1962 = vpop.f32.mrb[0].mxu0
      %v1963 = vpop.f32.mrb[0].mxu0
      %1964 = vdwg.mxu0
      %1965 = vmatprep.subr.bf16.mxu0 %v1875
      %1966 = vmatpush1.bf16.msra.mxu0 %v1872
      %1967 = vmatprep.subr.bf16.mxu0 0
      %1968 = vmatpush1.bf16.msra.mxu0 0
      %1969 = vmatprep.subr.bf16.mxu0 0
      %1970 = vmatpush1.bf16.msra.mxu0 0
      %1971 = vmatprep.subr.bf16.mxu0 0
      %1972 = vmatpush1.bf16.msra.mxu0 0
      %1973 = vmatprep.subr.bf16.mxu0 0
      %1974 = vmatpush1.bf16.msra.mxu0 0
      %1975 = vmatprep.subr.bf16.mxu0 0
      %1976 = vmatpush1.bf16.msra.mxu0 0
      %1977 = vmatprep.subr.bf16.mxu0 0
      %1978 = vmatpush1.bf16.msra.mxu0 0
      %1979 = vmatprep.subr.bf16.mxu0 0
      %1980 = vmatpush1.bf16.msra.mxu0 0
      %1981 = vmatprep.subr.bf16.mxu0 0
      %1982 = vmatpush1.bf16.msra.mxu0 0
      %1983 = vmatprep.subr.bf16.mxu0 0
      %1984 = vmatpush1.bf16.msra.mxu0 0
      %1985 = vmatprep.subr.bf16.mxu0 0
      %1986 = vmatpush1.bf16.msra.mxu0 0
      %1987 = vmatprep.subr.bf16.mxu0 0
      %1988 = vmatpush1.bf16.msra.mxu0 0
      %1989 = vmatprep.subr.bf16.mxu0 0
      %1990 = vmatpush1.bf16.msra.mxu0 0
      %1991 = vmatprep.subr.bf16.mxu0 0
      %1992 = vmatpush1.bf16.msra.mxu0 0
      %1993 = vmatprep.subr.bf16.mxu0 0
      %1994 = vmatpush1.bf16.msra.mxu0 0
      %1995 = vmatprep.subr.bf16.mxu0 0
      %1996 = vmatpush1.bf16.msra.mxu0 0
      %1997 = vmatprep.mubr.bf16.mxu0 0
      %1998 = vmatmul.mubr.bf16.gmra.mrb[0].mxu0 %v1857
      %v1999 = vpop.f32.mrb[0].mxu0
      %v2000 = vadd.f32 0.0, %v1999
      %v2001 = vpop.f32.mrb[0].mxu0
      %v2002 = vadd.f32 0.0, %v2001
      %v2003 = vpop.f32.mrb[0].mxu0
      %v2004 = vpop.f32.mrb[0].mxu0
      %2005 = vdwg.mxu0
      %2006 = vmatprep.subr.bf16.mxu0 %v1881
      %2007 = vmatpush1.bf16.msra.mxu0 %v1878
      %2008 = vmatprep.subr.bf16.mxu0 0
      %2009 = vmatpush1.bf16.msra.mxu0 0
      %2010 = vmatprep.subr.bf16.mxu0 0
      %2011 = vmatpush1.bf16.msra.mxu0 0
      %2012 = vmatprep.subr.bf16.mxu0 0
      %2013 = vmatpush1.bf16.msra.mxu0 0
      %2014 = vmatprep.subr.bf16.mxu0 0
      %2015 = vmatpush1.bf16.msra.mxu0 0
      %2016 = vmatprep.subr.bf16.mxu0 0
      %2017 = vmatpush1.bf16.msra.mxu0 0
      %2018 = vmatprep.subr.bf16.mxu0 0
      %2019 = vmatpush1.bf16.msra.mxu0 0
      %2020 = vmatprep.subr.bf16.mxu0 0
      %2021 = vmatpush1.bf16.msra.mxu0 0
      %2022 = vmatprep.subr.bf16.mxu0 0
      %2023 = vmatpush1.bf16.msra.mxu0 0
      %2024 = vmatprep.subr.bf16.mxu0 0
      %2025 = vmatpush1.bf16.msra.mxu0 0
      %2026 = vmatprep.subr.bf16.mxu0 0
      %2027 = vmatpush1.bf16.msra.mxu0 0
      %2028 = vmatprep.subr.bf16.mxu0 0
      %2029 = vmatpush1.bf16.msra.mxu0 0
      %2030 = vmatprep.subr.bf16.mxu0 0
      %2031 = vmatpush1.bf16.msra.mxu0 0
      %2032 = vmatprep.subr.bf16.mxu0 0
      %2033 = vmatpush1.bf16.msra.mxu0 0
      %2034 = vmatprep.subr.bf16.mxu0 0
      %2035 = vmatpush1.bf16.msra.mxu0 0
      %2036 = vmatprep.subr.bf16.mxu0 0
      %2037 = vmatpush1.bf16.msra.mxu0 0
      %2038 = vmatprep.mubr.bf16.mxu0 0
      %2039 = vmatmul.mubr.bf16.gmra.mrb[0].mxu0 %v1857
      %v2040 = vpop.f32.mrb[0].mxu0
      %v2041 = vadd.f32 0.0, %v2040
      %v2042 = vpop.f32.mrb[0].mxu0
      %v2043 = vadd.f32 0.0, %v2042
      %v2044 = vpop.f32.mrb[0].mxu0
      %v2045 = vpop.f32.mrb[0].mxu0
      %2046 = vdwg.mxu0
      %v2047 = vadd.f32 %v1819, %v1918
      %v2048 = vadd.f32 %v1820, %v1920
      %v2049 = vadd.f32 %v1821, %v1959
      %v2050 = vadd.f32 %v1822, %v1961
      %v2051 = vadd.f32 %v1823, %v2000
      %v2052 = vadd.f32 %v1824, %v2002
      %v2053 = vadd.f32 %v1825, %v2041
      %v2054 = vadd.f32 %v1826, %v2043
      %s2055 = scalar_lea.vmem %s3, 24
      %v2056 = vld [vmem:[%s2055] sm:$0xf]
      %2057 = vrot.lane.b32.xlu0 %v696, 91
      %v2058 = vpop.permute.xlu0 %2057
      %2059 = vrot.lane.b32.xlu0 %v697, 91
      %v2060 = vpop.permute.xlu0 %2059
      %2061 = vrot.lane.b32.xlu0 %v698, 91
      %v2062 = vpop.permute.xlu0 %2061
      %2063 = vrot.lane.b32.xlu0 %v699, 91
      %v2064 = vpop.permute.xlu0 %2063
      %2065 = vrot.lane.b32.xlu0 %v700, 91
      %v2066 = vpop.permute.xlu0 %2065
      %2067 = vrot.lane.b32.xlu0 %v701, 91
      %v2068 = vpop.permute.xlu0 %2067
      %2069 = vrot.lane.b32.xlu0 %v702, 91
      %v2070 = vpop.permute.xlu0 %2069
      %2071 = vrot.lane.b32.xlu0 %v703, 91
      %v2072 = vpop.permute.xlu0 %2071
      %2073 = vrot.lane.b32.xlu0 %v704, 91
      %v2074 = vpop.permute.xlu0 %2073
      %vm2075 = vcmask 744448
      %v2076 = vsel %vm2075, %v2058, %v2060
      %v2077 = vsel %vm2075, %v2060, %v2062
      %v2078 = vsel %vm2075, %v2062, %v2064
      %v2079 = vsel %vm2075, %v2064, %v2066
      %v2080 = vsel %vm2075, %v2066, %v2068
      %v2081 = vsel %vm2075, %v2068, %v2070
      %v2082 = vsel %vm2075, %v2070, %v2072
      %v2083 = vsel %vm2075, %v2072, %v2074
      %v2085 = vsel %vm732, %v2056, 0
      %v2088 = vsel %vm736, %v2076, 0
      %v2091 = vsel %vm736, %v2077, 0
      %v2094 = vsel %vm736, %v2078, 0
      %v2097 = vsel %vm736, %v2079, 0
      %v2100 = vsel %vm736, %v2080, 0
      %v2103 = vsel %vm736, %v2081, 0
      %v2106 = vsel %vm736, %v2082, 0
      %v2109 = vsel %vm736, %v2083, 0
      %2111 = vmatprep.subr.bf16.mxu0 %v2091
      %2112 = vmatpush1.bf16.msra.mxu0 %v2088
      %2113 = vmatprep.subr.bf16.mxu0 0
      %2114 = vmatpush1.bf16.msra.mxu0 0
      %2115 = vmatprep.subr.bf16.mxu0 0
      %2116 = vmatpush1.bf16.msra.mxu0 0
      %2117 = vmatprep.subr.bf16.mxu0 0
      %2118 = vmatpush1.bf16.msra.mxu0 0
      %2119 = vmatprep.subr.bf16.mxu0 0
      %2120 = vmatpush1.bf16.msra.mxu0 0
      %2121 = vmatprep.subr.bf16.mxu0 0
      %2122 = vmatpush1.bf16.msra.mxu0 0
      %2123 = vmatprep.subr.bf16.mxu0 0
      %2124 = vmatpush1.bf16.msra.mxu0 0
      %2125 = vmatprep.subr.bf16.mxu0 0
      %2126 = vmatpush1.bf16.msra.mxu0 0
      %2127 = vmatprep.subr.bf16.mxu0 0
      %2128 = vmatpush1.bf16.msra.mxu0 0
      %2129 = vmatprep.subr.bf16.mxu0 0
      %2130 = vmatpush1.bf16.msra.mxu0 0
      %2131 = vmatprep.subr.bf16.mxu0 0
      %2132 = vmatpush1.bf16.msra.mxu0 0
      %2133 = vmatprep.subr.bf16.mxu0 0
      %2134 = vmatpush1.bf16.msra.mxu0 0
      %2135 = vmatprep.subr.bf16.mxu0 0
      %2136 = vmatpush1.bf16.msra.mxu0 0
      %2137 = vmatprep.subr.bf16.mxu0 0
      %2138 = vmatpush1.bf16.msra.mxu0 0
      %2139 = vmatprep.subr.bf16.mxu0 0
      %2140 = vmatpush1.bf16.msra.mxu0 0
      %2141 = vmatprep.subr.bf16.mxu0 0
      %2142 = vmatpush1.bf16.msra.mxu0 0
      %2143 = vmatprep.mubr.bf16.mxu0 0
      %2144 = vmatmul.mubr.bf16.gmra.mrb[0].mxu0 %v2085
      %v2145 = vpop.f32.mrb[0].mxu0
      %v2146 = vadd.f32 0.0, %v2145
      %v2147 = vpop.f32.mrb[0].mxu0
      %v2148 = vadd.f32 0.0, %v2147
      %v2149 = vpop.f32.mrb[0].mxu0
      %v2150 = vpop.f32.mrb[0].mxu0
      %2151 = vdwg.mxu0
      %2152 = vmatprep.subr.bf16.mxu0 %v2097
      %2153 = vmatpush1.bf16.msra.mxu0 %v2094
      %2154 = vmatprep.subr.bf16.mxu0 0
      %2155 = vmatpush1.bf16.msra.mxu0 0
      %2156 = vmatprep.subr.bf16.mxu0 0
      %2157 = vmatpush1.bf16.msra.mxu0 0
      %2158 = vmatprep.subr.bf16.mxu0 0
      %2159 = vmatpush1.bf16.msra.mxu0 0
      %2160 = vmatprep.subr.bf16.mxu0 0
      %2161 = vmatpush1.bf16.msra.mxu0 0
      %2162 = vmatprep.subr.bf16.mxu0 0
      %2163 = vmatpush1.bf16.msra.mxu0 0
      %2164 = vmatprep.subr.bf16.mxu0 0
      %2165 = vmatpush1.bf16.msra.mxu0 0
      %2166 = vmatprep.subr.bf16.mxu0 0
      %2167 = vmatpush1.bf16.msra.mxu0 0
      %2168 = vmatprep.subr.bf16.mxu0 0
      %2169 = vmatpush1.bf16.msra.mxu0 0
      %2170 = vmatprep.subr.bf16.mxu0 0
      %2171 = vmatpush1.bf16.msra.mxu0 0
      %2172 = vmatprep.subr.bf16.mxu0 0
      %2173 = vmatpush1.bf16.msra.mxu0 0
      %2174 = vmatprep.subr.bf16.mxu0 0
      %2175 = vmatpush1.bf16.msra.mxu0 0
      %2176 = vmatprep.subr.bf16.mxu0 0
      %2177 = vmatpush1.bf16.msra.mxu0 0
      %2178 = vmatprep.subr.bf16.mxu0 0
      %2179 = vmatpush1.bf16.msra.mxu0 0
      %2180 = vmatprep.subr.bf16.mxu0 0
      %2181 = vmatpush1.bf16.msra.mxu0 0
      %2182 = vmatprep.subr.bf16.mxu0 0
      %2183 = vmatpush1.bf16.msra.mxu0 0
      %2184 = vmatprep.mubr.bf16.mxu0 0
      %2185 = vmatmul.mubr.bf16.gmra.mrb[0].mxu0 %v2085
      %v2186 = vpop.f32.mrb[0].mxu0
      %v2187 = vadd.f32 0.0, %v2186
      %v2188 = vpop.f32.mrb[0].mxu0
      %v2189 = vadd.f32 0.0, %v2188
      %v2190 = vpop.f32.mrb[0].mxu0
      %v2191 = vpop.f32.mrb[0].mxu0
      %2192 = vdwg.mxu0
      %2193 = vmatprep.subr.bf16.mxu0 %v2103
      %2194 = vmatpush1.bf16.msra.mxu0 %v2100
      %2195 = vmatprep.subr.bf16.mxu0 0
      %2196 = vmatpush1.bf16.msra.mxu0 0
      %2197 = vmatprep.subr.bf16.mxu0 0
      %2198 = vmatpush1.bf16.msra.mxu0 0
      %2199 = vmatprep.subr.bf16.mxu0 0
      %2200 = vmatpush1.bf16.msra.mxu0 0
      %2201 = vmatprep.subr.bf16.mxu0 0
      %2202 = vmatpush1.bf16.msra.mxu0 0
      %2203 = vmatprep.subr.bf16.mxu0 0
      %2204 = vmatpush1.bf16.msra.mxu0 0
      %2205 = vmatprep.subr.bf16.mxu0 0
      %2206 = vmatpush1.bf16.msra.mxu0 0
      %2207 = vmatprep.subr.bf16.mxu0 0
      %2208 = vmatpush1.bf16.msra.mxu0 0
      %2209 = vmatprep.subr.bf16.mxu0 0
      %2210 = vmatpush1.bf16.msra.mxu0 0
      %2211 = vmatprep.subr.bf16.mxu0 0
      %2212 = vmatpush1.bf16.msra.mxu0 0
      %2213 = vmatprep.subr.bf16.mxu0 0
      %2214 = vmatpush1.bf16.msra.mxu0 0
      %2215 = vmatprep.subr.bf16.mxu0 0
      %2216 = vmatpush1.bf16.msra.mxu0 0
      %2217 = vmatprep.subr.bf16.mxu0 0
      %2218 = vmatpush1.bf16.msra.mxu0 0
      %2219 = vmatprep.subr.bf16.mxu0 0
      %2220 = vmatpush1.bf16.msra.mxu0 0
      %2221 = vmatprep.subr.bf16.mxu0 0
      %2222 = vmatpush1.bf16.msra.mxu0 0
      %2223 = vmatprep.subr.bf16.mxu0 0
      %2224 = vmatpush1.bf16.msra.mxu0 0
      %2225 = vmatprep.mubr.bf16.mxu0 0
      %2226 = vmatmul.mubr.bf16.gmra.mrb[0].mxu0 %v2085
      %v2227 = vpop.f32.mrb[0].mxu0
      %v2228 = vadd.f32 0.0, %v2227
      %v2229 = vpop.f32.mrb[0].mxu0
      %v2230 = vadd.f32 0.0, %v2229
      %v2231 = vpop.f32.mrb[0].mxu0
      %v2232 = vpop.f32.mrb[0].mxu0
      %2233 = vdwg.mxu0
      %2234 = vmatprep.subr.bf16.mxu0 %v2109
      %2235 = vmatpush1.bf16.msra.mxu0 %v2106
      %2236 = vmatprep.subr.bf16.mxu0 0
      %2237 = vmatpush1.bf16.msra.mxu0 0
      %2238 = vmatprep.subr.bf16.mxu0 0
      %2239 = vmatpush1.bf16.msra.mxu0 0
      %2240 = vmatprep.subr.bf16.mxu0 0
      %2241 = vmatpush1.bf16.msra.mxu0 0
      %2242 = vmatprep.subr.bf16.mxu0 0
      %2243 = vmatpush1.bf16.msra.mxu0 0
      %2244 = vmatprep.subr.bf16.mxu0 0
      %2245 = vmatpush1.bf16.msra.mxu0 0
      %2246 = vmatprep.subr.bf16.mxu0 0
      %2247 = vmatpush1.bf16.msra.mxu0 0
      %2248 = vmatprep.subr.bf16.mxu0 0
      %2249 = vmatpush1.bf16.msra.mxu0 0
      %2250 = vmatprep.subr.bf16.mxu0 0
      %2251 = vmatpush1.bf16.msra.mxu0 0
      %2252 = vmatprep.subr.bf16.mxu0 0
      %2253 = vmatpush1.bf16.msra.mxu0 0
      %2254 = vmatprep.subr.bf16.mxu0 0
      %2255 = vmatpush1.bf16.msra.mxu0 0
      %2256 = vmatprep.subr.bf16.mxu0 0
      %2257 = vmatpush1.bf16.msra.mxu0 0
      %2258 = vmatprep.subr.bf16.mxu0 0
      %2259 = vmatpush1.bf16.msra.mxu0 0
      %2260 = vmatprep.subr.bf16.mxu0 0
      %2261 = vmatpush1.bf16.msra.mxu0 0
      %2262 = vmatprep.subr.bf16.mxu0 0
      %2263 = vmatpush1.bf16.msra.mxu0 0
      %2264 = vmatprep.subr.bf16.mxu0 0
      %2265 = vmatpush1.bf16.msra.mxu0 0
      %2266 = vmatprep.mubr.bf16.mxu0 0
      %2267 = vmatmul.mubr.bf16.gmra.mrb[0].mxu0 %v2085
      %v2268 = vpop.f32.mrb[0].mxu0
      %v2269 = vadd.f32 0.0, %v2268
      %v2270 = vpop.f32.mrb[0].mxu0
      %v2271 = vadd.f32 0.0, %v2270
      %v2272 = vpop.f32.mrb[0].mxu0
      %v2273 = vpop.f32.mrb[0].mxu0
      %2274 = vdwg.mxu0
      %v2275 = vadd.f32 %v2047, %v2146
      %v2276 = vadd.f32 %v2048, %v2148
      %v2277 = vadd.f32 %v2049, %v2187
      %v2278 = vadd.f32 %v2050, %v2189
      %v2279 = vadd.f32 %v2051, %v2228
      %v2280 = vadd.f32 %v2052, %v2230
      %v2281 = vadd.f32 %v2053, %v2269
      %v2282 = vadd.f32 %v2054, %v2271
      %s2283 = scalar_lea.vmem %s3, 28
      %v2284 = vld [vmem:[%s2283] sm:$0xf]
      %2285 = vrot.lane.b32.xlu0 %v696, 90
      %v2286 = vpop.permute.xlu0 %2285
      %2287 = vrot.lane.b32.xlu0 %v697, 90
      %v2288 = vpop.permute.xlu0 %2287
      %2289 = vrot.lane.b32.xlu0 %v698, 90
      %v2290 = vpop.permute.xlu0 %2289
      %2291 = vrot.lane.b32.xlu0 %v699, 90
      %v2292 = vpop.permute.xlu0 %2291
      %2293 = vrot.lane.b32.xlu0 %v700, 90
      %v2294 = vpop.permute.xlu0 %2293
      %2295 = vrot.lane.b32.xlu0 %v701, 90
      %v2296 = vpop.permute.xlu0 %2295
      %2297 = vrot.lane.b32.xlu0 %v702, 90
      %v2298 = vpop.permute.xlu0 %2297
      %2299 = vrot.lane.b32.xlu0 %v703, 90
      %v2300 = vpop.permute.xlu0 %2299
      %2301 = vrot.lane.b32.xlu0 %v704, 90
      %v2302 = vpop.permute.xlu0 %2301
      %vm2303 = vcmask 736256
      %v2304 = vsel %vm2303, %v2286, %v2288
      %v2305 = vsel %vm2303, %v2288, %v2290
      %v2306 = vsel %vm2303, %v2290, %v2292
      %v2307 = vsel %vm2303, %v2292, %v2294
      %v2308 = vsel %vm2303, %v2294, %v2296
      %v2309 = vsel %vm2303, %v2296, %v2298
      %v2310 = vsel %vm2303, %v2298, %v2300
      %v2311 = vsel %vm2303, %v2300, %v2302
      %v2313 = vsel %vm732, %v2284, 0
      %v2316 = vsel %vm736, %v2304, 0
      %v2319 = vsel %vm736, %v2305, 0
      %v2322 = vsel %vm736, %v2306, 0
      %v2325 = vsel %vm736, %v2307, 0
      %v2328 = vsel %vm736, %v2308, 0
      %v2331 = vsel %vm736, %v2309, 0
      %v2334 = vsel %vm736, %v2310, 0
      %v2337 = vsel %vm736, %v2311, 0
      %2339 = vmatprep.subr.bf16.mxu0 %v2319
      %2340 = vmatpush1.bf16.msra.mxu0 %v2316
      %2341 = vmatprep.subr.bf16.mxu0 0
      %2342 = vmatpush1.bf16.msra.mxu0 0
      %2343 = vmatprep.subr.bf16.mxu0 0
      %2344 = vmatpush1.bf16.msra.mxu0 0
      %2345 = vmatprep.subr.bf16.mxu0 0
      %2346 = vmatpush1.bf16.msra.mxu0 0
      %2347 = vmatprep.subr.bf16.mxu0 0
      %2348 = vmatpush1.bf16.msra.mxu0 0
      %2349 = vmatprep.subr.bf16.mxu0 0
      %2350 = vmatpush1.bf16.msra.mxu0 0
      %2351 = vmatprep.subr.bf16.mxu0 0
      %2352 = vmatpush1.bf16.msra.mxu0 0
      %2353 = vmatprep.subr.bf16.mxu0 0
      %2354 = vmatpush1.bf16.msra.mxu0 0
      %2355 = vmatprep.subr.bf16.mxu0 0
      %2356 = vmatpush1.bf16.msra.mxu0 0
      %2357 = vmatprep.subr.bf16.mxu0 0
      %2358 = vmatpush1.bf16.msra.mxu0 0
      %2359 = vmatprep.subr.bf16.mxu0 0
      %2360 = vmatpush1.bf16.msra.mxu0 0
      %2361 = vmatprep.subr.bf16.mxu0 0
      %2362 = vmatpush1.bf16.msra.mxu0 0
      %2363 = vmatprep.subr.bf16.mxu0 0
      %2364 = vmatpush1.bf16.msra.mxu0 0
      %2365 = vmatprep.subr.bf16.mxu0 0
      %2366 = vmatpush1.bf16.msra.mxu0 0
      %2367 = vmatprep.subr.bf16.mxu0 0
      %2368 = vmatpush1.bf16.msra.mxu0 0
      %2369 = vmatprep.subr.bf16.mxu0 0
      %2370 = vmatpush1.bf16.msra.mxu0 0
      %2371 = vmatprep.mubr.bf16.mxu0 0
      %2372 = vmatmul.mubr.bf16.gmra.mrb[0].mxu0 %v2313
      %v2373 = vpop.f32.mrb[0].mxu0
      %v2374 = vadd.f32 0.0, %v2373
      %v2375 = vpop.f32.mrb[0].mxu0
      %v2376 = vadd.f32 0.0, %v2375
      %v2377 = vpop.f32.mrb[0].mxu0
      %v2378 = vpop.f32.mrb[0].mxu0
      %2379 = vdwg.mxu0
      %2380 = vmatprep.subr.bf16.mxu0 %v2325
      %2381 = vmatpush1.bf16.msra.mxu0 %v2322
      %2382 = vmatprep.subr.bf16.mxu0 0
      %2383 = vmatpush1.bf16.msra.mxu0 0
      %2384 = vmatprep.subr.bf16.mxu0 0
      %2385 = vmatpush1.bf16.msra.mxu0 0
      %2386 = vmatprep.subr.bf16.mxu0 0
      %2387 = vmatpush1.bf16.msra.mxu0 0
      %2388 = vmatprep.subr.bf16.mxu0 0
      %2389 = vmatpush1.bf16.msra.mxu0 0
      %2390 = vmatprep.subr.bf16.mxu0 0
      %2391 = vmatpush1.bf16.msra.mxu0 0
      %2392 = vmatprep.subr.bf16.mxu0 0
      %2393 = vmatpush1.bf16.msra.mxu0 0
      %2394 = vmatprep.subr.bf16.mxu0 0
      %2395 = vmatpush1.bf16.msra.mxu0 0
      %2396 = vmatprep.subr.bf16.mxu0 0
      %2397 = vmatpush1.bf16.msra.mxu0 0
      %2398 = vmatprep.subr.bf16.mxu0 0
      %2399 = vmatpush1.bf16.msra.mxu0 0
      %2400 = vmatprep.subr.bf16.mxu0 0
      %2401 = vmatpush1.bf16.msra.mxu0 0
      %2402 = vmatprep.subr.bf16.mxu0 0
      %2403 = vmatpush1.bf16.msra.mxu0 0
      %2404 = vmatprep.subr.bf16.mxu0 0
      %2405 = vmatpush1.bf16.msra.mxu0 0
      %2406 = vmatprep.subr.bf16.mxu0 0
      %2407 = vmatpush1.bf16.msra.mxu0 0
      %2408 = vmatprep.subr.bf16.mxu0 0
      %2409 = vmatpush1.bf16.msra.mxu0 0
      %2410 = vmatprep.subr.bf16.mxu0 0
      %2411 = vmatpush1.bf16.msra.mxu0 0
      %2412 = vmatprep.mubr.bf16.mxu0 0
      %2413 = vmatmul.mubr.bf16.gmra.mrb[0].mxu0 %v2313
      %v2414 = vpop.f32.mrb[0].mxu0
      %v2415 = vadd.f32 0.0, %v2414
      %v2416 = vpop.f32.mrb[0].mxu0
      %v2417 = vadd.f32 0.0, %v2416
      %v2418 = vpop.f32.mrb[0].mxu0
      %v2419 = vpop.f32.mrb[0].mxu0
      %2420 = vdwg.mxu0
      %2421 = vmatprep.subr.bf16.mxu0 %v2331
      %2422 = vmatpush1.bf16.msra.mxu0 %v2328
      %2423 = vmatprep.subr.bf16.mxu0 0
      %2424 = vmatpush1.bf16.msra.mxu0 0
      %2425 = vmatprep.subr.bf16.mxu0 0
      %2426 = vmatpush1.bf16.msra.mxu0 0
      %2427 = vmatprep.subr.bf16.mxu0 0
      %2428 = vmatpush1.bf16.msra.mxu0 0
      %2429 = vmatprep.subr.bf16.mxu0 0
      %2430 = vmatpush1.bf16.msra.mxu0 0
      %2431 = vmatprep.subr.bf16.mxu0 0
      %2432 = vmatpush1.bf16.msra.mxu0 0
      %2433 = vmatprep.subr.bf16.mxu0 0
      %2434 = vmatpush1.bf16.msra.mxu0 0
      %2435 = vmatprep.subr.bf16.mxu0 0
      %2436 = vmatpush1.bf16.msra.mxu0 0
      %2437 = vmatprep.subr.bf16.mxu0 0
      %2438 = vmatpush1.bf16.msra.mxu0 0
      %2439 = vmatprep.subr.bf16.mxu0 0
      %2440 = vmatpush1.bf16.msra.mxu0 0
      %2441 = vmatprep.subr.bf16.mxu0 0
      %2442 = vmatpush1.bf16.msra.mxu0 0
      %2443 = vmatprep.subr.bf16.mxu0 0
      %2444 = vmatpush1.bf16.msra.mxu0 0
      %2445 = vmatprep.subr.bf16.mxu0 0
      %2446 = vmatpush1.bf16.msra.mxu0 0
      %2447 = vmatprep.subr.bf16.mxu0 0
      %2448 = vmatpush1.bf16.msra.mxu0 0
      %2449 = vmatprep.subr.bf16.mxu0 0
      %2450 = vmatpush1.bf16.msra.mxu0 0
      %2451 = vmatprep.subr.bf16.mxu0 0
      %2452 = vmatpush1.bf16.msra.mxu0 0
      %2453 = vmatprep.mubr.bf16.mxu0 0
      %2454 = vmatmul.mubr.bf16.gmra.mrb[0].mxu0 %v2313
      %v2455 = vpop.f32.mrb[0].mxu0
      %v2456 = vadd.f32 0.0, %v2455
      %v2457 = vpop.f32.mrb[0].mxu0
      %v2458 = vadd.f32 0.0, %v2457
      %v2459 = vpop.f32.mrb[0].mxu0
      %v2460 = vpop.f32.mrb[0].mxu0
      %2461 = vdwg.mxu0
      %2462 = vmatprep.subr.bf16.mxu0 %v2337
      %2463 = vmatpush1.bf16.msra.mxu0 %v2334
      %2464 = vmatprep.subr.bf16.mxu0 0
      %2465 = vmatpush1.bf16.msra.mxu0 0
      %2466 = vmatprep.subr.bf16.mxu0 0
      %2467 = vmatpush1.bf16.msra.mxu0 0
      %2468 = vmatprep.subr.bf16.mxu0 0
      %2469 = vmatpush1.bf16.msra.mxu0 0
      %2470 = vmatprep.subr.bf16.mxu0 0
      %2471 = vmatpush1.bf16.msra.mxu0 0
      %2472 = vmatprep.subr.bf16.mxu0 0
      %2473 = vmatpush1.bf16.msra.mxu0 0
      %2474 = vmatprep.subr.bf16.mxu0 0
      %2475 = vmatpush1.bf16.msra.mxu0 0
      %2476 = vmatprep.subr.bf16.mxu0 0
      %2477 = vmatpush1.bf16.msra.mxu0 0
      %2478 = vmatprep.subr.bf16.mxu0 0
      %2479 = vmatpush1.bf16.msra.mxu0 0
      %2480 = vmatprep.subr.bf16.mxu0 0
      %2481 = vmatpush1.bf16.msra.mxu0 0
      %2482 = vmatprep.subr.bf16.mxu0 0
      %2483 = vmatpush1.bf16.msra.mxu0 0
      %2484 = vmatprep.subr.bf16.mxu0 0
      %2485 = vmatpush1.bf16.msra.mxu0 0
      %2486 = vmatprep.subr.bf16.mxu0 0
      %2487 = vmatpush1.bf16.msra.mxu0 0
      %2488 = vmatprep.subr.bf16.mxu0 0
      %2489 = vmatpush1.bf16.msra.mxu0 0
      %2490 = vmatprep.subr.bf16.mxu0 0
      %2491 = vmatpush1.bf16.msra.mxu0 0
      %2492 = vmatprep.subr.bf16.mxu0 0
      %2493 = vmatpush1.bf16.msra.mxu0 0
      %2494 = vmatprep.mubr.bf16.mxu0 0
      %2495 = vmatmul.mubr.bf16.gmra.mrb[0].mxu0 %v2313
      %v2496 = vpop.f32.mrb[0].mxu0
      %v2497 = vadd.f32 0.0, %v2496
      %v2498 = vpop.f32.mrb[0].mxu0
      %v2499 = vadd.f32 0.0, %v2498
      %v2500 = vpop.f32.mrb[0].mxu0
      %v2501 = vpop.f32.mrb[0].mxu0
      %2502 = vdwg.mxu0
      %v2503 = vadd.f32 %v2275, %v2374
      %v2504 = vadd.f32 %v2276, %v2376
      %v2505 = vadd.f32 %v2277, %v2415
      %v2506 = vadd.f32 %v2278, %v2417
      %v2507 = vadd.f32 %v2279, %v2456
      %v2508 = vadd.f32 %v2280, %v2458
      %v2509 = vadd.f32 %v2281, %v2497
      %v2510 = vadd.f32 %v2282, %v2499
      %s2511 = scalar_lea.vmem %s3, 32
      %v2512 = vld [vmem:[%s2511] sm:$0xf]
      %2513 = vrot.lane.b32.xlu0 %v696, 89
      %v2514 = vpop.permute.xlu0 %2513
      %2515 = vrot.lane.b32.xlu0 %v697, 89
      %v2516 = vpop.permute.xlu0 %2515
      %2517 = vrot.lane.b32.xlu0 %v698, 89
      %v2518 = vpop.permute.xlu0 %2517
      %2519 = vrot.lane.b32.xlu0 %v699, 89
      %v2520 = vpop.permute.xlu0 %2519
      %2521 = vrot.lane.b32.xlu0 %v700, 89
      %v2522 = vpop.permute.xlu0 %2521
      %2523 = vrot.lane.b32.xlu0 %v701, 89
      %v2524 = vpop.permute.xlu0 %2523
      %2525 = vrot.lane.b32.xlu0 %v702, 89
      %v2526 = vpop.permute.xlu0 %2525
      %2527 = vrot.lane.b32.xlu0 %v703, 89
      %v2528 = vpop.permute.xlu0 %2527
      %2529 = vrot.lane.b32.xlu0 %v704, 89
      %v2530 = vpop.permute.xlu0 %2529
      %vm2531 = vcmask 728064
      %v2532 = vsel %vm2531, %v2514, %v2516
      %v2533 = vsel %vm2531, %v2516, %v2518
      %v2534 = vsel %vm2531, %v2518, %v2520
      %v2535 = vsel %vm2531, %v2520, %v2522
      %v2536 = vsel %vm2531, %v2522, %v2524
      %v2537 = vsel %vm2531, %v2524, %v2526
      %v2538 = vsel %vm2531, %v2526, %v2528
      %v2539 = vsel %vm2531, %v2528, %v2530
      %v2541 = vsel %vm732, %v2512, 0
      %v2544 = vsel %vm736, %v2532, 0
      %v2547 = vsel %vm736, %v2533, 0
      %v2550 = vsel %vm736, %v2534, 0
      %v2553 = vsel %vm736, %v2535, 0
      %v2556 = vsel %vm736, %v2536, 0
      %v2559 = vsel %vm736, %v2537, 0
      %v2562 = vsel %vm736, %v2538, 0
      %v2565 = vsel %vm736, %v2539, 0
      %2567 = vmatprep.subr.bf16.mxu0 %v2547
      %2568 = vmatpush1.bf16.msra.mxu0 %v2544
      %2569 = vmatprep.subr.bf16.mxu0 0
      %2570 = vmatpush1.bf16.msra.mxu0 0
      %2571 = vmatprep.subr.bf16.mxu0 0
      %2572 = vmatpush1.bf16.msra.mxu0 0
      %2573 = vmatprep.subr.bf16.mxu0 0
      %2574 = vmatpush1.bf16.msra.mxu0 0
      %2575 = vmatprep.subr.bf16.mxu0 0
      %2576 = vmatpush1.bf16.msra.mxu0 0
      %2577 = vmatprep.subr.bf16.mxu0 0
      %2578 = vmatpush1.bf16.msra.mxu0 0
      %2579 = vmatprep.subr.bf16.mxu0 0
      %2580 = vmatpush1.bf16.msra.mxu0 0
      %2581 = vmatprep.subr.bf16.mxu0 0
      %2582 = vmatpush1.bf16.msra.mxu0 0
      %2583 = vmatprep.subr.bf16.mxu0 0
      %2584 = vmatpush1.bf16.msra.mxu0 0
      %2585 = vmatprep.subr.bf16.mxu0 0
      %2586 = vmatpush1.bf16.msra.mxu0 0
      %2587 = vmatprep.subr.bf16.mxu0 0
      %2588 = vmatpush1.bf16.msra.mxu0 0
      %2589 = vmatprep.subr.bf16.mxu0 0
      %2590 = vmatpush1.bf16.msra.mxu0 0
      %2591 = vmatprep.subr.bf16.mxu0 0
      %2592 = vmatpush1.bf16.msra.mxu0 0
      %2593 = vmatprep.subr.bf16.mxu0 0
      %2594 = vmatpush1.bf16.msra.mxu0 0
      %2595 = vmatprep.subr.bf16.mxu0 0
      %2596 = vmatpush1.bf16.msra.mxu0 0
      %2597 = vmatprep.subr.bf16.mxu0 0
      %2598 = vmatpush1.bf16.msra.mxu0 0
      %2599 = vmatprep.mubr.bf16.mxu0 0
      %2600 = vmatmul.mubr.bf16.gmra.mrb[0].mxu0 %v2541
      %v2601 = vpop.f32.mrb[0].mxu0
      %v2602 = vadd.f32 0.0, %v2601
      %v2603 = vpop.f32.mrb[0].mxu0
      %v2604 = vadd.f32 0.0, %v2603
      %v2605 = vpop.f32.mrb[0].mxu0
      %v2606 = vpop.f32.mrb[0].mxu0
      %2607 = vdwg.mxu0
      %2608 = vmatprep.subr.bf16.mxu0 %v2553
      %2609 = vmatpush1.bf16.msra.mxu0 %v2550
      %2610 = vmatprep.subr.bf16.mxu0 0
      %2611 = vmatpush1.bf16.msra.mxu0 0
      %2612 = vmatprep.subr.bf16.mxu0 0
      %2613 = vmatpush1.bf16.msra.mxu0 0
      %2614 = vmatprep.subr.bf16.mxu0 0
      %2615 = vmatpush1.bf16.msra.mxu0 0
      %2616 = vmatprep.subr.bf16.mxu0 0
      %2617 = vmatpush1.bf16.msra.mxu0 0
      %2618 = vmatprep.subr.bf16.mxu0 0
      %2619 = vmatpush1.bf16.msra.mxu0 0
      %2620 = vmatprep.subr.bf16.mxu0 0
      %2621 = vmatpush1.bf16.msra.mxu0 0
      %2622 = vmatprep.subr.bf16.mxu0 0
      %2623 = vmatpush1.bf16.msra.mxu0 0
      %2624 = vmatprep.subr.bf16.mxu0 0
      %2625 = vmatpush1.bf16.msra.mxu0 0
      %2626 = vmatprep.subr.bf16.mxu0 0
      %2627 = vmatpush1.bf16.msra.mxu0 0
      %2628 = vmatprep.subr.bf16.mxu0 0
      %2629 = vmatpush1.bf16.msra.mxu0 0
      %2630 = vmatprep.subr.bf16.mxu0 0
      %2631 = vmatpush1.bf16.msra.mxu0 0
      %2632 = vmatprep.subr.bf16.mxu0 0
      %2633 = vmatpush1.bf16.msra.mxu0 0
      %2634 = vmatprep.subr.bf16.mxu0 0
      %2635 = vmatpush1.bf16.msra.mxu0 0
      %2636 = vmatprep.subr.bf16.mxu0 0
      %2637 = vmatpush1.bf16.msra.mxu0 0
      %2638 = vmatprep.subr.bf16.mxu0 0
      %2639 = vmatpush1.bf16.msra.mxu0 0
      %2640 = vmatprep.mubr.bf16.mxu0 0
      %2641 = vmatmul.mubr.bf16.gmra.mrb[0].mxu0 %v2541
      %v2642 = vpop.f32.mrb[0].mxu0
      %v2643 = vadd.f32 0.0, %v2642
      %v2644 = vpop.f32.mrb[0].mxu0
      %v2645 = vadd.f32 0.0, %v2644
      %v2646 = vpop.f32.mrb[0].mxu0
      %v2647 = vpop.f32.mrb[0].mxu0
      %2648 = vdwg.mxu0
      %2649 = vmatprep.subr.bf16.mxu0 %v2559
      %2650 = vmatpush1.bf16.msra.mxu0 %v2556
      %2651 = vmatprep.subr.bf16.mxu0 0
      %2652 = vmatpush1.bf16.msra.mxu0 0
      %2653 = vmatprep.subr.bf16.mxu0 0
      %2654 = vmatpush1.bf16.msra.mxu0 0
      %2655 = vmatprep.subr.bf16.mxu0 0
      %2656 = vmatpush1.bf16.msra.mxu0 0
      %2657 = vmatprep.subr.bf16.mxu0 0
      %2658 = vmatpush1.bf16.msra.mxu0 0
      %2659 = vmatprep.subr.bf16.mxu0 0
      %2660 = vmatpush1.bf16.msra.mxu0 0
      %2661 = vmatprep.subr.bf16.mxu0 0
      %2662 = vmatpush1.bf16.msra.mxu0 0
      %2663 = vmatprep.subr.bf16.mxu0 0
      %2664 = vmatpush1.bf16.msra.mxu0 0
      %2665 = vmatprep.subr.bf16.mxu0 0
      %2666 = vmatpush1.bf16.msra.mxu0 0
      %2667 = vmatprep.subr.bf16.mxu0 0
      %2668 = vmatpush1.bf16.msra.mxu0 0
      %2669 = vmatprep.subr.bf16.mxu0 0
      %2670 = vmatpush1.bf16.msra.mxu0 0
      %2671 = vmatprep.subr.bf16.mxu0 0
      %2672 = vmatpush1.bf16.msra.mxu0 0
      %2673 = vmatprep.subr.bf16.mxu0 0
      %2674 = vmatpush1.bf16.msra.mxu0 0
      %2675 = vmatprep.subr.bf16.mxu0 0
      %2676 = vmatpush1.bf16.msra.mxu0 0
      %2677 = vmatprep.subr.bf16.mxu0 0
      %2678 = vmatpush1.bf16.msra.mxu0 0
      %2679 = vmatprep.subr.bf16.mxu0 0
      %2680 = vmatpush1.bf16.msra.mxu0 0
      %2681 = vmatprep.mubr.bf16.mxu0 0
      %2682 = vmatmul.mubr.bf16.gmra.mrb[0].mxu0 %v2541
      %v2683 = vpop.f32.mrb[0].mxu0
      %v2684 = vadd.f32 0.0, %v2683
      %v2685 = vpop.f32.mrb[0].mxu0
      %v2686 = vadd.f32 0.0, %v2685
      %v2687 = vpop.f32.mrb[0].mxu0
      %v2688 = vpop.f32.mrb[0].mxu0
      %2689 = vdwg.mxu0
      %2690 = vmatprep.subr.bf16.mxu0 %v2565
      %2691 = vmatpush1.bf16.msra.mxu0 %v2562
      %2692 = vmatprep.subr.bf16.mxu0 0
      %2693 = vmatpush1.bf16.msra.mxu0 0
      %2694 = vmatprep.subr.bf16.mxu0 0
      %2695 = vmatpush1.bf16.msra.mxu0 0
      %2696 = vmatprep.subr.bf16.mxu0 0
      %2697 = vmatpush1.bf16.msra.mxu0 0
      %2698 = vmatprep.subr.bf16.mxu0 0
      %2699 = vmatpush1.bf16.msra.mxu0 0
      %2700 = vmatprep.subr.bf16.mxu0 0
      %2701 = vmatpush1.bf16.msra.mxu0 0
      %2702 = vmatprep.subr.bf16.mxu0 0
      %2703 = vmatpush1.bf16.msra.mxu0 0
      %2704 = vmatprep.subr.bf16.mxu0 0
      %2705 = vmatpush1.bf16.msra.mxu0 0
      %2706 = vmatprep.subr.bf16.mxu0 0
      %2707 = vmatpush1.bf16.msra.mxu0 0
      %2708 = vmatprep.subr.bf16.mxu0 0
      %2709 = vmatpush1.bf16.msra.mxu0 0
      %2710 = vmatprep.subr.bf16.mxu0 0
      %2711 = vmatpush1.bf16.msra.mxu0 0
      %2712 = vmatprep.subr.bf16.mxu0 0
      %2713 = vmatpush1.bf16.msra.mxu0 0
      %2714 = vmatprep.subr.bf16.mxu0 0
      %2715 = vmatpush1.bf16.msra.mxu0 0
      %2716 = vmatprep.subr.bf16.mxu0 0
      %2717 = vmatpush1.bf16.msra.mxu0 0
      %2718 = vmatprep.subr.bf16.mxu0 0
      %2719 = vmatpush1.bf16.msra.mxu0 0
      %2720 = vmatprep.subr.bf16.mxu0 0
      %2721 = vmatpush1.bf16.msra.mxu0 0
      %2722 = vmatprep.mubr.bf16.mxu0 0
      %2723 = vmatmul.mubr.bf16.gmra.mrb[0].mxu0 %v2541
      %v2724 = vpop.f32.mrb[0].mxu0
      %v2725 = vadd.f32 0.0, %v2724
      %v2726 = vpop.f32.mrb[0].mxu0
      %v2727 = vadd.f32 0.0, %v2726
      %v2728 = vpop.f32.mrb[0].mxu0
      %v2729 = vpop.f32.mrb[0].mxu0
      %2730 = vdwg.mxu0
      %v2731 = vadd.f32 %v2503, %v2602
      %v2732 = vadd.f32 %v2504, %v2604
      %v2733 = vadd.f32 %v2505, %v2643
      %v2734 = vadd.f32 %v2506, %v2645
      %v2735 = vadd.f32 %v2507, %v2684
      %v2736 = vadd.f32 %v2508, %v2686
      %v2737 = vadd.f32 %v2509, %v2725
      %v2738 = vadd.f32 %v2510, %v2727
      %s2739 = scalar_lea.vmem %s3, 36
      %v2740 = vld [vmem:[%s2739] sm:$0xf]
      %2741 = vrot.lane.b32.xlu0 %v696, 11
      %v2742 = vpop.permute.xlu0 %2741
      %2743 = vrot.lane.b32.xlu0 %v697, 11
      %v2744 = vpop.permute.xlu0 %2743
      %2745 = vrot.lane.b32.xlu0 %v698, 11
      %v2746 = vpop.permute.xlu0 %2745
      %2747 = vrot.lane.b32.xlu0 %v699, 11
      %v2748 = vpop.permute.xlu0 %2747
      %2749 = vrot.lane.b32.xlu0 %v700, 11
      %v2750 = vpop.permute.xlu0 %2749
      %2751 = vrot.lane.b32.xlu0 %v701, 11
      %v2752 = vpop.permute.xlu0 %2751
      %2753 = vrot.lane.b32.xlu0 %v702, 11
      %v2754 = vpop.permute.xlu0 %2753
      %2755 = vrot.lane.b32.xlu0 %v703, 11
      %v2756 = vpop.permute.xlu0 %2755
      %2757 = vrot.lane.b32.xlu0 %v704, 11
      %v2758 = vpop.permute.xlu0 %2757
      %vm2759 = vcmask 89088
      %v2760 = vsel %vm2759, %v2742, %v2744
      %v2761 = vsel %vm2759, %v2744, %v2746
      %v2762 = vsel %vm2759, %v2746, %v2748
      %v2763 = vsel %vm2759, %v2748, %v2750
      %v2764 = vsel %vm2759, %v2750, %v2752
      %v2765 = vsel %vm2759, %v2752, %v2754
      %v2766 = vsel %vm2759, %v2754, %v2756
      %v2767 = vsel %vm2759, %v2756, %v2758
      %v2769 = vsel %vm732, %v2740, 0
      %v2772 = vsel %vm736, %v2760, 0
      %v2775 = vsel %vm736, %v2761, 0
      %v2778 = vsel %vm736, %v2762, 0
      %v2781 = vsel %vm736, %v2763, 0
      %v2784 = vsel %vm736, %v2764, 0
      %v2787 = vsel %vm736, %v2765, 0
      %v2790 = vsel %vm736, %v2766, 0
      %v2793 = vsel %vm736, %v2767, 0
      %2795 = vmatprep.subr.bf16.mxu0 %v2775
      %2796 = vmatpush1.bf16.msra.mxu0 %v2772
      %2797 = vmatprep.subr.bf16.mxu0 0
      %2798 = vmatpush1.bf16.msra.mxu0 0
      %2799 = vmatprep.subr.bf16.mxu0 0
      %2800 = vmatpush1.bf16.msra.mxu0 0
      %2801 = vmatprep.subr.bf16.mxu0 0
      %2802 = vmatpush1.bf16.msra.mxu0 0
      %2803 = vmatprep.subr.bf16.mxu0 0
      %2804 = vmatpush1.bf16.msra.mxu0 0
      %2805 = vmatprep.subr.bf16.mxu0 0
      %2806 = vmatpush1.bf16.msra.mxu0 0
      %2807 = vmatprep.subr.bf16.mxu0 0
      %2808 = vmatpush1.bf16.msra.mxu0 0
      %2809 = vmatprep.subr.bf16.mxu0 0
      %2810 = vmatpush1.bf16.msra.mxu0 0
      %2811 = vmatprep.subr.bf16.mxu0 0
      %2812 = vmatpush1.bf16.msra.mxu0 0
      %2813 = vmatprep.subr.bf16.mxu0 0
      %2814 = vmatpush1.bf16.msra.mxu0 0
      %2815 = vmatprep.subr.bf16.mxu0 0
      %2816 = vmatpush1.bf16.msra.mxu0 0
      %2817 = vmatprep.subr.bf16.mxu0 0
      %2818 = vmatpush1.bf16.msra.mxu0 0
      %2819 = vmatprep.subr.bf16.mxu0 0
      %2820 = vmatpush1.bf16.msra.mxu0 0
      %2821 = vmatprep.subr.bf16.mxu0 0
      %2822 = vmatpush1.bf16.msra.mxu0 0
      %2823 = vmatprep.subr.bf16.mxu0 0
      %2824 = vmatpush1.bf16.msra.mxu0 0
      %2825 = vmatprep.subr.bf16.mxu0 0
      %2826 = vmatpush1.bf16.msra.mxu0 0
      %2827 = vmatprep.mubr.bf16.mxu0 0
      %2828 = vmatmul.mubr.bf16.gmra.mrb[0].mxu0 %v2769
      %v2829 = vpop.f32.mrb[0].mxu0
      %v2830 = vadd.f32 0.0, %v2829
      %v2831 = vpop.f32.mrb[0].mxu0
      %v2832 = vadd.f32 0.0, %v2831
      %v2833 = vpop.f32.mrb[0].mxu0
      %v2834 = vpop.f32.mrb[0].mxu0
      %2835 = vdwg.mxu0
      %2836 = vmatprep.subr.bf16.mxu0 %v2781
      %2837 = vmatpush1.bf16.msra.mxu0 %v2778
      %2838 = vmatprep.subr.bf16.mxu0 0
      %2839 = vmatpush1.bf16.msra.mxu0 0
      %2840 = vmatprep.subr.bf16.mxu0 0
      %2841 = vmatpush1.bf16.msra.mxu0 0
      %2842 = vmatprep.subr.bf16.mxu0 0
      %2843 = vmatpush1.bf16.msra.mxu0 0
      %2844 = vmatprep.subr.bf16.mxu0 0
      %2845 = vmatpush1.bf16.msra.mxu0 0
      %2846 = vmatprep.subr.bf16.mxu0 0
      %2847 = vmatpush1.bf16.msra.mxu0 0
      %2848 = vmatprep.subr.bf16.mxu0 0
      %2849 = vmatpush1.bf16.msra.mxu0 0
      %2850 = vmatprep.subr.bf16.mxu0 0
      %2851 = vmatpush1.bf16.msra.mxu0 0
      %2852 = vmatprep.subr.bf16.mxu0 0
      %2853 = vmatpush1.bf16.msra.mxu0 0
      %2854 = vmatprep.subr.bf16.mxu0 0
      %2855 = vmatpush1.bf16.msra.mxu0 0
      %2856 = vmatprep.subr.bf16.mxu0 0
      %2857 = vmatpush1.bf16.msra.mxu0 0
      %2858 = vmatprep.subr.bf16.mxu0 0
      %2859 = vmatpush1.bf16.msra.mxu0 0
      %2860 = vmatprep.subr.bf16.mxu0 0
      %2861 = vmatpush1.bf16.msra.mxu0 0
      %2862 = vmatprep.subr.bf16.mxu0 0
      %2863 = vmatpush1.bf16.msra.mxu0 0
      %2864 = vmatprep.subr.bf16.mxu0 0
      %2865 = vmatpush1.bf16.msra.mxu0 0
      %2866 = vmatprep.subr.bf16.mxu0 0
      %2867 = vmatpush1.bf16.msra.mxu0 0
      %2868 = vmatprep.mubr.bf16.mxu0 0
      %2869 = vmatmul.mubr.bf16.gmra.mrb[0].mxu0 %v2769
      %v2870 = vpop.f32.mrb[0].mxu0
      %v2871 = vadd.f32 0.0, %v2870
      %v2872 = vpop.f32.mrb[0].mxu0
      %v2873 = vadd.f32 0.0, %v2872
      %v2874 = vpop.f32.mrb[0].mxu0
      %v2875 = vpop.f32.mrb[0].mxu0
      %2876 = vdwg.mxu0
      %2877 = vmatprep.subr.bf16.mxu0 %v2787
      %2878 = vmatpush1.bf16.msra.mxu0 %v2784
      %2879 = vmatprep.subr.bf16.mxu0 0
      %2880 = vmatpush1.bf16.msra.mxu0 0
      %2881 = vmatprep.subr.bf16.mxu0 0
      %2882 = vmatpush1.bf16.msra.mxu0 0
      %2883 = vmatprep.subr.bf16.mxu0 0
      %2884 = vmatpush1.bf16.msra.mxu0 0
      %2885 = vmatprep.subr.bf16.mxu0 0
      %2886 = vmatpush1.bf16.msra.mxu0 0
      %2887 = vmatprep.subr.bf16.mxu0 0
      %2888 = vmatpush1.bf16.msra.mxu0 0
      %2889 = vmatprep.subr.bf16.mxu0 0
      %2890 = vmatpush1.bf16.msra.mxu0 0
      %2891 = vmatprep.subr.bf16.mxu0 0
      %2892 = vmatpush1.bf16.msra.mxu0 0
      %2893 = vmatprep.subr.bf16.mxu0 0
      %2894 = vmatpush1.bf16.msra.mxu0 0
      %2895 = vmatprep.subr.bf16.mxu0 0
      %2896 = vmatpush1.bf16.msra.mxu0 0
      %2897 = vmatprep.subr.bf16.mxu0 0
      %2898 = vmatpush1.bf16.msra.mxu0 0
      %2899 = vmatprep.subr.bf16.mxu0 0
      %2900 = vmatpush1.bf16.msra.mxu0 0
      %2901 = vmatprep.subr.bf16.mxu0 0
      %2902 = vmatpush1.bf16.msra.mxu0 0
      %2903 = vmatprep.subr.bf16.mxu0 0
      %2904 = vmatpush1.bf16.msra.mxu0 0
      %2905 = vmatprep.subr.bf16.mxu0 0
      %2906 = vmatpush1.bf16.msra.mxu0 0
      %2907 = vmatprep.subr.bf16.mxu0 0
      %2908 = vmatpush1.bf16.msra.mxu0 0
      %2909 = vmatprep.mubr.bf16.mxu0 0
      %2910 = vmatmul.mubr.bf16.gmra.mrb[0].mxu0 %v2769
      %v2911 = vpop.f32.mrb[0].mxu0
      %v2912 = vadd.f32 0.0, %v2911
      %v2913 = vpop.f32.mrb[0].mxu0
      %v2914 = vadd.f32 0.0, %v2913
      %v2915 = vpop.f32.mrb[0].mxu0
      %v2916 = vpop.f32.mrb[0].mxu0
      %2917 = vdwg.mxu0
      %2918 = vmatprep.subr.bf16.mxu0 %v2793
      %2919 = vmatpush1.bf16.msra.mxu0 %v2790
      %2920 = vmatprep.subr.bf16.mxu0 0
      %2921 = vmatpush1.bf16.msra.mxu0 0
      %2922 = vmatprep.subr.bf16.mxu0 0
      %2923 = vmatpush1.bf16.msra.mxu0 0
      %2924 = vmatprep.subr.bf16.mxu0 0
      %2925 = vmatpush1.bf16.msra.mxu0 0
      %2926 = vmatprep.subr.bf16.mxu0 0
      %2927 = vmatpush1.bf16.msra.mxu0 0
      %2928 = vmatprep.subr.bf16.mxu0 0
      %2929 = vmatpush1.bf16.msra.mxu0 0
      %2930 = vmatprep.subr.bf16.mxu0 0
      %2931 = vmatpush1.bf16.msra.mxu0 0
      %2932 = vmatprep.subr.bf16.mxu0 0
      %2933 = vmatpush1.bf16.msra.mxu0 0
      %2934 = vmatprep.subr.bf16.mxu0 0
      %2935 = vmatpush1.bf16.msra.mxu0 0
      %2936 = vmatprep.subr.bf16.mxu0 0
      %2937 = vmatpush1.bf16.msra.mxu0 0
      %2938 = vmatprep.subr.bf16.mxu0 0
      %2939 = vmatpush1.bf16.msra.mxu0 0
      %2940 = vmatprep.subr.bf16.mxu0 0
      %2941 = vmatpush1.bf16.msra.mxu0 0
      %2942 = vmatprep.subr.bf16.mxu0 0
      %2943 = vmatpush1.bf16.msra.mxu0 0
      %2944 = vmatprep.subr.bf16.mxu0 0
      %2945 = vmatpush1.bf16.msra.mxu0 0
      %2946 = vmatprep.subr.bf16.mxu0 0
      %2947 = vmatpush1.bf16.msra.mxu0 0
      %2948 = vmatprep.subr.bf16.mxu0 0
      %2949 = vmatpush1.bf16.msra.mxu0 0
      %2950 = vmatprep.mubr.bf16.mxu0 0
      %2951 = vmatmul.mubr.bf16.gmra.mrb[0].mxu0 %v2769
      %v2952 = vpop.f32.mrb[0].mxu0
      %v2953 = vadd.f32 0.0, %v2952
      %v2954 = vpop.f32.mrb[0].mxu0
      %v2955 = vadd.f32 0.0, %v2954
      %v2956 = vpop.f32.mrb[0].mxu0
      %v2957 = vpop.f32.mrb[0].mxu0
      %2958 = vdwg.mxu0
      %v2959 = vadd.f32 %v2731, %v2830
      %v2960 = vadd.f32 %v2732, %v2832
      %v2961 = vadd.f32 %v2733, %v2871
      %v2962 = vadd.f32 %v2734, %v2873
      %v2963 = vadd.f32 %v2735, %v2912
      %v2964 = vadd.f32 %v2736, %v2914
      %v2965 = vadd.f32 %v2737, %v2953
      %v2966 = vadd.f32 %v2738, %v2955
      %s2967 = scalar_lea.vmem %s3, 40
      %v2968 = vld [vmem:[%s2967] sm:$0xf]
      %2969 = vrot.lane.b32.xlu0 %v696, 10
      %v2970 = vpop.permute.xlu0 %2969
      %2971 = vrot.lane.b32.xlu0 %v697, 10
      %v2972 = vpop.permute.xlu0 %2971
      %2973 = vrot.lane.b32.xlu0 %v698, 10
      %v2974 = vpop.permute.xlu0 %2973
      %2975 = vrot.lane.b32.xlu0 %v699, 10
      %v2976 = vpop.permute.xlu0 %2975
      %2977 = vrot.lane.b32.xlu0 %v700, 10
      %v2978 = vpop.permute.xlu0 %2977
      %2979 = vrot.lane.b32.xlu0 %v701, 10
      %v2980 = vpop.permute.xlu0 %2979
      %2981 = vrot.lane.b32.xlu0 %v702, 10
      %v2982 = vpop.permute.xlu0 %2981
      %2983 = vrot.lane.b32.xlu0 %v703, 10
      %v2984 = vpop.permute.xlu0 %2983
      %2985 = vrot.lane.b32.xlu0 %v704, 10
      %v2986 = vpop.permute.xlu0 %2985
      %vm2987 = vcmask 80896
      %v2988 = vsel %vm2987, %v2970, %v2972
      %v2989 = vsel %vm2987, %v2972, %v2974
      %v2990 = vsel %vm2987, %v2974, %v2976
      %v2991 = vsel %vm2987, %v2976, %v2978
      %v2992 = vsel %vm2987, %v2978, %v2980
      %v2993 = vsel %vm2987, %v2980, %v2982
      %v2994 = vsel %vm2987, %v2982, %v2984
      %v2995 = vsel %vm2987, %v2984, %v2986
      %v2997 = vsel %vm732, %v2968, 0
      %v3000 = vsel %vm736, %v2988, 0
      %v3003 = vsel %vm736, %v2989, 0
      %v3006 = vsel %vm736, %v2990, 0
      %v3009 = vsel %vm736, %v2991, 0
      %v3012 = vsel %vm736, %v2992, 0
      %v3015 = vsel %vm736, %v2993, 0
      %v3018 = vsel %vm736, %v2994, 0
      %v3021 = vsel %vm736, %v2995, 0
      %3023 = vmatprep.subr.bf16.mxu0 %v3003
      %3024 = vmatpush1.bf16.msra.mxu0 %v3000
      %3025 = vmatprep.subr.bf16.mxu0 0
      %3026 = vmatpush1.bf16.msra.mxu0 0
      %3027 = vmatprep.subr.bf16.mxu0 0
      %3028 = vmatpush1.bf16.msra.mxu0 0
      %3029 = vmatprep.subr.bf16.mxu0 0
      %3030 = vmatpush1.bf16.msra.mxu0 0
      %3031 = vmatprep.subr.bf16.mxu0 0
      %3032 = vmatpush1.bf16.msra.mxu0 0
      %3033 = vmatprep.subr.bf16.mxu0 0
      %3034 = vmatpush1.bf16.msra.mxu0 0
      %3035 = vmatprep.subr.bf16.mxu0 0
      %3036 = vmatpush1.bf16.msra.mxu0 0
      %3037 = vmatprep.subr.bf16.mxu0 0
      %3038 = vmatpush1.bf16.msra.mxu0 0
      %3039 = vmatprep.subr.bf16.mxu0 0
      %3040 = vmatpush1.bf16.msra.mxu0 0
      %3041 = vmatprep.subr.bf16.mxu0 0
      %3042 = vmatpush1.bf16.msra.mxu0 0
      %3043 = vmatprep.subr.bf16.mxu0 0
      %3044 = vmatpush1.bf16.msra.mxu0 0
      %3045 = vmatprep.subr.bf16.mxu0 0
      %3046 = vmatpush1.bf16.msra.mxu0 0
      %3047 = vmatprep.subr.bf16.mxu0 0
      %3048 = vmatpush1.bf16.msra.mxu0 0
      %3049 = vmatprep.subr.bf16.mxu0 0
      %3050 = vmatpush1.bf16.msra.mxu0 0
      %3051 = vmatprep.subr.bf16.mxu0 0
      %3052 = vmatpush1.bf16.msra.mxu0 0
      %3053 = vmatprep.subr.bf16.mxu0 0
      %3054 = vmatpush1.bf16.msra.mxu0 0
      %3055 = vmatprep.mubr.bf16.mxu0 0
      %3056 = vmatmul.mubr.bf16.gmra.mrb[0].mxu0 %v2997
      %v3057 = vpop.f32.mrb[0].mxu0
      %v3058 = vadd.f32 0.0, %v3057
      %v3059 = vpop.f32.mrb[0].mxu0
      %v3060 = vadd.f32 0.0, %v3059
      %v3061 = vpop.f32.mrb[0].mxu0
      %v3062 = vpop.f32.mrb[0].mxu0
      %3063 = vdwg.mxu0
      %3064 = vmatprep.subr.bf16.mxu0 %v3009
      %3065 = vmatpush1.bf16.msra.mxu0 %v3006
      %3066 = vmatprep.subr.bf16.mxu0 0
      %3067 = vmatpush1.bf16.msra.mxu0 0
      %3068 = vmatprep.subr.bf16.mxu0 0
      %3069 = vmatpush1.bf16.msra.mxu0 0
      %3070 = vmatprep.subr.bf16.mxu0 0
      %3071 = vmatpush1.bf16.msra.mxu0 0
      %3072 = vmatprep.subr.bf16.mxu0 0
      %3073 = vmatpush1.bf16.msra.mxu0 0
      %3074 = vmatprep.subr.bf16.mxu0 0
      %3075 = vmatpush1.bf16.msra.mxu0 0
      %3076 = vmatprep.subr.bf16.mxu0 0
      %3077 = vmatpush1.bf16.msra.mxu0 0
      %3078 = vmatprep.subr.bf16.mxu0 0
      %3079 = vmatpush1.bf16.msra.mxu0 0
      %3080 = vmatprep.subr.bf16.mxu0 0
      %3081 = vmatpush1.bf16.msra.mxu0 0
      %3082 = vmatprep.subr.bf16.mxu0 0
      %3083 = vmatpush1.bf16.msra.mxu0 0
      %3084 = vmatprep.subr.bf16.mxu0 0
      %3085 = vmatpush1.bf16.msra.mxu0 0
      %3086 = vmatprep.subr.bf16.mxu0 0
      %3087 = vmatpush1.bf16.msra.mxu0 0
      %3088 = vmatprep.subr.bf16.mxu0 0
      %3089 = vmatpush1.bf16.msra.mxu0 0
      %3090 = vmatprep.subr.bf16.mxu0 0
      %3091 = vmatpush1.bf16.msra.mxu0 0
      %3092 = vmatprep.subr.bf16.mxu0 0
      %3093 = vmatpush1.bf16.msra.mxu0 0
      %3094 = vmatprep.subr.bf16.mxu0 0
      %3095 = vmatpush1.bf16.msra.mxu0 0
      %3096 = vmatprep.mubr.bf16.mxu0 0
      %3097 = vmatmul.mubr.bf16.gmra.mrb[0].mxu0 %v2997
      %v3098 = vpop.f32.mrb[0].mxu0
      %v3099 = vadd.f32 0.0, %v3098
      %v3100 = vpop.f32.mrb[0].mxu0
      %v3101 = vadd.f32 0.0, %v3100
      %v3102 = vpop.f32.mrb[0].mxu0
      %v3103 = vpop.f32.mrb[0].mxu0
      %3104 = vdwg.mxu0
      %3105 = vmatprep.subr.bf16.mxu0 %v3015
      %3106 = vmatpush1.bf16.msra.mxu0 %v3012
      %3107 = vmatprep.subr.bf16.mxu0 0
      %3108 = vmatpush1.bf16.msra.mxu0 0
      %3109 = vmatprep.subr.bf16.mxu0 0
      %3110 = vmatpush1.bf16.msra.mxu0 0
      %3111 = vmatprep.subr.bf16.mxu0 0
      %3112 = vmatpush1.bf16.msra.mxu0 0
      %3113 = vmatprep.subr.bf16.mxu0 0
      %3114 = vmatpush1.bf16.msra.mxu0 0
      %3115 = vmatprep.subr.bf16.mxu0 0
      %3116 = vmatpush1.bf16.msra.mxu0 0
      %3117 = vmatprep.subr.bf16.mxu0 0
      %3118 = vmatpush1.bf16.msra.mxu0 0
      %3119 = vmatprep.subr.bf16.mxu0 0
      %3120 = vmatpush1.bf16.msra.mxu0 0
      %3121 = vmatprep.subr.bf16.mxu0 0
      %3122 = vmatpush1.bf16.msra.mxu0 0
      %3123 = vmatprep.subr.bf16.mxu0 0
      %3124 = vmatpush1.bf16.msra.mxu0 0
      %3125 = vmatprep.subr.bf16.mxu0 0
      %3126 = vmatpush1.bf16.msra.mxu0 0
      %3127 = vmatprep.subr.bf16.mxu0 0
      %3128 = vmatpush1.bf16.msra.mxu0 0
      %3129 = vmatprep.subr.bf16.mxu0 0
      %3130 = vmatpush1.bf16.msra.mxu0 0
      %3131 = vmatprep.subr.bf16.mxu0 0
      %3132 = vmatpush1.bf16.msra.mxu0 0
      %3133 = vmatprep.subr.bf16.mxu0 0
      %3134 = vmatpush1.bf16.msra.mxu0 0
      %3135 = vmatprep.subr.bf16.mxu0 0
      %3136 = vmatpush1.bf16.msra.mxu0 0
      %3137 = vmatprep.mubr.bf16.mxu0 0
      %3138 = vmatmul.mubr.bf16.gmra.mrb[0].mxu0 %v2997
      %v3139 = vpop.f32.mrb[0].mxu0
      %v3140 = vadd.f32 0.0, %v3139
      %v3141 = vpop.f32.mrb[0].mxu0
      %v3142 = vadd.f32 0.0, %v3141
      %v3143 = vpop.f32.mrb[0].mxu0
      %v3144 = vpop.f32.mrb[0].mxu0
      %3145 = vdwg.mxu0
      %3146 = vmatprep.subr.bf16.mxu0 %v3021
      %3147 = vmatpush1.bf16.msra.mxu0 %v3018
      %3148 = vmatprep.subr.bf16.mxu0 0
      %3149 = vmatpush1.bf16.msra.mxu0 0
      %3150 = vmatprep.subr.bf16.mxu0 0
      %3151 = vmatpush1.bf16.msra.mxu0 0
      %3152 = vmatprep.subr.bf16.mxu0 0
      %3153 = vmatpush1.bf16.msra.mxu0 0
      %3154 = vmatprep.subr.bf16.mxu0 0
      %3155 = vmatpush1.bf16.msra.mxu0 0
      %3156 = vmatprep.subr.bf16.mxu0 0
      %3157 = vmatpush1.bf16.msra.mxu0 0
      %3158 = vmatprep.subr.bf16.mxu0 0
      %3159 = vmatpush1.bf16.msra.mxu0 0
      %3160 = vmatprep.subr.bf16.mxu0 0
      %3161 = vmatpush1.bf16.msra.mxu0 0
      %3162 = vmatprep.subr.bf16.mxu0 0
      %3163 = vmatpush1.bf16.msra.mxu0 0
      %3164 = vmatprep.subr.bf16.mxu0 0
      %3165 = vmatpush1.bf16.msra.mxu0 0
      %3166 = vmatprep.subr.bf16.mxu0 0
      %3167 = vmatpush1.bf16.msra.mxu0 0
      %3168 = vmatprep.subr.bf16.mxu0 0
      %3169 = vmatpush1.bf16.msra.mxu0 0
      %3170 = vmatprep.subr.bf16.mxu0 0
      %3171 = vmatpush1.bf16.msra.mxu0 0
      %3172 = vmatprep.subr.bf16.mxu0 0
      %3173 = vmatpush1.bf16.msra.mxu0 0
      %3174 = vmatprep.subr.bf16.mxu0 0
      %3175 = vmatpush1.bf16.msra.mxu0 0
      %3176 = vmatprep.subr.bf16.mxu0 0
      %3177 = vmatpush1.bf16.msra.mxu0 0
      %3178 = vmatprep.mubr.bf16.mxu0 0
      %3179 = vmatmul.mubr.bf16.gmra.mrb[0].mxu0 %v2997
      %v3180 = vpop.f32.mrb[0].mxu0
      %v3181 = vadd.f32 0.0, %v3180
      %v3182 = vpop.f32.mrb[0].mxu0
      %v3183 = vadd.f32 0.0, %v3182
      %v3184 = vpop.f32.mrb[0].mxu0
      %v3185 = vpop.f32.mrb[0].mxu0
      %3186 = vdwg.mxu0
      %v3187 = vadd.f32 %v2959, %v3058
      %v3188 = vadd.f32 %v2960, %v3060
      %v3189 = vadd.f32 %v2961, %v3099
      %v3190 = vadd.f32 %v2962, %v3101
      %v3191 = vadd.f32 %v2963, %v3140
      %v3192 = vadd.f32 %v2964, %v3142
      %v3193 = vadd.f32 %v2965, %v3181
      %v3194 = vadd.f32 %v2966, %v3183
      %s3195 = scalar_lea.vmem %s3, 44
      %v3196 = vld [vmem:[%s3195] sm:$0xf]
      %3197 = vrot.lane.b32.xlu0 %v696, 9
      %v3198 = vpop.permute.xlu0 %3197
      %3199 = vrot.lane.b32.xlu0 %v697, 9
      %v3200 = vpop.permute.xlu0 %3199
      %3201 = vrot.lane.b32.xlu0 %v698, 9
      %v3202 = vpop.permute.xlu0 %3201
      %3203 = vrot.lane.b32.xlu0 %v699, 9
      %v3204 = vpop.permute.xlu0 %3203
      %3205 = vrot.lane.b32.xlu0 %v700, 9
      %v3206 = vpop.permute.xlu0 %3205
      %3207 = vrot.lane.b32.xlu0 %v701, 9
      %v3208 = vpop.permute.xlu0 %3207
      %3209 = vrot.lane.b32.xlu0 %v702, 9
      %v3210 = vpop.permute.xlu0 %3209
      %3211 = vrot.lane.b32.xlu0 %v703, 9
      %v3212 = vpop.permute.xlu0 %3211
      %3213 = vrot.lane.b32.xlu0 %v704, 9
      %v3214 = vpop.permute.xlu0 %3213
      %vm3215 = vcmask 72704
      %v3216 = vsel %vm3215, %v3198, %v3200
      %v3217 = vsel %vm3215, %v3200, %v3202
      %v3218 = vsel %vm3215, %v3202, %v3204
      %v3219 = vsel %vm3215, %v3204, %v3206
      %v3220 = vsel %vm3215, %v3206, %v3208
      %v3221 = vsel %vm3215, %v3208, %v3210
      %v3222 = vsel %vm3215, %v3210, %v3212
      %v3223 = vsel %vm3215, %v3212, %v3214
      %v3225 = vsel %vm732, %v3196, 0
      %v3228 = vsel %vm736, %v3216, 0
      %v3231 = vsel %vm736, %v3217, 0
      %v3234 = vsel %vm736, %v3218, 0
      %v3237 = vsel %vm736, %v3219, 0
      %v3240 = vsel %vm736, %v3220, 0
      %v3243 = vsel %vm736, %v3221, 0
      %v3246 = vsel %vm736, %v3222, 0
      %v3249 = vsel %vm736, %v3223, 0
      %3251 = vmatprep.subr.bf16.mxu0 %v3231
      %3252 = vmatpush1.bf16.msra.mxu0 %v3228
      %3253 = vmatprep.subr.bf16.mxu0 0
      %3254 = vmatpush1.bf16.msra.mxu0 0
      %3255 = vmatprep.subr.bf16.mxu0 0
      %3256 = vmatpush1.bf16.msra.mxu0 0
      %3257 = vmatprep.subr.bf16.mxu0 0
      %3258 = vmatpush1.bf16.msra.mxu0 0
      %3259 = vmatprep.subr.bf16.mxu0 0
      %3260 = vmatpush1.bf16.msra.mxu0 0
      %3261 = vmatprep.subr.bf16.mxu0 0
      %3262 = vmatpush1.bf16.msra.mxu0 0
      %3263 = vmatprep.subr.bf16.mxu0 0
      %3264 = vmatpush1.bf16.msra.mxu0 0
      %3265 = vmatprep.subr.bf16.mxu0 0
      %3266 = vmatpush1.bf16.msra.mxu0 0
      %3267 = vmatprep.subr.bf16.mxu0 0
      %3268 = vmatpush1.bf16.msra.mxu0 0
      %3269 = vmatprep.subr.bf16.mxu0 0
      %3270 = vmatpush1.bf16.msra.mxu0 0
      %3271 = vmatprep.subr.bf16.mxu0 0
      %3272 = vmatpush1.bf16.msra.mxu0 0
      %3273 = vmatprep.subr.bf16.mxu0 0
      %3274 = vmatpush1.bf16.msra.mxu0 0
      %3275 = vmatprep.subr.bf16.mxu0 0
      %3276 = vmatpush1.bf16.msra.mxu0 0
      %3277 = vmatprep.subr.bf16.mxu0 0
      %3278 = vmatpush1.bf16.msra.mxu0 0
      %3279 = vmatprep.subr.bf16.mxu0 0
      %3280 = vmatpush1.bf16.msra.mxu0 0
      %3281 = vmatprep.subr.bf16.mxu0 0
      %3282 = vmatpush1.bf16.msra.mxu0 0
      %3283 = vmatprep.mubr.bf16.mxu0 0
      %3284 = vmatmul.mubr.bf16.gmra.mrb[0].mxu0 %v3225
      %v3285 = vpop.f32.mrb[0].mxu0
      %v3286 = vadd.f32 0.0, %v3285
      %v3287 = vpop.f32.mrb[0].mxu0
      %v3288 = vadd.f32 0.0, %v3287
      %v3289 = vpop.f32.mrb[0].mxu0
      %v3290 = vpop.f32.mrb[0].mxu0
      %3291 = vdwg.mxu0
      %3292 = vmatprep.subr.bf16.mxu0 %v3237
      %3293 = vmatpush1.bf16.msra.mxu0 %v3234
      %3294 = vmatprep.subr.bf16.mxu0 0
      %3295 = vmatpush1.bf16.msra.mxu0 0
      %3296 = vmatprep.subr.bf16.mxu0 0
      %3297 = vmatpush1.bf16.msra.mxu0 0
      %3298 = vmatprep.subr.bf16.mxu0 0
      %3299 = vmatpush1.bf16.msra.mxu0 0
      %3300 = vmatprep.subr.bf16.mxu0 0
      %3301 = vmatpush1.bf16.msra.mxu0 0
      %3302 = vmatprep.subr.bf16.mxu0 0
      %3303 = vmatpush1.bf16.msra.mxu0 0
      %3304 = vmatprep.subr.bf16.mxu0 0
      %3305 = vmatpush1.bf16.msra.mxu0 0
      %3306 = vmatprep.subr.bf16.mxu0 0
      %3307 = vmatpush1.bf16.msra.mxu0 0
      %3308 = vmatprep.subr.bf16.mxu0 0
      %3309 = vmatpush1.bf16.msra.mxu0 0
      %3310 = vmatprep.subr.bf16.mxu0 0
      %3311 = vmatpush1.bf16.msra.mxu0 0
      %3312 = vmatprep.subr.bf16.mxu0 0
      %3313 = vmatpush1.bf16.msra.mxu0 0
      %3314 = vmatprep.subr.bf16.mxu0 0
      %3315 = vmatpush1.bf16.msra.mxu0 0
      %3316 = vmatprep.subr.bf16.mxu0 0
      %3317 = vmatpush1.bf16.msra.mxu0 0
      %3318 = vmatprep.subr.bf16.mxu0 0
      %3319 = vmatpush1.bf16.msra.mxu0 0
      %3320 = vmatprep.subr.bf16.mxu0 0
      %3321 = vmatpush1.bf16.msra.mxu0 0
      %3322 = vmatprep.subr.bf16.mxu0 0
      %3323 = vmatpush1.bf16.msra.mxu0 0
      %3324 = vmatprep.mubr.bf16.mxu0 0
      %3325 = vmatmul.mubr.bf16.gmra.mrb[0].mxu0 %v3225
      %v3326 = vpop.f32.mrb[0].mxu0
      %v3327 = vadd.f32 0.0, %v3326
      %v3328 = vpop.f32.mrb[0].mxu0
      %v3329 = vadd.f32 0.0, %v3328
      %v3330 = vpop.f32.mrb[0].mxu0
      %v3331 = vpop.f32.mrb[0].mxu0
      %3332 = vdwg.mxu0
      %3333 = vmatprep.subr.bf16.mxu0 %v3243
      %3334 = vmatpush1.bf16.msra.mxu0 %v3240
      %3335 = vmatprep.subr.bf16.mxu0 0
      %3336 = vmatpush1.bf16.msra.mxu0 0
      %3337 = vmatprep.subr.bf16.mxu0 0
      %3338 = vmatpush1.bf16.msra.mxu0 0
      %3339 = vmatprep.subr.bf16.mxu0 0
      %3340 = vmatpush1.bf16.msra.mxu0 0
      %3341 = vmatprep.subr.bf16.mxu0 0
      %3342 = vmatpush1.bf16.msra.mxu0 0
      %3343 = vmatprep.subr.bf16.mxu0 0
      %3344 = vmatpush1.bf16.msra.mxu0 0
      %3345 = vmatprep.subr.bf16.mxu0 0
      %3346 = vmatpush1.bf16.msra.mxu0 0
      %3347 = vmatprep.subr.bf16.mxu0 0
      %3348 = vmatpush1.bf16.msra.mxu0 0
      %3349 = vmatprep.subr.bf16.mxu0 0
      %3350 = vmatpush1.bf16.msra.mxu0 0
      %3351 = vmatprep.subr.bf16.mxu0 0
      %3352 = vmatpush1.bf16.msra.mxu0 0
      %3353 = vmatprep.subr.bf16.mxu0 0
      %3354 = vmatpush1.bf16.msra.mxu0 0
      %3355 = vmatprep.subr.bf16.mxu0 0
      %3356 = vmatpush1.bf16.msra.mxu0 0
      %3357 = vmatprep.subr.bf16.mxu0 0
      %3358 = vmatpush1.bf16.msra.mxu0 0
      %3359 = vmatprep.subr.bf16.mxu0 0
      %3360 = vmatpush1.bf16.msra.mxu0 0
      %3361 = vmatprep.subr.bf16.mxu0 0
      %3362 = vmatpush1.bf16.msra.mxu0 0
      %3363 = vmatprep.subr.bf16.mxu0 0
      %3364 = vmatpush1.bf16.msra.mxu0 0
      %3365 = vmatprep.mubr.bf16.mxu0 0
      %3366 = vmatmul.mubr.bf16.gmra.mrb[0].mxu0 %v3225
      %v3367 = vpop.f32.mrb[0].mxu0
      %v3368 = vadd.f32 0.0, %v3367
      %v3369 = vpop.f32.mrb[0].mxu0
      %v3370 = vadd.f32 0.0, %v3369
      %v3371 = vpop.f32.mrb[0].mxu0
      %v3372 = vpop.f32.mrb[0].mxu0
      %3373 = vdwg.mxu0
      %3374 = vmatprep.subr.bf16.mxu0 %v3249
      %3375 = vmatpush1.bf16.msra.mxu0 %v3246
      %3376 = vmatprep.subr.bf16.mxu0 0
      %3377 = vmatpush1.bf16.msra.mxu0 0
      %3378 = vmatprep.subr.bf16.mxu0 0
      %3379 = vmatpush1.bf16.msra.mxu0 0
      %3380 = vmatprep.subr.bf16.mxu0 0
      %3381 = vmatpush1.bf16.msra.mxu0 0
      %3382 = vmatprep.subr.bf16.mxu0 0
      %3383 = vmatpush1.bf16.msra.mxu0 0
      %3384 = vmatprep.subr.bf16.mxu0 0
      %3385 = vmatpush1.bf16.msra.mxu0 0
      %3386 = vmatprep.subr.bf16.mxu0 0
      %3387 = vmatpush1.bf16.msra.mxu0 0
      %3388 = vmatprep.subr.bf16.mxu0 0
      %3389 = vmatpush1.bf16.msra.mxu0 0
      %3390 = vmatprep.subr.bf16.mxu0 0
      %3391 = vmatpush1.bf16.msra.mxu0 0
      %3392 = vmatprep.subr.bf16.mxu0 0
      %3393 = vmatpush1.bf16.msra.mxu0 0
      %3394 = vmatprep.subr.bf16.mxu0 0
      %3395 = vmatpush1.bf16.msra.mxu0 0
      %3396 = vmatprep.subr.bf16.mxu0 0
      %3397 = vmatpush1.bf16.msra.mxu0 0
      %3398 = vmatprep.subr.bf16.mxu0 0
      %3399 = vmatpush1.bf16.msra.mxu0 0
      %3400 = vmatprep.subr.bf16.mxu0 0
      %3401 = vmatpush1.bf16.msra.mxu0 0
      %3402 = vmatprep.subr.bf16.mxu0 0
      %3403 = vmatpush1.bf16.msra.mxu0 0
      %3404 = vmatprep.subr.bf16.mxu0 0
      %3405 = vmatpush1.bf16.msra.mxu0 0
      %3406 = vmatprep.mubr.bf16.mxu0 0
      %3407 = vmatmul.mubr.bf16.gmra.mrb[0].mxu0 %v3225
      %v3408 = vpop.f32.mrb[0].mxu0
      %v3409 = vadd.f32 0.0, %v3408
      %v3410 = vpop.f32.mrb[0].mxu0
      %v3411 = vadd.f32 0.0, %v3410
      %v3412 = vpop.f32.mrb[0].mxu0
      %v3413 = vpop.f32.mrb[0].mxu0
      %3414 = vdwg.mxu0
      %v3415 = vadd.f32 %v3187, %v3286
      %v3416 = vadd.f32 %v3188, %v3288
      %v3417 = vadd.f32 %v3189, %v3327
      %v3418 = vadd.f32 %v3190, %v3329
      %v3419 = vadd.f32 %v3191, %v3368
      %v3420 = vadd.f32 %v3192, %v3370
      %v3421 = vadd.f32 %v3193, %v3409
      %v3422 = vadd.f32 %v3194, %v3411
      %s3423 = scalar_lea.vmem %s3, 48
      %v3424 = vld [vmem:[%s3423] sm:$0xf]
      %3425 = vrot.lane.b32.xlu0 %v696, 1
      %v3426 = vpop.permute.xlu0 %3425
      %3427 = vrot.lane.b32.xlu0 %v697, 1
      %v3428 = vpop.permute.xlu0 %3427
      %3429 = vrot.lane.b32.xlu0 %v698, 1
      %v3430 = vpop.permute.xlu0 %3429
      %3431 = vrot.lane.b32.xlu0 %v699, 1
      %v3432 = vpop.permute.xlu0 %3431
      %3433 = vrot.lane.b32.xlu0 %v700, 1
      %v3434 = vpop.permute.xlu0 %3433
      %3435 = vrot.lane.b32.xlu0 %v701, 1
      %v3436 = vpop.permute.xlu0 %3435
      %3437 = vrot.lane.b32.xlu0 %v702, 1
      %v3438 = vpop.permute.xlu0 %3437
      %3439 = vrot.lane.b32.xlu0 %v703, 1
      %v3440 = vpop.permute.xlu0 %3439
      %3441 = vrot.lane.b32.xlu0 %v704, 1
      %v3442 = vpop.permute.xlu0 %3441
      %vm3443 = vcmask 7168
      %v3444 = vsel %vm3443, %v3426, %v3428
      %v3445 = vsel %vm3443, %v3428, %v3430
      %v3446 = vsel %vm3443, %v3430, %v3432
      %v3447 = vsel %vm3443, %v3432, %v3434
      %v3448 = vsel %vm3443, %v3434, %v3436
      %v3449 = vsel %vm3443, %v3436, %v3438
      %v3450 = vsel %vm3443, %v3438, %v3440
      %v3451 = vsel %vm3443, %v3440, %v3442
      %v3453 = vsel %vm732, %v3424, 0
      %v3456 = vsel %vm736, %v3444, 0
      %v3459 = vsel %vm736, %v3445, 0
      %v3462 = vsel %vm736, %v3446, 0
      %v3465 = vsel %vm736, %v3447, 0
      %v3468 = vsel %vm736, %v3448, 0
      %v3471 = vsel %vm736, %v3449, 0
      %v3474 = vsel %vm736, %v3450, 0
      %v3477 = vsel %vm736, %v3451, 0
      %3479 = vmatprep.subr.bf16.mxu0 %v3459
      %3480 = vmatpush1.bf16.msra.mxu0 %v3456
      %3481 = vmatprep.subr.bf16.mxu0 0
      %3482 = vmatpush1.bf16.msra.mxu0 0
      %3483 = vmatprep.subr.bf16.mxu0 0
      %3484 = vmatpush1.bf16.msra.mxu0 0
      %3485 = vmatprep.subr.bf16.mxu0 0
      %3486 = vmatpush1.bf16.msra.mxu0 0
      %3487 = vmatprep.subr.bf16.mxu0 0
      %3488 = vmatpush1.bf16.msra.mxu0 0
      %3489 = vmatprep.subr.bf16.mxu0 0
      %3490 = vmatpush1.bf16.msra.mxu0 0
      %3491 = vmatprep.subr.bf16.mxu0 0
      %3492 = vmatpush1.bf16.msra.mxu0 0
      %3493 = vmatprep.subr.bf16.mxu0 0
      %3494 = vmatpush1.bf16.msra.mxu0 0
      %3495 = vmatprep.subr.bf16.mxu0 0
      %3496 = vmatpush1.bf16.msra.mxu0 0
      %3497 = vmatprep.subr.bf16.mxu0 0
      %3498 = vmatpush1.bf16.msra.mxu0 0
      %3499 = vmatprep.subr.bf16.mxu0 0
      %3500 = vmatpush1.bf16.msra.mxu0 0
      %3501 = vmatprep.subr.bf16.mxu0 0
      %3502 = vmatpush1.bf16.msra.mxu0 0
      %3503 = vmatprep.subr.bf16.mxu0 0
      %3504 = vmatpush1.bf16.msra.mxu0 0
      %3505 = vmatprep.subr.bf16.mxu0 0
      %3506 = vmatpush1.bf16.msra.mxu0 0
      %3507 = vmatprep.subr.bf16.mxu0 0
      %3508 = vmatpush1.bf16.msra.mxu0 0
      %3509 = vmatprep.subr.bf16.mxu0 0
      %3510 = vmatpush1.bf16.msra.mxu0 0
      %3511 = vmatprep.mubr.bf16.mxu0 0
      %3512 = vmatmul.mubr.bf16.gmra.mrb[0].mxu0 %v3453
      %v3513 = vpop.f32.mrb[0].mxu0
      %v3514 = vadd.f32 0.0, %v3513
      %v3515 = vpop.f32.mrb[0].mxu0
      %v3516 = vadd.f32 0.0, %v3515
      %v3517 = vpop.f32.mrb[0].mxu0
      %v3518 = vpop.f32.mrb[0].mxu0
      %3519 = vdwg.mxu0
      %3520 = vmatprep.subr.bf16.mxu0 %v3465
      %3521 = vmatpush1.bf16.msra.mxu0 %v3462
      %3522 = vmatprep.subr.bf16.mxu0 0
      %3523 = vmatpush1.bf16.msra.mxu0 0
      %3524 = vmatprep.subr.bf16.mxu0 0
      %3525 = vmatpush1.bf16.msra.mxu0 0
      %3526 = vmatprep.subr.bf16.mxu0 0
      %3527 = vmatpush1.bf16.msra.mxu0 0
      %3528 = vmatprep.subr.bf16.mxu0 0
      %3529 = vmatpush1.bf16.msra.mxu0 0
      %3530 = vmatprep.subr.bf16.mxu0 0
      %3531 = vmatpush1.bf16.msra.mxu0 0
      %3532 = vmatprep.subr.bf16.mxu0 0
      %3533 = vmatpush1.bf16.msra.mxu0 0
      %3534 = vmatprep.subr.bf16.mxu0 0
      %3535 = vmatpush1.bf16.msra.mxu0 0
      %3536 = vmatprep.subr.bf16.mxu0 0
      %3537 = vmatpush1.bf16.msra.mxu0 0
      %3538 = vmatprep.subr.bf16.mxu0 0
      %3539 = vmatpush1.bf16.msra.mxu0 0
      %3540 = vmatprep.subr.bf16.mxu0 0
      %3541 = vmatpush1.bf16.msra.mxu0 0
      %3542 = vmatprep.subr.bf16.mxu0 0
      %3543 = vmatpush1.bf16.msra.mxu0 0
      %3544 = vmatprep.subr.bf16.mxu0 0
      %3545 = vmatpush1.bf16.msra.mxu0 0
      %3546 = vmatprep.subr.bf16.mxu0 0
      %3547 = vmatpush1.bf16.msra.mxu0 0
      %3548 = vmatprep.subr.bf16.mxu0 0
      %3549 = vmatpush1.bf16.msra.mxu0 0
      %3550 = vmatprep.subr.bf16.mxu0 0
      %3551 = vmatpush1.bf16.msra.mxu0 0
      %3552 = vmatprep.mubr.bf16.mxu0 0
      %3553 = vmatmul.mubr.bf16.gmra.mrb[0].mxu0 %v3453
      %v3554 = vpop.f32.mrb[0].mxu0
      %v3555 = vadd.f32 0.0, %v3554
      %v3556 = vpop.f32.mrb[0].mxu0
      %v3557 = vadd.f32 0.0, %v3556
      %v3558 = vpop.f32.mrb[0].mxu0
      %v3559 = vpop.f32.mrb[0].mxu0
      %3560 = vdwg.mxu0
      %3561 = vmatprep.subr.bf16.mxu0 %v3471
      %3562 = vmatpush1.bf16.msra.mxu0 %v3468
      %3563 = vmatprep.subr.bf16.mxu0 0
      %3564 = vmatpush1.bf16.msra.mxu0 0
      %3565 = vmatprep.subr.bf16.mxu0 0
      %3566 = vmatpush1.bf16.msra.mxu0 0
      %3567 = vmatprep.subr.bf16.mxu0 0
      %3568 = vmatpush1.bf16.msra.mxu0 0
      %3569 = vmatprep.subr.bf16.mxu0 0
      %3570 = vmatpush1.bf16.msra.mxu0 0
      %3571 = vmatprep.subr.bf16.mxu0 0
      %3572 = vmatpush1.bf16.msra.mxu0 0
      %3573 = vmatprep.subr.bf16.mxu0 0
      %3574 = vmatpush1.bf16.msra.mxu0 0
      %3575 = vmatprep.subr.bf16.mxu0 0
      %3576 = vmatpush1.bf16.msra.mxu0 0
      %3577 = vmatprep.subr.bf16.mxu0 0
      %3578 = vmatpush1.bf16.msra.mxu0 0
      %3579 = vmatprep.subr.bf16.mxu0 0
      %3580 = vmatpush1.bf16.msra.mxu0 0
      %3581 = vmatprep.subr.bf16.mxu0 0
      %3582 = vmatpush1.bf16.msra.mxu0 0
      %3583 = vmatprep.subr.bf16.mxu0 0
      %3584 = vmatpush1.bf16.msra.mxu0 0
      %3585 = vmatprep.subr.bf16.mxu0 0
      %3586 = vmatpush1.bf16.msra.mxu0 0
      %3587 = vmatprep.subr.bf16.mxu0 0
      %3588 = vmatpush1.bf16.msra.mxu0 0
      %3589 = vmatprep.subr.bf16.mxu0 0
      %3590 = vmatpush1.bf16.msra.mxu0 0
      %3591 = vmatprep.subr.bf16.mxu0 0
      %3592 = vmatpush1.bf16.msra.mxu0 0
      %3593 = vmatprep.mubr.bf16.mxu0 0
      %3594 = vmatmul.mubr.bf16.gmra.mrb[0].mxu0 %v3453
      %v3595 = vpop.f32.mrb[0].mxu0
      %v3596 = vadd.f32 0.0, %v3595
      %v3597 = vpop.f32.mrb[0].mxu0
      %v3598 = vadd.f32 0.0, %v3597
      %v3599 = vpop.f32.mrb[0].mxu0
      %v3600 = vpop.f32.mrb[0].mxu0
      %3601 = vdwg.mxu0
      %3602 = vmatprep.subr.bf16.mxu0 %v3477
      %3603 = vmatpush1.bf16.msra.mxu0 %v3474
      %3604 = vmatprep.subr.bf16.mxu0 0
      %3605 = vmatpush1.bf16.msra.mxu0 0
      %3606 = vmatprep.subr.bf16.mxu0 0
      %3607 = vmatpush1.bf16.msra.mxu0 0
      %3608 = vmatprep.subr.bf16.mxu0 0
      %3609 = vmatpush1.bf16.msra.mxu0 0
      %3610 = vmatprep.subr.bf16.mxu0 0
      %3611 = vmatpush1.bf16.msra.mxu0 0
      %3612 = vmatprep.subr.bf16.mxu0 0
      %3613 = vmatpush1.bf16.msra.mxu0 0
      %3614 = vmatprep.subr.bf16.mxu0 0
      %3615 = vmatpush1.bf16.msra.mxu0 0
      %3616 = vmatprep.subr.bf16.mxu0 0
      %3617 = vmatpush1.bf16.msra.mxu0 0
      %3618 = vmatprep.subr.bf16.mxu0 0
      %3619 = vmatpush1.bf16.msra.mxu0 0
      %3620 = vmatprep.subr.bf16.mxu0 0
      %3621 = vmatpush1.bf16.msra.mxu0 0
      %3622 = vmatprep.subr.bf16.mxu0 0
      %3623 = vmatpush1.bf16.msra.mxu0 0
      %3624 = vmatprep.subr.bf16.mxu0 0
      %3625 = vmatpush1.bf16.msra.mxu0 0
      %3626 = vmatprep.subr.bf16.mxu0 0
      %3627 = vmatpush1.bf16.msra.mxu0 0
      %3628 = vmatprep.subr.bf16.mxu0 0
      %3629 = vmatpush1.bf16.msra.mxu0 0
      %3630 = vmatprep.subr.bf16.mxu0 0
      %3631 = vmatpush1.bf16.msra.mxu0 0
      %3632 = vmatprep.subr.bf16.mxu0 0
      %3633 = vmatpush1.bf16.msra.mxu0 0
      %3634 = vmatprep.mubr.bf16.mxu0 0
      %3635 = vmatmul.mubr.bf16.gmra.mrb[0].mxu0 %v3453
      %v3636 = vpop.f32.mrb[0].mxu0
      %v3637 = vadd.f32 0.0, %v3636
      %v3638 = vpop.f32.mrb[0].mxu0
      %v3639 = vadd.f32 0.0, %v3638
      %v3640 = vpop.f32.mrb[0].mxu0
      %v3641 = vpop.f32.mrb[0].mxu0
      %3642 = vdwg.mxu0
      %v3643 = vadd.f32 %v3415, %v3514
      %v3644 = vadd.f32 %v3416, %v3516
      %v3645 = vadd.f32 %v3417, %v3555
      %v3646 = vadd.f32 %v3418, %v3557
      %v3647 = vadd.f32 %v3419, %v3596
      %v3648 = vadd.f32 %v3420, %v3598
      %v3649 = vadd.f32 %v3421, %v3637
      %v3650 = vadd.f32 %v3422, %v3639
      %v3651 = vld [vmem:[#allocation2 + $0x4] sm:$0xff]
      %v3652 = vld [vmem:[#allocation2 + $0xc] sm:$0xff]
      %v3653 = vld [vmem:[#allocation2 + $0x14] sm:$0xff]
      %v3654 = vld [vmem:[#allocation2 + $0x1c] sm:$0xff]
      %s3655 = scalar_lea.vmem %s3, 52
      %v3656 = vld [vmem:[%s3655] sm:$0xf]
      %v3661 = vunpack.c.l.b16 %v3651
      %v3662 = vunpack.c.h.b16 %v3651
      %v3663 = vunpack.c.l.b16 %v3652
      %v3664 = vunpack.c.h.b16 %v3652
      %v3665 = vunpack.c.l.b16 %v3653
      %v3666 = vunpack.c.h.b16 %v3653
      %v3667 = vunpack.c.l.b16 %v3654
      %v3668 = vunpack.c.h.b16 %v3654
      %v3669 = vpack.c.b16 %v3661, %v3661
      %v3670 = vpack.c.b16 %v3662, %v3662
      %v3671 = vpack.c.b16 %v3663, %v3663
      %v3672 = vpack.c.b16 %v3664, %v3664
      %v3673 = vpack.c.b16 %v3665, %v3665
      %v3674 = vpack.c.b16 %v3666, %v3666
      %v3675 = vpack.c.b16 %v3667, %v3667
      %v3676 = vpack.c.b16 %v3668, %v3668
      %v3678 = vsel %vm732, %v3656, 0
      %v3681 = vsel %vm736, %v3669, 0
      %v3684 = vsel %vm736, %v3670, 0
      %v3687 = vsel %vm736, %v3671, 0
      %v3690 = vsel %vm736, %v3672, 0
      %v3693 = vsel %vm736, %v3673, 0
      %v3696 = vsel %vm736, %v3674, 0
      %v3699 = vsel %vm736, %v3675, 0
      %v3702 = vsel %vm736, %v3676, 0
      %3704 = vmatprep.subr.bf16.mxu0 %v3684
      %3705 = vmatpush1.bf16.msra.mxu0 %v3681
      %3706 = vmatprep.subr.bf16.mxu0 0
      %3707 = vmatpush1.bf16.msra.mxu0 0
      %3708 = vmatprep.subr.bf16.mxu0 0
      %3709 = vmatpush1.bf16.msra.mxu0 0
      %3710 = vmatprep.subr.bf16.mxu0 0
      %3711 = vmatpush1.bf16.msra.mxu0 0
      %3712 = vmatprep.subr.bf16.mxu0 0
      %3713 = vmatpush1.bf16.msra.mxu0 0
      %3714 = vmatprep.subr.bf16.mxu0 0
      %3715 = vmatpush1.bf16.msra.mxu0 0
      %3716 = vmatprep.subr.bf16.mxu0 0
      %3717 = vmatpush1.bf16.msra.mxu0 0
      %3718 = vmatprep.subr.bf16.mxu0 0
      %3719 = vmatpush1.bf16.msra.mxu0 0
      %3720 = vmatprep.subr.bf16.mxu0 0
      %3721 = vmatpush1.bf16.msra.mxu0 0
      %3722 = vmatprep.subr.bf16.mxu0 0
      %3723 = vmatpush1.bf16.msra.mxu0 0
      %3724 = vmatprep.subr.bf16.mxu0 0
      %3725 = vmatpush1.bf16.msra.mxu0 0
      %3726 = vmatprep.subr.bf16.mxu0 0
      %3727 = vmatpush1.bf16.msra.mxu0 0
      %3728 = vmatprep.subr.bf16.mxu0 0
      %3729 = vmatpush1.bf16.msra.mxu0 0
      %3730 = vmatprep.subr.bf16.mxu0 0
      %3731 = vmatpush1.bf16.msra.mxu0 0
      %3732 = vmatprep.subr.bf16.mxu0 0
      %3733 = vmatpush1.bf16.msra.mxu0 0
      %3734 = vmatprep.subr.bf16.mxu0 0
      %3735 = vmatpush1.bf16.msra.mxu0 0
      %3736 = vmatprep.mubr.bf16.mxu0 0
      %3737 = vmatmul.mubr.bf16.gmra.mrb[0].mxu0 %v3678
      %v3738 = vpop.f32.mrb[0].mxu0
      %v3739 = vadd.f32 0.0, %v3738
      %v3740 = vpop.f32.mrb[0].mxu0
      %v3741 = vadd.f32 0.0, %v3740
      %v3742 = vpop.f32.mrb[0].mxu0
      %v3743 = vpop.f32.mrb[0].mxu0
      %3744 = vdwg.mxu0
      %3745 = vmatprep.subr.bf16.mxu0 %v3690
      %3746 = vmatpush1.bf16.msra.mxu0 %v3687
      %3747 = vmatprep.subr.bf16.mxu0 0
      %3748 = vmatpush1.bf16.msra.mxu0 0
      %3749 = vmatprep.subr.bf16.mxu0 0
      %3750 = vmatpush1.bf16.msra.mxu0 0
      %3751 = vmatprep.subr.bf16.mxu0 0
      %3752 = vmatpush1.bf16.msra.mxu0 0
      %3753 = vmatprep.subr.bf16.mxu0 0
      %3754 = vmatpush1.bf16.msra.mxu0 0
      %3755 = vmatprep.subr.bf16.mxu0 0
      %3756 = vmatpush1.bf16.msra.mxu0 0
      %3757 = vmatprep.subr.bf16.mxu0 0
      %3758 = vmatpush1.bf16.msra.mxu0 0
      %3759 = vmatprep.subr.bf16.mxu0 0
      %3760 = vmatpush1.bf16.msra.mxu0 0
      %3761 = vmatprep.subr.bf16.mxu0 0
      %3762 = vmatpush1.bf16.msra.mxu0 0
      %3763 = vmatprep.subr.bf16.mxu0 0
      %3764 = vmatpush1.bf16.msra.mxu0 0
      %3765 = vmatprep.subr.bf16.mxu0 0
      %3766 = vmatpush1.bf16.msra.mxu0 0
      %3767 = vmatprep.subr.bf16.mxu0 0
      %3768 = vmatpush1.bf16.msra.mxu0 0
      %3769 = vmatprep.subr.bf16.mxu0 0
      %3770 = vmatpush1.bf16.msra.mxu0 0
      %3771 = vmatprep.subr.bf16.mxu0 0
      %3772 = vmatpush1.bf16.msra.mxu0 0
      %3773 = vmatprep.subr.bf16.mxu0 0
      %3774 = vmatpush1.bf16.msra.mxu0 0
      %3775 = vmatprep.subr.bf16.mxu0 0
      %3776 = vmatpush1.bf16.msra.mxu0 0
      %3777 = vmatprep.mubr.bf16.mxu0 0
      %3778 = vmatmul.mubr.bf16.gmra.mrb[0].mxu0 %v3678
      %v3779 = vpop.f32.mrb[0].mxu0
      %v3780 = vadd.f32 0.0, %v3779
      %v3781 = vpop.f32.mrb[0].mxu0
      %v3782 = vadd.f32 0.0, %v3781
      %v3783 = vpop.f32.mrb[0].mxu0
      %v3784 = vpop.f32.mrb[0].mxu0
      %3785 = vdwg.mxu0
      %3786 = vmatprep.subr.bf16.mxu0 %v3696
      %3787 = vmatpush1.bf16.msra.mxu0 %v3693
      %3788 = vmatprep.subr.bf16.mxu0 0
      %3789 = vmatpush1.bf16.msra.mxu0 0
      %3790 = vmatprep.subr.bf16.mxu0 0
      %3791 = vmatpush1.bf16.msra.mxu0 0
      %3792 = vmatprep.subr.bf16.mxu0 0
      %3793 = vmatpush1.bf16.msra.mxu0 0
      %3794 = vmatprep.subr.bf16.mxu0 0
      %3795 = vmatpush1.bf16.msra.mxu0 0
      %3796 = vmatprep.subr.bf16.mxu0 0
      %3797 = vmatpush1.bf16.msra.mxu0 0
      %3798 = vmatprep.subr.bf16.mxu0 0
      %3799 = vmatpush1.bf16.msra.mxu0 0
      %3800 = vmatprep.subr.bf16.mxu0 0
      %3801 = vmatpush1.bf16.msra.mxu0 0
      %3802 = vmatprep.subr.bf16.mxu0 0
      %3803 = vmatpush1.bf16.msra.mxu0 0
      %3804 = vmatprep.subr.bf16.mxu0 0
      %3805 = vmatpush1.bf16.msra.mxu0 0
      %3806 = vmatprep.subr.bf16.mxu0 0
      %3807 = vmatpush1.bf16.msra.mxu0 0
      %3808 = vmatprep.subr.bf16.mxu0 0
      %3809 = vmatpush1.bf16.msra.mxu0 0
      %3810 = vmatprep.subr.bf16.mxu0 0
      %3811 = vmatpush1.bf16.msra.mxu0 0
      %3812 = vmatprep.subr.bf16.mxu0 0
      %3813 = vmatpush1.bf16.msra.mxu0 0
      %3814 = vmatprep.subr.bf16.mxu0 0
      %3815 = vmatpush1.bf16.msra.mxu0 0
      %3816 = vmatprep.subr.bf16.mxu0 0
      %3817 = vmatpush1.bf16.msra.mxu0 0
      %3818 = vmatprep.mubr.bf16.mxu0 0
      %3819 = vmatmul.mubr.bf16.gmra.mrb[0].mxu0 %v3678
      %v3820 = vpop.f32.mrb[0].mxu0
      %v3821 = vadd.f32 0.0, %v3820
      %v3822 = vpop.f32.mrb[0].mxu0
      %v3823 = vadd.f32 0.0, %v3822
      %v3824 = vpop.f32.mrb[0].mxu0
      %v3825 = vpop.f32.mrb[0].mxu0
      %3826 = vdwg.mxu0
      %3827 = vmatprep.subr.bf16.mxu0 %v3702
      %3828 = vmatpush1.bf16.msra.mxu0 %v3699
      %3829 = vmatprep.subr.bf16.mxu0 0
      %3830 = vmatpush1.bf16.msra.mxu0 0
      %3831 = vmatprep.subr.bf16.mxu0 0
      %3832 = vmatpush1.bf16.msra.mxu0 0
      %3833 = vmatprep.subr.bf16.mxu0 0
      %3834 = vmatpush1.bf16.msra.mxu0 0
      %3835 = vmatprep.subr.bf16.mxu0 0
      %3836 = vmatpush1.bf16.msra.mxu0 0
      %3837 = vmatprep.subr.bf16.mxu0 0
      %3838 = vmatpush1.bf16.msra.mxu0 0
      %3839 = vmatprep.subr.bf16.mxu0 0
      %3840 = vmatpush1.bf16.msra.mxu0 0
      %3841 = vmatprep.subr.bf16.mxu0 0
      %3842 = vmatpush1.bf16.msra.mxu0 0
      %3843 = vmatprep.subr.bf16.mxu0 0
      %3844 = vmatpush1.bf16.msra.mxu0 0
      %3845 = vmatprep.subr.bf16.mxu0 0
      %3846 = vmatpush1.bf16.msra.mxu0 0
      %3847 = vmatprep.subr.bf16.mxu0 0
      %3848 = vmatpush1.bf16.msra.mxu0 0
      %3849 = vmatprep.subr.bf16.mxu0 0
      %3850 = vmatpush1.bf16.msra.mxu0 0
      %3851 = vmatprep.subr.bf16.mxu0 0
      %3852 = vmatpush1.bf16.msra.mxu0 0
      %3853 = vmatprep.subr.bf16.mxu0 0
      %3854 = vmatpush1.bf16.msra.mxu0 0
      %3855 = vmatprep.subr.bf16.mxu0 0
      %3856 = vmatpush1.bf16.msra.mxu0 0
      %3857 = vmatprep.subr.bf16.mxu0 0
      %3858 = vmatpush1.bf16.msra.mxu0 0
      %3859 = vmatprep.mubr.bf16.mxu0 0
      %3860 = vmatmul.mubr.bf16.gmra.mrb[0].mxu0 %v3678
      %v3861 = vpop.f32.mrb[0].mxu0
      %v3862 = vadd.f32 0.0, %v3861
      %v3863 = vpop.f32.mrb[0].mxu0
      %v3864 = vadd.f32 0.0, %v3863
      %v3865 = vpop.f32.mrb[0].mxu0
      %v3866 = vpop.f32.mrb[0].mxu0
      %3867 = vdwg.mxu0
      %v3868 = vadd.f32 %v3643, %v3739
      %v3869 = vadd.f32 %v3644, %v3741
      %v3870 = vadd.f32 %v3645, %v3780
      %v3871 = vadd.f32 %v3646, %v3782
      %v3872 = vadd.f32 %v3647, %v3821
      %v3873 = vadd.f32 %v3648, %v3823
      %v3874 = vadd.f32 %v3649, %v3862
      %v3875 = vadd.f32 %v3650, %v3864
      %v3876 = vld [vmem:[#allocation2 + $0x4] sm:$0xff]
      %v3877 = vld [vmem:[#allocation2 + $0xc] sm:$0xff]
      %v3878 = vld [vmem:[#allocation2 + $0x14] sm:$0xff]
      %v3879 = vld [vmem:[#allocation2 + $0x1c] sm:$0xff]
      %v3880 = vld [vmem:[#allocation2 + $0x24] sm:$0xf]
      %s3881 = scalar_lea.vmem %s3, 56
      %v3882 = vld [vmem:[%s3881] sm:$0xf]
      %v3888 = vunpack.c.l.b16 %v3876
      %v3889 = vunpack.c.h.b16 %v3876
      %v3890 = vunpack.c.l.b16 %v3877
      %v3891 = vunpack.c.h.b16 %v3877
      %v3892 = vunpack.c.l.b16 %v3878
      %v3893 = vunpack.c.h.b16 %v3878
      %v3894 = vunpack.c.l.b16 %v3879
      %v3895 = vunpack.c.h.b16 %v3879
      %v3896 = vunpack.c.l.b16 %v3880
      %v3897 = vpack.c.b16 %v3888, %v3888
      %v3898 = vpack.c.b16 %v3889, %v3889
      %v3899 = vpack.c.b16 %v3890, %v3890
      %v3900 = vpack.c.b16 %v3891, %v3891
      %v3901 = vpack.c.b16 %v3892, %v3892
      %v3902 = vpack.c.b16 %v3893, %v3893
      %v3903 = vpack.c.b16 %v3894, %v3894
      %v3904 = vpack.c.b16 %v3895, %v3895
      %v3905 = vpack.c.b16 %v3896, %v3896
      %3906 = vrot.lane.b32.xlu0 %v3897, 127
      %v3907 = vpop.permute.xlu0 %3906
      %3908 = vrot.lane.b32.xlu0 %v3898, 127
      %v3909 = vpop.permute.xlu0 %3908
      %3910 = vrot.lane.b32.xlu0 %v3899, 127
      %v3911 = vpop.permute.xlu0 %3910
      %3912 = vrot.lane.b32.xlu0 %v3900, 127
      %v3913 = vpop.permute.xlu0 %3912
      %3914 = vrot.lane.b32.xlu0 %v3901, 127
      %v3915 = vpop.permute.xlu0 %3914
      %3916 = vrot.lane.b32.xlu0 %v3902, 127
      %v3917 = vpop.permute.xlu0 %3916
      %3918 = vrot.lane.b32.xlu0 %v3903, 127
      %v3919 = vpop.permute.xlu0 %3918
      %3920 = vrot.lane.b32.xlu0 %v3904, 127
      %v3921 = vpop.permute.xlu0 %3920
      %3922 = vrot.lane.b32.xlu0 %v3905, 127
      %v3923 = vpop.permute.xlu0 %3922
      %vm3924 = vcmask 1039360
      %v3925 = vsel %vm3924, %v3907, %v3909
      %v3926 = vsel %vm3924, %v3909, %v3911
      %v3927 = vsel %vm3924, %v3911, %v3913
      %v3928 = vsel %vm3924, %v3913, %v3915
      %v3929 = vsel %vm3924, %v3915, %v3917
      %v3930 = vsel %vm3924, %v3917, %v3919
      %v3931 = vsel %vm3924, %v3919, %v3921
      %v3932 = vsel %vm3924, %v3921, %v3923
      %v3934 = vsel %vm732, %v3882, 0
      %v3937 = vsel %vm736, %v3925, 0
      %v3940 = vsel %vm736, %v3926, 0
      %v3943 = vsel %vm736, %v3927, 0
      %v3946 = vsel %vm736, %v3928, 0
      %v3949 = vsel %vm736, %v3929, 0
      %v3952 = vsel %vm736, %v3930, 0
      %v3955 = vsel %vm736, %v3931, 0
      %v3958 = vsel %vm736, %v3932, 0
      %3960 = vmatprep.subr.bf16.mxu0 %v3940
      %3961 = vmatpush1.bf16.msra.mxu0 %v3937
      %3962 = vmatprep.subr.bf16.mxu0 0
      %3963 = vmatpush1.bf16.msra.mxu0 0
      %3964 = vmatprep.subr.bf16.mxu0 0
      %3965 = vmatpush1.bf16.msra.mxu0 0
      %3966 = vmatprep.subr.bf16.mxu0 0
      %3967 = vmatpush1.bf16.msra.mxu0 0
      %3968 = vmatprep.subr.bf16.mxu0 0
      %3969 = vmatpush1.bf16.msra.mxu0 0
      %3970 = vmatprep.subr.bf16.mxu0 0
      %3971 = vmatpush1.bf16.msra.mxu0 0
      %3972 = vmatprep.subr.bf16.mxu0 0
      %3973 = vmatpush1.bf16.msra.mxu0 0
      %3974 = vmatprep.subr.bf16.mxu0 0
      %3975 = vmatpush1.bf16.msra.mxu0 0
      %3976 = vmatprep.subr.bf16.mxu0 0
      %3977 = vmatpush1.bf16.msra.mxu0 0
      %3978 = vmatprep.subr.bf16.mxu0 0
      %3979 = vmatpush1.bf16.msra.mxu0 0
      %3980 = vmatprep.subr.bf16.mxu0 0
      %3981 = vmatpush1.bf16.msra.mxu0 0
      %3982 = vmatprep.subr.bf16.mxu0 0
      %3983 = vmatpush1.bf16.msra.mxu0 0
      %3984 = vmatprep.subr.bf16.mxu0 0
      %3985 = vmatpush1.bf16.msra.mxu0 0
      %3986 = vmatprep.subr.bf16.mxu0 0
      %3987 = vmatpush1.bf16.msra.mxu0 0
      %3988 = vmatprep.subr.bf16.mxu0 0
      %3989 = vmatpush1.bf16.msra.mxu0 0
      %3990 = vmatprep.subr.bf16.mxu0 0
      %3991 = vmatpush1.bf16.msra.mxu0 0
      %3992 = vmatprep.mubr.bf16.mxu0 0
      %3993 = vmatmul.mubr.bf16.gmra.mrb[0].mxu0 %v3934
      %v3994 = vpop.f32.mrb[0].mxu0
      %v3995 = vadd.f32 0.0, %v3994
      %v3996 = vpop.f32.mrb[0].mxu0
      %v3997 = vadd.f32 0.0, %v3996
      %v3998 = vpop.f32.mrb[0].mxu0
      %v3999 = vpop.f32.mrb[0].mxu0
      %4000 = vdwg.mxu0
      %4001 = vmatprep.subr.bf16.mxu0 %v3946
      %4002 = vmatpush1.bf16.msra.mxu0 %v3943
      %4003 = vmatprep.subr.bf16.mxu0 0
      %4004 = vmatpush1.bf16.msra.mxu0 0
      %4005 = vmatprep.subr.bf16.mxu0 0
      %4006 = vmatpush1.bf16.msra.mxu0 0
      %4007 = vmatprep.subr.bf16.mxu0 0
      %4008 = vmatpush1.bf16.msra.mxu0 0
      %4009 = vmatprep.subr.bf16.mxu0 0
      %4010 = vmatpush1.bf16.msra.mxu0 0
      %4011 = vmatprep.subr.bf16.mxu0 0
      %4012 = vmatpush1.bf16.msra.mxu0 0
      %4013 = vmatprep.subr.bf16.mxu0 0
      %4014 = vmatpush1.bf16.msra.mxu0 0
      %4015 = vmatprep.subr.bf16.mxu0 0
      %4016 = vmatpush1.bf16.msra.mxu0 0
      %4017 = vmatprep.subr.bf16.mxu0 0
      %4018 = vmatpush1.bf16.msra.mxu0 0
      %4019 = vmatprep.subr.bf16.mxu0 0
      %4020 = vmatpush1.bf16.msra.mxu0 0
      %4021 = vmatprep.subr.bf16.mxu0 0
      %4022 = vmatpush1.bf16.msra.mxu0 0
      %4023 = vmatprep.subr.bf16.mxu0 0
      %4024 = vmatpush1.bf16.msra.mxu0 0
      %4025 = vmatprep.subr.bf16.mxu0 0
      %4026 = vmatpush1.bf16.msra.mxu0 0
      %4027 = vmatprep.subr.bf16.mxu0 0
      %4028 = vmatpush1.bf16.msra.mxu0 0
      %4029 = vmatprep.subr.bf16.mxu0 0
      %4030 = vmatpush1.bf16.msra.mxu0 0
      %4031 = vmatprep.subr.bf16.mxu0 0
      %4032 = vmatpush1.bf16.msra.mxu0 0
      %4033 = vmatprep.mubr.bf16.mxu0 0
      %4034 = vmatmul.mubr.bf16.gmra.mrb[0].mxu0 %v3934
      %v4035 = vpop.f32.mrb[0].mxu0
      %v4036 = vadd.f32 0.0, %v4035
      %v4037 = vpop.f32.mrb[0].mxu0
      %v4038 = vadd.f32 0.0, %v4037
      %v4039 = vpop.f32.mrb[0].mxu0
      %v4040 = vpop.f32.mrb[0].mxu0
      %4041 = vdwg.mxu0
      %4042 = vmatprep.subr.bf16.mxu0 %v3952
      %4043 = vmatpush1.bf16.msra.mxu0 %v3949
      %4044 = vmatprep.subr.bf16.mxu0 0
      %4045 = vmatpush1.bf16.msra.mxu0 0
      %4046 = vmatprep.subr.bf16.mxu0 0
      %4047 = vmatpush1.bf16.msra.mxu0 0
      %4048 = vmatprep.subr.bf16.mxu0 0
      %4049 = vmatpush1.bf16.msra.mxu0 0
      %4050 = vmatprep.subr.bf16.mxu0 0
      %4051 = vmatpush1.bf16.msra.mxu0 0
      %4052 = vmatprep.subr.bf16.mxu0 0
      %4053 = vmatpush1.bf16.msra.mxu0 0
      %4054 = vmatprep.subr.bf16.mxu0 0
      %4055 = vmatpush1.bf16.msra.mxu0 0
      %4056 = vmatprep.subr.bf16.mxu0 0
      %4057 = vmatpush1.bf16.msra.mxu0 0
      %4058 = vmatprep.subr.bf16.mxu0 0
      %4059 = vmatpush1.bf16.msra.mxu0 0
      %4060 = vmatprep.subr.bf16.mxu0 0
      %4061 = vmatpush1.bf16.msra.mxu0 0
      %4062 = vmatprep.subr.bf16.mxu0 0
      %4063 = vmatpush1.bf16.msra.mxu0 0
      %4064 = vmatprep.subr.bf16.mxu0 0
      %4065 = vmatpush1.bf16.msra.mxu0 0
      %4066 = vmatprep.subr.bf16.mxu0 0
      %4067 = vmatpush1.bf16.msra.mxu0 0
      %4068 = vmatprep.subr.bf16.mxu0 0
      %4069 = vmatpush1.bf16.msra.mxu0 0
      %4070 = vmatprep.subr.bf16.mxu0 0
      %4071 = vmatpush1.bf16.msra.mxu0 0
      %4072 = vmatprep.subr.bf16.mxu0 0
      %4073 = vmatpush1.bf16.msra.mxu0 0
      %4074 = vmatprep.mubr.bf16.mxu0 0
      %4075 = vmatmul.mubr.bf16.gmra.mrb[0].mxu0 %v3934
      %v4076 = vpop.f32.mrb[0].mxu0
      %v4077 = vadd.f32 0.0, %v4076
      %v4078 = vpop.f32.mrb[0].mxu0
      %v4079 = vadd.f32 0.0, %v4078
      %v4080 = vpop.f32.mrb[0].mxu0
      %v4081 = vpop.f32.mrb[0].mxu0
      %4082 = vdwg.mxu0
      %4083 = vmatprep.subr.bf16.mxu0 %v3958
      %4084 = vmatpush1.bf16.msra.mxu0 %v3955
      %4085 = vmatprep.subr.bf16.mxu0 0
      %4086 = vmatpush1.bf16.msra.mxu0 0
      %4087 = vmatprep.subr.bf16.mxu0 0
      %4088 = vmatpush1.bf16.msra.mxu0 0
      %4089 = vmatprep.subr.bf16.mxu0 0
      %4090 = vmatpush1.bf16.msra.mxu0 0
      %4091 = vmatprep.subr.bf16.mxu0 0
      %4092 = vmatpush1.bf16.msra.mxu0 0
      %4093 = vmatprep.subr.bf16.mxu0 0
      %4094 = vmatpush1.bf16.msra.mxu0 0
      %4095 = vmatprep.subr.bf16.mxu0 0
      %4096 = vmatpush1.bf16.msra.mxu0 0
      %4097 = vmatprep.subr.bf16.mxu0 0
      %4098 = vmatpush1.bf16.msra.mxu0 0
      %4099 = vmatprep.subr.bf16.mxu0 0
      %4100 = vmatpush1.bf16.msra.mxu0 0
      %4101 = vmatprep.subr.bf16.mxu0 0
      %4102 = vmatpush1.bf16.msra.mxu0 0
      %4103 = vmatprep.subr.bf16.mxu0 0
      %4104 = vmatpush1.bf16.msra.mxu0 0
      %4105 = vmatprep.subr.bf16.mxu0 0
      %4106 = vmatpush1.bf16.msra.mxu0 0
      %4107 = vmatprep.subr.bf16.mxu0 0
      %4108 = vmatpush1.bf16.msra.mxu0 0
      %4109 = vmatprep.subr.bf16.mxu0 0
      %4110 = vmatpush1.bf16.msra.mxu0 0
      %4111 = vmatprep.subr.bf16.mxu0 0
      %4112 = vmatpush1.bf16.msra.mxu0 0
      %4113 = vmatprep.subr.bf16.mxu0 0
      %4114 = vmatpush1.bf16.msra.mxu0 0
      %4115 = vmatprep.mubr.bf16.mxu0 0
      %4116 = vmatmul.mubr.bf16.gmra.mrb[0].mxu0 %v3934
      %v4117 = vpop.f32.mrb[0].mxu0
      %v4118 = vadd.f32 0.0, %v4117
      %v4119 = vpop.f32.mrb[0].mxu0
      %v4120 = vadd.f32 0.0, %v4119
      %v4121 = vpop.f32.mrb[0].mxu0
      %v4122 = vpop.f32.mrb[0].mxu0
      %4123 = vdwg.mxu0
      %v4124 = vadd.f32 %v3868, %v3995
      %v4125 = vadd.f32 %v3869, %v3997
      %v4126 = vadd.f32 %v3870, %v4036
      %v4127 = vadd.f32 %v3871, %v4038
      %v4128 = vadd.f32 %v3872, %v4077
      %v4129 = vadd.f32 %v3873, %v4079
      %v4130 = vadd.f32 %v3874, %v4118
      %v4131 = vadd.f32 %v3875, %v4120
      %s4132 = scalar_lea.vmem %s3, 60
      %v4133 = vld [vmem:[%s4132] sm:$0xf]
      %4134 = vrot.lane.b32.xlu0 %v3897, 119
      %v4135 = vpop.permute.xlu0 %4134
      %4136 = vrot.lane.b32.xlu0 %v3898, 119
      %v4137 = vpop.permute.xlu0 %4136
      %4138 = vrot.lane.b32.xlu0 %v3899, 119
      %v4139 = vpop.permute.xlu0 %4138
      %4140 = vrot.lane.b32.xlu0 %v3900, 119
      %v4141 = vpop.permute.xlu0 %4140
      %4142 = vrot.lane.b32.xlu0 %v3901, 119
      %v4143 = vpop.permute.xlu0 %4142
      %4144 = vrot.lane.b32.xlu0 %v3902, 119
      %v4145 = vpop.permute.xlu0 %4144
      %4146 = vrot.lane.b32.xlu0 %v3903, 119
      %v4147 = vpop.permute.xlu0 %4146
      %4148 = vrot.lane.b32.xlu0 %v3904, 119
      %v4149 = vpop.permute.xlu0 %4148
      %4150 = vrot.lane.b32.xlu0 %v3905, 119
      %v4151 = vpop.permute.xlu0 %4150
      %vm4152 = vcmask 973824
      %v4153 = vsel %vm4152, %v4135, %v4137
      %v4154 = vsel %vm4152, %v4137, %v4139
      %v4155 = vsel %vm4152, %v4139, %v4141
      %v4156 = vsel %vm4152, %v4141, %v4143
      %v4157 = vsel %vm4152, %v4143, %v4145
      %v4158 = vsel %vm4152, %v4145, %v4147
      %v4159 = vsel %vm4152, %v4147, %v4149
      %v4160 = vsel %vm4152, %v4149, %v4151
      %v4162 = vsel %vm732, %v4133, 0
      %v4165 = vsel %vm736, %v4153, 0
      %v4168 = vsel %vm736, %v4154, 0
      %v4171 = vsel %vm736, %v4155, 0
      %v4174 = vsel %vm736, %v4156, 0
      %v4177 = vsel %vm736, %v4157, 0
      %v4180 = vsel %vm736, %v4158, 0
      %v4183 = vsel %vm736, %v4159, 0
      %v4186 = vsel %vm736, %v4160, 0
      %4188 = vmatprep.subr.bf16.mxu0 %v4168
      %4189 = vmatpush1.bf16.msra.mxu0 %v4165
      %4190 = vmatprep.subr.bf16.mxu0 0
      %4191 = vmatpush1.bf16.msra.mxu0 0
      %4192 = vmatprep.subr.bf16.mxu0 0
      %4193 = vmatpush1.bf16.msra.mxu0 0
      %4194 = vmatprep.subr.bf16.mxu0 0
      %4195 = vmatpush1.bf16.msra.mxu0 0
      %4196 = vmatprep.subr.bf16.mxu0 0
      %4197 = vmatpush1.bf16.msra.mxu0 0
      %4198 = vmatprep.subr.bf16.mxu0 0
      %4199 = vmatpush1.bf16.msra.mxu0 0
      %4200 = vmatprep.subr.bf16.mxu0 0
      %4201 = vmatpush1.bf16.msra.mxu0 0
      %4202 = vmatprep.subr.bf16.mxu0 0
      %4203 = vmatpush1.bf16.msra.mxu0 0
      %4204 = vmatprep.subr.bf16.mxu0 0
      %4205 = vmatpush1.bf16.msra.mxu0 0
      %4206 = vmatprep.subr.bf16.mxu0 0
      %4207 = vmatpush1.bf16.msra.mxu0 0
      %4208 = vmatprep.subr.bf16.mxu0 0
      %4209 = vmatpush1.bf16.msra.mxu0 0
      %4210 = vmatprep.subr.bf16.mxu0 0
      %4211 = vmatpush1.bf16.msra.mxu0 0
      %4212 = vmatprep.subr.bf16.mxu0 0
      %4213 = vmatpush1.bf16.msra.mxu0 0
      %4214 = vmatprep.subr.bf16.mxu0 0
      %4215 = vmatpush1.bf16.msra.mxu0 0
      %4216 = vmatprep.subr.bf16.mxu0 0
      %4217 = vmatpush1.bf16.msra.mxu0 0
      %4218 = vmatprep.subr.bf16.mxu0 0
      %4219 = vmatpush1.bf16.msra.mxu0 0
      %4220 = vmatprep.mubr.bf16.mxu0 0
      %4221 = vmatmul.mubr.bf16.gmra.mrb[0].mxu0 %v4162
      %v4222 = vpop.f32.mrb[0].mxu0
      %v4223 = vadd.f32 0.0, %v4222
      %v4224 = vpop.f32.mrb[0].mxu0
      %v4225 = vadd.f32 0.0, %v4224
      %v4226 = vpop.f32.mrb[0].mxu0
      %v4227 = vpop.f32.mrb[0].mxu0
      %4228 = vdwg.mxu0
      %4229 = vmatprep.subr.bf16.mxu0 %v4174
      %4230 = vmatpush1.bf16.msra.mxu0 %v4171
      %4231 = vmatprep.subr.bf16.mxu0 0
      %4232 = vmatpush1.bf16.msra.mxu0 0
      %4233 = vmatprep.subr.bf16.mxu0 0
      %4234 = vmatpush1.bf16.msra.mxu0 0
      %4235 = vmatprep.subr.bf16.mxu0 0
      %4236 = vmatpush1.bf16.msra.mxu0 0
      %4237 = vmatprep.subr.bf16.mxu0 0
      %4238 = vmatpush1.bf16.msra.mxu0 0
      %4239 = vmatprep.subr.bf16.mxu0 0
      %4240 = vmatpush1.bf16.msra.mxu0 0
      %4241 = vmatprep.subr.bf16.mxu0 0
      %4242 = vmatpush1.bf16.msra.mxu0 0
      %4243 = vmatprep.subr.bf16.mxu0 0
      %4244 = vmatpush1.bf16.msra.mxu0 0
      %4245 = vmatprep.subr.bf16.mxu0 0
      %4246 = vmatpush1.bf16.msra.mxu0 0
      %4247 = vmatprep.subr.bf16.mxu0 0
      %4248 = vmatpush1.bf16.msra.mxu0 0
      %4249 = vmatprep.subr.bf16.mxu0 0
      %4250 = vmatpush1.bf16.msra.mxu0 0
      %4251 = vmatprep.subr.bf16.mxu0 0
      %4252 = vmatpush1.bf16.msra.mxu0 0
      %4253 = vmatprep.subr.bf16.mxu0 0
      %4254 = vmatpush1.bf16.msra.mxu0 0
      %4255 = vmatprep.subr.bf16.mxu0 0
      %4256 = vmatpush1.bf16.msra.mxu0 0
      %4257 = vmatprep.subr.bf16.mxu0 0
      %4258 = vmatpush1.bf16.msra.mxu0 0
      %4259 = vmatprep.subr.bf16.mxu0 0
      %4260 = vmatpush1.bf16.msra.mxu0 0
      %4261 = vmatprep.mubr.bf16.mxu0 0
      %4262 = vmatmul.mubr.bf16.gmra.mrb[0].mxu0 %v4162
      %v4263 = vpop.f32.mrb[0].mxu0
      %v4264 = vadd.f32 0.0, %v4263
      %v4265 = vpop.f32.mrb[0].mxu0
      %v4266 = vadd.f32 0.0, %v4265
      %v4267 = vpop.f32.mrb[0].mxu0
      %v4268 = vpop.f32.mrb[0].mxu0
      %4269 = vdwg.mxu0
      %4270 = vmatprep.subr.bf16.mxu0 %v4180
      %4271 = vmatpush1.bf16.msra.mxu0 %v4177
      %4272 = vmatprep.subr.bf16.mxu0 0
      %4273 = vmatpush1.bf16.msra.mxu0 0
      %4274 = vmatprep.subr.bf16.mxu0 0
      %4275 = vmatpush1.bf16.msra.mxu0 0
      %4276 = vmatprep.subr.bf16.mxu0 0
      %4277 = vmatpush1.bf16.msra.mxu0 0
      %4278 = vmatprep.subr.bf16.mxu0 0
      %4279 = vmatpush1.bf16.msra.mxu0 0
      %4280 = vmatprep.subr.bf16.mxu0 0
      %4281 = vmatpush1.bf16.msra.mxu0 0
      %4282 = vmatprep.subr.bf16.mxu0 0
      %4283 = vmatpush1.bf16.msra.mxu0 0
      %4284 = vmatprep.subr.bf16.mxu0 0
      %4285 = vmatpush1.bf16.msra.mxu0 0
      %4286 = vmatprep.subr.bf16.mxu0 0
      %4287 = vmatpush1.bf16.msra.mxu0 0
      %4288 = vmatprep.subr.bf16.mxu0 0
      %4289 = vmatpush1.bf16.msra.mxu0 0
      %4290 = vmatprep.subr.bf16.mxu0 0
      %4291 = vmatpush1.bf16.msra.mxu0 0
      %4292 = vmatprep.subr.bf16.mxu0 0
      %4293 = vmatpush1.bf16.msra.mxu0 0
      %4294 = vmatprep.subr.bf16.mxu0 0
      %4295 = vmatpush1.bf16.msra.mxu0 0
      %4296 = vmatprep.subr.bf16.mxu0 0
      %4297 = vmatpush1.bf16.msra.mxu0 0
      %4298 = vmatprep.subr.bf16.mxu0 0
      %4299 = vmatpush1.bf16.msra.mxu0 0
      %4300 = vmatprep.subr.bf16.mxu0 0
      %4301 = vmatpush1.bf16.msra.mxu0 0
      %4302 = vmatprep.mubr.bf16.mxu0 0
      %4303 = vmatmul.mubr.bf16.gmra.mrb[0].mxu0 %v4162
      %v4304 = vpop.f32.mrb[0].mxu0
      %v4305 = vadd.f32 0.0, %v4304
      %v4306 = vpop.f32.mrb[0].mxu0
      %v4307 = vadd.f32 0.0, %v4306
      %v4308 = vpop.f32.mrb[0].mxu0
      %v4309 = vpop.f32.mrb[0].mxu0
      %4310 = vdwg.mxu0
      %4311 = vmatprep.subr.bf16.mxu0 %v4186
      %4312 = vmatpush1.bf16.msra.mxu0 %v4183
      %4313 = vmatprep.subr.bf16.mxu0 0
      %4314 = vmatpush1.bf16.msra.mxu0 0
      %4315 = vmatprep.subr.bf16.mxu0 0
      %4316 = vmatpush1.bf16.msra.mxu0 0
      %4317 = vmatprep.subr.bf16.mxu0 0
      %4318 = vmatpush1.bf16.msra.mxu0 0
      %4319 = vmatprep.subr.bf16.mxu0 0
      %4320 = vmatpush1.bf16.msra.mxu0 0
      %4321 = vmatprep.subr.bf16.mxu0 0
      %4322 = vmatpush1.bf16.msra.mxu0 0
      %4323 = vmatprep.subr.bf16.mxu0 0
      %4324 = vmatpush1.bf16.msra.mxu0 0
      %4325 = vmatprep.subr.bf16.mxu0 0
      %4326 = vmatpush1.bf16.msra.mxu0 0
      %4327 = vmatprep.subr.bf16.mxu0 0
      %4328 = vmatpush1.bf16.msra.mxu0 0
      %4329 = vmatprep.subr.bf16.mxu0 0
      %4330 = vmatpush1.bf16.msra.mxu0 0
      %4331 = vmatprep.subr.bf16.mxu0 0
      %4332 = vmatpush1.bf16.msra.mxu0 0
      %4333 = vmatprep.subr.bf16.mxu0 0
      %4334 = vmatpush1.bf16.msra.mxu0 0
      %4335 = vmatprep.subr.bf16.mxu0 0
      %4336 = vmatpush1.bf16.msra.mxu0 0
      %4337 = vmatprep.subr.bf16.mxu0 0
      %4338 = vmatpush1.bf16.msra.mxu0 0
      %4339 = vmatprep.subr.bf16.mxu0 0
      %4340 = vmatpush1.bf16.msra.mxu0 0
      %4341 = vmatprep.subr.bf16.mxu0 0
      %4342 = vmatpush1.bf16.msra.mxu0 0
      %4343 = vmatprep.mubr.bf16.mxu0 0
      %4344 = vmatmul.mubr.bf16.gmra.mrb[0].mxu0 %v4162
      %v4345 = vpop.f32.mrb[0].mxu0
      %v4346 = vadd.f32 0.0, %v4345
      %v4347 = vpop.f32.mrb[0].mxu0
      %v4348 = vadd.f32 0.0, %v4347
      %v4349 = vpop.f32.mrb[0].mxu0
      %v4350 = vpop.f32.mrb[0].mxu0
      %4351 = vdwg.mxu0
      %v4352 = vadd.f32 %v4124, %v4223
      %v4353 = vadd.f32 %v4125, %v4225
      %v4354 = vadd.f32 %v4126, %v4264
      %v4355 = vadd.f32 %v4127, %v4266
      %v4356 = vadd.f32 %v4128, %v4305
      %v4357 = vadd.f32 %v4129, %v4307
      %v4358 = vadd.f32 %v4130, %v4346
      %v4359 = vadd.f32 %v4131, %v4348
      %s4360 = scalar_lea.vmem %s3, 64
      %v4361 = vld [vmem:[%s4360] sm:$0xf]
      %4362 = vrot.lane.b32.xlu0 %v3897, 118
      %v4363 = vpop.permute.xlu0 %4362
      %4364 = vrot.lane.b32.xlu0 %v3898, 118
      %v4365 = vpop.permute.xlu0 %4364
      %4366 = vrot.lane.b32.xlu0 %v3899, 118
      %v4367 = vpop.permute.xlu0 %4366
      %4368 = vrot.lane.b32.xlu0 %v3900, 118
      %v4369 = vpop.permute.xlu0 %4368
      %4370 = vrot.lane.b32.xlu0 %v3901, 118
      %v4371 = vpop.permute.xlu0 %4370
      %4372 = vrot.lane.b32.xlu0 %v3902, 118
      %v4373 = vpop.permute.xlu0 %4372
      %4374 = vrot.lane.b32.xlu0 %v3903, 118
      %v4375 = vpop.permute.xlu0 %4374
      %4376 = vrot.lane.b32.xlu0 %v3904, 118
      %v4377 = vpop.permute.xlu0 %4376
      %4378 = vrot.lane.b32.xlu0 %v3905, 118
      %v4379 = vpop.permute.xlu0 %4378
      %vm4380 = vcmask 965632
      %v4381 = vsel %vm4380, %v4363, %v4365
      %v4382 = vsel %vm4380, %v4365, %v4367
      %v4383 = vsel %vm4380, %v4367, %v4369
      %v4384 = vsel %vm4380, %v4369, %v4371
      %v4385 = vsel %vm4380, %v4371, %v4373
      %v4386 = vsel %vm4380, %v4373, %v4375
      %v4387 = vsel %vm4380, %v4375, %v4377
      %v4388 = vsel %vm4380, %v4377, %v4379
      %v4390 = vsel %vm732, %v4361, 0
      %v4393 = vsel %vm736, %v4381, 0
      %v4396 = vsel %vm736, %v4382, 0
      %v4399 = vsel %vm736, %v4383, 0
      %v4402 = vsel %vm736, %v4384, 0
      %v4405 = vsel %vm736, %v4385, 0
      %v4408 = vsel %vm736, %v4386, 0
      %v4411 = vsel %vm736, %v4387, 0
      %v4414 = vsel %vm736, %v4388, 0
      %4416 = vmatprep.subr.bf16.mxu0 %v4396
      %4417 = vmatpush1.bf16.msra.mxu0 %v4393
      %4418 = vmatprep.subr.bf16.mxu0 0
      %4419 = vmatpush1.bf16.msra.mxu0 0
      %4420 = vmatprep.subr.bf16.mxu0 0
      %4421 = vmatpush1.bf16.msra.mxu0 0
      %4422 = vmatprep.subr.bf16.mxu0 0
      %4423 = vmatpush1.bf16.msra.mxu0 0
      %4424 = vmatprep.subr.bf16.mxu0 0
      %4425 = vmatpush1.bf16.msra.mxu0 0
      %4426 = vmatprep.subr.bf16.mxu0 0
      %4427 = vmatpush1.bf16.msra.mxu0 0
      %4428 = vmatprep.subr.bf16.mxu0 0
      %4429 = vmatpush1.bf16.msra.mxu0 0
      %4430 = vmatprep.subr.bf16.mxu0 0
      %4431 = vmatpush1.bf16.msra.mxu0 0
      %4432 = vmatprep.subr.bf16.mxu0 0
      %4433 = vmatpush1.bf16.msra.mxu0 0
      %4434 = vmatprep.subr.bf16.mxu0 0
      %4435 = vmatpush1.bf16.msra.mxu0 0
      %4436 = vmatprep.subr.bf16.mxu0 0
      %4437 = vmatpush1.bf16.msra.mxu0 0
      %4438 = vmatprep.subr.bf16.mxu0 0
      %4439 = vmatpush1.bf16.msra.mxu0 0
      %4440 = vmatprep.subr.bf16.mxu0 0
      %4441 = vmatpush1.bf16.msra.mxu0 0
      %4442 = vmatprep.subr.bf16.mxu0 0
      %4443 = vmatpush1.bf16.msra.mxu0 0
      %4444 = vmatprep.subr.bf16.mxu0 0
      %4445 = vmatpush1.bf16.msra.mxu0 0
      %4446 = vmatprep.subr.bf16.mxu0 0
      %4447 = vmatpush1.bf16.msra.mxu0 0
      %4448 = vmatprep.mubr.bf16.mxu0 0
      %4449 = vmatmul.mubr.bf16.gmra.mrb[0].mxu0 %v4390
      %v4450 = vpop.f32.mrb[0].mxu0
      %v4451 = vadd.f32 0.0, %v4450
      %v4452 = vpop.f32.mrb[0].mxu0
      %v4453 = vadd.f32 0.0, %v4452
      %v4454 = vpop.f32.mrb[0].mxu0
      %v4455 = vpop.f32.mrb[0].mxu0
      %4456 = vdwg.mxu0
      %4457 = vmatprep.subr.bf16.mxu0 %v4402
      %4458 = vmatpush1.bf16.msra.mxu0 %v4399
      %4459 = vmatprep.subr.bf16.mxu0 0
      %4460 = vmatpush1.bf16.msra.mxu0 0
      %4461 = vmatprep.subr.bf16.mxu0 0
      %4462 = vmatpush1.bf16.msra.mxu0 0
      %4463 = vmatprep.subr.bf16.mxu0 0
      %4464 = vmatpush1.bf16.msra.mxu0 0
      %4465 = vmatprep.subr.bf16.mxu0 0
      %4466 = vmatpush1.bf16.msra.mxu0 0
      %4467 = vmatprep.subr.bf16.mxu0 0
      %4468 = vmatpush1.bf16.msra.mxu0 0
      %4469 = vmatprep.subr.bf16.mxu0 0
      %4470 = vmatpush1.bf16.msra.mxu0 0
      %4471 = vmatprep.subr.bf16.mxu0 0
      %4472 = vmatpush1.bf16.msra.mxu0 0
      %4473 = vmatprep.subr.bf16.mxu0 0
      %4474 = vmatpush1.bf16.msra.mxu0 0
      %4475 = vmatprep.subr.bf16.mxu0 0
      %4476 = vmatpush1.bf16.msra.mxu0 0
      %4477 = vmatprep.subr.bf16.mxu0 0
      %4478 = vmatpush1.bf16.msra.mxu0 0
      %4479 = vmatprep.subr.bf16.mxu0 0
      %4480 = vmatpush1.bf16.msra.mxu0 0
      %4481 = vmatprep.subr.bf16.mxu0 0
      %4482 = vmatpush1.bf16.msra.mxu0 0
      %4483 = vmatprep.subr.bf16.mxu0 0
      %4484 = vmatpush1.bf16.msra.mxu0 0
      %4485 = vmatprep.subr.bf16.mxu0 0
      %4486 = vmatpush1.bf16.msra.mxu0 0
      %4487 = vmatprep.subr.bf16.mxu0 0
      %4488 = vmatpush1.bf16.msra.mxu0 0
      %4489 = vmatprep.mubr.bf16.mxu0 0
      %4490 = vmatmul.mubr.bf16.gmra.mrb[0].mxu0 %v4390
      %v4491 = vpop.f32.mrb[0].mxu0
      %v4492 = vadd.f32 0.0, %v4491
      %v4493 = vpop.f32.mrb[0].mxu0
      %v4494 = vadd.f32 0.0, %v4493
      %v4495 = vpop.f32.mrb[0].mxu0
      %v4496 = vpop.f32.mrb[0].mxu0
      %4497 = vdwg.mxu0
      %4498 = vmatprep.subr.bf16.mxu0 %v4408
      %4499 = vmatpush1.bf16.msra.mxu0 %v4405
      %4500 = vmatprep.subr.bf16.mxu0 0
      %4501 = vmatpush1.bf16.msra.mxu0 0
      %4502 = vmatprep.subr.bf16.mxu0 0
      %4503 = vmatpush1.bf16.msra.mxu0 0
      %4504 = vmatprep.subr.bf16.mxu0 0
      %4505 = vmatpush1.bf16.msra.mxu0 0
      %4506 = vmatprep.subr.bf16.mxu0 0
      %4507 = vmatpush1.bf16.msra.mxu0 0
      %4508 = vmatprep.subr.bf16.mxu0 0
      %4509 = vmatpush1.bf16.msra.mxu0 0
      %4510 = vmatprep.subr.bf16.mxu0 0
      %4511 = vmatpush1.bf16.msra.mxu0 0
      %4512 = vmatprep.subr.bf16.mxu0 0
      %4513 = vmatpush1.bf16.msra.mxu0 0
      %4514 = vmatprep.subr.bf16.mxu0 0
      %4515 = vmatpush1.bf16.msra.mxu0 0
      %4516 = vmatprep.subr.bf16.mxu0 0
      %4517 = vmatpush1.bf16.msra.mxu0 0
      %4518 = vmatprep.subr.bf16.mxu0 0
      %4519 = vmatpush1.bf16.msra.mxu0 0
      %4520 = vmatprep.subr.bf16.mxu0 0
      %4521 = vmatpush1.bf16.msra.mxu0 0
      %4522 = vmatprep.subr.bf16.mxu0 0
      %4523 = vmatpush1.bf16.msra.mxu0 0
      %4524 = vmatprep.subr.bf16.mxu0 0
      %4525 = vmatpush1.bf16.msra.mxu0 0
      %4526 = vmatprep.subr.bf16.mxu0 0
      %4527 = vmatpush1.bf16.msra.mxu0 0
      %4528 = vmatprep.subr.bf16.mxu0 0
      %4529 = vmatpush1.bf16.msra.mxu0 0
      %4530 = vmatprep.mubr.bf16.mxu0 0
      %4531 = vmatmul.mubr.bf16.gmra.mrb[0].mxu0 %v4390
      %v4532 = vpop.f32.mrb[0].mxu0
      %v4533 = vadd.f32 0.0, %v4532
      %v4534 = vpop.f32.mrb[0].mxu0
      %v4535 = vadd.f32 0.0, %v4534
      %v4536 = vpop.f32.mrb[0].mxu0
      %v4537 = vpop.f32.mrb[0].mxu0
      %4538 = vdwg.mxu0
      %4539 = vmatprep.subr.bf16.mxu0 %v4414
      %4540 = vmatpush1.bf16.msra.mxu0 %v4411
      %4541 = vmatprep.subr.bf16.mxu0 0
      %4542 = vmatpush1.bf16.msra.mxu0 0
      %4543 = vmatprep.subr.bf16.mxu0 0
      %4544 = vmatpush1.bf16.msra.mxu0 0
      %4545 = vmatprep.subr.bf16.mxu0 0
      %4546 = vmatpush1.bf16.msra.mxu0 0
      %4547 = vmatprep.subr.bf16.mxu0 0
      %4548 = vmatpush1.bf16.msra.mxu0 0
      %4549 = vmatprep.subr.bf16.mxu0 0
      %4550 = vmatpush1.bf16.msra.mxu0 0
      %4551 = vmatprep.subr.bf16.mxu0 0
      %4552 = vmatpush1.bf16.msra.mxu0 0
      %4553 = vmatprep.subr.bf16.mxu0 0
      %4554 = vmatpush1.bf16.msra.mxu0 0
      %4555 = vmatprep.subr.bf16.mxu0 0
      %4556 = vmatpush1.bf16.msra.mxu0 0
      %4557 = vmatprep.subr.bf16.mxu0 0
      %4558 = vmatpush1.bf16.msra.mxu0 0
      %4559 = vmatprep.subr.bf16.mxu0 0
      %4560 = vmatpush1.bf16.msra.mxu0 0
      %4561 = vmatprep.subr.bf16.mxu0 0
      %4562 = vmatpush1.bf16.msra.mxu0 0
      %4563 = vmatprep.subr.bf16.mxu0 0
      %4564 = vmatpush1.bf16.msra.mxu0 0
      %4565 = vmatprep.subr.bf16.mxu0 0
      %4566 = vmatpush1.bf16.msra.mxu0 0
      %4567 = vmatprep.subr.bf16.mxu0 0
      %4568 = vmatpush1.bf16.msra.mxu0 0
      %4569 = vmatprep.subr.bf16.mxu0 0
      %4570 = vmatpush1.bf16.msra.mxu0 0
      %4571 = vmatprep.mubr.bf16.mxu0 0
      %4572 = vmatmul.mubr.bf16.gmra.mrb[0].mxu0 %v4390
      %v4573 = vpop.f32.mrb[0].mxu0
      %v4574 = vadd.f32 0.0, %v4573
      %v4575 = vpop.f32.mrb[0].mxu0
      %v4576 = vadd.f32 0.0, %v4575
      %v4577 = vpop.f32.mrb[0].mxu0
      %v4578 = vpop.f32.mrb[0].mxu0
      %4579 = vdwg.mxu0
      %v4580 = vadd.f32 %v4352, %v4451
      %v4581 = vadd.f32 %v4353, %v4453
      %v4582 = vadd.f32 %v4354, %v4492
      %v4583 = vadd.f32 %v4355, %v4494
      %v4584 = vadd.f32 %v4356, %v4533
      %v4585 = vadd.f32 %v4357, %v4535
      %v4586 = vadd.f32 %v4358, %v4574
      %v4587 = vadd.f32 %v4359, %v4576
      %s4588 = scalar_lea.vmem %s3, 68
      %v4589 = vld [vmem:[%s4588] sm:$0xf]
      %4590 = vrot.lane.b32.xlu0 %v3897, 117
      %v4591 = vpop.permute.xlu0 %4590
      %4592 = vrot.lane.b32.xlu0 %v3898, 117
      %v4593 = vpop.permute.xlu0 %4592
      %4594 = vrot.lane.b32.xlu0 %v3899, 117
      %v4595 = vpop.permute.xlu0 %4594
      %4596 = vrot.lane.b32.xlu0 %v3900, 117
      %v4597 = vpop.permute.xlu0 %4596
      %4598 = vrot.lane.b32.xlu0 %v3901, 117
      %v4599 = vpop.permute.xlu0 %4598
      %4600 = vrot.lane.b32.xlu0 %v3902, 117
      %v4601 = vpop.permute.xlu0 %4600
      %4602 = vrot.lane.b32.xlu0 %v3903, 117
      %v4603 = vpop.permute.xlu0 %4602
      %4604 = vrot.lane.b32.xlu0 %v3904, 117
      %v4605 = vpop.permute.xlu0 %4604
      %4606 = vrot.lane.b32.xlu0 %v3905, 117
      %v4607 = vpop.permute.xlu0 %4606
      %vm4608 = vcmask 957440
      %v4609 = vsel %vm4608, %v4591, %v4593
      %v4610 = vsel %vm4608, %v4593, %v4595
      %v4611 = vsel %vm4608, %v4595, %v4597
      %v4612 = vsel %vm4608, %v4597, %v4599
      %v4613 = vsel %vm4608, %v4599, %v4601
      %v4614 = vsel %vm4608, %v4601, %v4603
      %v4615 = vsel %vm4608, %v4603, %v4605
      %v4616 = vsel %vm4608, %v4605, %v4607
      %v4618 = vsel %vm732, %v4589, 0
      %v4621 = vsel %vm736, %v4609, 0
      %v4624 = vsel %vm736, %v4610, 0
      %v4627 = vsel %vm736, %v4611, 0
      %v4630 = vsel %vm736, %v4612, 0
      %v4633 = vsel %vm736, %v4613, 0
      %v4636 = vsel %vm736, %v4614, 0
      %v4639 = vsel %vm736, %v4615, 0
      %v4642 = vsel %vm736, %v4616, 0
      %4644 = vmatprep.subr.bf16.mxu0 %v4624
      %4645 = vmatpush1.bf16.msra.mxu0 %v4621
      %4646 = vmatprep.subr.bf16.mxu0 0
      %4647 = vmatpush1.bf16.msra.mxu0 0
      %4648 = vmatprep.subr.bf16.mxu0 0
      %4649 = vmatpush1.bf16.msra.mxu0 0
      %4650 = vmatprep.subr.bf16.mxu0 0
      %4651 = vmatpush1.bf16.msra.mxu0 0
      %4652 = vmatprep.subr.bf16.mxu0 0
      %4653 = vmatpush1.bf16.msra.mxu0 0
      %4654 = vmatprep.subr.bf16.mxu0 0
      %4655 = vmatpush1.bf16.msra.mxu0 0
      %4656 = vmatprep.subr.bf16.mxu0 0
      %4657 = vmatpush1.bf16.msra.mxu0 0
      %4658 = vmatprep.subr.bf16.mxu0 0
      %4659 = vmatpush1.bf16.msra.mxu0 0
      %4660 = vmatprep.subr.bf16.mxu0 0
      %4661 = vmatpush1.bf16.msra.mxu0 0
      %4662 = vmatprep.subr.bf16.mxu0 0
      %4663 = vmatpush1.bf16.msra.mxu0 0
      %4664 = vmatprep.subr.bf16.mxu0 0
      %4665 = vmatpush1.bf16.msra.mxu0 0
      %4666 = vmatprep.subr.bf16.mxu0 0
      %4667 = vmatpush1.bf16.msra.mxu0 0
      %4668 = vmatprep.subr.bf16.mxu0 0
      %4669 = vmatpush1.bf16.msra.mxu0 0
      %4670 = vmatprep.subr.bf16.mxu0 0
      %4671 = vmatpush1.bf16.msra.mxu0 0
      %4672 = vmatprep.subr.bf16.mxu0 0
      %4673 = vmatpush1.bf16.msra.mxu0 0
      %4674 = vmatprep.subr.bf16.mxu0 0
      %4675 = vmatpush1.bf16.msra.mxu0 0
      %4676 = vmatprep.mubr.bf16.mxu0 0
      %4677 = vmatmul.mubr.bf16.gmra.mrb[0].mxu0 %v4618
      %v4678 = vpop.f32.mrb[0].mxu0
      %v4679 = vadd.f32 0.0, %v4678
      %v4680 = vpop.f32.mrb[0].mxu0
      %v4681 = vadd.f32 0.0, %v4680
      %v4682 = vpop.f32.mrb[0].mxu0
      %v4683 = vpop.f32.mrb[0].mxu0
      %4684 = vdwg.mxu0
      %4685 = vmatprep.subr.bf16.mxu0 %v4630
      %4686 = vmatpush1.bf16.msra.mxu0 %v4627
      %4687 = vmatprep.subr.bf16.mxu0 0
      %4688 = vmatpush1.bf16.msra.mxu0 0
      %4689 = vmatprep.subr.bf16.mxu0 0
      %4690 = vmatpush1.bf16.msra.mxu0 0
      %4691 = vmatprep.subr.bf16.mxu0 0
      %4692 = vmatpush1.bf16.msra.mxu0 0
      %4693 = vmatprep.subr.bf16.mxu0 0
      %4694 = vmatpush1.bf16.msra.mxu0 0
      %4695 = vmatprep.subr.bf16.mxu0 0
      %4696 = vmatpush1.bf16.msra.mxu0 0
      %4697 = vmatprep.subr.bf16.mxu0 0
      %4698 = vmatpush1.bf16.msra.mxu0 0
      %4699 = vmatprep.subr.bf16.mxu0 0
      %4700 = vmatpush1.bf16.msra.mxu0 0
      %4701 = vmatprep.subr.bf16.mxu0 0
      %4702 = vmatpush1.bf16.msra.mxu0 0
      %4703 = vmatprep.subr.bf16.mxu0 0
      %4704 = vmatpush1.bf16.msra.mxu0 0
      %4705 = vmatprep.subr.bf16.mxu0 0
      %4706 = vmatpush1.bf16.msra.mxu0 0
      %4707 = vmatprep.subr.bf16.mxu0 0
      %4708 = vmatpush1.bf16.msra.mxu0 0
      %4709 = vmatprep.subr.bf16.mxu0 0
      %4710 = vmatpush1.bf16.msra.mxu0 0
      %4711 = vmatprep.subr.bf16.mxu0 0
      %4712 = vmatpush1.bf16.msra.mxu0 0
      %4713 = vmatprep.subr.bf16.mxu0 0
      %4714 = vmatpush1.bf16.msra.mxu0 0
      %4715 = vmatprep.subr.bf16.mxu0 0
      %4716 = vmatpush1.bf16.msra.mxu0 0
      %4717 = vmatprep.mubr.bf16.mxu0 0
      %4718 = vmatmul.mubr.bf16.gmra.mrb[0].mxu0 %v4618
      %v4719 = vpop.f32.mrb[0].mxu0
      %v4720 = vadd.f32 0.0, %v4719
      %v4721 = vpop.f32.mrb[0].mxu0
      %v4722 = vadd.f32 0.0, %v4721
      %v4723 = vpop.f32.mrb[0].mxu0
      %v4724 = vpop.f32.mrb[0].mxu0
      %4725 = vdwg.mxu0
      %4726 = vmatprep.subr.bf16.mxu0 %v4636
      %4727 = vmatpush1.bf16.msra.mxu0 %v4633
      %4728 = vmatprep.subr.bf16.mxu0 0
      %4729 = vmatpush1.bf16.msra.mxu0 0
      %4730 = vmatprep.subr.bf16.mxu0 0
      %4731 = vmatpush1.bf16.msra.mxu0 0
      %4732 = vmatprep.subr.bf16.mxu0 0
      %4733 = vmatpush1.bf16.msra.mxu0 0
      %4734 = vmatprep.subr.bf16.mxu0 0
      %4735 = vmatpush1.bf16.msra.mxu0 0
      %4736 = vmatprep.subr.bf16.mxu0 0
      %4737 = vmatpush1.bf16.msra.mxu0 0
      %4738 = vmatprep.subr.bf16.mxu0 0
      %4739 = vmatpush1.bf16.msra.mxu0 0
      %4740 = vmatprep.subr.bf16.mxu0 0
      %4741 = vmatpush1.bf16.msra.mxu0 0
      %4742 = vmatprep.subr.bf16.mxu0 0
      %4743 = vmatpush1.bf16.msra.mxu0 0
      %4744 = vmatprep.subr.bf16.mxu0 0
      %4745 = vmatpush1.bf16.msra.mxu0 0
      %4746 = vmatprep.subr.bf16.mxu0 0
      %4747 = vmatpush1.bf16.msra.mxu0 0
      %4748 = vmatprep.subr.bf16.mxu0 0
      %4749 = vmatpush1.bf16.msra.mxu0 0
      %4750 = vmatprep.subr.bf16.mxu0 0
      %4751 = vmatpush1.bf16.msra.mxu0 0
      %4752 = vmatprep.subr.bf16.mxu0 0
      %4753 = vmatpush1.bf16.msra.mxu0 0
      %4754 = vmatprep.subr.bf16.mxu0 0
      %4755 = vmatpush1.bf16.msra.mxu0 0
      %4756 = vmatprep.subr.bf16.mxu0 0
      %4757 = vmatpush1.bf16.msra.mxu0 0
      %4758 = vmatprep.mubr.bf16.mxu0 0
      %4759 = vmatmul.mubr.bf16.gmra.mrb[0].mxu0 %v4618
      %v4760 = vpop.f32.mrb[0].mxu0
      %v4761 = vadd.f32 0.0, %v4760
      %v4762 = vpop.f32.mrb[0].mxu0
      %v4763 = vadd.f32 0.0, %v4762
      %v4764 = vpop.f32.mrb[0].mxu0
      %v4765 = vpop.f32.mrb[0].mxu0
      %4766 = vdwg.mxu0
      %4767 = vmatprep.subr.bf16.mxu0 %v4642
      %4768 = vmatpush1.bf16.msra.mxu0 %v4639
      %4769 = vmatprep.subr.bf16.mxu0 0
      %4770 = vmatpush1.bf16.msra.mxu0 0
      %4771 = vmatprep.subr.bf16.mxu0 0
      %4772 = vmatpush1.bf16.msra.mxu0 0
      %4773 = vmatprep.subr.bf16.mxu0 0
      %4774 = vmatpush1.bf16.msra.mxu0 0
      %4775 = vmatprep.subr.bf16.mxu0 0
      %4776 = vmatpush1.bf16.msra.mxu0 0
      %4777 = vmatprep.subr.bf16.mxu0 0
      %4778 = vmatpush1.bf16.msra.mxu0 0
      %4779 = vmatprep.subr.bf16.mxu0 0
      %4780 = vmatpush1.bf16.msra.mxu0 0
      %4781 = vmatprep.subr.bf16.mxu0 0
      %4782 = vmatpush1.bf16.msra.mxu0 0
      %4783 = vmatprep.subr.bf16.mxu0 0
      %4784 = vmatpush1.bf16.msra.mxu0 0
      %4785 = vmatprep.subr.bf16.mxu0 0
      %4786 = vmatpush1.bf16.msra.mxu0 0
      %4787 = vmatprep.subr.bf16.mxu0 0
      %4788 = vmatpush1.bf16.msra.mxu0 0
      %4789 = vmatprep.subr.bf16.mxu0 0
      %4790 = vmatpush1.bf16.msra.mxu0 0
      %4791 = vmatprep.subr.bf16.mxu0 0
      %4792 = vmatpush1.bf16.msra.mxu0 0
      %4793 = vmatprep.subr.bf16.mxu0 0
      %4794 = vmatpush1.bf16.msra.mxu0 0
      %4795 = vmatprep.subr.bf16.mxu0 0
      %4796 = vmatpush1.bf16.msra.mxu0 0
      %4797 = vmatprep.subr.bf16.mxu0 0
      %4798 = vmatpush1.bf16.msra.mxu0 0
      %4799 = vmatprep.mubr.bf16.mxu0 0
      %4800 = vmatmul.mubr.bf16.gmra.mrb[0].mxu0 %v4618
      %v4801 = vpop.f32.mrb[0].mxu0
      %v4802 = vadd.f32 0.0, %v4801
      %v4803 = vpop.f32.mrb[0].mxu0
      %v4804 = vadd.f32 0.0, %v4803
      %v4805 = vpop.f32.mrb[0].mxu0
      %v4806 = vpop.f32.mrb[0].mxu0
      %4807 = vdwg.mxu0
      %v4808 = vadd.f32 %v4580, %v4679
      %v4809 = vadd.f32 %v4581, %v4681
      %v4810 = vadd.f32 %v4582, %v4720
      %v4811 = vadd.f32 %v4583, %v4722
      %v4812 = vadd.f32 %v4584, %v4761
      %v4813 = vadd.f32 %v4585, %v4763
      %v4814 = vadd.f32 %v4586, %v4802
      %v4815 = vadd.f32 %v4587, %v4804
      %s4816 = scalar_lea.vmem %s3, 72
      %v4817 = vld [vmem:[%s4816] sm:$0xf]
      %4818 = vrot.lane.b32.xlu0 %v3897, 39
      %v4819 = vpop.permute.xlu0 %4818
      %4820 = vrot.lane.b32.xlu0 %v3898, 39
      %v4821 = vpop.permute.xlu0 %4820
      %4822 = vrot.lane.b32.xlu0 %v3899, 39
      %v4823 = vpop.permute.xlu0 %4822
      %4824 = vrot.lane.b32.xlu0 %v3900, 39
      %v4825 = vpop.permute.xlu0 %4824
      %4826 = vrot.lane.b32.xlu0 %v3901, 39
      %v4827 = vpop.permute.xlu0 %4826
      %4828 = vrot.lane.b32.xlu0 %v3902, 39
      %v4829 = vpop.permute.xlu0 %4828
      %4830 = vrot.lane.b32.xlu0 %v3903, 39
      %v4831 = vpop.permute.xlu0 %4830
      %4832 = vrot.lane.b32.xlu0 %v3904, 39
      %v4833 = vpop.permute.xlu0 %4832
      %4834 = vrot.lane.b32.xlu0 %v3905, 39
      %v4835 = vpop.permute.xlu0 %4834
      %vm4836 = vcmask 318464
      %v4837 = vsel %vm4836, %v4819, %v4821
      %v4838 = vsel %vm4836, %v4821, %v4823
      %v4839 = vsel %vm4836, %v4823, %v4825
      %v4840 = vsel %vm4836, %v4825, %v4827
      %v4841 = vsel %vm4836, %v4827, %v4829
      %v4842 = vsel %vm4836, %v4829, %v4831
      %v4843 = vsel %vm4836, %v4831, %v4833
      %v4844 = vsel %vm4836, %v4833, %v4835
      %v4846 = vsel %vm732, %v4817, 0
      %v4849 = vsel %vm736, %v4837, 0
      %v4852 = vsel %vm736, %v4838, 0
      %v4855 = vsel %vm736, %v4839, 0
      %v4858 = vsel %vm736, %v4840, 0
      %v4861 = vsel %vm736, %v4841, 0
      %v4864 = vsel %vm736, %v4842, 0
      %v4867 = vsel %vm736, %v4843, 0
      %v4870 = vsel %vm736, %v4844, 0
      %4872 = vmatprep.subr.bf16.mxu0 %v4852
      %4873 = vmatpush1.bf16.msra.mxu0 %v4849
      %4874 = vmatprep.subr.bf16.mxu0 0
      %4875 = vmatpush1.bf16.msra.mxu0 0
      %4876 = vmatprep.subr.bf16.mxu0 0
      %4877 = vmatpush1.bf16.msra.mxu0 0
      %4878 = vmatprep.subr.bf16.mxu0 0
      %4879 = vmatpush1.bf16.msra.mxu0 0
      %4880 = vmatprep.subr.bf16.mxu0 0
      %4881 = vmatpush1.bf16.msra.mxu0 0
      %4882 = vmatprep.subr.bf16.mxu0 0
      %4883 = vmatpush1.bf16.msra.mxu0 0
      %4884 = vmatprep.subr.bf16.mxu0 0
      %4885 = vmatpush1.bf16.msra.mxu0 0
      %4886 = vmatprep.subr.bf16.mxu0 0
      %4887 = vmatpush1.bf16.msra.mxu0 0
      %4888 = vmatprep.subr.bf16.mxu0 0
      %4889 = vmatpush1.bf16.msra.mxu0 0
      %4890 = vmatprep.subr.bf16.mxu0 0
      %4891 = vmatpush1.bf16.msra.mxu0 0
      %4892 = vmatprep.subr.bf16.mxu0 0
      %4893 = vmatpush1.bf16.msra.mxu0 0
      %4894 = vmatprep.subr.bf16.mxu0 0
      %4895 = vmatpush1.bf16.msra.mxu0 0
      %4896 = vmatprep.subr.bf16.mxu0 0
      %4897 = vmatpush1.bf16.msra.mxu0 0
      %4898 = vmatprep.subr.bf16.mxu0 0
      %4899 = vmatpush1.bf16.msra.mxu0 0
      %4900 = vmatprep.subr.bf16.mxu0 0
      %4901 = vmatpush1.bf16.msra.mxu0 0
      %4902 = vmatprep.subr.bf16.mxu0 0
      %4903 = vmatpush1.bf16.msra.mxu0 0
      %4904 = vmatprep.mubr.bf16.mxu0 0
      %4905 = vmatmul.mubr.bf16.gmra.mrb[0].mxu0 %v4846
      %v4906 = vpop.f32.mrb[0].mxu0
      %v4907 = vadd.f32 0.0, %v4906
      %v4908 = vpop.f32.mrb[0].mxu0
      %v4909 = vadd.f32 0.0, %v4908
      %v4910 = vpop.f32.mrb[0].mxu0
      %v4911 = vpop.f32.mrb[0].mxu0
      %4912 = vdwg.mxu0
      %4913 = vmatprep.subr.bf16.mxu0 %v4858
      %4914 = vmatpush1.bf16.msra.mxu0 %v4855
      %4915 = vmatprep.subr.bf16.mxu0 0
      %4916 = vmatpush1.bf16.msra.mxu0 0
      %4917 = vmatprep.subr.bf16.mxu0 0
      %4918 = vmatpush1.bf16.msra.mxu0 0
      %4919 = vmatprep.subr.bf16.mxu0 0
      %4920 = vmatpush1.bf16.msra.mxu0 0
      %4921 = vmatprep.subr.bf16.mxu0 0
      %4922 = vmatpush1.bf16.msra.mxu0 0
      %4923 = vmatprep.subr.bf16.mxu0 0
      %4924 = vmatpush1.bf16.msra.mxu0 0
      %4925 = vmatprep.subr.bf16.mxu0 0
      %4926 = vmatpush1.bf16.msra.mxu0 0
      %4927 = vmatprep.subr.bf16.mxu0 0
      %4928 = vmatpush1.bf16.msra.mxu0 0
      %4929 = vmatprep.subr.bf16.mxu0 0
      %4930 = vmatpush1.bf16.msra.mxu0 0
      %4931 = vmatprep.subr.bf16.mxu0 0
      %4932 = vmatpush1.bf16.msra.mxu0 0
      %4933 = vmatprep.subr.bf16.mxu0 0
      %4934 = vmatpush1.bf16.msra.mxu0 0
      %4935 = vmatprep.subr.bf16.mxu0 0
      %4936 = vmatpush1.bf16.msra.mxu0 0
      %4937 = vmatprep.subr.bf16.mxu0 0
      %4938 = vmatpush1.bf16.msra.mxu0 0
      %4939 = vmatprep.subr.bf16.mxu0 0
      %4940 = vmatpush1.bf16.msra.mxu0 0
      %4941 = vmatprep.subr.bf16.mxu0 0
      %4942 = vmatpush1.bf16.msra.mxu0 0
      %4943 = vmatprep.subr.bf16.mxu0 0
      %4944 = vmatpush1.bf16.msra.mxu0 0
      %4945 = vmatprep.mubr.bf16.mxu0 0
      %4946 = vmatmul.mubr.bf16.gmra.mrb[0].mxu0 %v4846
      %v4947 = vpop.f32.mrb[0].mxu0
      %v4948 = vadd.f32 0.0, %v4947
      %v4949 = vpop.f32.mrb[0].mxu0
      %v4950 = vadd.f32 0.0, %v4949
      %v4951 = vpop.f32.mrb[0].mxu0
      %v4952 = vpop.f32.mrb[0].mxu0
      %4953 = vdwg.mxu0
      %4954 = vmatprep.subr.bf16.mxu0 %v4864
      %4955 = vmatpush1.bf16.msra.mxu0 %v4861
      %4956 = vmatprep.subr.bf16.mxu0 0
      %4957 = vmatpush1.bf16.msra.mxu0 0
      %4958 = vmatprep.subr.bf16.mxu0 0
      %4959 = vmatpush1.bf16.msra.mxu0 0
      %4960 = vmatprep.subr.bf16.mxu0 0
      %4961 = vmatpush1.bf16.msra.mxu0 0
      %4962 = vmatprep.subr.bf16.mxu0 0
      %4963 = vmatpush1.bf16.msra.mxu0 0
      %4964 = vmatprep.subr.bf16.mxu0 0
      %4965 = vmatpush1.bf16.msra.mxu0 0
      %4966 = vmatprep.subr.bf16.mxu0 0
      %4967 = vmatpush1.bf16.msra.mxu0 0
      %4968 = vmatprep.subr.bf16.mxu0 0
      %4969 = vmatpush1.bf16.msra.mxu0 0
      %4970 = vmatprep.subr.bf16.mxu0 0
      %4971 = vmatpush1.bf16.msra.mxu0 0
      %4972 = vmatprep.subr.bf16.mxu0 0
      %4973 = vmatpush1.bf16.msra.mxu0 0
      %4974 = vmatprep.subr.bf16.mxu0 0
      %4975 = vmatpush1.bf16.msra.mxu0 0
      %4976 = vmatprep.subr.bf16.mxu0 0
      %4977 = vmatpush1.bf16.msra.mxu0 0
      %4978 = vmatprep.subr.bf16.mxu0 0
      %4979 = vmatpush1.bf16.msra.mxu0 0
      %4980 = vmatprep.subr.bf16.mxu0 0
      %4981 = vmatpush1.bf16.msra.mxu0 0
      %4982 = vmatprep.subr.bf16.mxu0 0
      %4983 = vmatpush1.bf16.msra.mxu0 0
      %4984 = vmatprep.subr.bf16.mxu0 0
      %4985 = vmatpush1.bf16.msra.mxu0 0
      %4986 = vmatprep.mubr.bf16.mxu0 0
      %4987 = vmatmul.mubr.bf16.gmra.mrb[0].mxu0 %v4846
      %v4988 = vpop.f32.mrb[0].mxu0
      %v4989 = vadd.f32 0.0, %v4988
      %v4990 = vpop.f32.mrb[0].mxu0
      %v4991 = vadd.f32 0.0, %v4990
      %v4992 = vpop.f32.mrb[0].mxu0
      %v4993 = vpop.f32.mrb[0].mxu0
      %4994 = vdwg.mxu0
      %4995 = vmatprep.subr.bf16.mxu0 %v4870
      %4996 = vmatpush1.bf16.msra.mxu0 %v4867
      %4997 = vmatprep.subr.bf16.mxu0 0
      %4998 = vmatpush1.bf16.msra.mxu0 0
      %4999 = vmatprep.subr.bf16.mxu0 0
      %5000 = vmatpush1.bf16.msra.mxu0 0
      %5001 = vmatprep.subr.bf16.mxu0 0
      %5002 = vmatpush1.bf16.msra.mxu0 0
      %5003 = vmatprep.subr.bf16.mxu0 0
      %5004 = vmatpush1.bf16.msra.mxu0 0
      %5005 = vmatprep.subr.bf16.mxu0 0
      %5006 = vmatpush1.bf16.msra.mxu0 0
      %5007 = vmatprep.subr.bf16.mxu0 0
      %5008 = vmatpush1.bf16.msra.mxu0 0
      %5009 = vmatprep.subr.bf16.mxu0 0
      %5010 = vmatpush1.bf16.msra.mxu0 0
      %5011 = vmatprep.subr.bf16.mxu0 0
      %5012 = vmatpush1.bf16.msra.mxu0 0
      %5013 = vmatprep.subr.bf16.mxu0 0
      %5014 = vmatpush1.bf16.msra.mxu0 0
      %5015 = vmatprep.subr.bf16.mxu0 0
      %5016 = vmatpush1.bf16.msra.mxu0 0
      %5017 = vmatprep.subr.bf16.mxu0 0
      %5018 = vmatpush1.bf16.msra.mxu0 0
      %5019 = vmatprep.subr.bf16.mxu0 0
      %5020 = vmatpush1.bf16.msra.mxu0 0
      %5021 = vmatprep.subr.bf16.mxu0 0
      %5022 = vmatpush1.bf16.msra.mxu0 0
      %5023 = vmatprep.subr.bf16.mxu0 0
      %5024 = vmatpush1.bf16.msra.mxu0 0
      %5025 = vmatprep.subr.bf16.mxu0 0
      %5026 = vmatpush1.bf16.msra.mxu0 0
      %5027 = vmatprep.mubr.bf16.mxu0 0
      %5028 = vmatmul.mubr.bf16.gmra.mrb[0].mxu0 %v4846
      %v5029 = vpop.f32.mrb[0].mxu0
      %v5030 = vadd.f32 0.0, %v5029
      %v5031 = vpop.f32.mrb[0].mxu0
      %v5032 = vadd.f32 0.0, %v5031
      %v5033 = vpop.f32.mrb[0].mxu0
      %v5034 = vpop.f32.mrb[0].mxu0
      %5035 = vdwg.mxu0
      %v5036 = vadd.f32 %v4808, %v4907
      %v5037 = vadd.f32 %v4809, %v4909
      %v5038 = vadd.f32 %v4810, %v4948
      %v5039 = vadd.f32 %v4811, %v4950
      %v5040 = vadd.f32 %v4812, %v4989
      %v5041 = vadd.f32 %v4813, %v4991
      %v5042 = vadd.f32 %v4814, %v5030
      %v5043 = vadd.f32 %v4815, %v5032
      %s5044 = scalar_lea.vmem %s3, 76
      %v5045 = vld [vmem:[%s5044] sm:$0xf]
      %5046 = vrot.lane.b32.xlu0 %v3897, 38
      %v5047 = vpop.permute.xlu0 %5046
      %5048 = vrot.lane.b32.xlu0 %v3898, 38
      %v5049 = vpop.permute.xlu0 %5048
      %5050 = vrot.lane.b32.xlu0 %v3899, 38
      %v5051 = vpop.permute.xlu0 %5050
      %5052 = vrot.lane.b32.xlu0 %v3900, 38
      %v5053 = vpop.permute.xlu0 %5052
      %5054 = vrot.lane.b32.xlu0 %v3901, 38
      %v5055 = vpop.permute.xlu0 %5054
      %5056 = vrot.lane.b32.xlu0 %v3902, 38
      %v5057 = vpop.permute.xlu0 %5056
      %5058 = vrot.lane.b32.xlu0 %v3903, 38
      %v5059 = vpop.permute.xlu0 %5058
      %5060 = vrot.lane.b32.xlu0 %v3904, 38
      %v5061 = vpop.permute.xlu0 %5060
      %5062 = vrot.lane.b32.xlu0 %v3905, 38
      %v5063 = vpop.permute.xlu0 %5062
      %vm5064 = vcmask 310272
      %v5065 = vsel %vm5064, %v5047, %v5049
      %v5066 = vsel %vm5064, %v5049, %v5051
      %v5067 = vsel %vm5064, %v5051, %v5053
      %v5068 = vsel %vm5064, %v5053, %v5055
      %v5069 = vsel %vm5064, %v5055, %v5057
      %v5070 = vsel %vm5064, %v5057, %v5059
      %v5071 = vsel %vm5064, %v5059, %v5061
      %v5072 = vsel %vm5064, %v5061, %v5063
      %v5074 = vsel %vm732, %v5045, 0
      %v5077 = vsel %vm736, %v5065, 0
      %v5080 = vsel %vm736, %v5066, 0
      %v5083 = vsel %vm736, %v5067, 0
      %v5086 = vsel %vm736, %v5068, 0
      %v5089 = vsel %vm736, %v5069, 0
      %v5092 = vsel %vm736, %v5070, 0
      %v5095 = vsel %vm736, %v5071, 0
      %v5098 = vsel %vm736, %v5072, 0
      %5100 = vmatprep.subr.bf16.mxu0 %v5080
      %5101 = vmatpush1.bf16.msra.mxu0 %v5077
      %5102 = vmatprep.subr.bf16.mxu0 0
      %5103 = vmatpush1.bf16.msra.mxu0 0
      %5104 = vmatprep.subr.bf16.mxu0 0
      %5105 = vmatpush1.bf16.msra.mxu0 0
      %5106 = vmatprep.subr.bf16.mxu0 0
      %5107 = vmatpush1.bf16.msra.mxu0 0
      %5108 = vmatprep.subr.bf16.mxu0 0
      %5109 = vmatpush1.bf16.msra.mxu0 0
      %5110 = vmatprep.subr.bf16.mxu0 0
      %5111 = vmatpush1.bf16.msra.mxu0 0
      %5112 = vmatprep.subr.bf16.mxu0 0
      %5113 = vmatpush1.bf16.msra.mxu0 0
      %5114 = vmatprep.subr.bf16.mxu0 0
      %5115 = vmatpush1.bf16.msra.mxu0 0
      %5116 = vmatprep.subr.bf16.mxu0 0
      %5117 = vmatpush1.bf16.msra.mxu0 0
      %5118 = vmatprep.subr.bf16.mxu0 0
      %5119 = vmatpush1.bf16.msra.mxu0 0
      %5120 = vmatprep.subr.bf16.mxu0 0
      %5121 = vmatpush1.bf16.msra.mxu0 0
      %5122 = vmatprep.subr.bf16.mxu0 0
      %5123 = vmatpush1.bf16.msra.mxu0 0
      %5124 = vmatprep.subr.bf16.mxu0 0
      %5125 = vmatpush1.bf16.msra.mxu0 0
      %5126 = vmatprep.subr.bf16.mxu0 0
      %5127 = vmatpush1.bf16.msra.mxu0 0
      %5128 = vmatprep.subr.bf16.mxu0 0
      %5129 = vmatpush1.bf16.msra.mxu0 0
      %5130 = vmatprep.subr.bf16.mxu0 0
      %5131 = vmatpush1.bf16.msra.mxu0 0
      %5132 = vmatprep.mubr.bf16.mxu0 0
      %5133 = vmatmul.mubr.bf16.gmra.mrb[0].mxu0 %v5074
      %v5134 = vpop.f32.mrb[0].mxu0
      %v5135 = vadd.f32 0.0, %v5134
      %v5136 = vpop.f32.mrb[0].mxu0
      %v5137 = vadd.f32 0.0, %v5136
      %v5138 = vpop.f32.mrb[0].mxu0
      %v5139 = vpop.f32.mrb[0].mxu0
      %5140 = vdwg.mxu0
      %5141 = vmatprep.subr.bf16.mxu0 %v5086
      %5142 = vmatpush1.bf16.msra.mxu0 %v5083
      %5143 = vmatprep.subr.bf16.mxu0 0
      %5144 = vmatpush1.bf16.msra.mxu0 0
      %5145 = vmatprep.subr.bf16.mxu0 0
      %5146 = vmatpush1.bf16.msra.mxu0 0
      %5147 = vmatprep.subr.bf16.mxu0 0
      %5148 = vmatpush1.bf16.msra.mxu0 0
      %5149 = vmatprep.subr.bf16.mxu0 0
      %5150 = vmatpush1.bf16.msra.mxu0 0
      %5151 = vmatprep.subr.bf16.mxu0 0
      %5152 = vmatpush1.bf16.msra.mxu0 0
      %5153 = vmatprep.subr.bf16.mxu0 0
      %5154 = vmatpush1.bf16.msra.mxu0 0
      %5155 = vmatprep.subr.bf16.mxu0 0
      %5156 = vmatpush1.bf16.msra.mxu0 0
      %5157 = vmatprep.subr.bf16.mxu0 0
      %5158 = vmatpush1.bf16.msra.mxu0 0
      %5159 = vmatprep.subr.bf16.mxu0 0
      %5160 = vmatpush1.bf16.msra.mxu0 0
      %5161 = vmatprep.subr.bf16.mxu0 0
      %5162 = vmatpush1.bf16.msra.mxu0 0
      %5163 = vmatprep.subr.bf16.mxu0 0
      %5164 = vmatpush1.bf16.msra.mxu0 0
      %5165 = vmatprep.subr.bf16.mxu0 0
      %5166 = vmatpush1.bf16.msra.mxu0 0
      %5167 = vmatprep.subr.bf16.mxu0 0
      %5168 = vmatpush1.bf16.msra.mxu0 0
      %5169 = vmatprep.subr.bf16.mxu0 0
      %5170 = vmatpush1.bf16.msra.mxu0 0
      %5171 = vmatprep.subr.bf16.mxu0 0
      %5172 = vmatpush1.bf16.msra.mxu0 0
      %5173 = vmatprep.mubr.bf16.mxu0 0
      %5174 = vmatmul.mubr.bf16.gmra.mrb[0].mxu0 %v5074
      %v5175 = vpop.f32.mrb[0].mxu0
      %v5176 = vadd.f32 0.0, %v5175
      %v5177 = vpop.f32.mrb[0].mxu0
      %v5178 = vadd.f32 0.0, %v5177
      %v5179 = vpop.f32.mrb[0].mxu0
      %v5180 = vpop.f32.mrb[0].mxu0
      %5181 = vdwg.mxu0
      %5182 = vmatprep.subr.bf16.mxu0 %v5092
      %5183 = vmatpush1.bf16.msra.mxu0 %v5089
      %5184 = vmatprep.subr.bf16.mxu0 0
      %5185 = vmatpush1.bf16.msra.mxu0 0
      %5186 = vmatprep.subr.bf16.mxu0 0
      %5187 = vmatpush1.bf16.msra.mxu0 0
      %5188 = vmatprep.subr.bf16.mxu0 0
      %5189 = vmatpush1.bf16.msra.mxu0 0
      %5190 = vmatprep.subr.bf16.mxu0 0
      %5191 = vmatpush1.bf16.msra.mxu0 0
      %5192 = vmatprep.subr.bf16.mxu0 0
      %5193 = vmatpush1.bf16.msra.mxu0 0
      %5194 = vmatprep.subr.bf16.mxu0 0
      %5195 = vmatpush1.bf16.msra.mxu0 0
      %5196 = vmatprep.subr.bf16.mxu0 0
      %5197 = vmatpush1.bf16.msra.mxu0 0
      %5198 = vmatprep.subr.bf16.mxu0 0
      %5199 = vmatpush1.bf16.msra.mxu0 0
      %5200 = vmatprep.subr.bf16.mxu0 0
      %5201 = vmatpush1.bf16.msra.mxu0 0
      %5202 = vmatprep.subr.bf16.mxu0 0
      %5203 = vmatpush1.bf16.msra.mxu0 0
      %5204 = vmatprep.subr.bf16.mxu0 0
      %5205 = vmatpush1.bf16.msra.mxu0 0
      %5206 = vmatprep.subr.bf16.mxu0 0
      %5207 = vmatpush1.bf16.msra.mxu0 0
      %5208 = vmatprep.subr.bf16.mxu0 0
      %5209 = vmatpush1.bf16.msra.mxu0 0
      %5210 = vmatprep.subr.bf16.mxu0 0
      %5211 = vmatpush1.bf16.msra.mxu0 0
      %5212 = vmatprep.subr.bf16.mxu0 0
      %5213 = vmatpush1.bf16.msra.mxu0 0
      %5214 = vmatprep.mubr.bf16.mxu0 0
      %5215 = vmatmul.mubr.bf16.gmra.mrb[0].mxu0 %v5074
      %v5216 = vpop.f32.mrb[0].mxu0
      %v5217 = vadd.f32 0.0, %v5216
      %v5218 = vpop.f32.mrb[0].mxu0
      %v5219 = vadd.f32 0.0, %v5218
      %v5220 = vpop.f32.mrb[0].mxu0
      %v5221 = vpop.f32.mrb[0].mxu0
      %5222 = vdwg.mxu0
      %5223 = vmatprep.subr.bf16.mxu0 %v5098
      %5224 = vmatpush1.bf16.msra.mxu0 %v5095
      %5225 = vmatprep.subr.bf16.mxu0 0
      %5226 = vmatpush1.bf16.msra.mxu0 0
      %5227 = vmatprep.subr.bf16.mxu0 0
      %5228 = vmatpush1.bf16.msra.mxu0 0
      %5229 = vmatprep.subr.bf16.mxu0 0
      %5230 = vmatpush1.bf16.msra.mxu0 0
      %5231 = vmatprep.subr.bf16.mxu0 0
      %5232 = vmatpush1.bf16.msra.mxu0 0
      %5233 = vmatprep.subr.bf16.mxu0 0
      %5234 = vmatpush1.bf16.msra.mxu0 0
      %5235 = vmatprep.subr.bf16.mxu0 0
      %5236 = vmatpush1.bf16.msra.mxu0 0
      %5237 = vmatprep.subr.bf16.mxu0 0
      %5238 = vmatpush1.bf16.msra.mxu0 0
      %5239 = vmatprep.subr.bf16.mxu0 0
      %5240 = vmatpush1.bf16.msra.mxu0 0
      %5241 = vmatprep.subr.bf16.mxu0 0
      %5242 = vmatpush1.bf16.msra.mxu0 0
      %5243 = vmatprep.subr.bf16.mxu0 0
      %5244 = vmatpush1.bf16.msra.mxu0 0
      %5245 = vmatprep.subr.bf16.mxu0 0
      %5246 = vmatpush1.bf16.msra.mxu0 0
      %5247 = vmatprep.subr.bf16.mxu0 0
      %5248 = vmatpush1.bf16.msra.mxu0 0
      %5249 = vmatprep.subr.bf16.mxu0 0
      %5250 = vmatpush1.bf16.msra.mxu0 0
      %5251 = vmatprep.subr.bf16.mxu0 0
      %5252 = vmatpush1.bf16.msra.mxu0 0
      %5253 = vmatprep.subr.bf16.mxu0 0
      %5254 = vmatpush1.bf16.msra.mxu0 0
      %5255 = vmatprep.mubr.bf16.mxu0 0
      %5256 = vmatmul.mubr.bf16.gmra.mrb[0].mxu0 %v5074
      %v5257 = vpop.f32.mrb[0].mxu0
      %v5258 = vadd.f32 0.0, %v5257
      %v5259 = vpop.f32.mrb[0].mxu0
      %v5260 = vadd.f32 0.0, %v5259
      %v5261 = vpop.f32.mrb[0].mxu0
      %v5262 = vpop.f32.mrb[0].mxu0
      %5263 = vdwg.mxu0
      %v5264 = vadd.f32 %v5036, %v5135
      %v5265 = vadd.f32 %v5037, %v5137
      %v5266 = vadd.f32 %v5038, %v5176
      %v5267 = vadd.f32 %v5039, %v5178
      %v5268 = vadd.f32 %v5040, %v5217
      %v5269 = vadd.f32 %v5041, %v5219
      %v5270 = vadd.f32 %v5042, %v5258
      %v5271 = vadd.f32 %v5043, %v5260
      %s5272 = scalar_lea.vmem %s3, 80
      %v5273 = vld [vmem:[%s5272] sm:$0xf]
      %5274 = vrot.lane.b32.xlu0 %v3897, 37
      %v5275 = vpop.permute.xlu0 %5274
      %5276 = vrot.lane.b32.xlu0 %v3898, 37
      %v5277 = vpop.permute.xlu0 %5276
      %5278 = vrot.lane.b32.xlu0 %v3899, 37
      %v5279 = vpop.permute.xlu0 %5278
      %5280 = vrot.lane.b32.xlu0 %v3900, 37
      %v5281 = vpop.permute.xlu0 %5280
      %5282 = vrot.lane.b32.xlu0 %v3901, 37
      %v5283 = vpop.permute.xlu0 %5282
      %5284 = vrot.lane.b32.xlu0 %v3902, 37
      %v5285 = vpop.permute.xlu0 %5284
      %5286 = vrot.lane.b32.xlu0 %v3903, 37
      %v5287 = vpop.permute.xlu0 %5286
      %5288 = vrot.lane.b32.xlu0 %v3904, 37
      %v5289 = vpop.permute.xlu0 %5288
      %5290 = vrot.lane.b32.xlu0 %v3905, 37
      %v5291 = vpop.permute.xlu0 %5290
      %vm5292 = vcmask 302080
      %v5293 = vsel %vm5292, %v5275, %v5277
      %v5294 = vsel %vm5292, %v5277, %v5279
      %v5295 = vsel %vm5292, %v5279, %v5281
      %v5296 = vsel %vm5292, %v5281, %v5283
      %v5297 = vsel %vm5292, %v5283, %v5285
      %v5298 = vsel %vm5292, %v5285, %v5287
      %v5299 = vsel %vm5292, %v5287, %v5289
      %v5300 = vsel %vm5292, %v5289, %v5291
      %v5302 = vsel %vm732, %v5273, 0
      %v5305 = vsel %vm736, %v5293, 0
      %v5308 = vsel %vm736, %v5294, 0
      %v5311 = vsel %vm736, %v5295, 0
      %v5314 = vsel %vm736, %v5296, 0
      %v5317 = vsel %vm736, %v5297, 0
      %v5320 = vsel %vm736, %v5298, 0
      %v5323 = vsel %vm736, %v5299, 0
      %v5326 = vsel %vm736, %v5300, 0
      %5328 = vmatprep.subr.bf16.mxu0 %v5308
      %5329 = vmatpush1.bf16.msra.mxu0 %v5305
      %5330 = vmatprep.subr.bf16.mxu0 0
      %5331 = vmatpush1.bf16.msra.mxu0 0
      %5332 = vmatprep.subr.bf16.mxu0 0
      %5333 = vmatpush1.bf16.msra.mxu0 0
      %5334 = vmatprep.subr.bf16.mxu0 0
      %5335 = vmatpush1.bf16.msra.mxu0 0
      %5336 = vmatprep.subr.bf16.mxu0 0
      %5337 = vmatpush1.bf16.msra.mxu0 0
      %5338 = vmatprep.subr.bf16.mxu0 0
      %5339 = vmatpush1.bf16.msra.mxu0 0
      %5340 = vmatprep.subr.bf16.mxu0 0
      %5341 = vmatpush1.bf16.msra.mxu0 0
      %5342 = vmatprep.subr.bf16.mxu0 0
      %5343 = vmatpush1.bf16.msra.mxu0 0
      %5344 = vmatprep.subr.bf16.mxu0 0
      %5345 = vmatpush1.bf16.msra.mxu0 0
      %5346 = vmatprep.subr.bf16.mxu0 0
      %5347 = vmatpush1.bf16.msra.mxu0 0
      %5348 = vmatprep.subr.bf16.mxu0 0
      %5349 = vmatpush1.bf16.msra.mxu0 0
      %5350 = vmatprep.subr.bf16.mxu0 0
      %5351 = vmatpush1.bf16.msra.mxu0 0
      %5352 = vmatprep.subr.bf16.mxu0 0
      %5353 = vmatpush1.bf16.msra.mxu0 0
      %5354 = vmatprep.subr.bf16.mxu0 0
      %5355 = vmatpush1.bf16.msra.mxu0 0
      %5356 = vmatprep.subr.bf16.mxu0 0
      %5357 = vmatpush1.bf16.msra.mxu0 0
      %5358 = vmatprep.subr.bf16.mxu0 0
      %5359 = vmatpush1.bf16.msra.mxu0 0
      %5360 = vmatprep.mubr.bf16.mxu0 0
      %5361 = vmatmul.mubr.bf16.gmra.mrb[0].mxu0 %v5302
      %v5362 = vpop.f32.mrb[0].mxu0
      %v5363 = vadd.f32 0.0, %v5362
      %v5364 = vpop.f32.mrb[0].mxu0
      %v5365 = vadd.f32 0.0, %v5364
      %v5366 = vpop.f32.mrb[0].mxu0
      %v5367 = vpop.f32.mrb[0].mxu0
      %5368 = vdwg.mxu0
      %5369 = vmatprep.subr.bf16.mxu0 %v5314
      %5370 = vmatpush1.bf16.msra.mxu0 %v5311
      %5371 = vmatprep.subr.bf16.mxu0 0
      %5372 = vmatpush1.bf16.msra.mxu0 0
      %5373 = vmatprep.subr.bf16.mxu0 0
      %5374 = vmatpush1.bf16.msra.mxu0 0
      %5375 = vmatprep.subr.bf16.mxu0 0
      %5376 = vmatpush1.bf16.msra.mxu0 0
      %5377 = vmatprep.subr.bf16.mxu0 0
      %5378 = vmatpush1.bf16.msra.mxu0 0
      %5379 = vmatprep.subr.bf16.mxu0 0
      %5380 = vmatpush1.bf16.msra.mxu0 0
      %5381 = vmatprep.subr.bf16.mxu0 0
      %5382 = vmatpush1.bf16.msra.mxu0 0
      %5383 = vmatprep.subr.bf16.mxu0 0
      %5384 = vmatpush1.bf16.msra.mxu0 0
      %5385 = vmatprep.subr.bf16.mxu0 0
      %5386 = vmatpush1.bf16.msra.mxu0 0
      %5387 = vmatprep.subr.bf16.mxu0 0
      %5388 = vmatpush1.bf16.msra.mxu0 0
      %5389 = vmatprep.subr.bf16.mxu0 0
      %5390 = vmatpush1.bf16.msra.mxu0 0
      %5391 = vmatprep.subr.bf16.mxu0 0
      %5392 = vmatpush1.bf16.msra.mxu0 0
      %5393 = vmatprep.subr.bf16.mxu0 0
      %5394 = vmatpush1.bf16.msra.mxu0 0
      %5395 = vmatprep.subr.bf16.mxu0 0
      %5396 = vmatpush1.bf16.msra.mxu0 0
      %5397 = vmatprep.subr.bf16.mxu0 0
      %5398 = vmatpush1.bf16.msra.mxu0 0
      %5399 = vmatprep.subr.bf16.mxu0 0
      %5400 = vmatpush1.bf16.msra.mxu0 0
      %5401 = vmatprep.mubr.bf16.mxu0 0
      %5402 = vmatmul.mubr.bf16.gmra.mrb[0].mxu0 %v5302
      %v5403 = vpop.f32.mrb[0].mxu0
      %v5404 = vadd.f32 0.0, %v5403
      %v5405 = vpop.f32.mrb[0].mxu0
      %v5406 = vadd.f32 0.0, %v5405
      %v5407 = vpop.f32.mrb[0].mxu0
      %v5408 = vpop.f32.mrb[0].mxu0
      %5409 = vdwg.mxu0
      %5410 = vmatprep.subr.bf16.mxu0 %v5320
      %5411 = vmatpush1.bf16.msra.mxu0 %v5317
      %5412 = vmatprep.subr.bf16.mxu0 0
      %5413 = vmatpush1.bf16.msra.mxu0 0
      %5414 = vmatprep.subr.bf16.mxu0 0
      %5415 = vmatpush1.bf16.msra.mxu0 0
      %5416 = vmatprep.subr.bf16.mxu0 0
      %5417 = vmatpush1.bf16.msra.mxu0 0
      %5418 = vmatprep.subr.bf16.mxu0 0
      %5419 = vmatpush1.bf16.msra.mxu0 0
      %5420 = vmatprep.subr.bf16.mxu0 0
      %5421 = vmatpush1.bf16.msra.mxu0 0
      %5422 = vmatprep.subr.bf16.mxu0 0
      %5423 = vmatpush1.bf16.msra.mxu0 0
      %5424 = vmatprep.subr.bf16.mxu0 0
      %5425 = vmatpush1.bf16.msra.mxu0 0
      %5426 = vmatprep.subr.bf16.mxu0 0
      %5427 = vmatpush1.bf16.msra.mxu0 0
      %5428 = vmatprep.subr.bf16.mxu0 0
      %5429 = vmatpush1.bf16.msra.mxu0 0
      %5430 = vmatprep.subr.bf16.mxu0 0
      %5431 = vmatpush1.bf16.msra.mxu0 0
      %5432 = vmatprep.subr.bf16.mxu0 0
      %5433 = vmatpush1.bf16.msra.mxu0 0
      %5434 = vmatprep.subr.bf16.mxu0 0
      %5435 = vmatpush1.bf16.msra.mxu0 0
      %5436 = vmatprep.subr.bf16.mxu0 0
      %5437 = vmatpush1.bf16.msra.mxu0 0
      %5438 = vmatprep.subr.bf16.mxu0 0
      %5439 = vmatpush1.bf16.msra.mxu0 0
      %5440 = vmatprep.subr.bf16.mxu0 0
      %5441 = vmatpush1.bf16.msra.mxu0 0
      %5442 = vmatprep.mubr.bf16.mxu0 0
      %5443 = vmatmul.mubr.bf16.gmra.mrb[0].mxu0 %v5302
      %v5444 = vpop.f32.mrb[0].mxu0
      %v5445 = vadd.f32 0.0, %v5444
      %v5446 = vpop.f32.mrb[0].mxu0
      %v5447 = vadd.f32 0.0, %v5446
      %v5448 = vpop.f32.mrb[0].mxu0
      %v5449 = vpop.f32.mrb[0].mxu0
      %5450 = vdwg.mxu0
      %5451 = vmatprep.subr.bf16.mxu0 %v5326
      %5452 = vmatpush1.bf16.msra.mxu0 %v5323
      %5453 = vmatprep.subr.bf16.mxu0 0
      %5454 = vmatpush1.bf16.msra.mxu0 0
      %5455 = vmatprep.subr.bf16.mxu0 0
      %5456 = vmatpush1.bf16.msra.mxu0 0
      %5457 = vmatprep.subr.bf16.mxu0 0
      %5458 = vmatpush1.bf16.msra.mxu0 0
      %5459 = vmatprep.subr.bf16.mxu0 0
      %5460 = vmatpush1.bf16.msra.mxu0 0
      %5461 = vmatprep.subr.bf16.mxu0 0
      %5462 = vmatpush1.bf16.msra.mxu0 0
      %5463 = vmatprep.subr.bf16.mxu0 0
      %5464 = vmatpush1.bf16.msra.mxu0 0
      %5465 = vmatprep.subr.bf16.mxu0 0
      %5466 = vmatpush1.bf16.msra.mxu0 0
      %5467 = vmatprep.subr.bf16.mxu0 0
      %5468 = vmatpush1.bf16.msra.mxu0 0
      %5469 = vmatprep.subr.bf16.mxu0 0
      %5470 = vmatpush1.bf16.msra.mxu0 0
      %5471 = vmatprep.subr.bf16.mxu0 0
      %5472 = vmatpush1.bf16.msra.mxu0 0
      %5473 = vmatprep.subr.bf16.mxu0 0
      %5474 = vmatpush1.bf16.msra.mxu0 0
      %5475 = vmatprep.subr.bf16.mxu0 0
      %5476 = vmatpush1.bf16.msra.mxu0 0
      %5477 = vmatprep.subr.bf16.mxu0 0
      %5478 = vmatpush1.bf16.msra.mxu0 0
      %5479 = vmatprep.subr.bf16.mxu0 0
      %5480 = vmatpush1.bf16.msra.mxu0 0
      %5481 = vmatprep.subr.bf16.mxu0 0
      %5482 = vmatpush1.bf16.msra.mxu0 0
      %5483 = vmatprep.mubr.bf16.mxu0 0
      %5484 = vmatmul.mubr.bf16.gmra.mrb[0].mxu0 %v5302
      %v5485 = vpop.f32.mrb[0].mxu0
      %v5486 = vadd.f32 0.0, %v5485
      %v5487 = vpop.f32.mrb[0].mxu0
      %v5488 = vadd.f32 0.0, %v5487
      %v5489 = vpop.f32.mrb[0].mxu0
      %v5490 = vpop.f32.mrb[0].mxu0
      %5491 = vdwg.mxu0
      %v5492 = vadd.f32 %v5264, %v5363
      %v5493 = vadd.f32 %v5265, %v5365
      %v5494 = vadd.f32 %v5266, %v5404
      %v5495 = vadd.f32 %v5267, %v5406
      %v5496 = vadd.f32 %v5268, %v5445
      %v5497 = vadd.f32 %v5269, %v5447
      %v5498 = vadd.f32 %v5270, %v5486
      %v5499 = vadd.f32 %v5271, %v5488
      %s5500 = scalar_lea.vmem %s3, 84
      %v5501 = vld [vmem:[%s5500] sm:$0xf]
      %5502 = vrot.lane.b32.xlu0 %v3897, 29
      %v5503 = vpop.permute.xlu0 %5502
      %5504 = vrot.lane.b32.xlu0 %v3898, 29
      %v5505 = vpop.permute.xlu0 %5504
      %5506 = vrot.lane.b32.xlu0 %v3899, 29
      %v5507 = vpop.permute.xlu0 %5506
      %5508 = vrot.lane.b32.xlu0 %v3900, 29
      %v5509 = vpop.permute.xlu0 %5508
      %5510 = vrot.lane.b32.xlu0 %v3901, 29
      %v5511 = vpop.permute.xlu0 %5510
      %5512 = vrot.lane.b32.xlu0 %v3902, 29
      %v5513 = vpop.permute.xlu0 %5512
      %5514 = vrot.lane.b32.xlu0 %v3903, 29
      %v5515 = vpop.permute.xlu0 %5514
      %5516 = vrot.lane.b32.xlu0 %v3904, 29
      %v5517 = vpop.permute.xlu0 %5516
      %5518 = vrot.lane.b32.xlu0 %v3905, 29
      %v5519 = vpop.permute.xlu0 %5518
      %vm5520 = vcmask 236544
      %v5521 = vsel %vm5520, %v5503, %v5505
      %v5522 = vsel %vm5520, %v5505, %v5507
      %v5523 = vsel %vm5520, %v5507, %v5509
      %v5524 = vsel %vm5520, %v5509, %v5511
      %v5525 = vsel %vm5520, %v5511, %v5513
      %v5526 = vsel %vm5520, %v5513, %v5515
      %v5527 = vsel %vm5520, %v5515, %v5517
      %v5528 = vsel %vm5520, %v5517, %v5519
      %v5530 = vsel %vm732, %v5501, 0
      %v5533 = vsel %vm736, %v5521, 0
      %v5536 = vsel %vm736, %v5522, 0
      %v5539 = vsel %vm736, %v5523, 0
      %v5542 = vsel %vm736, %v5524, 0
      %v5545 = vsel %vm736, %v5525, 0
      %v5548 = vsel %vm736, %v5526, 0
      %v5551 = vsel %vm736, %v5527, 0
      %v5554 = vsel %vm736, %v5528, 0
      %5556 = vmatprep.subr.bf16.mxu0 %v5536
      %5557 = vmatpush1.bf16.msra.mxu0 %v5533
      %5558 = vmatprep.subr.bf16.mxu0 0
      %5559 = vmatpush1.bf16.msra.mxu0 0
      %5560 = vmatprep.subr.bf16.mxu0 0
      %5561 = vmatpush1.bf16.msra.mxu0 0
      %5562 = vmatprep.subr.bf16.mxu0 0
      %5563 = vmatpush1.bf16.msra.mxu0 0
      %5564 = vmatprep.subr.bf16.mxu0 0
      %5565 = vmatpush1.bf16.msra.mxu0 0
      %5566 = vmatprep.subr.bf16.mxu0 0
      %5567 = vmatpush1.bf16.msra.mxu0 0
      %5568 = vmatprep.subr.bf16.mxu0 0
      %5569 = vmatpush1.bf16.msra.mxu0 0
      %5570 = vmatprep.subr.bf16.mxu0 0
      %5571 = vmatpush1.bf16.msra.mxu0 0
      %5572 = vmatprep.subr.bf16.mxu0 0
      %5573 = vmatpush1.bf16.msra.mxu0 0
      %5574 = vmatprep.subr.bf16.mxu0 0
      %5575 = vmatpush1.bf16.msra.mxu0 0
      %5576 = vmatprep.subr.bf16.mxu0 0
      %5577 = vmatpush1.bf16.msra.mxu0 0
      %5578 = vmatprep.subr.bf16.mxu0 0
      %5579 = vmatpush1.bf16.msra.mxu0 0
      %5580 = vmatprep.subr.bf16.mxu0 0
      %5581 = vmatpush1.bf16.msra.mxu0 0
      %5582 = vmatprep.subr.bf16.mxu0 0
      %5583 = vmatpush1.bf16.msra.mxu0 0
      %5584 = vmatprep.subr.bf16.mxu0 0
      %5585 = vmatpush1.bf16.msra.mxu0 0
      %5586 = vmatprep.subr.bf16.mxu0 0
      %5587 = vmatpush1.bf16.msra.mxu0 0
      %5588 = vmatprep.mubr.bf16.mxu0 0
      %5589 = vmatmul.mubr.bf16.gmra.mrb[0].mxu0 %v5530
      %v5590 = vpop.f32.mrb[0].mxu0
      %v5591 = vadd.f32 0.0, %v5590
      %v5592 = vpop.f32.mrb[0].mxu0
      %v5593 = vadd.f32 0.0, %v5592
      %v5594 = vpop.f32.mrb[0].mxu0
      %v5595 = vpop.f32.mrb[0].mxu0
      %5596 = vdwg.mxu0
      %5597 = vmatprep.subr.bf16.mxu0 %v5542
      %5598 = vmatpush1.bf16.msra.mxu0 %v5539
      %5599 = vmatprep.subr.bf16.mxu0 0
      %5600 = vmatpush1.bf16.msra.mxu0 0
      %5601 = vmatprep.subr.bf16.mxu0 0
      %5602 = vmatpush1.bf16.msra.mxu0 0
      %5603 = vmatprep.subr.bf16.mxu0 0
      %5604 = vmatpush1.bf16.msra.mxu0 0
      %5605 = vmatprep.subr.bf16.mxu0 0
      %5606 = vmatpush1.bf16.msra.mxu0 0
      %5607 = vmatprep.subr.bf16.mxu0 0
      %5608 = vmatpush1.bf16.msra.mxu0 0
      %5609 = vmatprep.subr.bf16.mxu0 0
      %5610 = vmatpush1.bf16.msra.mxu0 0
      %5611 = vmatprep.subr.bf16.mxu0 0
      %5612 = vmatpush1.bf16.msra.mxu0 0
      %5613 = vmatprep.subr.bf16.mxu0 0
      %5614 = vmatpush1.bf16.msra.mxu0 0
      %5615 = vmatprep.subr.bf16.mxu0 0
      %5616 = vmatpush1.bf16.msra.mxu0 0
      %5617 = vmatprep.subr.bf16.mxu0 0
      %5618 = vmatpush1.bf16.msra.mxu0 0
      %5619 = vmatprep.subr.bf16.mxu0 0
      %5620 = vmatpush1.bf16.msra.mxu0 0
      %5621 = vmatprep.subr.bf16.mxu0 0
      %5622 = vmatpush1.bf16.msra.mxu0 0
      %5623 = vmatprep.subr.bf16.mxu0 0
      %5624 = vmatpush1.bf16.msra.mxu0 0
      %5625 = vmatprep.subr.bf16.mxu0 0
      %5626 = vmatpush1.bf16.msra.mxu0 0
      %5627 = vmatprep.subr.bf16.mxu0 0
      %5628 = vmatpush1.bf16.msra.mxu0 0
      %5629 = vmatprep.mubr.bf16.mxu0 0
      %5630 = vmatmul.mubr.bf16.gmra.mrb[0].mxu0 %v5530
      %v5631 = vpop.f32.mrb[0].mxu0
      %v5632 = vadd.f32 0.0, %v5631
      %v5633 = vpop.f32.mrb[0].mxu0
      %v5634 = vadd.f32 0.0, %v5633
      %v5635 = vpop.f32.mrb[0].mxu0
      %v5636 = vpop.f32.mrb[0].mxu0
      %5637 = vdwg.mxu0
      %5638 = vmatprep.subr.bf16.mxu0 %v5548
      %5639 = vmatpush1.bf16.msra.mxu0 %v5545
      %5640 = vmatprep.subr.bf16.mxu0 0
      %5641 = vmatpush1.bf16.msra.mxu0 0
      %5642 = vmatprep.subr.bf16.mxu0 0
      %5643 = vmatpush1.bf16.msra.mxu0 0
      %5644 = vmatprep.subr.bf16.mxu0 0
      %5645 = vmatpush1.bf16.msra.mxu0 0
      %5646 = vmatprep.subr.bf16.mxu0 0
      %5647 = vmatpush1.bf16.msra.mxu0 0
      %5648 = vmatprep.subr.bf16.mxu0 0
      %5649 = vmatpush1.bf16.msra.mxu0 0
      %5650 = vmatprep.subr.bf16.mxu0 0
      %5651 = vmatpush1.bf16.msra.mxu0 0
      %5652 = vmatprep.subr.bf16.mxu0 0
      %5653 = vmatpush1.bf16.msra.mxu0 0
      %5654 = vmatprep.subr.bf16.mxu0 0
      %5655 = vmatpush1.bf16.msra.mxu0 0
      %5656 = vmatprep.subr.bf16.mxu0 0
      %5657 = vmatpush1.bf16.msra.mxu0 0
      %5658 = vmatprep.subr.bf16.mxu0 0
      %5659 = vmatpush1.bf16.msra.mxu0 0
      %5660 = vmatprep.subr.bf16.mxu0 0
      %5661 = vmatpush1.bf16.msra.mxu0 0
      %5662 = vmatprep.subr.bf16.mxu0 0
      %5663 = vmatpush1.bf16.msra.mxu0 0
      %5664 = vmatprep.subr.bf16.mxu0 0
      %5665 = vmatpush1.bf16.msra.mxu0 0
      %5666 = vmatprep.subr.bf16.mxu0 0
      %5667 = vmatpush1.bf16.msra.mxu0 0
      %5668 = vmatprep.subr.bf16.mxu0 0
      %5669 = vmatpush1.bf16.msra.mxu0 0
      %5670 = vmatprep.mubr.bf16.mxu0 0
      %5671 = vmatmul.mubr.bf16.gmra.mrb[0].mxu0 %v5530
      %v5672 = vpop.f32.mrb[0].mxu0
      %v5673 = vadd.f32 0.0, %v5672
      %v5674 = vpop.f32.mrb[0].mxu0
      %v5675 = vadd.f32 0.0, %v5674
      %v5676 = vpop.f32.mrb[0].mxu0
      %v5677 = vpop.f32.mrb[0].mxu0
      %5678 = vdwg.mxu0
      %5679 = vmatprep.subr.bf16.mxu0 %v5554
      %5680 = vmatpush1.bf16.msra.mxu0 %v5551
      %5681 = vmatprep.subr.bf16.mxu0 0
      %5682 = vmatpush1.bf16.msra.mxu0 0
      %5683 = vmatprep.subr.bf16.mxu0 0
      %5684 = vmatpush1.bf16.msra.mxu0 0
      %5685 = vmatprep.subr.bf16.mxu0 0
      %5686 = vmatpush1.bf16.msra.mxu0 0
      %5687 = vmatprep.subr.bf16.mxu0 0
      %5688 = vmatpush1.bf16.msra.mxu0 0
      %5689 = vmatprep.subr.bf16.mxu0 0
      %5690 = vmatpush1.bf16.msra.mxu0 0
      %5691 = vmatprep.subr.bf16.mxu0 0
      %5692 = vmatpush1.bf16.msra.mxu0 0
      %5693 = vmatprep.subr.bf16.mxu0 0
      %5694 = vmatpush1.bf16.msra.mxu0 0
      %5695 = vmatprep.subr.bf16.mxu0 0
      %5696 = vmatpush1.bf16.msra.mxu0 0
      %5697 = vmatprep.subr.bf16.mxu0 0
      %5698 = vmatpush1.bf16.msra.mxu0 0
      %5699 = vmatprep.subr.bf16.mxu0 0
      %5700 = vmatpush1.bf16.msra.mxu0 0
      %5701 = vmatprep.subr.bf16.mxu0 0
      %5702 = vmatpush1.bf16.msra.mxu0 0
      %5703 = vmatprep.subr.bf16.mxu0 0
      %5704 = vmatpush1.bf16.msra.mxu0 0
      %5705 = vmatprep.subr.bf16.mxu0 0
      %5706 = vmatpush1.bf16.msra.mxu0 0
      %5707 = vmatprep.subr.bf16.mxu0 0
      %5708 = vmatpush1.bf16.msra.mxu0 0
      %5709 = vmatprep.subr.bf16.mxu0 0
      %5710 = vmatpush1.bf16.msra.mxu0 0
      %5711 = vmatprep.mubr.bf16.mxu0 0
      %5712 = vmatmul.mubr.bf16.gmra.mrb[0].mxu0 %v5530
      %v5713 = vpop.f32.mrb[0].mxu0
      %v5714 = vadd.f32 0.0, %v5713
      %v5715 = vpop.f32.mrb[0].mxu0
      %v5716 = vadd.f32 0.0, %v5715
      %v5717 = vpop.f32.mrb[0].mxu0
      %v5718 = vpop.f32.mrb[0].mxu0
      %5719 = vdwg.mxu0
      %v5720 = vadd.f32 %v5492, %v5591
      %v5721 = vadd.f32 %v5493, %v5593
      %v5722 = vadd.f32 %v5494, %v5632
      %v5723 = vadd.f32 %v5495, %v5634
      %v5724 = vadd.f32 %v5496, %v5673
      %v5725 = vadd.f32 %v5497, %v5675
      %v5726 = vadd.f32 %v5498, %v5714
      %v5727 = vadd.f32 %v5499, %v5716
      %s5728 = scalar_lea.vmem %s3, 88
      %v5729 = vld [vmem:[%s5728] sm:$0xf]
      %5730 = vrot.lane.b32.xlu0 %v3897, 28
      %v5731 = vpop.permute.xlu0 %5730
      %5732 = vrot.lane.b32.xlu0 %v3898, 28
      %v5733 = vpop.permute.xlu0 %5732
      %5734 = vrot.lane.b32.xlu0 %v3899, 28
      %v5735 = vpop.permute.xlu0 %5734
      %5736 = vrot.lane.b32.xlu0 %v3900, 28
      %v5737 = vpop.permute.xlu0 %5736
      %5738 = vrot.lane.b32.xlu0 %v3901, 28
      %v5739 = vpop.permute.xlu0 %5738
      %5740 = vrot.lane.b32.xlu0 %v3902, 28
      %v5741 = vpop.permute.xlu0 %5740
      %5742 = vrot.lane.b32.xlu0 %v3903, 28
      %v5743 = vpop.permute.xlu0 %5742
      %5744 = vrot.lane.b32.xlu0 %v3904, 28
      %v5745 = vpop.permute.xlu0 %5744
      %5746 = vrot.lane.b32.xlu0 %v3905, 28
      %v5747 = vpop.permute.xlu0 %5746
      %vm5748 = vcmask 228352
      %v5749 = vsel %vm5748, %v5731, %v5733
      %v5750 = vsel %vm5748, %v5733, %v5735
      %v5751 = vsel %vm5748, %v5735, %v5737
      %v5752 = vsel %vm5748, %v5737, %v5739
      %v5753 = vsel %vm5748, %v5739, %v5741
      %v5754 = vsel %vm5748, %v5741, %v5743
      %v5755 = vsel %vm5748, %v5743, %v5745
      %v5756 = vsel %vm5748, %v5745, %v5747
      %v5758 = vsel %vm732, %v5729, 0
      %v5761 = vsel %vm736, %v5749, 0
      %v5764 = vsel %vm736, %v5750, 0
      %v5767 = vsel %vm736, %v5751, 0
      %v5770 = vsel %vm736, %v5752, 0
      %v5773 = vsel %vm736, %v5753, 0
      %v5776 = vsel %vm736, %v5754, 0
      %v5779 = vsel %vm736, %v5755, 0
      %v5782 = vsel %vm736, %v5756, 0
      %5784 = vmatprep.subr.bf16.mxu0 %v5764
      %5785 = vmatpush1.bf16.msra.mxu0 %v5761
      %5786 = vmatprep.subr.bf16.mxu0 0
      %5787 = vmatpush1.bf16.msra.mxu0 0
      %5788 = vmatprep.subr.bf16.mxu0 0
      %5789 = vmatpush1.bf16.msra.mxu0 0
      %5790 = vmatprep.subr.bf16.mxu0 0
      %5791 = vmatpush1.bf16.msra.mxu0 0
      %5792 = vmatprep.subr.bf16.mxu0 0
      %5793 = vmatpush1.bf16.msra.mxu0 0
      %5794 = vmatprep.subr.bf16.mxu0 0
      %5795 = vmatpush1.bf16.msra.mxu0 0
      %5796 = vmatprep.subr.bf16.mxu0 0
      %5797 = vmatpush1.bf16.msra.mxu0 0
      %5798 = vmatprep.subr.bf16.mxu0 0
      %5799 = vmatpush1.bf16.msra.mxu0 0
      %5800 = vmatprep.subr.bf16.mxu0 0
      %5801 = vmatpush1.bf16.msra.mxu0 0
      %5802 = vmatprep.subr.bf16.mxu0 0
      %5803 = vmatpush1.bf16.msra.mxu0 0
      %5804 = vmatprep.subr.bf16.mxu0 0
      %5805 = vmatpush1.bf16.msra.mxu0 0
      %5806 = vmatprep.subr.bf16.mxu0 0
      %5807 = vmatpush1.bf16.msra.mxu0 0
      %5808 = vmatprep.subr.bf16.mxu0 0
      %5809 = vmatpush1.bf16.msra.mxu0 0
      %5810 = vmatprep.subr.bf16.mxu0 0
      %5811 = vmatpush1.bf16.msra.mxu0 0
      %5812 = vmatprep.subr.bf16.mxu0 0
      %5813 = vmatpush1.bf16.msra.mxu0 0
      %5814 = vmatprep.subr.bf16.mxu0 0
      %5815 = vmatpush1.bf16.msra.mxu0 0
      %5816 = vmatprep.mubr.bf16.mxu0 0
      %5817 = vmatmul.mubr.bf16.gmra.mrb[0].mxu0 %v5758
      %v5818 = vpop.f32.mrb[0].mxu0
      %v5819 = vadd.f32 0.0, %v5818
      %v5820 = vpop.f32.mrb[0].mxu0
      %v5821 = vadd.f32 0.0, %v5820
      %v5822 = vpop.f32.mrb[0].mxu0
      %v5823 = vpop.f32.mrb[0].mxu0
      %5824 = vdwg.mxu0
      %5825 = vmatprep.subr.bf16.mxu0 %v5770
      %5826 = vmatpush1.bf16.msra.mxu0 %v5767
      %5827 = vmatprep.subr.bf16.mxu0 0
      %5828 = vmatpush1.bf16.msra.mxu0 0
      %5829 = vmatprep.subr.bf16.mxu0 0
      %5830 = vmatpush1.bf16.msra.mxu0 0
      %5831 = vmatprep.subr.bf16.mxu0 0
      %5832 = vmatpush1.bf16.msra.mxu0 0
      %5833 = vmatprep.subr.bf16.mxu0 0
      %5834 = vmatpush1.bf16.msra.mxu0 0
      %5835 = vmatprep.subr.bf16.mxu0 0
      %5836 = vmatpush1.bf16.msra.mxu0 0
      %5837 = vmatprep.subr.bf16.mxu0 0
      %5838 = vmatpush1.bf16.msra.mxu0 0
      %5839 = vmatprep.subr.bf16.mxu0 0
      %5840 = vmatpush1.bf16.msra.mxu0 0
      %5841 = vmatprep.subr.bf16.mxu0 0
      %5842 = vmatpush1.bf16.msra.mxu0 0
      %5843 = vmatprep.subr.bf16.mxu0 0
      %5844 = vmatpush1.bf16.msra.mxu0 0
      %5845 = vmatprep.subr.bf16.mxu0 0
      %5846 = vmatpush1.bf16.msra.mxu0 0
      %5847 = vmatprep.subr.bf16.mxu0 0
      %5848 = vmatpush1.bf16.msra.mxu0 0
      %5849 = vmatprep.subr.bf16.mxu0 0
      %5850 = vmatpush1.bf16.msra.mxu0 0
      %5851 = vmatprep.subr.bf16.mxu0 0
      %5852 = vmatpush1.bf16.msra.mxu0 0
      %5853 = vmatprep.subr.bf16.mxu0 0
      %5854 = vmatpush1.bf16.msra.mxu0 0
      %5855 = vmatprep.subr.bf16.mxu0 0
      %5856 = vmatpush1.bf16.msra.mxu0 0
      %5857 = vmatprep.mubr.bf16.mxu0 0
      %5858 = vmatmul.mubr.bf16.gmra.mrb[0].mxu0 %v5758
      %v5859 = vpop.f32.mrb[0].mxu0
      %v5860 = vadd.f32 0.0, %v5859
      %v5861 = vpop.f32.mrb[0].mxu0
      %v5862 = vadd.f32 0.0, %v5861
      %v5863 = vpop.f32.mrb[0].mxu0
      %v5864 = vpop.f32.mrb[0].mxu0
      %5865 = vdwg.mxu0
      %5866 = vmatprep.subr.bf16.mxu0 %v5776
      %5867 = vmatpush1.bf16.msra.mxu0 %v5773
      %5868 = vmatprep.subr.bf16.mxu0 0
      %5869 = vmatpush1.bf16.msra.mxu0 0
      %5870 = vmatprep.subr.bf16.mxu0 0
      %5871 = vmatpush1.bf16.msra.mxu0 0
      %5872 = vmatprep.subr.bf16.mxu0 0
      %5873 = vmatpush1.bf16.msra.mxu0 0
      %5874 = vmatprep.subr.bf16.mxu0 0
      %5875 = vmatpush1.bf16.msra.mxu0 0
      %5876 = vmatprep.subr.bf16.mxu0 0
      %5877 = vmatpush1.bf16.msra.mxu0 0
      %5878 = vmatprep.subr.bf16.mxu0 0
      %5879 = vmatpush1.bf16.msra.mxu0 0
      %5880 = vmatprep.subr.bf16.mxu0 0
      %5881 = vmatpush1.bf16.msra.mxu0 0
      %5882 = vmatprep.subr.bf16.mxu0 0
      %5883 = vmatpush1.bf16.msra.mxu0 0
      %5884 = vmatprep.subr.bf16.mxu0 0
      %5885 = vmatpush1.bf16.msra.mxu0 0
      %5886 = vmatprep.subr.bf16.mxu0 0
      %5887 = vmatpush1.bf16.msra.mxu0 0
      %5888 = vmatprep.subr.bf16.mxu0 0
      %5889 = vmatpush1.bf16.msra.mxu0 0
      %5890 = vmatprep.subr.bf16.mxu0 0
      %5891 = vmatpush1.bf16.msra.mxu0 0
      %5892 = vmatprep.subr.bf16.mxu0 0
      %5893 = vmatpush1.bf16.msra.mxu0 0
      %5894 = vmatprep.subr.bf16.mxu0 0
      %5895 = vmatpush1.bf16.msra.mxu0 0
      %5896 = vmatprep.subr.bf16.mxu0 0
      %5897 = vmatpush1.bf16.msra.mxu0 0
      %5898 = vmatprep.mubr.bf16.mxu0 0
      %5899 = vmatmul.mubr.bf16.gmra.mrb[0].mxu0 %v5758
      %v5900 = vpop.f32.mrb[0].mxu0
      %v5901 = vadd.f32 0.0, %v5900
      %v5902 = vpop.f32.mrb[0].mxu0
      %v5903 = vadd.f32 0.0, %v5902
      %v5904 = vpop.f32.mrb[0].mxu0
      %v5905 = vpop.f32.mrb[0].mxu0
      %5906 = vdwg.mxu0
      %5907 = vmatprep.subr.bf16.mxu0 %v5782
      %5908 = vmatpush1.bf16.msra.mxu0 %v5779
      %5909 = vmatprep.subr.bf16.mxu0 0
      %5910 = vmatpush1.bf16.msra.mxu0 0
      %5911 = vmatprep.subr.bf16.mxu0 0
      %5912 = vmatpush1.bf16.msra.mxu0 0
      %5913 = vmatprep.subr.bf16.mxu0 0
      %5914 = vmatpush1.bf16.msra.mxu0 0
      %5915 = vmatprep.subr.bf16.mxu0 0
      %5916 = vmatpush1.bf16.msra.mxu0 0
      %5917 = vmatprep.subr.bf16.mxu0 0
      %5918 = vmatpush1.bf16.msra.mxu0 0
      %5919 = vmatprep.subr.bf16.mxu0 0
      %5920 = vmatpush1.bf16.msra.mxu0 0
      %5921 = vmatprep.subr.bf16.mxu0 0
      %5922 = vmatpush1.bf16.msra.mxu0 0
      %5923 = vmatprep.subr.bf16.mxu0 0
      %5924 = vmatpush1.bf16.msra.mxu0 0
      %5925 = vmatprep.subr.bf16.mxu0 0
      %5926 = vmatpush1.bf16.msra.mxu0 0
      %5927 = vmatprep.subr.bf16.mxu0 0
      %5928 = vmatpush1.bf16.msra.mxu0 0
      %5929 = vmatprep.subr.bf16.mxu0 0
      %5930 = vmatpush1.bf16.msra.mxu0 0
      %5931 = vmatprep.subr.bf16.mxu0 0
      %5932 = vmatpush1.bf16.msra.mxu0 0
      %5933 = vmatprep.subr.bf16.mxu0 0
      %5934 = vmatpush1.bf16.msra.mxu0 0
      %5935 = vmatprep.subr.bf16.mxu0 0
      %5936 = vmatpush1.bf16.msra.mxu0 0
      %5937 = vmatprep.subr.bf16.mxu0 0
      %5938 = vmatpush1.bf16.msra.mxu0 0
      %5939 = vmatprep.mubr.bf16.mxu0 0
      %5940 = vmatmul.mubr.bf16.gmra.mrb[0].mxu0 %v5758
      %v5941 = vpop.f32.mrb[0].mxu0
      %v5942 = vadd.f32 0.0, %v5941
      %v5943 = vpop.f32.mrb[0].mxu0
      %v5944 = vadd.f32 0.0, %v5943
      %v5945 = vpop.f32.mrb[0].mxu0
      %v5946 = vpop.f32.mrb[0].mxu0
      %5947 = vdwg.mxu0
      %v5948 = vadd.f32 %v5720, %v5819
      %v5949 = vadd.f32 %v5721, %v5821
      %v5950 = vadd.f32 %v5722, %v5860
      %v5951 = vadd.f32 %v5723, %v5862
      %v5952 = vadd.f32 %v5724, %v5901
      %v5953 = vadd.f32 %v5725, %v5903
      %v5954 = vadd.f32 %v5726, %v5942
      %v5955 = vadd.f32 %v5727, %v5944
      %s5956 = scalar_lea.vmem %s3, 92
      %v5957 = vld [vmem:[%s5956] sm:$0xf]
      %5958 = vrot.lane.b32.xlu0 %v3897, 27
      %v5959 = vpop.permute.xlu0 %5958
      %5960 = vrot.lane.b32.xlu0 %v3898, 27
      %v5961 = vpop.permute.xlu0 %5960
      %5962 = vrot.lane.b32.xlu0 %v3899, 27
      %v5963 = vpop.permute.xlu0 %5962
      %5964 = vrot.lane.b32.xlu0 %v3900, 27
      %v5965 = vpop.permute.xlu0 %5964
      %5966 = vrot.lane.b32.xlu0 %v3901, 27
      %v5967 = vpop.permute.xlu0 %5966
      %5968 = vrot.lane.b32.xlu0 %v3902, 27
      %v5969 = vpop.permute.xlu0 %5968
      %5970 = vrot.lane.b32.xlu0 %v3903, 27
      %v5971 = vpop.permute.xlu0 %5970
      %5972 = vrot.lane.b32.xlu0 %v3904, 27
      %v5973 = vpop.permute.xlu0 %5972
      %5974 = vrot.lane.b32.xlu0 %v3905, 27
      %v5975 = vpop.permute.xlu0 %5974
      %vm5976 = vcmask 220160
      %v5977 = vsel %vm5976, %v5959, %v5961
      %v5978 = vsel %vm5976, %v5961, %v5963
      %v5979 = vsel %vm5976, %v5963, %v5965
      %v5980 = vsel %vm5976, %v5965, %v5967
      %v5981 = vsel %vm5976, %v5967, %v5969
      %v5982 = vsel %vm5976, %v5969, %v5971
      %v5983 = vsel %vm5976, %v5971, %v5973
      %v5984 = vsel %vm5976, %v5973, %v5975
      %v5986 = vsel %vm732, %v5957, 0
      %v5989 = vsel %vm736, %v5977, 0
      %v5992 = vsel %vm736, %v5978, 0
      %v5995 = vsel %vm736, %v5979, 0
      %v5998 = vsel %vm736, %v5980, 0
      %v6001 = vsel %vm736, %v5981, 0
      %v6004 = vsel %vm736, %v5982, 0
      %v6007 = vsel %vm736, %v5983, 0
      %v6010 = vsel %vm736, %v5984, 0
      %6012 = vmatprep.subr.bf16.mxu0 %v5992
      %6013 = vmatpush1.bf16.msra.mxu0 %v5989
      %6014 = vmatprep.subr.bf16.mxu0 0
      %6015 = vmatpush1.bf16.msra.mxu0 0
      %6016 = vmatprep.subr.bf16.mxu0 0
      %6017 = vmatpush1.bf16.msra.mxu0 0
      %6018 = vmatprep.subr.bf16.mxu0 0
      %6019 = vmatpush1.bf16.msra.mxu0 0
      %6020 = vmatprep.subr.bf16.mxu0 0
      %6021 = vmatpush1.bf16.msra.mxu0 0
      %6022 = vmatprep.subr.bf16.mxu0 0
      %6023 = vmatpush1.bf16.msra.mxu0 0
      %6024 = vmatprep.subr.bf16.mxu0 0
      %6025 = vmatpush1.bf16.msra.mxu0 0
      %6026 = vmatprep.subr.bf16.mxu0 0
      %6027 = vmatpush1.bf16.msra.mxu0 0
      %6028 = vmatprep.subr.bf16.mxu0 0
      %6029 = vmatpush1.bf16.msra.mxu0 0
      %6030 = vmatprep.subr.bf16.mxu0 0
      %6031 = vmatpush1.bf16.msra.mxu0 0
      %6032 = vmatprep.subr.bf16.mxu0 0
      %6033 = vmatpush1.bf16.msra.mxu0 0
      %6034 = vmatprep.subr.bf16.mxu0 0
      %6035 = vmatpush1.bf16.msra.mxu0 0
      %6036 = vmatprep.subr.bf16.mxu0 0
      %6037 = vmatpush1.bf16.msra.mxu0 0
      %6038 = vmatprep.subr.bf16.mxu0 0
      %6039 = vmatpush1.bf16.msra.mxu0 0
      %6040 = vmatprep.subr.bf16.mxu0 0
      %6041 = vmatpush1.bf16.msra.mxu0 0
      %6042 = vmatprep.subr.bf16.mxu0 0
      %6043 = vmatpush1.bf16.msra.mxu0 0
      %6044 = vmatprep.mubr.bf16.mxu0 0
      %6045 = vmatmul.mubr.bf16.gmra.mrb[0].mxu0 %v5986
      %v6046 = vpop.f32.mrb[0].mxu0
      %v6047 = vadd.f32 0.0, %v6046
      %v6048 = vpop.f32.mrb[0].mxu0
      %v6049 = vadd.f32 0.0, %v6048
      %v6050 = vpop.f32.mrb[0].mxu0
      %v6051 = vpop.f32.mrb[0].mxu0
      %6052 = vdwg.mxu0
      %6053 = vmatprep.subr.bf16.mxu0 %v5998
      %6054 = vmatpush1.bf16.msra.mxu0 %v5995
      %6055 = vmatprep.subr.bf16.mxu0 0
      %6056 = vmatpush1.bf16.msra.mxu0 0
      %6057 = vmatprep.subr.bf16.mxu0 0
      %6058 = vmatpush1.bf16.msra.mxu0 0
      %6059 = vmatprep.subr.bf16.mxu0 0
      %6060 = vmatpush1.bf16.msra.mxu0 0
      %6061 = vmatprep.subr.bf16.mxu0 0
      %6062 = vmatpush1.bf16.msra.mxu0 0
      %6063 = vmatprep.subr.bf16.mxu0 0
      %6064 = vmatpush1.bf16.msra.mxu0 0
      %6065 = vmatprep.subr.bf16.mxu0 0
      %6066 = vmatpush1.bf16.msra.mxu0 0
      %6067 = vmatprep.subr.bf16.mxu0 0
      %6068 = vmatpush1.bf16.msra.mxu0 0
      %6069 = vmatprep.subr.bf16.mxu0 0
      %6070 = vmatpush1.bf16.msra.mxu0 0
      %6071 = vmatprep.subr.bf16.mxu0 0
      %6072 = vmatpush1.bf16.msra.mxu0 0
      %6073 = vmatprep.subr.bf16.mxu0 0
      %6074 = vmatpush1.bf16.msra.mxu0 0
      %6075 = vmatprep.subr.bf16.mxu0 0
      %6076 = vmatpush1.bf16.msra.mxu0 0
      %6077 = vmatprep.subr.bf16.mxu0 0
      %6078 = vmatpush1.bf16.msra.mxu0 0
      %6079 = vmatprep.subr.bf16.mxu0 0
      %6080 = vmatpush1.bf16.msra.mxu0 0
      %6081 = vmatprep.subr.bf16.mxu0 0
      %6082 = vmatpush1.bf16.msra.mxu0 0
      %6083 = vmatprep.subr.bf16.mxu0 0
      %6084 = vmatpush1.bf16.msra.mxu0 0
      %6085 = vmatprep.mubr.bf16.mxu0 0
      %6086 = vmatmul.mubr.bf16.gmra.mrb[0].mxu0 %v5986
      %v6087 = vpop.f32.mrb[0].mxu0
      %v6088 = vadd.f32 0.0, %v6087
      %v6089 = vpop.f32.mrb[0].mxu0
      %v6090 = vadd.f32 0.0, %v6089
      %v6091 = vpop.f32.mrb[0].mxu0
      %v6092 = vpop.f32.mrb[0].mxu0
      %6093 = vdwg.mxu0
      %6094 = vmatprep.subr.bf16.mxu0 %v6004
      %6095 = vmatpush1.bf16.msra.mxu0 %v6001
      %6096 = vmatprep.subr.bf16.mxu0 0
      %6097 = vmatpush1.bf16.msra.mxu0 0
      %6098 = vmatprep.subr.bf16.mxu0 0
      %6099 = vmatpush1.bf16.msra.mxu0 0
      %6100 = vmatprep.subr.bf16.mxu0 0
      %6101 = vmatpush1.bf16.msra.mxu0 0
      %6102 = vmatprep.subr.bf16.mxu0 0
      %6103 = vmatpush1.bf16.msra.mxu0 0
      %6104 = vmatprep.subr.bf16.mxu0 0
      %6105 = vmatpush1.bf16.msra.mxu0 0
      %6106 = vmatprep.subr.bf16.mxu0 0
      %6107 = vmatpush1.bf16.msra.mxu0 0
      %6108 = vmatprep.subr.bf16.mxu0 0
      %6109 = vmatpush1.bf16.msra.mxu0 0
      %6110 = vmatprep.subr.bf16.mxu0 0
      %6111 = vmatpush1.bf16.msra.mxu0 0
      %6112 = vmatprep.subr.bf16.mxu0 0
      %6113 = vmatpush1.bf16.msra.mxu0 0
      %6114 = vmatprep.subr.bf16.mxu0 0
      %6115 = vmatpush1.bf16.msra.mxu0 0
      %6116 = vmatprep.subr.bf16.mxu0 0
      %6117 = vmatpush1.bf16.msra.mxu0 0
      %6118 = vmatprep.subr.bf16.mxu0 0
      %6119 = vmatpush1.bf16.msra.mxu0 0
      %6120 = vmatprep.subr.bf16.mxu0 0
      %6121 = vmatpush1.bf16.msra.mxu0 0
      %6122 = vmatprep.subr.bf16.mxu0 0
      %6123 = vmatpush1.bf16.msra.mxu0 0
      %6124 = vmatprep.subr.bf16.mxu0 0
      %6125 = vmatpush1.bf16.msra.mxu0 0
      %6126 = vmatprep.mubr.bf16.mxu0 0
      %6127 = vmatmul.mubr.bf16.gmra.mrb[0].mxu0 %v5986
      %v6128 = vpop.f32.mrb[0].mxu0
      %v6129 = vadd.f32 0.0, %v6128
      %v6130 = vpop.f32.mrb[0].mxu0
      %v6131 = vadd.f32 0.0, %v6130
      %v6132 = vpop.f32.mrb[0].mxu0
      %v6133 = vpop.f32.mrb[0].mxu0
      %6134 = vdwg.mxu0
      %6135 = vmatprep.subr.bf16.mxu0 %v6010
      %6136 = vmatpush1.bf16.msra.mxu0 %v6007
      %6137 = vmatprep.subr.bf16.mxu0 0
      %6138 = vmatpush1.bf16.msra.mxu0 0
      %6139 = vmatprep.subr.bf16.mxu0 0
      %6140 = vmatpush1.bf16.msra.mxu0 0
      %6141 = vmatprep.subr.bf16.mxu0 0
      %6142 = vmatpush1.bf16.msra.mxu0 0
      %6143 = vmatprep.subr.bf16.mxu0 0
      %6144 = vmatpush1.bf16.msra.mxu0 0
      %6145 = vmatprep.subr.bf16.mxu0 0
      %6146 = vmatpush1.bf16.msra.mxu0 0
      %6147 = vmatprep.subr.bf16.mxu0 0
      %6148 = vmatpush1.bf16.msra.mxu0 0
      %6149 = vmatprep.subr.bf16.mxu0 0
      %6150 = vmatpush1.bf16.msra.mxu0 0
      %6151 = vmatprep.subr.bf16.mxu0 0
      %6152 = vmatpush1.bf16.msra.mxu0 0
      %6153 = vmatprep.subr.bf16.mxu0 0
      %6154 = vmatpush1.bf16.msra.mxu0 0
      %6155 = vmatprep.subr.bf16.mxu0 0
      %6156 = vmatpush1.bf16.msra.mxu0 0
      %6157 = vmatprep.subr.bf16.mxu0 0
      %6158 = vmatpush1.bf16.msra.mxu0 0
      %6159 = vmatprep.subr.bf16.mxu0 0
      %6160 = vmatpush1.bf16.msra.mxu0 0
      %6161 = vmatprep.subr.bf16.mxu0 0
      %6162 = vmatpush1.bf16.msra.mxu0 0
      %6163 = vmatprep.subr.bf16.mxu0 0
      %6164 = vmatpush1.bf16.msra.mxu0 0
      %6165 = vmatprep.subr.bf16.mxu0 0
      %6166 = vmatpush1.bf16.msra.mxu0 0
      %6167 = vmatprep.mubr.bf16.mxu0 0
      %6168 = vmatmul.mubr.bf16.gmra.mrb[0].mxu0 %v5986
      %v6169 = vpop.f32.mrb[0].mxu0
      %v6170 = vadd.f32 0.0, %v6169
      %v6171 = vpop.f32.mrb[0].mxu0
      %v6172 = vadd.f32 0.0, %v6171
      %v6173 = vpop.f32.mrb[0].mxu0
      %v6174 = vpop.f32.mrb[0].mxu0
      %6175 = vdwg.mxu0
      %v6176 = vadd.f32 %v5948, %v6047
      %v6177 = vadd.f32 %v5949, %v6049
      %v6178 = vadd.f32 %v5950, %v6088
      %v6179 = vadd.f32 %v5951, %v6090
      %v6180 = vadd.f32 %v5952, %v6129
      %v6181 = vadd.f32 %v5953, %v6131
      %v6182 = vadd.f32 %v5954, %v6170
      %v6183 = vadd.f32 %v5955, %v6172
      %s6184 = scalar_lea.vmem %s3, 96
      %v6185 = vld [vmem:[%s6184] sm:$0xf]
      %6186 = vrot.lane.b32.xlu0 %v3897, 19
      %v6187 = vpop.permute.xlu0 %6186
      %6188 = vrot.lane.b32.xlu0 %v3898, 19
      %v6189 = vpop.permute.xlu0 %6188
      %6190 = vrot.lane.b32.xlu0 %v3899, 19
      %v6191 = vpop.permute.xlu0 %6190
      %6192 = vrot.lane.b32.xlu0 %v3900, 19
      %v6193 = vpop.permute.xlu0 %6192
      %6194 = vrot.lane.b32.xlu0 %v3901, 19
      %v6195 = vpop.permute.xlu0 %6194
      %6196 = vrot.lane.b32.xlu0 %v3902, 19
      %v6197 = vpop.permute.xlu0 %6196
      %6198 = vrot.lane.b32.xlu0 %v3903, 19
      %v6199 = vpop.permute.xlu0 %6198
      %6200 = vrot.lane.b32.xlu0 %v3904, 19
      %v6201 = vpop.permute.xlu0 %6200
      %6202 = vrot.lane.b32.xlu0 %v3905, 19
      %v6203 = vpop.permute.xlu0 %6202
      %vm6204 = vcmask 154624
      %v6205 = vsel %vm6204, %v6187, %v6189
      %v6206 = vsel %vm6204, %v6189, %v6191
      %v6207 = vsel %vm6204, %v6191, %v6193
      %v6208 = vsel %vm6204, %v6193, %v6195
      %v6209 = vsel %vm6204, %v6195, %v6197
      %v6210 = vsel %vm6204, %v6197, %v6199
      %v6211 = vsel %vm6204, %v6199, %v6201
      %v6212 = vsel %vm6204, %v6201, %v6203
      %v6214 = vsel %vm732, %v6185, 0
      %v6217 = vsel %vm736, %v6205, 0
      %v6220 = vsel %vm736, %v6206, 0
      %v6223 = vsel %vm736, %v6207, 0
      %v6226 = vsel %vm736, %v6208, 0
      %v6229 = vsel %vm736, %v6209, 0
      %v6232 = vsel %vm736, %v6210, 0
      %v6235 = vsel %vm736, %v6211, 0
      %v6238 = vsel %vm736, %v6212, 0
      %6240 = vmatprep.subr.bf16.mxu0 %v6220
      %6241 = vmatpush1.bf16.msra.mxu0 %v6217
      %6242 = vmatprep.subr.bf16.mxu0 0
      %6243 = vmatpush1.bf16.msra.mxu0 0
      %6244 = vmatprep.subr.bf16.mxu0 0
      %6245 = vmatpush1.bf16.msra.mxu0 0
      %6246 = vmatprep.subr.bf16.mxu0 0
      %6247 = vmatpush1.bf16.msra.mxu0 0
      %6248 = vmatprep.subr.bf16.mxu0 0
      %6249 = vmatpush1.bf16.msra.mxu0 0
      %6250 = vmatprep.subr.bf16.mxu0 0
      %6251 = vmatpush1.bf16.msra.mxu0 0
      %6252 = vmatprep.subr.bf16.mxu0 0
      %6253 = vmatpush1.bf16.msra.mxu0 0
      %6254 = vmatprep.subr.bf16.mxu0 0
      %6255 = vmatpush1.bf16.msra.mxu0 0
      %6256 = vmatprep.subr.bf16.mxu0 0
      %6257 = vmatpush1.bf16.msra.mxu0 0
      %6258 = vmatprep.subr.bf16.mxu0 0
      %6259 = vmatpush1.bf16.msra.mxu0 0
      %6260 = vmatprep.subr.bf16.mxu0 0
      %6261 = vmatpush1.bf16.msra.mxu0 0
      %6262 = vmatprep.subr.bf16.mxu0 0
      %6263 = vmatpush1.bf16.msra.mxu0 0
      %6264 = vmatprep.subr.bf16.mxu0 0
      %6265 = vmatpush1.bf16.msra.mxu0 0
      %6266 = vmatprep.subr.bf16.mxu0 0
      %6267 = vmatpush1.bf16.msra.mxu0 0
      %6268 = vmatprep.subr.bf16.mxu0 0
      %6269 = vmatpush1.bf16.msra.mxu0 0
      %6270 = vmatprep.subr.bf16.mxu0 0
      %6271 = vmatpush1.bf16.msra.mxu0 0
      %6272 = vmatprep.mubr.bf16.mxu0 0
      %6273 = vmatmul.mubr.bf16.gmra.mrb[0].mxu0 %v6214
      %v6274 = vpop.f32.mrb[0].mxu0
      %v6275 = vadd.f32 0.0, %v6274
      %v6276 = vpop.f32.mrb[0].mxu0
      %v6277 = vadd.f32 0.0, %v6276
      %v6278 = vpop.f32.mrb[0].mxu0
      %v6279 = vpop.f32.mrb[0].mxu0
      %6280 = vdwg.mxu0
      %6281 = vmatprep.subr.bf16.mxu0 %v6226
      %6282 = vmatpush1.bf16.msra.mxu0 %v6223
      %6283 = vmatprep.subr.bf16.mxu0 0
      %6284 = vmatpush1.bf16.msra.mxu0 0
      %6285 = vmatprep.subr.bf16.mxu0 0
      %6286 = vmatpush1.bf16.msra.mxu0 0
      %6287 = vmatprep.subr.bf16.mxu0 0
      %6288 = vmatpush1.bf16.msra.mxu0 0
      %6289 = vmatprep.subr.bf16.mxu0 0
      %6290 = vmatpush1.bf16.msra.mxu0 0
      %6291 = vmatprep.subr.bf16.mxu0 0
      %6292 = vmatpush1.bf16.msra.mxu0 0
      %6293 = vmatprep.subr.bf16.mxu0 0
      %6294 = vmatpush1.bf16.msra.mxu0 0
      %6295 = vmatprep.subr.bf16.mxu0 0
      %6296 = vmatpush1.bf16.msra.mxu0 0
      %6297 = vmatprep.subr.bf16.mxu0 0
      %6298 = vmatpush1.bf16.msra.mxu0 0
      %6299 = vmatprep.subr.bf16.mxu0 0
      %6300 = vmatpush1.bf16.msra.mxu0 0
      %6301 = vmatprep.subr.bf16.mxu0 0
      %6302 = vmatpush1.bf16.msra.mxu0 0
      %6303 = vmatprep.subr.bf16.mxu0 0
      %6304 = vmatpush1.bf16.msra.mxu0 0
      %6305 = vmatprep.subr.bf16.mxu0 0
      %6306 = vmatpush1.bf16.msra.mxu0 0
      %6307 = vmatprep.subr.bf16.mxu0 0
      %6308 = vmatpush1.bf16.msra.mxu0 0
      %6309 = vmatprep.subr.bf16.mxu0 0
      %6310 = vmatpush1.bf16.msra.mxu0 0
      %6311 = vmatprep.subr.bf16.mxu0 0
      %6312 = vmatpush1.bf16.msra.mxu0 0
      %6313 = vmatprep.mubr.bf16.mxu0 0
      %6314 = vmatmul.mubr.bf16.gmra.mrb[0].mxu0 %v6214
      %v6315 = vpop.f32.mrb[0].mxu0
      %v6316 = vadd.f32 0.0, %v6315
      %v6317 = vpop.f32.mrb[0].mxu0
      %v6318 = vadd.f32 0.0, %v6317
      %v6319 = vpop.f32.mrb[0].mxu0
      %v6320 = vpop.f32.mrb[0].mxu0
      %6321 = vdwg.mxu0
      %6322 = vmatprep.subr.bf16.mxu0 %v6232
      %6323 = vmatpush1.bf16.msra.mxu0 %v6229
      %6324 = vmatprep.subr.bf16.mxu0 0
      %6325 = vmatpush1.bf16.msra.mxu0 0
      %6326 = vmatprep.subr.bf16.mxu0 0
      %6327 = vmatpush1.bf16.msra.mxu0 0
      %6328 = vmatprep.subr.bf16.mxu0 0
      %6329 = vmatpush1.bf16.msra.mxu0 0
      %6330 = vmatprep.subr.bf16.mxu0 0
      %6331 = vmatpush1.bf16.msra.mxu0 0
      %6332 = vmatprep.subr.bf16.mxu0 0
      %6333 = vmatpush1.bf16.msra.mxu0 0
      %6334 = vmatprep.subr.bf16.mxu0 0
      %6335 = vmatpush1.bf16.msra.mxu0 0
      %6336 = vmatprep.subr.bf16.mxu0 0
      %6337 = vmatpush1.bf16.msra.mxu0 0
      %6338 = vmatprep.subr.bf16.mxu0 0
      %6339 = vmatpush1.bf16.msra.mxu0 0
      %6340 = vmatprep.subr.bf16.mxu0 0
      %6341 = vmatpush1.bf16.msra.mxu0 0
      %6342 = vmatprep.subr.bf16.mxu0 0
      %6343 = vmatpush1.bf16.msra.mxu0 0
      %6344 = vmatprep.subr.bf16.mxu0 0
      %6345 = vmatpush1.bf16.msra.mxu0 0
      %6346 = vmatprep.subr.bf16.mxu0 0
      %6347 = vmatpush1.bf16.msra.mxu0 0
      %6348 = vmatprep.subr.bf16.mxu0 0
      %6349 = vmatpush1.bf16.msra.mxu0 0
      %6350 = vmatprep.subr.bf16.mxu0 0
      %6351 = vmatpush1.bf16.msra.mxu0 0
      %6352 = vmatprep.subr.bf16.mxu0 0
      %6353 = vmatpush1.bf16.msra.mxu0 0
      %6354 = vmatprep.mubr.bf16.mxu0 0
      %6355 = vmatmul.mubr.bf16.gmra.mrb[0].mxu0 %v6214
      %v6356 = vpop.f32.mrb[0].mxu0
      %v6357 = vadd.f32 0.0, %v6356
      %v6358 = vpop.f32.mrb[0].mxu0
      %v6359 = vadd.f32 0.0, %v6358
      %v6360 = vpop.f32.mrb[0].mxu0
      %v6361 = vpop.f32.mrb[0].mxu0
      %6362 = vdwg.mxu0
      %6363 = vmatprep.subr.bf16.mxu0 %v6238
      %6364 = vmatpush1.bf16.msra.mxu0 %v6235
      %6365 = vmatprep.subr.bf16.mxu0 0
      %6366 = vmatpush1.bf16.msra.mxu0 0
      %6367 = vmatprep.subr.bf16.mxu0 0
      %6368 = vmatpush1.bf16.msra.mxu0 0
      %6369 = vmatprep.subr.bf16.mxu0 0
      %6370 = vmatpush1.bf16.msra.mxu0 0
      %6371 = vmatprep.subr.bf16.mxu0 0
      %6372 = vmatpush1.bf16.msra.mxu0 0
      %6373 = vmatprep.subr.bf16.mxu0 0
      %6374 = vmatpush1.bf16.msra.mxu0 0
      %6375 = vmatprep.subr.bf16.mxu0 0
      %6376 = vmatpush1.bf16.msra.mxu0 0
      %6377 = vmatprep.subr.bf16.mxu0 0
      %6378 = vmatpush1.bf16.msra.mxu0 0
      %6379 = vmatprep.subr.bf16.mxu0 0
      %6380 = vmatpush1.bf16.msra.mxu0 0
      %6381 = vmatprep.subr.bf16.mxu0 0
      %6382 = vmatpush1.bf16.msra.mxu0 0
      %6383 = vmatprep.subr.bf16.mxu0 0
      %6384 = vmatpush1.bf16.msra.mxu0 0
      %6385 = vmatprep.subr.bf16.mxu0 0
      %6386 = vmatpush1.bf16.msra.mxu0 0
      %6387 = vmatprep.subr.bf16.mxu0 0
      %6388 = vmatpush1.bf16.msra.mxu0 0
      %6389 = vmatprep.subr.bf16.mxu0 0
      %6390 = vmatpush1.bf16.msra.mxu0 0
      %6391 = vmatprep.subr.bf16.mxu0 0
      %6392 = vmatpush1.bf16.msra.mxu0 0
      %6393 = vmatprep.subr.bf16.mxu0 0
      %6394 = vmatpush1.bf16.msra.mxu0 0
      %6395 = vmatprep.mubr.bf16.mxu0 0
      %6396 = vmatmul.mubr.bf16.gmra.mrb[0].mxu0 %v6214
      %v6397 = vpop.f32.mrb[0].mxu0
      %v6398 = vadd.f32 0.0, %v6397
      %v6399 = vpop.f32.mrb[0].mxu0
      %v6400 = vadd.f32 0.0, %v6399
      %v6401 = vpop.f32.mrb[0].mxu0
      %v6402 = vpop.f32.mrb[0].mxu0
      %6403 = vdwg.mxu0
      %v6404 = vadd.f32 %v6176, %v6275
      %v6405 = vadd.f32 %v6177, %v6277
      %v6406 = vadd.f32 %v6178, %v6316
      %v6407 = vadd.f32 %v6179, %v6318
      %v6408 = vadd.f32 %v6180, %v6357
      %v6409 = vadd.f32 %v6181, %v6359
      %v6410 = vadd.f32 %v6182, %v6398
      %v6411 = vadd.f32 %v6183, %v6400
      %s6412 = scalar_lea.vmem %s3, 100
      %v6413 = vld [vmem:[%s6412] sm:$0xf]
      %6414 = vrot.lane.b32.xlu0 %v3897, 18
      %v6415 = vpop.permute.xlu0 %6414
      %6416 = vrot.lane.b32.xlu0 %v3898, 18
      %v6417 = vpop.permute.xlu0 %6416
      %6418 = vrot.lane.b32.xlu0 %v3899, 18
      %v6419 = vpop.permute.xlu0 %6418
      %6420 = vrot.lane.b32.xlu0 %v3900, 18
      %v6421 = vpop.permute.xlu0 %6420
      %6422 = vrot.lane.b32.xlu0 %v3901, 18
      %v6423 = vpop.permute.xlu0 %6422
      %6424 = vrot.lane.b32.xlu0 %v3902, 18
      %v6425 = vpop.permute.xlu0 %6424
      %6426 = vrot.lane.b32.xlu0 %v3903, 18
      %v6427 = vpop.permute.xlu0 %6426
      %6428 = vrot.lane.b32.xlu0 %v3904, 18
      %v6429 = vpop.permute.xlu0 %6428
      %6430 = vrot.lane.b32.xlu0 %v3905, 18
      %v6431 = vpop.permute.xlu0 %6430
      %vm6432 = vcmask 146432
      %v6433 = vsel %vm6432, %v6415, %v6417
      %v6434 = vsel %vm6432, %v6417, %v6419
      %v6435 = vsel %vm6432, %v6419, %v6421
      %v6436 = vsel %vm6432, %v6421, %v6423
      %v6437 = vsel %vm6432, %v6423, %v6425
      %v6438 = vsel %vm6432, %v6425, %v6427
      %v6439 = vsel %vm6432, %v6427, %v6429
      %v6440 = vsel %vm6432, %v6429, %v6431
      %v6442 = vsel %vm732, %v6413, 0
      %v6445 = vsel %vm736, %v6433, 0
      %v6448 = vsel %vm736, %v6434, 0
      %v6451 = vsel %vm736, %v6435, 0
      %v6454 = vsel %vm736, %v6436, 0
      %v6457 = vsel %vm736, %v6437, 0
      %v6460 = vsel %vm736, %v6438, 0
      %v6463 = vsel %vm736, %v6439, 0
      %v6466 = vsel %vm736, %v6440, 0
      %6468 = vmatprep.subr.bf16.mxu0 %v6448
      %6469 = vmatpush1.bf16.msra.mxu0 %v6445
      %6470 = vmatprep.subr.bf16.mxu0 0
      %6471 = vmatpush1.bf16.msra.mxu0 0
      %6472 = vmatprep.subr.bf16.mxu0 0
      %6473 = vmatpush1.bf16.msra.mxu0 0
      %6474 = vmatprep.subr.bf16.mxu0 0
      %6475 = vmatpush1.bf16.msra.mxu0 0
      %6476 = vmatprep.subr.bf16.mxu0 0
      %6477 = vmatpush1.bf16.msra.mxu0 0
      %6478 = vmatprep.subr.bf16.mxu0 0
      %6479 = vmatpush1.bf16.msra.mxu0 0
      %6480 = vmatprep.subr.bf16.mxu0 0
      %6481 = vmatpush1.bf16.msra.mxu0 0
      %6482 = vmatprep.subr.bf16.mxu0 0
      %6483 = vmatpush1.bf16.msra.mxu0 0
      %6484 = vmatprep.subr.bf16.mxu0 0
      %6485 = vmatpush1.bf16.msra.mxu0 0
      %6486 = vmatprep.subr.bf16.mxu0 0
      %6487 = vmatpush1.bf16.msra.mxu0 0
      %6488 = vmatprep.subr.bf16.mxu0 0
      %6489 = vmatpush1.bf16.msra.mxu0 0
      %6490 = vmatprep.subr.bf16.mxu0 0
      %6491 = vmatpush1.bf16.msra.mxu0 0
      %6492 = vmatprep.subr.bf16.mxu0 0
      %6493 = vmatpush1.bf16.msra.mxu0 0
      %6494 = vmatprep.subr.bf16.mxu0 0
      %6495 = vmatpush1.bf16.msra.mxu0 0
      %6496 = vmatprep.subr.bf16.mxu0 0
      %6497 = vmatpush1.bf16.msra.mxu0 0
      %6498 = vmatprep.subr.bf16.mxu0 0
      %6499 = vmatpush1.bf16.msra.mxu0 0
      %6500 = vmatprep.mubr.bf16.mxu0 0
      %6501 = vmatmul.mubr.bf16.gmra.mrb[0].mxu0 %v6442
      %v6502 = vpop.f32.mrb[0].mxu0
      %v6503 = vadd.f32 0.0, %v6502
      %v6504 = vpop.f32.mrb[0].mxu0
      %v6505 = vadd.f32 0.0, %v6504
      %v6506 = vpop.f32.mrb[0].mxu0
      %v6507 = vpop.f32.mrb[0].mxu0
      %6508 = vdwg.mxu0
      %6509 = vmatprep.subr.bf16.mxu0 %v6454
      %6510 = vmatpush1.bf16.msra.mxu0 %v6451
      %6511 = vmatprep.subr.bf16.mxu0 0
      %6512 = vmatpush1.bf16.msra.mxu0 0
      %6513 = vmatprep.subr.bf16.mxu0 0
      %6514 = vmatpush1.bf16.msra.mxu0 0
      %6515 = vmatprep.subr.bf16.mxu0 0
      %6516 = vmatpush1.bf16.msra.mxu0 0
      %6517 = vmatprep.subr.bf16.mxu0 0
      %6518 = vmatpush1.bf16.msra.mxu0 0
      %6519 = vmatprep.subr.bf16.mxu0 0
      %6520 = vmatpush1.bf16.msra.mxu0 0
      %6521 = vmatprep.subr.bf16.mxu0 0
      %6522 = vmatpush1.bf16.msra.mxu0 0
      %6523 = vmatprep.subr.bf16.mxu0 0
      %6524 = vmatpush1.bf16.msra.mxu0 0
      %6525 = vmatprep.subr.bf16.mxu0 0
      %6526 = vmatpush1.bf16.msra.mxu0 0
      %6527 = vmatprep.subr.bf16.mxu0 0
      %6528 = vmatpush1.bf16.msra.mxu0 0
      %6529 = vmatprep.subr.bf16.mxu0 0
      %6530 = vmatpush1.bf16.msra.mxu0 0
      %6531 = vmatprep.subr.bf16.mxu0 0
      %6532 = vmatpush1.bf16.msra.mxu0 0
      %6533 = vmatprep.subr.bf16.mxu0 0
      %6534 = vmatpush1.bf16.msra.mxu0 0
      %6535 = vmatprep.subr.bf16.mxu0 0
      %6536 = vmatpush1.bf16.msra.mxu0 0
      %6537 = vmatprep.subr.bf16.mxu0 0
      %6538 = vmatpush1.bf16.msra.mxu0 0
      %6539 = vmatprep.subr.bf16.mxu0 0
      %6540 = vmatpush1.bf16.msra.mxu0 0
      %6541 = vmatprep.mubr.bf16.mxu0 0
      %6542 = vmatmul.mubr.bf16.gmra.mrb[0].mxu0 %v6442
      %v6543 = vpop.f32.mrb[0].mxu0
      %v6544 = vadd.f32 0.0, %v6543
      %v6545 = vpop.f32.mrb[0].mxu0
      %v6546 = vadd.f32 0.0, %v6545
      %v6547 = vpop.f32.mrb[0].mxu0
      %v6548 = vpop.f32.mrb[0].mxu0
      %6549 = vdwg.mxu0
      %6550 = vmatprep.subr.bf16.mxu0 %v6460
      %6551 = vmatpush1.bf16.msra.mxu0 %v6457
      %6552 = vmatprep.subr.bf16.mxu0 0
      %6553 = vmatpush1.bf16.msra.mxu0 0
      %6554 = vmatprep.subr.bf16.mxu0 0
      %6555 = vmatpush1.bf16.msra.mxu0 0
      %6556 = vmatprep.subr.bf16.mxu0 0
      %6557 = vmatpush1.bf16.msra.mxu0 0
      %6558 = vmatprep.subr.bf16.mxu0 0
      %6559 = vmatpush1.bf16.msra.mxu0 0
      %6560 = vmatprep.subr.bf16.mxu0 0
      %6561 = vmatpush1.bf16.msra.mxu0 0
      %6562 = vmatprep.subr.bf16.mxu0 0
      %6563 = vmatpush1.bf16.msra.mxu0 0
      %6564 = vmatprep.subr.bf16.mxu0 0
      %6565 = vmatpush1.bf16.msra.mxu0 0
      %6566 = vmatprep.subr.bf16.mxu0 0
      %6567 = vmatpush1.bf16.msra.mxu0 0
      %6568 = vmatprep.subr.bf16.mxu0 0
      %6569 = vmatpush1.bf16.msra.mxu0 0
      %6570 = vmatprep.subr.bf16.mxu0 0
      %6571 = vmatpush1.bf16.msra.mxu0 0
      %6572 = vmatprep.subr.bf16.mxu0 0
      %6573 = vmatpush1.bf16.msra.mxu0 0
      %6574 = vmatprep.subr.bf16.mxu0 0
      %6575 = vmatpush1.bf16.msra.mxu0 0
      %6576 = vmatprep.subr.bf16.mxu0 0
      %6577 = vmatpush1.bf16.msra.mxu0 0
      %6578 = vmatprep.subr.bf16.mxu0 0
      %6579 = vmatpush1.bf16.msra.mxu0 0
      %6580 = vmatprep.subr.bf16.mxu0 0
      %6581 = vmatpush1.bf16.msra.mxu0 0
      %6582 = vmatprep.mubr.bf16.mxu0 0
      %6583 = vmatmul.mubr.bf16.gmra.mrb[0].mxu0 %v6442
      %v6584 = vpop.f32.mrb[0].mxu0
      %v6585 = vadd.f32 0.0, %v6584
      %v6586 = vpop.f32.mrb[0].mxu0
      %v6587 = vadd.f32 0.0, %v6586
      %v6588 = vpop.f32.mrb[0].mxu0
      %v6589 = vpop.f32.mrb[0].mxu0
      %6590 = vdwg.mxu0
      %6591 = vmatprep.subr.bf16.mxu0 %v6466
      %6592 = vmatpush1.bf16.msra.mxu0 %v6463
      %6593 = vmatprep.subr.bf16.mxu0 0
      %6594 = vmatpush1.bf16.msra.mxu0 0
      %6595 = vmatprep.subr.bf16.mxu0 0
      %6596 = vmatpush1.bf16.msra.mxu0 0
      %6597 = vmatprep.subr.bf16.mxu0 0
      %6598 = vmatpush1.bf16.msra.mxu0 0
      %6599 = vmatprep.subr.bf16.mxu0 0
      %6600 = vmatpush1.bf16.msra.mxu0 0
      %6601 = vmatprep.subr.bf16.mxu0 0
      %6602 = vmatpush1.bf16.msra.mxu0 0
      %6603 = vmatprep.subr.bf16.mxu0 0
      %6604 = vmatpush1.bf16.msra.mxu0 0
      %6605 = vmatprep.subr.bf16.mxu0 0
      %6606 = vmatpush1.bf16.msra.mxu0 0
      %6607 = vmatprep.subr.bf16.mxu0 0
      %6608 = vmatpush1.bf16.msra.mxu0 0
      %6609 = vmatprep.subr.bf16.mxu0 0
      %6610 = vmatpush1.bf16.msra.mxu0 0
      %6611 = vmatprep.subr.bf16.mxu0 0
      %6612 = vmatpush1.bf16.msra.mxu0 0
      %6613 = vmatprep.subr.bf16.mxu0 0
      %6614 = vmatpush1.bf16.msra.mxu0 0
      %6615 = vmatprep.subr.bf16.mxu0 0
      %6616 = vmatpush1.bf16.msra.mxu0 0
      %6617 = vmatprep.subr.bf16.mxu0 0
      %6618 = vmatpush1.bf16.msra.mxu0 0
      %6619 = vmatprep.subr.bf16.mxu0 0
      %6620 = vmatpush1.bf16.msra.mxu0 0
      %6621 = vmatprep.subr.bf16.mxu0 0
      %6622 = vmatpush1.bf16.msra.mxu0 0
      %6623 = vmatprep.mubr.bf16.mxu0 0
      %6624 = vmatmul.mubr.bf16.gmra.mrb[0].mxu0 %v6442
      %v6625 = vpop.f32.mrb[0].mxu0
      %v6626 = vadd.f32 0.0, %v6625
      %v6627 = vpop.f32.mrb[0].mxu0
      %v6628 = vadd.f32 0.0, %v6627
      %v6629 = vpop.f32.mrb[0].mxu0
      %v6630 = vpop.f32.mrb[0].mxu0
      %6631 = vdwg.mxu0
      %v6632 = vadd.f32 %v6404, %v6503
      %v6633 = vadd.f32 %v6405, %v6505
      %v6634 = vadd.f32 %v6406, %v6544
      %v6635 = vadd.f32 %v6407, %v6546
      %v6636 = vadd.f32 %v6408, %v6585
      %v6637 = vadd.f32 %v6409, %v6587
      %v6638 = vadd.f32 %v6410, %v6626
      %v6639 = vadd.f32 %v6411, %v6628
      %s6640 = scalar_lea.vmem %s3, 104
      %v6641 = vld [vmem:[%s6640] sm:$0xf]
      %6642 = vrot.lane.b32.xlu0 %v3897, 17
      %v6643 = vpop.permute.xlu0 %6642
      %6644 = vrot.lane.b32.xlu0 %v3898, 17
      %v6645 = vpop.permute.xlu0 %6644
      %6646 = vrot.lane.b32.xlu0 %v3899, 17
      %v6647 = vpop.permute.xlu0 %6646
      %6648 = vrot.lane.b32.xlu0 %v3900, 17
      %v6649 = vpop.permute.xlu0 %6648
      %6650 = vrot.lane.b32.xlu0 %v3901, 17
      %v6651 = vpop.permute.xlu0 %6650
      %6652 = vrot.lane.b32.xlu0 %v3902, 17
      %v6653 = vpop.permute.xlu0 %6652
      %6654 = vrot.lane.b32.xlu0 %v3903, 17
      %v6655 = vpop.permute.xlu0 %6654
      %6656 = vrot.lane.b32.xlu0 %v3904, 17
      %v6657 = vpop.permute.xlu0 %6656
      %6658 = vrot.lane.b32.xlu0 %v3905, 17
      %v6659 = vpop.permute.xlu0 %6658
      %vm6660 = vcmask 138240
      %v6661 = vsel %vm6660, %v6643, %v6645
      %v6662 = vsel %vm6660, %v6645, %v6647
      %v6663 = vsel %vm6660, %v6647, %v6649
      %v6664 = vsel %vm6660, %v6649, %v6651
      %v6665 = vsel %vm6660, %v6651, %v6653
      %v6666 = vsel %vm6660, %v6653, %v6655
      %v6667 = vsel %vm6660, %v6655, %v6657
      %v6668 = vsel %vm6660, %v6657, %v6659
      %v6670 = vsel %vm732, %v6641, 0
      %v6673 = vsel %vm736, %v6661, 0
      %v6676 = vsel %vm736, %v6662, 0
      %v6679 = vsel %vm736, %v6663, 0
      %v6682 = vsel %vm736, %v6664, 0
      %v6685 = vsel %vm736, %v6665, 0
      %v6688 = vsel %vm736, %v6666, 0
      %v6691 = vsel %vm736, %v6667, 0
      %v6694 = vsel %vm736, %v6668, 0
      %6696 = vmatprep.subr.bf16.mxu0 %v6676
      %6697 = vmatpush1.bf16.msra.mxu0 %v6673
      %6698 = vmatprep.subr.bf16.mxu0 0
      %6699 = vmatpush1.bf16.msra.mxu0 0
      %6700 = vmatprep.subr.bf16.mxu0 0
      %6701 = vmatpush1.bf16.msra.mxu0 0
      %6702 = vmatprep.subr.bf16.mxu0 0
      %6703 = vmatpush1.bf16.msra.mxu0 0
      %6704 = vmatprep.subr.bf16.mxu0 0
      %6705 = vmatpush1.bf16.msra.mxu0 0
      %6706 = vmatprep.subr.bf16.mxu0 0
      %6707 = vmatpush1.bf16.msra.mxu0 0
      %6708 = vmatprep.subr.bf16.mxu0 0
      %6709 = vmatpush1.bf16.msra.mxu0 0
      %6710 = vmatprep.subr.bf16.mxu0 0
      %6711 = vmatpush1.bf16.msra.mxu0 0
      %6712 = vmatprep.subr.bf16.mxu0 0
      %6713 = vmatpush1.bf16.msra.mxu0 0
      %6714 = vmatprep.subr.bf16.mxu0 0
      %6715 = vmatpush1.bf16.msra.mxu0 0
      %6716 = vmatprep.subr.bf16.mxu0 0
      %6717 = vmatpush1.bf16.msra.mxu0 0
      %6718 = vmatprep.subr.bf16.mxu0 0
      %6719 = vmatpush1.bf16.msra.mxu0 0
      %6720 = vmatprep.subr.bf16.mxu0 0
      %6721 = vmatpush1.bf16.msra.mxu0 0
      %6722 = vmatprep.subr.bf16.mxu0 0
      %6723 = vmatpush1.bf16.msra.mxu0 0
      %6724 = vmatprep.subr.bf16.mxu0 0
      %6725 = vmatpush1.bf16.msra.mxu0 0
      %6726 = vmatprep.subr.bf16.mxu0 0
      %6727 = vmatpush1.bf16.msra.mxu0 0
      %6728 = vmatprep.mubr.bf16.mxu0 0
      %6729 = vmatmul.mubr.bf16.gmra.mrb[0].mxu0 %v6670
      %v6730 = vpop.f32.mrb[0].mxu0
      %v6731 = vadd.f32 0.0, %v6730
      %v6732 = vpop.f32.mrb[0].mxu0
      %v6733 = vadd.f32 0.0, %v6732
      %v6734 = vpop.f32.mrb[0].mxu0
      %v6735 = vpop.f32.mrb[0].mxu0
      %6736 = vdwg.mxu0
      %6737 = vmatprep.subr.bf16.mxu0 %v6682
      %6738 = vmatpush1.bf16.msra.mxu0 %v6679
      %6739 = vmatprep.subr.bf16.mxu0 0
      %6740 = vmatpush1.bf16.msra.mxu0 0
      %6741 = vmatprep.subr.bf16.mxu0 0
      %6742 = vmatpush1.bf16.msra.mxu0 0
      %6743 = vmatprep.subr.bf16.mxu0 0
      %6744 = vmatpush1.bf16.msra.mxu0 0
      %6745 = vmatprep.subr.bf16.mxu0 0
      %6746 = vmatpush1.bf16.msra.mxu0 0
      %6747 = vmatprep.subr.bf16.mxu0 0
      %6748 = vmatpush1.bf16.msra.mxu0 0
      %6749 = vmatprep.subr.bf16.mxu0 0
      %6750 = vmatpush1.bf16.msra.mxu0 0
      %6751 = vmatprep.subr.bf16.mxu0 0
      %6752 = vmatpush1.bf16.msra.mxu0 0
      %6753 = vmatprep.subr.bf16.mxu0 0
      %6754 = vmatpush1.bf16.msra.mxu0 0
      %6755 = vmatprep.subr.bf16.mxu0 0
      %6756 = vmatpush1.bf16.msra.mxu0 0
      %6757 = vmatprep.subr.bf16.mxu0 0
      %6758 = vmatpush1.bf16.msra.mxu0 0
      %6759 = vmatprep.subr.bf16.mxu0 0
      %6760 = vmatpush1.bf16.msra.mxu0 0
      %6761 = vmatprep.subr.bf16.mxu0 0
      %6762 = vmatpush1.bf16.msra.mxu0 0
      %6763 = vmatprep.subr.bf16.mxu0 0
      %6764 = vmatpush1.bf16.msra.mxu0 0
      %6765 = vmatprep.subr.bf16.mxu0 0
      %6766 = vmatpush1.bf16.msra.mxu0 0
      %6767 = vmatprep.subr.bf16.mxu0 0
      %6768 = vmatpush1.bf16.msra.mxu0 0
      %6769 = vmatprep.mubr.bf16.mxu0 0
      %6770 = vmatmul.mubr.bf16.gmra.mrb[0].mxu0 %v6670
      %v6771 = vpop.f32.mrb[0].mxu0
      %v6772 = vadd.f32 0.0, %v6771
      %v6773 = vpop.f32.mrb[0].mxu0
      %v6774 = vadd.f32 0.0, %v6773
      %v6775 = vpop.f32.mrb[0].mxu0
      %v6776 = vpop.f32.mrb[0].mxu0
      %6777 = vdwg.mxu0
      %6778 = vmatprep.subr.bf16.mxu0 %v6688
      %6779 = vmatpush1.bf16.msra.mxu0 %v6685
      %6780 = vmatprep.subr.bf16.mxu0 0
      %6781 = vmatpush1.bf16.msra.mxu0 0
      %6782 = vmatprep.subr.bf16.mxu0 0
      %6783 = vmatpush1.bf16.msra.mxu0 0
      %6784 = vmatprep.subr.bf16.mxu0 0
      %6785 = vmatpush1.bf16.msra.mxu0 0
      %6786 = vmatprep.subr.bf16.mxu0 0
      %6787 = vmatpush1.bf16.msra.mxu0 0
      %6788 = vmatprep.subr.bf16.mxu0 0
      %6789 = vmatpush1.bf16.msra.mxu0 0
      %6790 = vmatprep.subr.bf16.mxu0 0
      %6791 = vmatpush1.bf16.msra.mxu0 0
      %6792 = vmatprep.subr.bf16.mxu0 0
      %6793 = vmatpush1.bf16.msra.mxu0 0
      %6794 = vmatprep.subr.bf16.mxu0 0
      %6795 = vmatpush1.bf16.msra.mxu0 0
      %6796 = vmatprep.subr.bf16.mxu0 0
      %6797 = vmatpush1.bf16.msra.mxu0 0
      %6798 = vmatprep.subr.bf16.mxu0 0
      %6799 = vmatpush1.bf16.msra.mxu0 0
      %6800 = vmatprep.subr.bf16.mxu0 0
      %6801 = vmatpush1.bf16.msra.mxu0 0
      %6802 = vmatprep.subr.bf16.mxu0 0
      %6803 = vmatpush1.bf16.msra.mxu0 0
      %6804 = vmatprep.subr.bf16.mxu0 0
      %6805 = vmatpush1.bf16.msra.mxu0 0
      %6806 = vmatprep.subr.bf16.mxu0 0
      %6807 = vmatpush1.bf16.msra.mxu0 0
      %6808 = vmatprep.subr.bf16.mxu0 0
      %6809 = vmatpush1.bf16.msra.mxu0 0
      %6810 = vmatprep.mubr.bf16.mxu0 0
      %6811 = vmatmul.mubr.bf16.gmra.mrb[0].mxu0 %v6670
      %v6812 = vpop.f32.mrb[0].mxu0
      %v6813 = vadd.f32 0.0, %v6812
      %v6814 = vpop.f32.mrb[0].mxu0
      %v6815 = vadd.f32 0.0, %v6814
      %v6816 = vpop.f32.mrb[0].mxu0
      %v6817 = vpop.f32.mrb[0].mxu0
      %6818 = vdwg.mxu0
      %6819 = vmatprep.subr.bf16.mxu0 %v6694
      %6820 = vmatpush1.bf16.msra.mxu0 %v6691
      %6821 = vmatprep.subr.bf16.mxu0 0
      %6822 = vmatpush1.bf16.msra.mxu0 0
      %6823 = vmatprep.subr.bf16.mxu0 0
      %6824 = vmatpush1.bf16.msra.mxu0 0
      %6825 = vmatprep.subr.bf16.mxu0 0
      %6826 = vmatpush1.bf16.msra.mxu0 0
      %6827 = vmatprep.subr.bf16.mxu0 0
      %6828 = vmatpush1.bf16.msra.mxu0 0
      %6829 = vmatprep.subr.bf16.mxu0 0
      %6830 = vmatpush1.bf16.msra.mxu0 0
      %6831 = vmatprep.subr.bf16.mxu0 0
      %6832 = vmatpush1.bf16.msra.mxu0 0
      %6833 = vmatprep.subr.bf16.mxu0 0
      %6834 = vmatpush1.bf16.msra.mxu0 0
      %6835 = vmatprep.subr.bf16.mxu0 0
      %6836 = vmatpush1.bf16.msra.mxu0 0
      %6837 = vmatprep.subr.bf16.mxu0 0
      %6838 = vmatpush1.bf16.msra.mxu0 0
      %6839 = vmatprep.subr.bf16.mxu0 0
      %6840 = vmatpush1.bf16.msra.mxu0 0
      %6841 = vmatprep.subr.bf16.mxu0 0
      %6842 = vmatpush1.bf16.msra.mxu0 0
      %6843 = vmatprep.subr.bf16.mxu0 0
      %6844 = vmatpush1.bf16.msra.mxu0 0
      %6845 = vmatprep.subr.bf16.mxu0 0
      %6846 = vmatpush1.bf16.msra.mxu0 0
      %6847 = vmatprep.subr.bf16.mxu0 0
      %6848 = vmatpush1.bf16.msra.mxu0 0
      %6849 = vmatprep.subr.bf16.mxu0 0
      %6850 = vmatpush1.bf16.msra.mxu0 0
      %6851 = vmatprep.mubr.bf16.mxu0 0
      %6852 = vmatmul.mubr.bf16.gmra.mrb[0].mxu0 %v6670
      %v6853 = vpop.f32.mrb[0].mxu0
      %v6854 = vadd.f32 0.0, %v6853
      %v6855 = vpop.f32.mrb[0].mxu0
      %v6856 = vadd.f32 0.0, %v6855
      %v6857 = vpop.f32.mrb[0].mxu0
      %v6858 = vpop.f32.mrb[0].mxu0
      %6859 = vdwg.mxu0
      %v6860 = vadd.f32 %v6632, %v6731
      %v6861 = vadd.f32 %v6633, %v6733
      %v6862 = vadd.f32 %v6634, %v6772
      %v6863 = vadd.f32 %v6635, %v6774
      %v6864 = vadd.f32 %v6636, %v6813
      %v6865 = vadd.f32 %v6637, %v6815
      %v6866 = vadd.f32 %v6638, %v6854
      %v6867 = vadd.f32 %v6639, %v6856
      %v6868 = vld [vmem:[%s6] sm:$0xff]
      %6870 = vset.pattern.permute.xlu0 0
      %6871 = vperm.xlu0 %6870, %v6868
      %v6872 = vpop.permute.xlu0 %6871
      %v6874 = vadd.f32 %v6860, %v6872
      %v6875 = vadd.f32 %v6861, %v6872
      %v6876 = vadd.f32 %v6862, %v6872
      %v6877 = vadd.f32 %v6863, %v6872
      %v6878 = vadd.f32 %v6864, %v6872
      %v6879 = vadd.f32 %v6865, %v6872
      %v6880 = vadd.f32 %v6866, %v6872
      %v6881 = vadd.f32 %v6867, %v6872
      %v6882 = vmax.f32 %v6874, 0.0
      %v6883 = vmax.f32 %v6875, 0.0
      %v6884 = vmax.f32 %v6876, 0.0
      %v6885 = vmax.f32 %v6877, 0.0
      %v6886 = vmax.f32 %v6878, 0.0
      %v6887 = vmax.f32 %v6879, 0.0
      %v6888 = vmax.f32 %v6880, 0.0
      %v6889 = vmax.f32 %v6881, 0.0
      %v6890 = vpack.c.bf16 %v6882, %v6882
      %v6891 = vpack.c.bf16 %v6883, %v6883
      %v6892 = vpack.c.bf16 %v6884, %v6884
      %v6893 = vpack.c.bf16 %v6885, %v6885
      %v6894 = vpack.c.bf16 %v6886, %v6886
      %v6895 = vpack.c.bf16 %v6887, %v6887
      %v6896 = vpack.c.bf16 %v6888, %v6888
      %v6897 = vpack.c.bf16 %v6889, %v6889
      %v6898 = vld [vmem:[%s4] sm:$0xf]
      %v6899 = vld [vmem:[%s4 + $0x4] sm:$0xf]
      %v6900 = vld [vmem:[%s4 + $0x8] sm:$0xf]
      %v6901 = vld [vmem:[%s4 + $0xc] sm:$0xf]
      %v6902 = vld [vmem:[%s7] sm:$0xff]
      %v6903 = vld [vmem:[%s7 + $0x8] sm:$0xff]
      %v6904 = vld [vmem:[%s7 + $0x10] sm:$0xff]
      %v6905 = vld [vmem:[%s7 + $0x18] sm:$0xff]
      %6907 = vset.pattern.permute.xlu0 0
      %6908 = vperm.xlu0 %6907, %v6902
      %v6909 = vpop.permute.xlu0 %6908
      %6912 = vset.pattern.permute.xlu0 0
      %6913 = vperm.xlu0 %6912, %v6903
      %v6914 = vpop.permute.xlu0 %6913
      %6917 = vset.pattern.permute.xlu0 0
      %6918 = vperm.xlu0 %6917, %v6904
      %v6919 = vpop.permute.xlu0 %6918
      %6922 = vset.pattern.permute.xlu0 0
      %6923 = vperm.xlu0 %6922, %v6905
      %v6924 = vpop.permute.xlu0 %6923
      %v6930 = vunpack.c.l.b16 %v6898
      %v6931 = vunpack.c.l.b16 %v6899
      %v6932 = vunpack.c.l.b16 %v6900
      %v6933 = vunpack.c.l.b16 %v6901
      %v6934 = vpack.c.b16 %v6931, %v6930
      %v6935 = vpack.c.b16 %v6933, %v6932
      %v6937 = vsel %vm732, %v6934, 0
      %v6940 = vsel %vm732, %v6935, 0
      %v6943 = vsel %vm736, %v6890, 0
      %v6946 = vsel %vm736, %v6891, 0
      %v6949 = vsel %vm736, %v6892, 0
      %v6952 = vsel %vm736, %v6893, 0
      %v6955 = vsel %vm736, %v6894, 0
      %v6958 = vsel %vm736, %v6895, 0
      %v6961 = vsel %vm736, %v6896, 0
      %v6964 = vsel %vm736, %v6897, 0
      %6966 = vmatprep.subr.bf16.mxu0 %v6946
      %6967 = vmatpush1.bf16.msra.mxu0 %v6943
      %6968 = vmatprep.subr.bf16.mxu0 0
      %6969 = vmatpush1.bf16.msra.mxu0 0
      %6970 = vmatprep.subr.bf16.mxu0 0
      %6971 = vmatpush1.bf16.msra.mxu0 0
      %6972 = vmatprep.subr.bf16.mxu0 0
      %6973 = vmatpush1.bf16.msra.mxu0 0
      %6974 = vmatprep.subr.bf16.mxu0 0
      %6975 = vmatpush1.bf16.msra.mxu0 0
      %6976 = vmatprep.subr.bf16.mxu0 0
      %6977 = vmatpush1.bf16.msra.mxu0 0
      %6978 = vmatprep.subr.bf16.mxu0 0
      %6979 = vmatpush1.bf16.msra.mxu0 0
      %6980 = vmatprep.subr.bf16.mxu0 0
      %6981 = vmatpush1.bf16.msra.mxu0 0
      %6982 = vmatprep.subr.bf16.mxu0 0
      %6983 = vmatpush1.bf16.msra.mxu0 0
      %6984 = vmatprep.subr.bf16.mxu0 0
      %6985 = vmatpush1.bf16.msra.mxu0 0
      %6986 = vmatprep.subr.bf16.mxu0 0
      %6987 = vmatpush1.bf16.msra.mxu0 0
      %6988 = vmatprep.subr.bf16.mxu0 0
      %6989 = vmatpush1.bf16.msra.mxu0 0
      %6990 = vmatprep.subr.bf16.mxu0 0
      %6991 = vmatpush1.bf16.msra.mxu0 0
      %6992 = vmatprep.subr.bf16.mxu0 0
      %6993 = vmatpush1.bf16.msra.mxu0 0
      %6994 = vmatprep.subr.bf16.mxu0 0
      %6995 = vmatpush1.bf16.msra.mxu0 0
      %6996 = vmatprep.subr.bf16.mxu0 0
      %6997 = vmatpush1.bf16.msra.mxu0 0
      %6998 = vmatprep.mubr.bf16.mxu0 0
      %6999 = vmatmul.mubr.bf16.gmra.mrb[0].mxu0 %v6937
      %v7000 = vpop.f32.mrb[0].mxu0
      %v7001 = vadd.f32 %v6909, %v7000
      %v7002 = vpop.f32.mrb[0].mxu0
      %v7003 = vadd.f32 %v6909, %v7002
      %v7004 = vpop.f32.mrb[0].mxu0
      %v7005 = vadd.f32 %v6914, %v7004
      %v7006 = vpop.f32.mrb[0].mxu0
      %v7007 = vadd.f32 %v6914, %v7006
      %7008 = vmatprep.mubr.bf16.mxu0 0
      %7009 = vmatmul.mubr.bf16.gmra.mrb[0].mxu0 %v6940
      %v7010 = vpop.f32.mrb[0].mxu0
      %v7011 = vadd.f32 %v6919, %v7010
      %v7012 = vpop.f32.mrb[0].mxu0
      %v7013 = vadd.f32 %v6919, %v7012
      %v7014 = vpop.f32.mrb[0].mxu0
      %v7015 = vadd.f32 %v6924, %v7014
      %v7016 = vpop.f32.mrb[0].mxu0
      %v7017 = vadd.f32 %v6924, %v7016
      %7018 = vdwg.mxu0
      %7019 = vmatprep.subr.bf16.mxu0 %v6952
      %7020 = vmatpush1.bf16.msra.mxu0 %v6949
      %7021 = vmatprep.subr.bf16.mxu0 0
      %7022 = vmatpush1.bf16.msra.mxu0 0
      %7023 = vmatprep.subr.bf16.mxu0 0
      %7024 = vmatpush1.bf16.msra.mxu0 0
      %7025 = vmatprep.subr.bf16.mxu0 0
      %7026 = vmatpush1.bf16.msra.mxu0 0
      %7027 = vmatprep.subr.bf16.mxu0 0
      %7028 = vmatpush1.bf16.msra.mxu0 0
      %7029 = vmatprep.subr.bf16.mxu0 0
      %7030 = vmatpush1.bf16.msra.mxu0 0
      %7031 = vmatprep.subr.bf16.mxu0 0
      %7032 = vmatpush1.bf16.msra.mxu0 0
      %7033 = vmatprep.subr.bf16.mxu0 0
      %7034 = vmatpush1.bf16.msra.mxu0 0
      %7035 = vmatprep.subr.bf16.mxu0 0
      %7036 = vmatpush1.bf16.msra.mxu0 0
      %7037 = vmatprep.subr.bf16.mxu0 0
      %7038 = vmatpush1.bf16.msra.mxu0 0
      %7039 = vmatprep.subr.bf16.mxu0 0
      %7040 = vmatpush1.bf16.msra.mxu0 0
      %7041 = vmatprep.subr.bf16.mxu0 0
      %7042 = vmatpush1.bf16.msra.mxu0 0
      %7043 = vmatprep.subr.bf16.mxu0 0
      %7044 = vmatpush1.bf16.msra.mxu0 0
      %7045 = vmatprep.subr.bf16.mxu0 0
      %7046 = vmatpush1.bf16.msra.mxu0 0
      %7047 = vmatprep.subr.bf16.mxu0 0
      %7048 = vmatpush1.bf16.msra.mxu0 0
      %7049 = vmatprep.subr.bf16.mxu0 0
      %7050 = vmatpush1.bf16.msra.mxu0 0
      %7051 = vmatprep.mubr.bf16.mxu0 0
      %7052 = vmatmul.mubr.bf16.gmra.mrb[0].mxu0 %v6937
      %v7053 = vpop.f32.mrb[0].mxu0
      %v7054 = vadd.f32 %v6909, %v7053
      %v7055 = vpop.f32.mrb[0].mxu0
      %v7056 = vadd.f32 %v6909, %v7055
      %v7057 = vpop.f32.mrb[0].mxu0
      %v7058 = vadd.f32 %v6914, %v7057
      %v7059 = vpop.f32.mrb[0].mxu0
      %v7060 = vadd.f32 %v6914, %v7059
      %7061 = vmatprep.mubr.bf16.mxu0 0
      %7062 = vmatmul.mubr.bf16.gmra.mrb[0].mxu0 %v6940
      %v7063 = vpop.f32.mrb[0].mxu0
      %v7064 = vadd.f32 %v6919, %v7063
      %v7065 = vpop.f32.mrb[0].mxu0
      %v7066 = vadd.f32 %v6919, %v7065
      %v7067 = vpop.f32.mrb[0].mxu0
      %v7068 = vadd.f32 %v6924, %v7067
      %v7069 = vpop.f32.mrb[0].mxu0
      %v7070 = vadd.f32 %v6924, %v7069
      %7071 = vdwg.mxu0
      %7072 = vmatprep.subr.bf16.mxu0 %v6958
      %7073 = vmatpush1.bf16.msra.mxu0 %v6955
      %7074 = vmatprep.subr.bf16.mxu0 0
      %7075 = vmatpush1.bf16.msra.mxu0 0
      %7076 = vmatprep.subr.bf16.mxu0 0
      %7077 = vmatpush1.bf16.msra.mxu0 0
      %7078 = vmatprep.subr.bf16.mxu0 0
      %7079 = vmatpush1.bf16.msra.mxu0 0
      %7080 = vmatprep.subr.bf16.mxu0 0
      %7081 = vmatpush1.bf16.msra.mxu0 0
      %7082 = vmatprep.subr.bf16.mxu0 0
      %7083 = vmatpush1.bf16.msra.mxu0 0
      %7084 = vmatprep.subr.bf16.mxu0 0
      %7085 = vmatpush1.bf16.msra.mxu0 0
      %7086 = vmatprep.subr.bf16.mxu0 0
      %7087 = vmatpush1.bf16.msra.mxu0 0
      %7088 = vmatprep.subr.bf16.mxu0 0
      %7089 = vmatpush1.bf16.msra.mxu0 0
      %7090 = vmatprep.subr.bf16.mxu0 0
      %7091 = vmatpush1.bf16.msra.mxu0 0
      %7092 = vmatprep.subr.bf16.mxu0 0
      %7093 = vmatpush1.bf16.msra.mxu0 0
      %7094 = vmatprep.subr.bf16.mxu0 0
      %7095 = vmatpush1.bf16.msra.mxu0 0
      %7096 = vmatprep.subr.bf16.mxu0 0
      %7097 = vmatpush1.bf16.msra.mxu0 0
      %7098 = vmatprep.subr.bf16.mxu0 0
      %7099 = vmatpush1.bf16.msra.mxu0 0
      %7100 = vmatprep.subr.bf16.mxu0 0
      %7101 = vmatpush1.bf16.msra.mxu0 0
      %7102 = vmatprep.subr.bf16.mxu0 0
      %7103 = vmatpush1.bf16.msra.mxu0 0
      %7104 = vmatprep.mubr.bf16.mxu0 0
      %7105 = vmatmul.mubr.bf16.gmra.mrb[0].mxu0 %v6937
      %v7106 = vpop.f32.mrb[0].mxu0
      %v7107 = vadd.f32 %v6909, %v7106
      %v7108 = vpop.f32.mrb[0].mxu0
      %v7109 = vadd.f32 %v6909, %v7108
      %v7110 = vpop.f32.mrb[0].mxu0
      %v7111 = vadd.f32 %v6914, %v7110
      %v7112 = vpop.f32.mrb[0].mxu0
      %v7113 = vadd.f32 %v6914, %v7112
      %7114 = vmatprep.mubr.bf16.mxu0 0
      %7115 = vmatmul.mubr.bf16.gmra.mrb[0].mxu0 %v6940
      %v7116 = vpop.f32.mrb[0].mxu0
      %v7117 = vadd.f32 %v6919, %v7116
      %v7118 = vpop.f32.mrb[0].mxu0
      %v7119 = vadd.f32 %v6919, %v7118
      %v7120 = vpop.f32.mrb[0].mxu0
      %v7121 = vadd.f32 %v6924, %v7120
      %v7122 = vpop.f32.mrb[0].mxu0
      %v7123 = vadd.f32 %v6924, %v7122
      %7124 = vdwg.mxu0
      %7125 = vmatprep.subr.bf16.mxu0 %v6964
      %7126 = vmatpush1.bf16.msra.mxu0 %v6961
      %7127 = vmatprep.subr.bf16.mxu0 0
      %7128 = vmatpush1.bf16.msra.mxu0 0
      %7129 = vmatprep.subr.bf16.mxu0 0
      %7130 = vmatpush1.bf16.msra.mxu0 0
      %7131 = vmatprep.subr.bf16.mxu0 0
      %7132 = vmatpush1.bf16.msra.mxu0 0
      %7133 = vmatprep.subr.bf16.mxu0 0
      %7134 = vmatpush1.bf16.msra.mxu0 0
      %7135 = vmatprep.subr.bf16.mxu0 0
      %7136 = vmatpush1.bf16.msra.mxu0 0
      %7137 = vmatprep.subr.bf16.mxu0 0
      %7138 = vmatpush1.bf16.msra.mxu0 0
      %7139 = vmatprep.subr.bf16.mxu0 0
      %7140 = vmatpush1.bf16.msra.mxu0 0
      %7141 = vmatprep.subr.bf16.mxu0 0
      %7142 = vmatpush1.bf16.msra.mxu0 0
      %7143 = vmatprep.subr.bf16.mxu0 0
      %7144 = vmatpush1.bf16.msra.mxu0 0
      %7145 = vmatprep.subr.bf16.mxu0 0
      %7146 = vmatpush1.bf16.msra.mxu0 0
      %7147 = vmatprep.subr.bf16.mxu0 0
      %7148 = vmatpush1.bf16.msra.mxu0 0
      %7149 = vmatprep.subr.bf16.mxu0 0
      %7150 = vmatpush1.bf16.msra.mxu0 0
      %7151 = vmatprep.subr.bf16.mxu0 0
      %7152 = vmatpush1.bf16.msra.mxu0 0
      %7153 = vmatprep.subr.bf16.mxu0 0
      %7154 = vmatpush1.bf16.msra.mxu0 0
      %7155 = vmatprep.subr.bf16.mxu0 0
      %7156 = vmatpush1.bf16.msra.mxu0 0
      %7157 = vmatprep.mubr.bf16.mxu0 0
      %7158 = vmatmul.mubr.bf16.gmra.mrb[0].mxu0 %v6937
      %v7159 = vpop.f32.mrb[0].mxu0
      %v7160 = vadd.f32 %v6909, %v7159
      %v7161 = vpop.f32.mrb[0].mxu0
      %v7162 = vadd.f32 %v6909, %v7161
      %v7163 = vpop.f32.mrb[0].mxu0
      %v7164 = vadd.f32 %v6914, %v7163
      %v7165 = vpop.f32.mrb[0].mxu0
      %v7166 = vadd.f32 %v6914, %v7165
      %7167 = vmatprep.mubr.bf16.mxu0 0
      %7168 = vmatmul.mubr.bf16.gmra.mrb[0].mxu0 %v6940
      %v7169 = vpop.f32.mrb[0].mxu0
      %v7170 = vadd.f32 %v6919, %v7169
      %v7171 = vpop.f32.mrb[0].mxu0
      %v7172 = vadd.f32 %v6919, %v7171
      %v7173 = vpop.f32.mrb[0].mxu0
      %v7174 = vadd.f32 %v6924, %v7173
      %v7175 = vpop.f32.mrb[0].mxu0
      %v7176 = vadd.f32 %v6924, %v7175
      %7177 = vdwg.mxu0
      %v7178 = vunpack.c.l.bf16 %v307
      %v7179 = vunpack.c.h.bf16 %v307
      %v7180 = vunpack.c.l.bf16 %v308
      %v7181 = vunpack.c.h.bf16 %v308
      %v7182 = vunpack.c.l.bf16 %v309
      %v7183 = vunpack.c.h.bf16 %v309
      %v7184 = vunpack.c.l.bf16 %v310
      %v7185 = vunpack.c.h.bf16 %v310
      %v7186 = vunpack.c.l.bf16 %v311
      %v7187 = vunpack.c.h.bf16 %v311
      %v7188 = vunpack.c.l.bf16 %v312
      %v7189 = vunpack.c.h.bf16 %v312
      %v7190 = vunpack.c.l.bf16 %v313
      %v7191 = vunpack.c.h.bf16 %v313
      %v7192 = vunpack.c.l.bf16 %v314
      %v7193 = vunpack.c.h.bf16 %v314
      %v7194 = vunpack.c.l.bf16 %v315
      %v7195 = vunpack.c.h.bf16 %v315
      %v7196 = vunpack.c.l.bf16 %v316
      %v7197 = vunpack.c.h.bf16 %v316
      %v7198 = vunpack.c.l.bf16 %v317
      %v7199 = vunpack.c.h.bf16 %v317
      %v7200 = vunpack.c.l.bf16 %v318
      %v7201 = vunpack.c.h.bf16 %v318
      %v7202 = vunpack.c.l.bf16 %v319
      %v7203 = vunpack.c.h.bf16 %v319
      %v7204 = vunpack.c.l.bf16 %v320
      %v7205 = vunpack.c.h.bf16 %v320
      %v7206 = vunpack.c.l.bf16 %v321
      %v7207 = vunpack.c.h.bf16 %v321
      %v7208 = vunpack.c.l.bf16 %v322
      %v7209 = vunpack.c.h.bf16 %v322
      %v7210 = vadd.f32 %v7001, %v7178
      %v7211 = vadd.f32 %v7003, %v7179
      %v7212 = vadd.f32 %v7054, %v7180
      %v7213 = vadd.f32 %v7056, %v7181
      %v7214 = vadd.f32 %v7107, %v7182
      %v7215 = vadd.f32 %v7109, %v7183
      %v7216 = vadd.f32 %v7160, %v7184
      %v7217 = vadd.f32 %v7162, %v7185
      %v7218 = vadd.f32 %v7005, %v7186
      %v7219 = vadd.f32 %v7007, %v7187
      %v7220 = vadd.f32 %v7058, %v7188
      %v7221 = vadd.f32 %v7060, %v7189
      %v7222 = vadd.f32 %v7111, %v7190
      %v7223 = vadd.f32 %v7113, %v7191
      %v7224 = vadd.f32 %v7164, %v7192
      %v7225 = vadd.f32 %v7166, %v7193
      %v7226 = vadd.f32 %v7011, %v7194
      %v7227 = vadd.f32 %v7013, %v7195
      %v7228 = vadd.f32 %v7064, %v7196
      %v7229 = vadd.f32 %v7066, %v7197
      %v7230 = vadd.f32 %v7117, %v7198
      %v7231 = vadd.f32 %v7119, %v7199
      %v7232 = vadd.f32 %v7170, %v7200
      %v7233 = vadd.f32 %v7172, %v7201
      %v7234 = vadd.f32 %v7015, %v7202
      %v7235 = vadd.f32 %v7017, %v7203
      %v7236 = vadd.f32 %v7068, %v7204
      %v7237 = vadd.f32 %v7070, %v7205
      %v7238 = vadd.f32 %v7121, %v7206
      %v7239 = vadd.f32 %v7123, %v7207
      %v7240 = vadd.f32 %v7174, %v7208
      %v7241 = vadd.f32 %v7176, %v7209
      %v7242 = vmax.f32 %v7210, 0.0
      %v7243 = vmax.f32 %v7211, 0.0
      %v7244 = vmax.f32 %v7212, 0.0
      %v7245 = vmax.f32 %v7213, 0.0
      %v7246 = vmax.f32 %v7214, 0.0
      %v7247 = vmax.f32 %v7215, 0.0
      %v7248 = vmax.f32 %v7216, 0.0
      %v7249 = vmax.f32 %v7217, 0.0
      %v7250 = vmax.f32 %v7218, 0.0
      %v7251 = vmax.f32 %v7219, 0.0
      %v7252 = vmax.f32 %v7220, 0.0
      %v7253 = vmax.f32 %v7221, 0.0
      %v7254 = vmax.f32 %v7222, 0.0
      %v7255 = vmax.f32 %v7223, 0.0
      %v7256 = vmax.f32 %v7224, 0.0
      %v7257 = vmax.f32 %v7225, 0.0
      %v7258 = vmax.f32 %v7226, 0.0
      %v7259 = vmax.f32 %v7227, 0.0
      %v7260 = vmax.f32 %v7228, 0.0
      %v7261 = vmax.f32 %v7229, 0.0
      %v7262 = vmax.f32 %v7230, 0.0
      %v7263 = vmax.f32 %v7231, 0.0
      %v7264 = vmax.f32 %v7232, 0.0
      %v7265 = vmax.f32 %v7233, 0.0
      %v7266 = vmax.f32 %v7234, 0.0
      %v7267 = vmax.f32 %v7235, 0.0
      %v7268 = vmax.f32 %v7236, 0.0
      %v7269 = vmax.f32 %v7237, 0.0
      %v7270 = vmax.f32 %v7238, 0.0
      %v7271 = vmax.f32 %v7239, 0.0
      %v7272 = vmax.f32 %v7240, 0.0
      %v7273 = vmax.f32 %v7241, 0.0
      %7274 = vst [vmem:[%s305] sm:$0xff] %v7242
      %7275 = vst [vmem:[%s305 + $0x8] sm:$0xff] %v7243
      %7276 = vst [vmem:[%s305 + $0x10] sm:$0xff] %v7244
      %7277 = vst [vmem:[%s305 + $0x18] sm:$0xff] %v7245
      %7278 = vst [vmem:[%s305 + $0x20] sm:$0xff] %v7246
      %7279 = vst [vmem:[%s305 + $0x28] sm:$0xff] %v7247
      %7280 = vst [vmem:[%s305 + $0x30] sm:$0xff] %v7248
      %7281 = vst [vmem:[%s305 + $0x38] sm:$0xff] %v7249
      %7282 = vst [vmem:[%s305 + $0x40] sm:$0xff] %v7250
      %7283 = vst [vmem:[%s305 + $0x48] sm:$0xff] %v7251
      %7284 = vst [vmem:[%s305 + $0x50] sm:$0xff] %v7252
      %7285 = vst [vmem:[%s305 + $0x58] sm:$0xff] %v7253
      %7286 = vst [vmem:[%s305 + $0x60] sm:$0xff] %v7254
      %7287 = vst [vmem:[%s305 + $0x68] sm:$0xff] %v7255
      %7288 = vst [vmem:[%s305 + $0x70] sm:$0xff] %v7256
      %7289 = vst [vmem:[%s305 + $0x78] sm:$0xff] %v7257
      %7290 = vst [vmem:[%s305 + $0x80] sm:$0xff] %v7258
      %7291 = vst [vmem:[%s305 + $0x88] sm:$0xff] %v7259
      %7292 = vst [vmem:[%s305 + $0x90] sm:$0xff] %v7260
      %7293 = vst [vmem:[%s305 + $0x98] sm:$0xff] %v7261
      %7294 = vst [vmem:[%s305 + $0xa0] sm:$0xff] %v7262
      %7295 = vst [vmem:[%s305 + $0xa8] sm:$0xff] %v7263
      %7296 = vst [vmem:[%s305 + $0xb0] sm:$0xff] %v7264
      %7297 = vst [vmem:[%s305 + $0xb8] sm:$0xff] %v7265
      %7298 = vst [vmem:[%s305 + $0xc0] sm:$0xff] %v7266
      %7299 = vst [vmem:[%s305 + $0xc8] sm:$0xff] %v7267
      %7300 = vst [vmem:[%s305 + $0xd0] sm:$0xff] %v7268
      %7301 = vst [vmem:[%s305 + $0xd8] sm:$0xff] %v7269
      %7302 = vst [vmem:[%s305 + $0xe0] sm:$0xff] %v7270
      %7303 = vst [vmem:[%s305 + $0xe8] sm:$0xff] %v7271
      %7304 = vst [vmem:[%s305 + $0xf0] sm:$0xff] %v7272
      %7305 = vst [vmem:[%s305 + $0xf8] sm:$0xff] %v7273
      %p7306 = scmp.lt.s32.totalorder %s19, 1
      %s7307 = scalar_select %p7306, %s19, 1
      %s7308 = smul.addr %s7307, 32
      %s7309 = smul.addr %s7308, 8
      %s7310 = scalar_lea.vmem %s8, %s7309
      // Predicated region
      $region53: #{bottleneck_forward.1} parent=51 // pred_check
        %p7311 = pneg %p210
      $region54: #{bottleneck_forward.1} parent=51 // pred_check_branch
        %7313 = sbr.rel (%p7311) target = $region56
      $region55: #{bottleneck_forward.1} parent=51 // pred_region
        _
      $region56: #{bottleneck_forward.1} parent=51 // pred_fallthru
        _
    $region52: #{bottleneck_forward.1} parent=5 // pred_fallthru
      _
    %p7314 = scmp.le.s32.totalorder 2, %s14
    // Predicated region
    $region57: #{bottleneck_forward.1} parent=5 // pred_check
      %p7315 = pneg %p7314
    $region58: #{bottleneck_forward.1} parent=5 // pred_check_branch
      %7317 = sbr.rel (%p7315) target = $region60
    $region59: #{bottleneck_forward.1} parent=5 // pred_region
      %s7318 = ssub.s32 %s14, 2
      // Predicated region
      $region61: #{bottleneck_forward.1} parent=59 // pred_check
        %p7319 = pneg %p216
      $region62: #{bottleneck_forward.1} parent=59 // pred_check_branch
        %7321 = sbr.rel (%p7319) target = $region64
      $region63: #{bottleneck_forward.1} parent=59 // pred_region
        %p7322 = scmp.lt.s32.totalorder %s20, 1
        %s7323 = scalar_select %p7322, %s20, 1
        %s7324 = smul.addr %s7323, 32
        %s7325 = smul.addr %s7324, 8
        %s7326 = scalar_lea.vmem %s8, %s7325
      $region64: #{bottleneck_forward.1} parent=59 // pred_fallthru
        _
    $region60: #{bottleneck_forward.1} parent=5 // pred_fallthru
      _
  $region6: #{bottleneck_forward.1} parent=0 // loop_footer
    %s18 = sadd.s32 1, %s14
  $region7: #{bottleneck_forward.1} parent=0 // loop_footer_branch
    %13 = sbr.rel target = $region3
  $region8: #{bottleneck_forward.1} parent=0 // loop_exit
    _

</llo_original>
